<compile_context>
chip_gen: v5e
topology: v5e:2x2
jax: 0.10.0
libtpu: 0.0.40
codegen_flags: <defaults>
</compile_context>

<pallas_src>
import functools

import jax
import jax.numpy as jnp
from jax import lax
from jax.experimental import pallas as pl
from jax.experimental.pallas import tpu as pltpu
from jax.scipy.special import erf


def _round_up(x, m):
    return (x + m - 1) // m * m


def _gelu(x):
    # torch.nn.GELU() default (exact erf).
    # TODO(synk): switch to the tanh approximation (EUP slot) if the VALU erf
    # polynomial ever becomes the binding slot.
    return 0.5 * x * (1.0 + erf(x * 0.7071067811865476))


def _shift(x, off, L):
    """y[:, i] = x[:, (i + off) % L] via an XLU lane rotate.

    Valid (interior) output voxels never read wrapped lanes — guaranteed by the
    zero halo that every stage re-establishes on its output.
    """
    if off == 0:
        return x
    return pltpu.roll(x, shift=(-off) % L, axis=1)


def _block_body(x, mask, prefs, offsets, inv_m, L):
    """Depthwise k^3 conv -> GroupNorm(C groups) -> 1x1x1 expand -> GELU ->
    GRN -> 1x1x1 project, all on a resident (C, L) tile.  Returns (Cout, L)."""
    dw_w, dw_b, gn_w, gn_b, w2, b2, grn_g, grn_b, w3, b3 = prefs

    # Depthwise conv: per-tap lane roll (XLU) + VALU FMA chain.
    acc = None
    for t, off in enumerate(offsets):
        term = _shift(x, off, L) * dw_w[t]                 # (C, L) * (C, 1)
        acc = term if acc is None else acc + term
    x1 = acc + dw_b[...]

    # GroupNorm (groups == channels): one-pass masked stats, fused affine.
    xm = x1 * mask
    mean = jnp.sum(xm, axis=1, keepdims=True) * inv_m      # (C, 1)
    ex2 = jnp.sum(xm * x1, axis=1, keepdims=True) * inv_m
    var = jnp.maximum(ex2 - mean * mean, 0.0)              # biased variance
    scale = lax.rsqrt(var + 1e-5) * gn_w[...]              # (C, 1)
    shift_c = gn_b[...] - scale * mean                     # (C, 1)
    xn = x1 * scale + shift_c
    # TODO(synk): fold `scale` into w2's columns ((C,1)->(1,C) relayout needed).

    # 1x1x1 expansion conv == channel matmul; (E, L) output is lane-dense.
    h = jnp.dot(w2[...], xn, preferred_element_type=jnp.float32) + b2[...]
    h = _gelu(h)

    # GRN: masked per-channel L2; epilogue rewritten as h*(1 + g*nx) + beta.
    hm = h * mask
    gx = jnp.sqrt(jnp.sum(hm * h, axis=1, keepdims=True))  # (E, 1)
    den = jnp.mean(gx, axis=0, keepdims=True) + 1e-6       # (1, 1)
    coeff = 1.0 + grn_g[...] * (gx / den)                  # (E, 1)
    h = h * coeff + grn_b[...]

    # 1x1x1 projection conv.
    return jnp.dot(w3[...], h, preferred_element_type=jnp.float32) + b3[...]


def _make_encoder_kernel(n_res, stem_offsets, dw_offsets, cin_p, L,
                         inv_m1, inv_m2):
    def kernel(*refs):
        x_ref, m1_ref, m2_ref, stem_w, stem_b = refs[:5]
        res_refs = refs[5:5 + 10 * n_res]
        down_refs = refs[5 + 10 * n_res:5 + 10 * n_res + 12]
        o_ref = refs[5 + 10 * n_res + 12]
        stack_ref = refs[5 + 10 * n_res + 13]   # (27*cin_p, L) VMEM scratch

        m1 = m1_ref[...]                        # (1, L) interior-voxel mask
        m2 = m2_ref[...]                        # (1, L) stride-2 sample mask
        x = x_ref[0]                            # (cin_p, L)

        # stem Conv3d(Cin -> C, 3, padding=1): tap-stacked single MXU matmul.
        for t, off in enumerate(stem_offsets):
            stack_ref[pl.ds(t * cin_p, cin_p), :] = _shift(x, off, L)
        h = jnp.dot(stem_w[...], stack_ref[...],
                    preferred_element_type=jnp.float32) + stem_b[...]
        h = h * m1                              # re-zero halo for next stage

        # MedNeXtBlocks (exp_r=1, residual), fully resident in VMEM.
        for b in range(n_res):
            bp = res_refs[10 * b:10 * (b + 1)]
            y = _block_body(h, m1, bp, dw_offsets, inv_m1, L)
            h = (h + y) * m1

        # MedNeXtDownBlock (exp_r=2): the stride-2 is handled purely by the m2
        # sampling mask plus one host-side slice.
        # TODO(synk): compact stride-2 samples into a dense (C, ~L/8) tile
        # before the MLP to drop ~8x of the work in this stage.
        y = _block_body(h, m2, down_refs[:10], dw_offsets, inv_m2, L)
        res = jnp.dot(down_refs[10][...], h,
                      preferred_element_type=jnp.float32) + down_refs[11][...]
        o_ref[0] = (y + res) * m2

    return kernel


def _block_kernel_params(p):
    """torch-layout block params -> channel-major kernel views."""
    c = p["conv1_w"].shape[0]
    k = p["conv1_w"].shape[-1]
    dw_w = jnp.transpose(p["conv1_w"].reshape(c, k * k * k))[:, :, None]
    out = [
        dw_w, p["conv1_b"].reshape(c, 1),
        p["norm_w"].reshape(c, 1), p["norm_b"].reshape(c, 1),
        p["conv2_w"].reshape(-1, c), p["conv2_b"].reshape(-1, 1),
        p["grn_gamma"].reshape(-1, 1), p["grn_beta"].reshape(-1, 1),
        p["conv3_w"].reshape(p["conv3_w"].shape[0], -1),
        p["conv3_b"].reshape(-1, 1),
    ]
    if "res_conv_w" in p:
        out += [p["res_conv_w"].reshape(p["res_conv_w"].shape[0], c),
                p["res_conv_b"].reshape(-1, 1)]
    return out


@functools.partial(jax.jit, static_argnames=("kernel_size",))
def encoder_forward(x_ncdhw, params, kernel_size):
    """MedNeXt Encoder forward.  x: (N, Cin, D, H, W) NCDHW (PyTorch layout)."""
    x = x_ncdhw.astype(jnp.float32)
    N, Cin, D, H, W = x.shape
    k = kernel_size
    P = k // 2
    Dp, Hp, Wp = D + 2 * P, H + 2 * P, W + 2 * P
    HpWp = Hp * Wp
    Lp = Dp * HpWp
    L = _round_up(Lp, 128)                      # lane-align the flat axis
    Do, Ho, Wo = (D - 1) // 2 + 1, (H - 1) // 2 + 1, (W - 1) // 2 + 1
    cin_p = _round_up(Cin, 8)                   # sublane-align the stem stack

    # Pad once (halo + channel + lane padding) and flatten spatial onto lanes.
    xp = jnp.pad(x, ((0, 0), (0, cin_p - Cin), (P, P), (P, P), (P, P)))
    xf = jnp.pad(xp.reshape(N, cin_p, Lp), ((0, 0), (0, 0), (0, L - Lp)))

    # Voxel-validity masks: m1 = interior voxels, m2 = stride-2 samples.
    m1 = jnp.zeros((Dp, Hp, Wp), jnp.float32)
    m1 = m1.at[P:P + D, P:P + H, P:P + W].set(1.0)
    m2 = jnp.zeros((Dp, Hp, Wp), jnp.float32)
    m2 = m2.at[P:P + 2 * Do:2, P:P + 2 * Ho:2, P:P + 2 * Wo:2].set(1.0)
    m1 = jnp.pad(m1.reshape(1, Lp), ((0, 0), (0, L - Lp)))
    m2 = jnp.pad(m2.reshape(1, Lp), ((0, 0), (0, L - Lp)))

    # Parameter layout conversion (torch layouts -> kernel matmul layouts).
    sw = params["stem"]["w"]                    # (C, Cin, 3, 3, 3)
    C = sw.shape[0]
    sw = jnp.transpose(sw, (0, 2, 3, 4, 1))     # (C, 3, 3, 3, Cin)
    sw = jnp.pad(sw, ((0, 0), (0, 0), (0, 0), (0, 0), (0, cin_p - Cin)))
    plist = [sw.reshape(C, 27 * cin_p), params["stem"]["b"].reshape(C, 1)]
    for bp in params["res_blocks"]:
        plist += _block_kernel_params(bp)
    plist += _block_kernel_params(params["down_block"])
    n_res = len(params["res_blocks"])
    C2 = params["down_block"]["conv3_b"].shape[0]

    # Static tap offsets on the flattened padded volume.
    stem_offsets = tuple((kd - 1) * HpWp + (kh - 1) * Wp + (kw - 1)
                         for kd in range(3) for kh in range(3) for kw in range(3))
    dw_offsets = tuple((kd - P) * HpWp + (kh - P) * Wp + (kw - P)
                       for kd in range(k) for kh in range(k) for kw in range(k))

    kernel = _make_encoder_kernel(
        n_res, stem_offsets, dw_offsets, cin_p, L,
        inv_m1=1.0 / float(D * H * W), inv_m2=1.0 / float(Do * Ho * Wo))

    in_specs = ([pl.BlockSpec((1, cin_p, L), lambda i: (i, 0, 0)),
                 pl.BlockSpec((1, L), lambda i: (0, 0)),
                 pl.BlockSpec((1, L), lambda i: (0, 0))]
                + [pl.BlockSpec(p.shape, lambda i, _nd=p.ndim: (0,) * _nd)
                   for p in plist])

    # Explicit scoped-VMEM budget (f32 activations, with headroom), clamped to
    # stay within every chip's physical VMEM.
    e_max = max(2 * C, C2)
    act_bytes = 4 * L * (27 * cin_p + 2 * cin_p + 6 * max(C, C2)
                         + 3 * e_max + 2 * C2 + 4)
    vmem_limit = int(min(max(4 * act_bytes, 16 << 20), 48 << 20))

    y = pl.pallas_call(
        kernel,
        out_shape=jax.ShapeDtypeStruct((N, C2, L), jnp.float32),
        grid=(N,),
        in_specs=in_specs,
        out_specs=pl.BlockSpec((1, C2, L), lambda i: (i, 0, 0)),
        scratch_shapes=[pltpu.VMEM((27 * cin_p, L), jnp.float32)],
        compiler_params=pltpu.CompilerParams(
            dimension_semantics=("parallel",),       # megacore-friendly batch
            vmem_limit_bytes=vmem_limit),
    )(xf, m1, m2, *plist)

    # Extract the stride-2 output voxels (module boundary only).
    y = y[:, :, :Lp].reshape(N, C2, Dp, Hp, Wp)
    return y[:, :, P:P + 2 * Do:2, P:P + 2 * Ho:2, P:P + 2 * Wo:2]


# -----------------------------------------------------------------------------
# Deterministic parameter construction (torch state-dict layouts).
# -----------------------------------------------------------------------------
def _init_mednext_block(key, cin, cout, exp_r, k):
    e = exp_r * cin
    ks = jax.random.split(key, 8)
    nrm = lambda kk, shape: 0.1 * jax.random.normal(kk, shape, jnp.float32)
    return {
        "conv1_w": nrm(ks[0], (cin, 1, k, k, k)),     # depthwise conv
        "conv1_b": nrm(ks[1], (cin,)),
        "norm_w": jnp.ones((cin,), jnp.float32),      # GroupNorm affine init
        "norm_b": jnp.zeros((cin,), jnp.float32),
        "conv2_w": nrm(ks[2], (e, cin, 1, 1, 1)),
        "conv2_b": nrm(ks[3], (e,)),
        # torch inits GRN params to zero; small random so the path is exercised
        "grn_gamma": nrm(ks[4], (1, e, 1, 1, 1)),
        "grn_beta": nrm(ks[5], (1, e, 1, 1, 1)),
        "conv3_w": nrm(ks[6], (cout, e, 1, 1, 1)),
        "conv3_b": nrm(ks[7], (cout,)),
    }


def _init_down_block(key, cin, cout, exp_r, k):
    kb, kr, krb = jax.random.split(key, 3)
    p = _init_mednext_block(kb, cin, cout, exp_r, k)
    p["res_conv_w"] = 0.1 * jax.random.normal(kr, (cout, cin, 1, 1, 1),
                                              jnp.float32)
    p["res_conv_b"] = 0.1 * jax.random.normal(krb, (cout,), jnp.float32)
    return p


def init_encoder_params(key, in_channel, channel, n_res_block, kernel_size,
                        type=0):
    assert type == 0  # type==1 simply drops the stem conv; not built here
    exp_r = 2
    keys = jax.random.split(key, n_res_block + 3)
    stem = {
        "w": 0.1 * jax.random.normal(keys[0], (channel, in_channel, 3, 3, 3),
                                     jnp.float32),
        "b": 0.1 * jax.random.normal(keys[1], (channel,), jnp.float32),
    }
    res_blocks = [
        _init_mednext_block(keys[2 + i], channel, channel, 1, kernel_size)
        for i in range(n_res_block)
    ]
    down_block = _init_down_block(keys[-1], channel, 2 * channel, exp_r,
                                  kernel_size)
    return {"stem": stem, "res_blocks": res_blocks, "down_block": down_block}


# -----------------------------------------------------------------------------
# Pure-JAX reference (XLA convs) used only for a correctness check in __main__.
# -----------------------------------------------------------------------------
def _cvec(v):
    return v.reshape(1, -1, 1, 1, 1)


def _conv3d_ref(x, w, b, *, stride=1, padding=0, groups=1):
    out = lax.conv_general_dilated(
        x, w, window_strides=(stride,) * 3, padding=[(padding, padding)] * 3,
        dimension_numbers=("NCDHW", "OIDHW", "NCDHW"),
        feature_group_count=groups, precision=lax.Precision.HIGHEST)
    return out + _cvec(b)


def _block_tail_ref(x1, p):
    mean = jnp.mean(x1, axis=(2, 3, 4), keepdims=True)
    var = jnp.mean((x1 - mean) ** 2, axis=(2, 3, 4), keepdims=True)
    xn = ((x1 - mean) * lax.rsqrt(var + 1e-5) * _cvec(p["norm_w"])
          + _cvec(p["norm_b"]))
    E, C = p["conv2_w"].shape[:2]
    h = jnp.einsum("ec,ncdhw->nedhw", p["conv2_w"].reshape(E, C), xn,
                   precision=lax.Precision.HIGHEST) + _cvec(p["conv2_b"])
    h = 0.5 * h * (1.0 + erf(h * 0.7071067811865476))
    gx = jnp.sqrt(jnp.sum(h * h, axis=(2, 3, 4), keepdims=True))
    nx = gx / (jnp.mean(gx, axis=1, keepdims=True) + 1e-6)
    h = p["grn_gamma"] * (h * nx) + p["grn_beta"] + h
    O = p["conv3_w"].shape[0]
    return jnp.einsum("oe,nedhw->nodhw", p["conv3_w"].reshape(O, E), h,
                      precision=lax.Precision.HIGHEST) + _cvec(p["conv3_b"])


def encoder_reference(x, params, kernel_size):
    k = kernel_size
    h = _conv3d_ref(x, params["stem"]["w"], params["stem"]["b"], padding=1)
    for p in params["res_blocks"]:
        C = h.shape[1]
        x1 = _conv3d_ref(h, p["conv1_w"], p["conv1_b"], padding=k // 2,
                         groups=C)
        h = h + _block_tail_ref(x1, p)
    p = params["down_block"]
    C = h.shape[1]
    x1 = _conv3d_ref(h, p["conv1_w"], p["conv1_b"], stride=2, padding=k // 2,
                     groups=C)
    y = _block_tail_ref(x1, p)
    res = jnp.einsum("oc,ncdhw->nodhw", p["res_conv_w"].reshape(-1, C),
                     h[:, :, ::2, ::2, ::2],
                     precision=lax.Precision.HIGHEST) + _cvec(p["res_conv_b"])
    return y + res


if __name__ == "__main__":
    key = jax.random.PRNGKey(0)
    kp, kx = jax.random.split(key)

    # Encoder(in_channel=4, channel=8, n_res_block=1, kernel_size=3, type=0)
    # on a (2, 4, 8, 8, 8) NCDHW input.
    N, Cin, S = 2, 4, 8
    channel, n_res_block, kernel_size = 8, 1, 3

    params = init_encoder_params(kp, in_channel=Cin, channel=channel,
                                 n_res_block=n_res_block,
                                 kernel_size=kernel_size)
    x = jax.random.normal(kx, (N, Cin, S, S, S), jnp.float32)   # NCDHW

    out = jax.block_until_ready(encoder_forward(x, params, kernel_size))

    assert out.shape == (N, 2 * channel, S // 2, S // 2, S // 2), out.shape
    assert bool(jnp.all(jnp.isfinite(out)))

    # correctness check against a pure-JAX (XLA conv) reference of the module.
    ref = encoder_reference(x, params, kernel_size)
    err = float(jnp.max(jnp.abs(out - ref)))
    assert err < 2e-2, f"max abs error vs reference: {err}"

    print("KERNEL_OK")
</pallas_src>

<mosaic_0001>
module attributes {stable_mosaic.version = 11 : i64} {
  func.func @kernel(%arg0: i32, %arg1: memref<1x8x1024xf32, #tpu.memory_space<vmem>>, %arg2: memref<1x1024xf32, #tpu.memory_space<vmem>>, %arg3: memref<1x1024xf32, #tpu.memory_space<vmem>>, %arg4: memref<8x216xf32, #tpu.memory_space<vmem>>, %arg5: memref<8x1xf32, #tpu.memory_space<vmem>>, %arg6: memref<27x8x1xf32, #tpu.memory_space<vmem>>, %arg7: memref<8x1xf32, #tpu.memory_space<vmem>>, %arg8: memref<8x1xf32, #tpu.memory_space<vmem>>, %arg9: memref<8x1xf32, #tpu.memory_space<vmem>>, %arg10: memref<8x8xf32, #tpu.memory_space<vmem>>, %arg11: memref<8x1xf32, #tpu.memory_space<vmem>>, %arg12: memref<8x1xf32, #tpu.memory_space<vmem>>, %arg13: memref<8x1xf32, #tpu.memory_space<vmem>>, %arg14: memref<8x8xf32, #tpu.memory_space<vmem>>, %arg15: memref<8x1xf32, #tpu.memory_space<vmem>>, %arg16: memref<27x8x1xf32, #tpu.memory_space<vmem>>, %arg17: memref<8x1xf32, #tpu.memory_space<vmem>>, %arg18: memref<8x1xf32, #tpu.memory_space<vmem>>, %arg19: memref<8x1xf32, #tpu.memory_space<vmem>>, %arg20: memref<16x8xf32, #tpu.memory_space<vmem>>, %arg21: memref<16x1xf32, #tpu.memory_space<vmem>>, %arg22: memref<16x1xf32, #tpu.memory_space<vmem>>, %arg23: memref<16x1xf32, #tpu.memory_space<vmem>>, %arg24: memref<16x16xf32, #tpu.memory_space<vmem>>, %arg25: memref<16x1xf32, #tpu.memory_space<vmem>>, %arg26: memref<16x8xf32, #tpu.memory_space<vmem>>, %arg27: memref<16x1xf32, #tpu.memory_space<vmem>>, %arg28: memref<1x16x1024xf32, #tpu.memory_space<vmem>>, %arg29: memref<216x1024xf32, #tpu.memory_space<vmem>>) attributes {dimension_semantics = [#tpu.dimension_semantics<parallel>], iteration_bounds = array<i64: 2>, scalar_prefetch = 0 : i64, scratch_operands = 1 : i64, tpu.core_type = #tpu.core_type<tc>, window_params = [{transform_indices = @transform_0, window_bounds = array<i64: 1, 8, 1024>}, {pipeline_mode = #tpu.pipeline_mode<synchronous>, transform_indices = @transform_1, window_bounds = array<i64: 1, 1024>}, {pipeline_mode = #tpu.pipeline_mode<synchronous>, transform_indices = @transform_2, window_bounds = array<i64: 1, 1024>}, {pipeline_mode = #tpu.pipeline_mode<synchronous>, transform_indices = @transform_3, window_bounds = array<i64: 8, 216>}, {pipeline_mode = #tpu.pipeline_mode<synchronous>, transform_indices = @transform_4, window_bounds = array<i64: 8, 1>}, {pipeline_mode = #tpu.pipeline_mode<synchronous>, transform_indices = @transform_5, window_bounds = array<i64: 27, 8, 1>}, {pipeline_mode = #tpu.pipeline_mode<synchronous>, transform_indices = @transform_6, window_bounds = array<i64: 8, 1>}, {pipeline_mode = #tpu.pipeline_mode<synchronous>, transform_indices = @transform_7, window_bounds = array<i64: 8, 1>}, {pipeline_mode = #tpu.pipeline_mode<synchronous>, transform_indices = @transform_8, window_bounds = array<i64: 8, 1>}, {pipeline_mode = #tpu.pipeline_mode<synchronous>, transform_indices = @transform_9, window_bounds = array<i64: 8, 8>}, {pipeline_mode = #tpu.pipeline_mode<synchronous>, transform_indices = @transform_10, window_bounds = array<i64: 8, 1>}, {pipeline_mode = #tpu.pipeline_mode<synchronous>, transform_indices = @transform_11, window_bounds = array<i64: 8, 1>}, {pipeline_mode = #tpu.pipeline_mode<synchronous>, transform_indices = @transform_12, window_bounds = array<i64: 8, 1>}, {pipeline_mode = #tpu.pipeline_mode<synchronous>, transform_indices = @transform_13, window_bounds = array<i64: 8, 8>}, {pipeline_mode = #tpu.pipeline_mode<synchronous>, transform_indices = @transform_14, window_bounds = array<i64: 8, 1>}, {pipeline_mode = #tpu.pipeline_mode<synchronous>, transform_indices = @transform_15, window_bounds = array<i64: 27, 8, 1>}, {pipeline_mode = #tpu.pipeline_mode<synchronous>, transform_indices = @transform_16, window_bounds = array<i64: 8, 1>}, {pipeline_mode = #tpu.pipeline_mode<synchronous>, transform_indices = @transform_17, window_bounds = array<i64: 8, 1>}, {pipeline_mode = #tpu.pipeline_mode<synchronous>, transform_indices = @transform_18, window_bounds = array<i64: 8, 1>}, {pipeline_mode = #tpu.pipeline_mode<synchronous>, transform_indices = @transform_19, window_bounds = array<i64: 16, 8>}, {pipeline_mode = #tpu.pipeline_mode<synchronous>, transform_indices = @transform_20, window_bounds = array<i64: 16, 1>}, {pipeline_mode = #tpu.pipeline_mode<synchronous>, transform_indices = @transform_21, window_bounds = array<i64: 16, 1>}, {pipeline_mode = #tpu.pipeline_mode<synchronous>, transform_indices = @transform_22, window_bounds = array<i64: 16, 1>}, {pipeline_mode = #tpu.pipeline_mode<synchronous>, transform_indices = @transform_23, window_bounds = array<i64: 16, 16>}, {pipeline_mode = #tpu.pipeline_mode<synchronous>, transform_indices = @transform_24, window_bounds = array<i64: 16, 1>}, {pipeline_mode = #tpu.pipeline_mode<synchronous>, transform_indices = @transform_25, window_bounds = array<i64: 16, 8>}, {pipeline_mode = #tpu.pipeline_mode<synchronous>, transform_indices = @transform_26, window_bounds = array<i64: 16, 1>}, {transform_indices = @transform_27, window_bounds = array<i64: 1, 16, 1024>}]} {
    %c0 = arith.constant 0 : index
    %c0_0 = arith.constant 0 : index
    %0 = vector.load %arg2[%c0, %c0_0] : memref<1x1024xf32, #tpu.memory_space<vmem>>, vector<1x1024xf32>
    %c0_1 = arith.constant 0 : index
    %c0_2 = arith.constant 0 : index
    %1 = vector.load %arg3[%c0_1, %c0_2] : memref<1x1024xf32, #tpu.memory_space<vmem>>, vector<1x1024xf32>
    %c0_3 = arith.constant 0 : index
    %c0_4 = arith.constant 0 : index
    %c0_5 = arith.constant 0 : index
    %2 = vector.load %arg1[%c0_3, %c0_4, %c0_5] : memref<1x8x1024xf32, #tpu.memory_space<vmem>>, vector<1x8x1024xf32>
    %3 = vector.shape_cast %2 : vector<1x8x1024xf32> to vector<8x1024xf32>
    %c111_i32 = arith.constant 111 : i32
    %4 = tpu.dynamic_rotate %3 by %c111_i32 dim 1 : vector<8x1024xf32>, i32 -> vector<8x1024xf32>
    %c0_6 = arith.constant 0 : index
    %c0_7 = arith.constant 0 : index
    %5 = vector.load %arg29[%c0_6, %c0_7] : memref<216x1024xf32, #tpu.memory_space<vmem>>, vector<8x1024xf32>
    tpu.vector_store %arg29[%c0_6, %c0_7], %4 {strides = array<i32>} : memref<216x1024xf32, #tpu.memory_space<vmem>>, vector<8x1024xf32>,
    %c110_i32 = arith.constant 110 : i32
    %6 = tpu.dynamic_rotate %3 by %c110_i32 dim 1 : vector<8x1024xf32>, i32 -> vector<8x1024xf32>
    %c8 = arith.constant 8 : index
    %c0_8 = arith.constant 0 : index
    %7 = vector.load %arg29[%c8, %c0_8] : memref<216x1024xf32, #tpu.memory_space<vmem>>, vector<8x1024xf32>
    tpu.vector_store %arg29[%c8, %c0_8], %6 {strides = array<i32>} : memref<216x1024xf32, #tpu.memory_space<vmem>>, vector<8x1024xf32>,
    %c109_i32 = arith.constant 109 : i32
    %8 = tpu.dynamic_rotate %3 by %c109_i32 dim 1 : vector<8x1024xf32>, i32 -> vector<8x1024xf32>
    %c16 = arith.constant 16 : index
    %c0_9 = arith.constant 0 : index
    %9 = vector.load %arg29[%c16, %c0_9] : memref<216x1024xf32, #tpu.memory_space<vmem>>, vector<8x1024xf32>
    tpu.vector_store %arg29[%c16, %c0_9], %8 {strides = array<i32>} : memref<216x1024xf32, #tpu.memory_space<vmem>>, vector<8x1024xf32>,
    %c101_i32 = arith.constant 101 : i32
    %10 = tpu.dynamic_rotate %3 by %c101_i32 dim 1 : vector<8x1024xf32>, i32 -> vector<8x1024xf32>
    %c24 = arith.constant 24 : index
    %c0_10 = arith.constant 0 : index
    %11 = vector.load %arg29[%c24, %c0_10] : memref<216x1024xf32, #tpu.memory_space<vmem>>, vector<8x1024xf32>
    tpu.vector_store %arg29[%c24, %c0_10], %10 {strides = array<i32>} : memref<216x1024xf32, #tpu.memory_space<vmem>>, vector<8x1024xf32>,
    %c100_i32 = arith.constant 100 : i32
    %12 = tpu.dynamic_rotate %3 by %c100_i32 dim 1 : vector<8x1024xf32>, i32 -> vector<8x1024xf32>
    %c32 = arith.constant 32 : index
    %c0_11 = arith.constant 0 : index
    %13 = vector.load %arg29[%c32, %c0_11] : memref<216x1024xf32, #tpu.memory_space<vmem>>, vector<8x1024xf32>
    tpu.vector_store %arg29[%c32, %c0_11], %12 {strides = array<i32>} : memref<216x1024xf32, #tpu.memory_space<vmem>>, vector<8x1024xf32>,
    %c99_i32 = arith.constant 99 : i32
    %14 = tpu.dynamic_rotate %3 by %c99_i32 dim 1 : vector<8x1024xf32>, i32 -> vector<8x1024xf32>
    %c40 = arith.constant 40 : index
    %c0_12 = arith.constant 0 : index
    %15 = vector.load %arg29[%c40, %c0_12] : memref<216x1024xf32, #tpu.memory_space<vmem>>, vector<8x1024xf32>
    tpu.vector_store %arg29[%c40, %c0_12], %14 {strides = array<i32>} : memref<216x1024xf32, #tpu.memory_space<vmem>>, vector<8x1024xf32>,
    %c91_i32 = arith.constant 91 : i32
    %16 = tpu.dynamic_rotate %3 by %c91_i32 dim 1 : vector<8x1024xf32>, i32 -> vector<8x1024xf32>
    %c48 = arith.constant 48 : index
    %c0_13 = arith.constant 0 : index
    %17 = vector.load %arg29[%c48, %c0_13] : memref<216x1024xf32, #tpu.memory_space<vmem>>, vector<8x1024xf32>
    tpu.vector_store %arg29[%c48, %c0_13], %16 {strides = array<i32>} : memref<216x1024xf32, #tpu.memory_space<vmem>>, vector<8x1024xf32>,
    %c90_i32 = arith.constant 90 : i32
    %18 = tpu.dynamic_rotate %3 by %c90_i32 dim 1 : vector<8x1024xf32>, i32 -> vector<8x1024xf32>
    %c56 = arith.constant 56 : index
    %c0_14 = arith.constant 0 : index
    %19 = vector.load %arg29[%c56, %c0_14] : memref<216x1024xf32, #tpu.memory_space<vmem>>, vector<8x1024xf32>
    tpu.vector_store %arg29[%c56, %c0_14], %18 {strides = array<i32>} : memref<216x1024xf32, #tpu.memory_space<vmem>>, vector<8x1024xf32>,
    %c89_i32 = arith.constant 89 : i32
    %20 = tpu.dynamic_rotate %3 by %c89_i32 dim 1 : vector<8x1024xf32>, i32 -> vector<8x1024xf32>
    %c64 = arith.constant 64 : index
    %c0_15 = arith.constant 0 : index
    %21 = vector.load %arg29[%c64, %c0_15] : memref<216x1024xf32, #tpu.memory_space<vmem>>, vector<8x1024xf32>
    tpu.vector_store %arg29[%c64, %c0_15], %20 {strides = array<i32>} : memref<216x1024xf32, #tpu.memory_space<vmem>>, vector<8x1024xf32>,
    %c11_i32 = arith.constant 11 : i32
    %22 = tpu.dynamic_rotate %3 by %c11_i32 dim 1 : vector<8x1024xf32>, i32 -> vector<8x1024xf32>
    %c72 = arith.constant 72 : index
    %c0_16 = arith.constant 0 : index
    %23 = vector.load %arg29[%c72, %c0_16] : memref<216x1024xf32, #tpu.memory_space<vmem>>, vector<8x1024xf32>
    tpu.vector_store %arg29[%c72, %c0_16], %22 {strides = array<i32>} : memref<216x1024xf32, #tpu.memory_space<vmem>>, vector<8x1024xf32>,
    %c10_i32 = arith.constant 10 : i32
    %24 = tpu.dynamic_rotate %3 by %c10_i32 dim 1 : vector<8x1024xf32>, i32 -> vector<8x1024xf32>
    %c80 = arith.constant 80 : index
    %c0_17 = arith.constant 0 : index
    %25 = vector.load %arg29[%c80, %c0_17] : memref<216x1024xf32, #tpu.memory_space<vmem>>, vector<8x1024xf32>
    tpu.vector_store %arg29[%c80, %c0_17], %24 {strides = array<i32>} : memref<216x1024xf32, #tpu.memory_space<vmem>>, vector<8x1024xf32>,
    %c9_i32 = arith.constant 9 : i32
    %26 = tpu.dynamic_rotate %3 by %c9_i32 dim 1 : vector<8x1024xf32>, i32 -> vector<8x1024xf32>
    %c88 = arith.constant 88 : index
    %c0_18 = arith.constant 0 : index
    %27 = vector.load %arg29[%c88, %c0_18] : memref<216x1024xf32, #tpu.memory_space<vmem>>, vector<8x1024xf32>
    tpu.vector_store %arg29[%c88, %c0_18], %26 {strides = array<i32>} : memref<216x1024xf32, #tpu.memory_space<vmem>>, vector<8x1024xf32>,
    %c1_i32 = arith.constant 1 : i32
    %28 = tpu.dynamic_rotate %3 by %c1_i32 dim 1 : vector<8x1024xf32>, i32 -> vector<8x1024xf32>
    %c96 = arith.constant 96 : index
    %c0_19 = arith.constant 0 : index
    %29 = vector.load %arg29[%c96, %c0_19] : memref<216x1024xf32, #tpu.memory_space<vmem>>, vector<8x1024xf32>
    tpu.vector_store %arg29[%c96, %c0_19], %28 {strides = array<i32>} : memref<216x1024xf32, #tpu.memory_space<vmem>>, vector<8x1024xf32>,
    %c104 = arith.constant 104 : index
    %c0_20 = arith.constant 0 : index
    %30 = vector.load %arg29[%c104, %c0_20] : memref<216x1024xf32, #tpu.memory_space<vmem>>, vector<8x1024xf32>
    tpu.vector_store %arg29[%c104, %c0_20], %3 {strides = array<i32>} : memref<216x1024xf32, #tpu.memory_space<vmem>>, vector<8x1024xf32>,
    %c1023_i32 = arith.constant 1023 : i32
    %31 = tpu.dynamic_rotate %3 by %c1023_i32 dim 1 : vector<8x1024xf32>, i32 -> vector<8x1024xf32>
    %c112 = arith.constant 112 : index
    %c0_21 = arith.constant 0 : index
    %32 = vector.load %arg29[%c112, %c0_21] : memref<216x1024xf32, #tpu.memory_space<vmem>>, vector<8x1024xf32>
    tpu.vector_store %arg29[%c112, %c0_21], %31 {strides = array<i32>} : memref<216x1024xf32, #tpu.memory_space<vmem>>, vector<8x1024xf32>,
    %c1015_i32 = arith.constant 1015 : i32
    %33 = tpu.dynamic_rotate %3 by %c1015_i32 dim 1 : vector<8x1024xf32>, i32 -> vector<8x1024xf32>
    %c120 = arith.constant 120 : index
    %c0_22 = arith.constant 0 : index
    %34 = vector.load %arg29[%c120, %c0_22] : memref<216x1024xf32, #tpu.memory_space<vmem>>, vector<8x1024xf32>
    tpu.vector_store %arg29[%c120, %c0_22], %33 {strides = array<i32>} : memref<216x1024xf32, #tpu.memory_space<vmem>>, vector<8x1024xf32>,
    %c1014_i32 = arith.constant 1014 : i32
    %35 = tpu.dynamic_rotate %3 by %c1014_i32 dim 1 : vector<8x1024xf32>, i32 -> vector<8x1024xf32>
    %c128 = arith.constant 128 : index
    %c0_23 = arith.constant 0 : index
    %36 = vector.load %arg29[%c128, %c0_23] : memref<216x1024xf32, #tpu.memory_space<vmem>>, vector<8x1024xf32>
    tpu.vector_store %arg29[%c128, %c0_23], %35 {strides = array<i32>} : memref<216x1024xf32, #tpu.memory_space<vmem>>, vector<8x1024xf32>,
    %c1013_i32 = arith.constant 1013 : i32
    %37 = tpu.dynamic_rotate %3 by %c1013_i32 dim 1 : vector<8x1024xf32>, i32 -> vector<8x1024xf32>
    %c136 = arith.constant 136 : index
    %c0_24 = arith.constant 0 : index
    %38 = vector.load %arg29[%c136, %c0_24] : memref<216x1024xf32, #tpu.memory_space<vmem>>, vector<8x1024xf32>
    tpu.vector_store %arg29[%c136, %c0_24], %37 {strides = array<i32>} : memref<216x1024xf32, #tpu.memory_space<vmem>>, vector<8x1024xf32>,
    %c935_i32 = arith.constant 935 : i32
    %39 = tpu.dynamic_rotate %3 by %c935_i32 dim 1 : vector<8x1024xf32>, i32 -> vector<8x1024xf32>
    %c144 = arith.constant 144 : index
    %c0_25 = arith.constant 0 : index
    %40 = vector.load %arg29[%c144, %c0_25] : memref<216x1024xf32, #tpu.memory_space<vmem>>, vector<8x1024xf32>
    tpu.vector_store %arg29[%c144, %c0_25], %39 {strides = array<i32>} : memref<216x1024xf32, #tpu.memory_space<vmem>>, vector<8x1024xf32>,
    %c934_i32 = arith.constant 934 : i32
    %41 = tpu.dynamic_rotate %3 by %c934_i32 dim 1 : vector<8x1024xf32>, i32 -> vector<8x1024xf32>
    %c152 = arith.constant 152 : index
    %c0_26 = arith.constant 0 : index
    %42 = vector.load %arg29[%c152, %c0_26] : memref<216x1024xf32, #tpu.memory_space<vmem>>, vector<8x1024xf32>
    tpu.vector_store %arg29[%c152, %c0_26], %41 {strides = array<i32>} : memref<216x1024xf32, #tpu.memory_space<vmem>>, vector<8x1024xf32>,
    %c933_i32 = arith.constant 933 : i32
    %43 = tpu.dynamic_rotate %3 by %c933_i32 dim 1 : vector<8x1024xf32>, i32 -> vector<8x1024xf32>
    %c160 = arith.constant 160 : index
    %c0_27 = arith.constant 0 : index
    %44 = vector.load %arg29[%c160, %c0_27] : memref<216x1024xf32, #tpu.memory_space<vmem>>, vector<8x1024xf32>
    tpu.vector_store %arg29[%c160, %c0_27], %43 {strides = array<i32>} : memref<216x1024xf32, #tpu.memory_space<vmem>>, vector<8x1024xf32>,
    %c925_i32 = arith.constant 925 : i32
    %45 = tpu.dynamic_rotate %3 by %c925_i32 dim 1 : vector<8x1024xf32>, i32 -> vector<8x1024xf32>
    %c168 = arith.constant 168 : index
    %c0_28 = arith.constant 0 : index
    %46 = vector.load %arg29[%c168, %c0_28] : memref<216x1024xf32, #tpu.memory_space<vmem>>, vector<8x1024xf32>
    tpu.vector_store %arg29[%c168, %c0_28], %45 {strides = array<i32>} : memref<216x1024xf32, #tpu.memory_space<vmem>>, vector<8x1024xf32>,
    %c924_i32 = arith.constant 924 : i32
    %47 = tpu.dynamic_rotate %3 by %c924_i32 dim 1 : vector<8x1024xf32>, i32 -> vector<8x1024xf32>
    %c176 = arith.constant 176 : index
    %c0_29 = arith.constant 0 : index
    %48 = vector.load %arg29[%c176, %c0_29] : memref<216x1024xf32, #tpu.memory_space<vmem>>, vector<8x1024xf32>
    tpu.vector_store %arg29[%c176, %c0_29], %47 {strides = array<i32>} : memref<216x1024xf32, #tpu.memory_space<vmem>>, vector<8x1024xf32>,
    %c923_i32 = arith.constant 923 : i32
    %49 = tpu.dynamic_rotate %3 by %c923_i32 dim 1 : vector<8x1024xf32>, i32 -> vector<8x1024xf32>
    %c184 = arith.constant 184 : index
    %c0_30 = arith.constant 0 : index
    %50 = vector.load %arg29[%c184, %c0_30] : memref<216x1024xf32, #tpu.memory_space<vmem>>, vector<8x1024xf32>
    tpu.vector_store %arg29[%c184, %c0_30], %49 {strides = array<i32>} : memref<216x1024xf32, #tpu.memory_space<vmem>>, vector<8x1024xf32>,
    %c915_i32 = arith.constant 915 : i32
    %51 = tpu.dynamic_rotate %3 by %c915_i32 dim 1 : vector<8x1024xf32>, i32 -> vector<8x1024xf32>
    %c192 = arith.constant 192 : index
    %c0_31 = arith.constant 0 : index
    %52 = vector.load %arg29[%c192, %c0_31] : memref<216x1024xf32, #tpu.memory_space<vmem>>, vector<8x1024xf32>
    tpu.vector_store %arg29[%c192, %c0_31], %51 {strides = array<i32>} : memref<216x1024xf32, #tpu.memory_space<vmem>>, vector<8x1024xf32>,
    %c914_i32 = arith.constant 914 : i32
    %53 = tpu.dynamic_rotate %3 by %c914_i32 dim 1 : vector<8x1024xf32>, i32 -> vector<8x1024xf32>
    %c200 = arith.constant 200 : index
    %c0_32 = arith.constant 0 : index
    %54 = vector.load %arg29[%c200, %c0_32] : memref<216x1024xf32, #tpu.memory_space<vmem>>, vector<8x1024xf32>
    tpu.vector_store %arg29[%c200, %c0_32], %53 {strides = array<i32>} : memref<216x1024xf32, #tpu.memory_space<vmem>>, vector<8x1024xf32>,
    %c913_i32 = arith.constant 913 : i32
    %55 = tpu.dynamic_rotate %3 by %c913_i32 dim 1 : vector<8x1024xf32>, i32 -> vector<8x1024xf32>
    %c208 = arith.constant 208 : index
    %c0_33 = arith.constant 0 : index
    %56 = vector.load %arg29[%c208, %c0_33] : memref<216x1024xf32, #tpu.memory_space<vmem>>, vector<8x1024xf32>
    tpu.vector_store %arg29[%c208, %c0_33], %55 {strides = array<i32>} : memref<216x1024xf32, #tpu.memory_space<vmem>>, vector<8x1024xf32>,
    %c0_34 = arith.constant 0 : index
    %c0_35 = arith.constant 0 : index
    %57 = vector.load %arg4[%c0_34, %c0_35] : memref<8x216xf32, #tpu.memory_space<vmem>>, vector<8x216xf32>
    %c0_36 = arith.constant 0 : index
    %c0_37 = arith.constant 0 : index
    %58 = vector.load %arg29[%c0_36, %c0_37] : memref<216x1024xf32, #tpu.memory_space<vmem>>, vector<216x1024xf32>
    %cst = arith.constant dense<0.000000e+00> : vector<8x1024xf32>
    %59 = tpu.matmul %57, %58, %cst {dimension_numbers = #tpu.dot_dimension_numbers<[1], [0], [0], [1], [0, 0, 1, 1], [], []>} : vector<8x216xf32>, vector<216x1024xf32>, vector<8x1024xf32> -> vector<8x1024xf32>
    %c0_38 = arith.constant 0 : index
    %c0_39 = arith.constant 0 : index
    %60 = vector.load %arg5[%c0_38, %c0_39] : memref<8x1xf32, #tpu.memory_space<vmem>>, vector<8x1xf32>
    %61 = vector.broadcast %60 : vector<8x1xf32> to vector<8x1024xf32>
    %62 = arith.addf %59, %61 : vector<8x1024xf32>
    %63 = vector.broadcast %0 : vector<1x1024xf32> to vector<8x1024xf32>
    %64 = arith.mulf %62, %63 : vector<8x1024xf32>
    %c111_i32_40 = arith.constant 111 : i32
    %65 = tpu.dynamic_rotate %64 by %c111_i32_40 dim 1 : vector<8x1024xf32>, i32 -> vector<8x1024xf32>
    %c0_41 = arith.constant 0 : index
    %c0_42 = arith.constant 0 : index
    %c0_43 = arith.constant 0 : index
    %66 = vector.load %arg6[%c0_41, %c0_42, %c0_43] : memref<27x8x1xf32, #tpu.memory_space<vmem>>, vector<1x8x1xf32>
    %67 = vector.shape_cast %66 : vector<1x8x1xf32> to vector<8x1xf32>
    %68 = vector.broadcast %67 : vector<8x1xf32> to vector<8x1024xf32>
    %69 = arith.mulf %65, %68 : vector<8x1024xf32>
    %c110_i32_44 = arith.constant 110 : i32
    %70 = tpu.dynamic_rotate %64 by %c110_i32_44 dim 1 : vector<8x1024xf32>, i32 -> vector<8x1024xf32>
    %c1 = arith.constant 1 : index
    %c0_45 = arith.constant 0 : index
    %c0_46 = arith.constant 0 : index
    %71 = vector.load %arg6[%c1, %c0_45, %c0_46] : memref<27x8x1xf32, #tpu.memory_space<vmem>>, vector<1x8x1xf32>
    %72 = vector.shape_cast %71 : vector<1x8x1xf32> to vector<8x1xf32>
    %73 = vector.broadcast %72 : vector<8x1xf32> to vector<8x1024xf32>
    %74 = arith.mulf %70, %73 : vector<8x1024xf32>
    %75 = arith.addf %69, %74 : vector<8x1024xf32>
    %c109_i32_47 = arith.constant 109 : i32
    %76 = tpu.dynamic_rotate %64 by %c109_i32_47 dim 1 : vector<8x1024xf32>, i32 -> vector<8x1024xf32>
    %c2 = arith.constant 2 : index
    %c0_48 = arith.constant 0 : index
    %c0_49 = arith.constant 0 : index
    %77 = vector.load %arg6[%c2, %c0_48, %c0_49] : memref<27x8x1xf32, #tpu.memory_space<vmem>>, vector<1x8x1xf32>
    %78 = vector.shape_cast %77 : vector<1x8x1xf32> to vector<8x1xf32>
    %79 = vector.broadcast %78 : vector<8x1xf32> to vector<8x1024xf32>
    %80 = arith.mulf %76, %79 : vector<8x1024xf32>
    %81 = arith.addf %75, %80 : vector<8x1024xf32>
    %c101_i32_50 = arith.constant 101 : i32
    %82 = tpu.dynamic_rotate %64 by %c101_i32_50 dim 1 : vector<8x1024xf32>, i32 -> vector<8x1024xf32>
    %c3 = arith.constant 3 : index
    %c0_51 = arith.constant 0 : index
    %c0_52 = arith.constant 0 : index
    %83 = vector.load %arg6[%c3, %c0_51, %c0_52] : memref<27x8x1xf32, #tpu.memory_space<vmem>>, vector<1x8x1xf32>
    %84 = vector.shape_cast %83 : vector<1x8x1xf32> to vector<8x1xf32>
    %85 = vector.broadcast %84 : vector<8x1xf32> to vector<8x1024xf32>
    %86 = arith.mulf %82, %85 : vector<8x1024xf32>
    %87 = arith.addf %81, %86 : vector<8x1024xf32>
    %c100_i32_53 = arith.constant 100 : i32
    %88 = tpu.dynamic_rotate %64 by %c100_i32_53 dim 1 : vector<8x1024xf32>, i32 -> vector<8x1024xf32>
    %c4 = arith.constant 4 : index
    %c0_54 = arith.constant 0 : index
    %c0_55 = arith.constant 0 : index
    %89 = vector.load %arg6[%c4, %c0_54, %c0_55] : memref<27x8x1xf32, #tpu.memory_space<vmem>>, vector<1x8x1xf32>
    %90 = vector.shape_cast %89 : vector<1x8x1xf32> to vector<8x1xf32>
    %91 = vector.broadcast %90 : vector<8x1xf32> to vector<8x1024xf32>
    %92 = arith.mulf %88, %91 : vector<8x1024xf32>
    %93 = arith.addf %87, %92 : vector<8x1024xf32>
    %c99_i32_56 = arith.constant 99 : i32
    %94 = tpu.dynamic_rotate %64 by %c99_i32_56 dim 1 : vector<8x1024xf32>, i32 -> vector<8x1024xf32>
    %c5 = arith.constant 5 : index
    %c0_57 = arith.constant 0 : index
    %c0_58 = arith.constant 0 : index
    %95 = vector.load %arg6[%c5, %c0_57, %c0_58] : memref<27x8x1xf32, #tpu.memory_space<vmem>>, vector<1x8x1xf32>
    %96 = vector.shape_cast %95 : vector<1x8x1xf32> to vector<8x1xf32>
    %97 = vector.broadcast %96 : vector<8x1xf32> to vector<8x1024xf32>
    %98 = arith.mulf %94, %97 : vector<8x1024xf32>
    %99 = arith.addf %93, %98 : vector<8x1024xf32>
    %c91_i32_59 = arith.constant 91 : i32
    %100 = tpu.dynamic_rotate %64 by %c91_i32_59 dim 1 : vector<8x1024xf32>, i32 -> vector<8x1024xf32>
    %c6 = arith.constant 6 : index
    %c0_60 = arith.constant 0 : index
    %c0_61 = arith.constant 0 : index
    %101 = vector.load %arg6[%c6, %c0_60, %c0_61] : memref<27x8x1xf32, #tpu.memory_space<vmem>>, vector<1x8x1xf32>
    %102 = vector.shape_cast %101 : vector<1x8x1xf32> to vector<8x1xf32>
    %103 = vector.broadcast %102 : vector<8x1xf32> to vector<8x1024xf32>
    %104 = arith.mulf %100, %103 : vector<8x1024xf32>
    %105 = arith.addf %99, %104 : vector<8x1024xf32>
    %c90_i32_62 = arith.constant 90 : i32
    %106 = tpu.dynamic_rotate %64 by %c90_i32_62 dim 1 : vector<8x1024xf32>, i32 -> vector<8x1024xf32>
    %c7 = arith.constant 7 : index
    %c0_63 = arith.constant 0 : index
    %c0_64 = arith.constant 0 : index
    %107 = vector.load %arg6[%c7, %c0_63, %c0_64] : memref<27x8x1xf32, #tpu.memory_space<vmem>>, vector<1x8x1xf32>
    %108 = vector.shape_cast %107 : vector<1x8x1xf32> to vector<8x1xf32>
    %109 = vector.broadcast %108 : vector<8x1xf32> to vector<8x1024xf32>
    %110 = arith.mulf %106, %109 : vector<8x1024xf32>
    %111 = arith.addf %105, %110 : vector<8x1024xf32>
    %c89_i32_65 = arith.constant 89 : i32
    %112 = tpu.dynamic_rotate %64 by %c89_i32_65 dim 1 : vector<8x1024xf32>, i32 -> vector<8x1024xf32>
    %c8_66 = arith.constant 8 : index
    %c0_67 = arith.constant 0 : index
    %c0_68 = arith.constant 0 : index
    %113 = vector.load %arg6[%c8_66, %c0_67, %c0_68] : memref<27x8x1xf32, #tpu.memory_space<vmem>>, vector<1x8x1xf32>
    %114 = vector.shape_cast %113 : vector<1x8x1xf32> to vector<8x1xf32>
    %115 = vector.broadcast %114 : vector<8x1xf32> to vector<8x1024xf32>
    %116 = arith.mulf %112, %115 : vector<8x1024xf32>
    %117 = arith.addf %111, %116 : vector<8x1024xf32>
    %c11_i32_69 = arith.constant 11 : i32
    %118 = tpu.dynamic_rotate %64 by %c11_i32_69 dim 1 : vector<8x1024xf32>, i32 -> vector<8x1024xf32>
    %c9 = arith.constant 9 : index
    %c0_70 = arith.constant 0 : index
    %c0_71 = arith.constant 0 : index
    %119 = vector.load %arg6[%c9, %c0_70, %c0_71] : memref<27x8x1xf32, #tpu.memory_space<vmem>>, vector<1x8x1xf32>
    %120 = vector.shape_cast %119 : vector<1x8x1xf32> to vector<8x1xf32>
    %121 = vector.broadcast %120 : vector<8x1xf32> to vector<8x1024xf32>
    %122 = arith.mulf %118, %121 : vector<8x1024xf32>
    %123 = arith.addf %117, %122 : vector<8x1024xf32>
    %c10_i32_72 = arith.constant 10 : i32
    %124 = tpu.dynamic_rotate %64 by %c10_i32_72 dim 1 : vector<8x1024xf32>, i32 -> vector<8x1024xf32>
    %c10 = arith.constant 10 : index
    %c0_73 = arith.constant 0 : index
    %c0_74 = arith.constant 0 : index
    %125 = vector.load %arg6[%c10, %c0_73, %c0_74] : memref<27x8x1xf32, #tpu.memory_space<vmem>>, vector<1x8x1xf32>
    %126 = vector.shape_cast %125 : vector<1x8x1xf32> to vector<8x1xf32>
    %127 = vector.broadcast %126 : vector<8x1xf32> to vector<8x1024xf32>
    %128 = arith.mulf %124, %127 : vector<8x1024xf32>
    %129 = arith.addf %123, %128 : vector<8x1024xf32>
    %c9_i32_75 = arith.constant 9 : i32
    %130 = tpu.dynamic_rotate %64 by %c9_i32_75 dim 1 : vector<8x1024xf32>, i32 -> vector<8x1024xf32>
    %c11 = arith.constant 11 : index
    %c0_76 = arith.constant 0 : index
    %c0_77 = arith.constant 0 : index
    %131 = vector.load %arg6[%c11, %c0_76, %c0_77] : memref<27x8x1xf32, #tpu.memory_space<vmem>>, vector<1x8x1xf32>
    %132 = vector.shape_cast %131 : vector<1x8x1xf32> to vector<8x1xf32>
    %133 = vector.broadcast %132 : vector<8x1xf32> to vector<8x1024xf32>
    %134 = arith.mulf %130, %133 : vector<8x1024xf32>
    %135 = arith.addf %129, %134 : vector<8x1024xf32>
    %c1_i32_78 = arith.constant 1 : i32
    %136 = tpu.dynamic_rotate %64 by %c1_i32_78 dim 1 : vector<8x1024xf32>, i32 -> vector<8x1024xf32>
    %c12 = arith.constant 12 : index
    %c0_79 = arith.constant 0 : index
    %c0_80 = arith.constant 0 : index
    %137 = vector.load %arg6[%c12, %c0_79, %c0_80] : memref<27x8x1xf32, #tpu.memory_space<vmem>>, vector<1x8x1xf32>
    %138 = vector.shape_cast %137 : vector<1x8x1xf32> to vector<8x1xf32>
    %139 = vector.broadcast %138 : vector<8x1xf32> to vector<8x1024xf32>
    %140 = arith.mulf %136, %139 : vector<8x1024xf32>
    %141 = arith.addf %135, %140 : vector<8x1024xf32>
    %c13 = arith.constant 13 : index
    %c0_81 = arith.constant 0 : index
    %c0_82 = arith.constant 0 : index
    %142 = vector.load %arg6[%c13, %c0_81, %c0_82] : memref<27x8x1xf32, #tpu.memory_space<vmem>>, vector<1x8x1xf32>
    %143 = vector.shape_cast %142 : vector<1x8x1xf32> to vector<8x1xf32>
    %144 = vector.broadcast %143 : vector<8x1xf32> to vector<8x1024xf32>
    %145 = arith.mulf %64, %144 : vector<8x1024xf32>
    %146 = arith.addf %141, %145 : vector<8x1024xf32>
    %c1023_i32_83 = arith.constant 1023 : i32
    %147 = tpu.dynamic_rotate %64 by %c1023_i32_83 dim 1 : vector<8x1024xf32>, i32 -> vector<8x1024xf32>
    %c14 = arith.constant 14 : index
    %c0_84 = arith.constant 0 : index
    %c0_85 = arith.constant 0 : index
    %148 = vector.load %arg6[%c14, %c0_84, %c0_85] : memref<27x8x1xf32, #tpu.memory_space<vmem>>, vector<1x8x1xf32>
    %149 = vector.shape_cast %148 : vector<1x8x1xf32> to vector<8x1xf32>
    %150 = vector.broadcast %149 : vector<8x1xf32> to vector<8x1024xf32>
    %151 = arith.mulf %147, %150 : vector<8x1024xf32>
    %152 = arith.addf %146, %151 : vector<8x1024xf32>
    %c1015_i32_86 = arith.constant 1015 : i32
    %153 = tpu.dynamic_rotate %64 by %c1015_i32_86 dim 1 : vector<8x1024xf32>, i32 -> vector<8x1024xf32>
    %c15 = arith.constant 15 : index
    %c0_87 = arith.constant 0 : index
    %c0_88 = arith.constant 0 : index
    %154 = vector.load %arg6[%c15, %c0_87, %c0_88] : memref<27x8x1xf32, #tpu.memory_space<vmem>>, vector<1x8x1xf32>
    %155 = vector.shape_cast %154 : vector<1x8x1xf32> to vector<8x1xf32>
    %156 = vector.broadcast %155 : vector<8x1xf32> to vector<8x1024xf32>
    %157 = arith.mulf %153, %156 : vector<8x1024xf32>
    %158 = arith.addf %152, %157 : vector<8x1024xf32>
    %c1014_i32_89 = arith.constant 1014 : i32
    %159 = tpu.dynamic_rotate %64 by %c1014_i32_89 dim 1 : vector<8x1024xf32>, i32 -> vector<8x1024xf32>
    %c16_90 = arith.constant 16 : index
    %c0_91 = arith.constant 0 : index
    %c0_92 = arith.constant 0 : index
    %160 = vector.load %arg6[%c16_90, %c0_91, %c0_92] : memref<27x8x1xf32, #tpu.memory_space<vmem>>, vector<1x8x1xf32>
    %161 = vector.shape_cast %160 : vector<1x8x1xf32> to vector<8x1xf32>
    %162 = vector.broadcast %161 : vector<8x1xf32> to vector<8x1024xf32>
    %163 = arith.mulf %159, %162 : vector<8x1024xf32>
    %164 = arith.addf %158, %163 : vector<8x1024xf32>
    %c1013_i32_93 = arith.constant 1013 : i32
    %165 = tpu.dynamic_rotate %64 by %c1013_i32_93 dim 1 : vector<8x1024xf32>, i32 -> vector<8x1024xf32>
    %c17 = arith.constant 17 : index
    %c0_94 = arith.constant 0 : index
    %c0_95 = arith.constant 0 : index
    %166 = vector.load %arg6[%c17, %c0_94, %c0_95] : memref<27x8x1xf32, #tpu.memory_space<vmem>>, vector<1x8x1xf32>
    %167 = vector.shape_cast %166 : vector<1x8x1xf32> to vector<8x1xf32>
    %168 = vector.broadcast %167 : vector<8x1xf32> to vector<8x1024xf32>
    %169 = arith.mulf %165, %168 : vector<8x1024xf32>
    %170 = arith.addf %164, %169 : vector<8x1024xf32>
    %c935_i32_96 = arith.constant 935 : i32
    %171 = tpu.dynamic_rotate %64 by %c935_i32_96 dim 1 : vector<8x1024xf32>, i32 -> vector<8x1024xf32>
    %c18 = arith.constant 18 : index
    %c0_97 = arith.constant 0 : index
    %c0_98 = arith.constant 0 : index
    %172 = vector.load %arg6[%c18, %c0_97, %c0_98] : memref<27x8x1xf32, #tpu.memory_space<vmem>>, vector<1x8x1xf32>
    %173 = vector.shape_cast %172 : vector<1x8x1xf32> to vector<8x1xf32>
    %174 = vector.broadcast %173 : vector<8x1xf32> to vector<8x1024xf32>
    %175 = arith.mulf %171, %174 : vector<8x1024xf32>
    %176 = arith.addf %170, %175 : vector<8x1024xf32>
    %c934_i32_99 = arith.constant 934 : i32
    %177 = tpu.dynamic_rotate %64 by %c934_i32_99 dim 1 : vector<8x1024xf32>, i32 -> vector<8x1024xf32>
    %c19 = arith.constant 19 : index
    %c0_100 = arith.constant 0 : index
    %c0_101 = arith.constant 0 : index
    %178 = vector.load %arg6[%c19, %c0_100, %c0_101] : memref<27x8x1xf32, #tpu.memory_space<vmem>>, vector<1x8x1xf32>
    %179 = vector.shape_cast %178 : vector<1x8x1xf32> to vector<8x1xf32>
    %180 = vector.broadcast %179 : vector<8x1xf32> to vector<8x1024xf32>
    %181 = arith.mulf %177, %180 : vector<8x1024xf32>
    %182 = arith.addf %176, %181 : vector<8x1024xf32>
    %c933_i32_102 = arith.constant 933 : i32
    %183 = tpu.dynamic_rotate %64 by %c933_i32_102 dim 1 : vector<8x1024xf32>, i32 -> vector<8x1024xf32>
    %c20 = arith.constant 20 : index
    %c0_103 = arith.constant 0 : index
    %c0_104 = arith.constant 0 : index
    %184 = vector.load %arg6[%c20, %c0_103, %c0_104] : memref<27x8x1xf32, #tpu.memory_space<vmem>>, vector<1x8x1xf32>
    %185 = vector.shape_cast %184 : vector<1x8x1xf32> to vector<8x1xf32>
    %186 = vector.broadcast %185 : vector<8x1xf32> to vector<8x1024xf32>
    %187 = arith.mulf %183, %186 : vector<8x1024xf32>
    %188 = arith.addf %182, %187 : vector<8x1024xf32>
    %c925_i32_105 = arith.constant 925 : i32
    %189 = tpu.dynamic_rotate %64 by %c925_i32_105 dim 1 : vector<8x1024xf32>, i32 -> vector<8x1024xf32>
    %c21 = arith.constant 21 : index
    %c0_106 = arith.constant 0 : index
    %c0_107 = arith.constant 0 : index
    %190 = vector.load %arg6[%c21, %c0_106, %c0_107] : memref<27x8x1xf32, #tpu.memory_space<vmem>>, vector<1x8x1xf32>
    %191 = vector.shape_cast %190 : vector<1x8x1xf32> to vector<8x1xf32>
    %192 = vector.broadcast %191 : vector<8x1xf32> to vector<8x1024xf32>
    %193 = arith.mulf %189, %192 : vector<8x1024xf32>
    %194 = arith.addf %188, %193 : vector<8x1024xf32>
    %c924_i32_108 = arith.constant 924 : i32
    %195 = tpu.dynamic_rotate %64 by %c924_i32_108 dim 1 : vector<8x1024xf32>, i32 -> vector<8x1024xf32>
    %c22 = arith.constant 22 : index
    %c0_109 = arith.constant 0 : index
    %c0_110 = arith.constant 0 : index
    %196 = vector.load %arg6[%c22, %c0_109, %c0_110] : memref<27x8x1xf32, #tpu.memory_space<vmem>>, vector<1x8x1xf32>
    %197 = vector.shape_cast %196 : vector<1x8x1xf32> to vector<8x1xf32>
    %198 = vector.broadcast %197 : vector<8x1xf32> to vector<8x1024xf32>
    %199 = arith.mulf %195, %198 : vector<8x1024xf32>
    %200 = arith.addf %194, %199 : vector<8x1024xf32>
    %c923_i32_111 = arith.constant 923 : i32
    %201 = tpu.dynamic_rotate %64 by %c923_i32_111 dim 1 : vector<8x1024xf32>, i32 -> vector<8x1024xf32>
    %c23 = arith.constant 23 : index
    %c0_112 = arith.constant 0 : index
    %c0_113 = arith.constant 0 : index
    %202 = vector.load %arg6[%c23, %c0_112, %c0_113] : memref<27x8x1xf32, #tpu.memory_space<vmem>>, vector<1x8x1xf32>
    %203 = vector.shape_cast %202 : vector<1x8x1xf32> to vector<8x1xf32>
    %204 = vector.broadcast %203 : vector<8x1xf32> to vector<8x1024xf32>
    %205 = arith.mulf %201, %204 : vector<8x1024xf32>
    %206 = arith.addf %200, %205 : vector<8x1024xf32>
    %c915_i32_114 = arith.constant 915 : i32
    %207 = tpu.dynamic_rotate %64 by %c915_i32_114 dim 1 : vector<8x1024xf32>, i32 -> vector<8x1024xf32>
    %c24_115 = arith.constant 24 : index
    %c0_116 = arith.constant 0 : index
    %c0_117 = arith.constant 0 : index
    %208 = vector.load %arg6[%c24_115, %c0_116, %c0_117] : memref<27x8x1xf32, #tpu.memory_space<vmem>>, vector<1x8x1xf32>
    %209 = vector.shape_cast %208 : vector<1x8x1xf32> to vector<8x1xf32>
    %210 = vector.broadcast %209 : vector<8x1xf32> to vector<8x1024xf32>
    %211 = arith.mulf %207, %210 : vector<8x1024xf32>
    %212 = arith.addf %206, %211 : vector<8x1024xf32>
    %c914_i32_118 = arith.constant 914 : i32
    %213 = tpu.dynamic_rotate %64 by %c914_i32_118 dim 1 : vector<8x1024xf32>, i32 -> vector<8x1024xf32>
    %c25 = arith.constant 25 : index
    %c0_119 = arith.constant 0 : index
    %c0_120 = arith.constant 0 : index
    %214 = vector.load %arg6[%c25, %c0_119, %c0_120] : memref<27x8x1xf32, #tpu.memory_space<vmem>>, vector<1x8x1xf32>
    %215 = vector.shape_cast %214 : vector<1x8x1xf32> to vector<8x1xf32>
    %216 = vector.broadcast %215 : vector<8x1xf32> to vector<8x1024xf32>
    %217 = arith.mulf %213, %216 : vector<8x1024xf32>
    %218 = arith.addf %212, %217 : vector<8x1024xf32>
    %c913_i32_121 = arith.constant 913 : i32
    %219 = tpu.dynamic_rotate %64 by %c913_i32_121 dim 1 : vector<8x1024xf32>, i32 -> vector<8x1024xf32>
    %c26 = arith.constant 26 : index
    %c0_122 = arith.constant 0 : index
    %c0_123 = arith.constant 0 : index
    %220 = vector.load %arg6[%c26, %c0_122, %c0_123] : memref<27x8x1xf32, #tpu.memory_space<vmem>>, vector<1x8x1xf32>
    %221 = vector.shape_cast %220 : vector<1x8x1xf32> to vector<8x1xf32>
    %222 = vector.broadcast %221 : vector<8x1xf32> to vector<8x1024xf32>
    %223 = arith.mulf %219, %222 : vector<8x1024xf32>
    %224 = arith.addf %218, %223 : vector<8x1024xf32>
    %c0_124 = arith.constant 0 : index
    %c0_125 = arith.constant 0 : index
    %225 = vector.load %arg7[%c0_124, %c0_125] : memref<8x1xf32, #tpu.memory_space<vmem>>, vector<8x1xf32>
    %226 = vector.broadcast %225 : vector<8x1xf32> to vector<8x1024xf32>
    %227 = arith.addf %224, %226 : vector<8x1024xf32>
    %228 = vector.broadcast %0 : vector<1x1024xf32> to vector<8x1024xf32>
    %229 = arith.mulf %227, %228 : vector<8x1024xf32>
    %cst_126 = arith.constant dense<0.000000e+00> : vector<8xf32>
    %230 = vector.multi_reduction <add>, %229, %cst_126 [1] : vector<8x1024xf32> to vector<8xf32>
    %231 = vector.shape_cast %230 : vector<8xf32> to vector<8x1xf32>
    %cst_127 = arith.constant 0.001953125 : f32
    %232 = vector.broadcast %cst_127 : f32 to vector<8x1xf32>
    %233 = arith.mulf %231, %232 : vector<8x1xf32>
    %234 = arith.mulf %229, %227 : vector<8x1024xf32>
    %cst_128 = arith.constant dense<0.000000e+00> : vector<8xf32>
    %235 = vector.multi_reduction <add>, %234, %cst_128 [1] : vector<8x1024xf32> to vector<8xf32>
    %236 = vector.shape_cast %235 : vector<8xf32> to vector<8x1xf32>
    %cst_129 = arith.constant 0.001953125 : f32
    %237 = vector.broadcast %cst_129 : f32 to vector<8x1xf32>
    %238 = arith.mulf %236, %237 : vector<8x1xf32>
    %239 = arith.mulf %233, %233 : vector<8x1xf32>
    %240 = arith.subf %238, %239 : vector<8x1xf32>
    %cst_130 = arith.constant 0.000000e+00 : f32
    %241 = vector.broadcast %cst_130 : f32 to vector<8x1xf32>
    %242 = arith.maximumf %240, %241 : vector<8x1xf32>
    %cst_131 = arith.constant 9.99999974E-6 : f32
    %243 = vector.broadcast %cst_131 : f32 to vector<8x1xf32>
    %244 = arith.addf %242, %243 : vector<8x1xf32>
    %245 = math.rsqrt %244 : vector<8x1xf32>
    %c0_132 = arith.constant 0 : index
    %c0_133 = arith.constant 0 : index
    %246 = vector.load %arg8[%c0_132, %c0_133] : memref<8x1xf32, #tpu.memory_space<vmem>>, vector<8x1xf32>
    %247 = arith.mulf %245, %246 : vector<8x1xf32>
    %c0_134 = arith.constant 0 : index
    %c0_135 = arith.constant 0 : index
    %248 = vector.load %arg9[%c0_134, %c0_135] : memref<8x1xf32, #tpu.memory_space<vmem>>, vector<8x1xf32>
    %249 = arith.mulf %247, %233 : vector<8x1xf32>
    %250 = arith.subf %248, %249 : vector<8x1xf32>
    %251 = vector.broadcast %247 : vector<8x1xf32> to vector<8x1024xf32>
    %252 = arith.mulf %227, %251 : vector<8x1024xf32>
    %253 = vector.broadcast %250 : vector<8x1xf32> to vector<8x1024xf32>
    %254 = arith.addf %252, %253 : vector<8x1024xf32>
    %c0_136 = arith.constant 0 : index
    %c0_137 = arith.constant 0 : index
    %255 = vector.load %arg10[%c0_136, %c0_137] : memref<8x8xf32, #tpu.memory_space<vmem>>, vector<8x8xf32>
    %cst_138 = arith.constant dense<0.000000e+00> : vector<8x1024xf32>
    %256 = tpu.matmul %255, %254, %cst_138 {dimension_numbers = #tpu.dot_dimension_numbers<[1], [0], [0], [1], [0, 0, 1, 1], [], []>} : vector<8x8xf32>, vector<8x1024xf32>, vector<8x1024xf32> -> vector<8x1024xf32>
    %c0_139 = arith.constant 0 : index
    %c0_140 = arith.constant 0 : index
    %257 = vector.load %arg11[%c0_139, %c0_140] : memref<8x1xf32, #tpu.memory_space<vmem>>, vector<8x1xf32>
    %258 = vector.broadcast %257 : vector<8x1xf32> to vector<8x1024xf32>
    %259 = arith.addf %256, %258 : vector<8x1024xf32>
    %cst_141 = arith.constant 5.000000e-01 : f32
    %260 = vector.broadcast %cst_141 : f32 to vector<8x1024xf32>
    %261 = arith.mulf %260, %259 : vector<8x1024xf32>
    %cst_142 = arith.constant 0.707106769 : f32
    %262 = vector.broadcast %cst_142 : f32 to vector<8x1024xf32>
    %263 = arith.mulf %259, %262 : vector<8x1024xf32>
    %264 = math.erf %263 : vector<8x1024xf32>
    %cst_143 = arith.constant 1.000000e+00 : f32
    %265 = vector.broadcast %cst_143 : f32 to vector<8x1024xf32>
    %266 = arith.addf %265, %264 : vector<8x1024xf32>
    %267 = arith.mulf %261, %266 : vector<8x1024xf32>
    %268 = vector.broadcast %0 : vector<1x1024xf32> to vector<8x1024xf32>
    %269 = arith.mulf %267, %268 : vector<8x1024xf32>
    %270 = arith.mulf %269, %267 : vector<8x1024xf32>
    %cst_144 = arith.constant dense<0.000000e+00> : vector<8xf32>
    %271 = vector.multi_reduction <add>, %270, %cst_144 [1] : vector<8x1024xf32> to vector<8xf32>
    %272 = vector.shape_cast %271 : vector<8xf32> to vector<8x1xf32>
    %273 = math.sqrt %272 : vector<8x1xf32>
    %cst_145 = arith.constant dense<0.000000e+00> : vector<1xf32>
    %274 = vector.multi_reduction <add>, %273, %cst_145 [0] : vector<8x1xf32> to vector<1xf32>
    %275 = vector.shape_cast %274 : vector<1xf32> to vector<1x1xf32>
    %cst_146 = arith.constant 8.000000e+00 : f32
    %276 = vector.broadcast %cst_146 : f32 to vector<1x1xf32>
    %277 = arith.divf %275, %276 : vector<1x1xf32>
    %cst_147 = arith.constant 9.99999997E-7 : f32
    %278 = vector.broadcast %cst_147 : f32 to vector<1x1xf32>
    %279 = arith.addf %277, %278 : vector<1x1xf32>
    %c0_148 = arith.constant 0 : index
    %c0_149 = arith.constant 0 : index
    %280 = vector.load %arg12[%c0_148, %c0_149] : memref<8x1xf32, #tpu.memory_space<vmem>>, vector<8x1xf32>
    %281 = vector.broadcast %279 : vector<1x1xf32> to vector<8x1xf32>
    %282 = arith.divf %273, %281 : vector<8x1xf32>
    %283 = arith.mulf %280, %282 : vector<8x1xf32>
    %cst_150 = arith.constant 1.000000e+00 : f32
    %284 = vector.broadcast %cst_150 : f32 to vector<8x1xf32>
    %285 = arith.addf %284, %283 : vector<8x1xf32>
    %286 = vector.broadcast %285 : vector<8x1xf32> to vector<8x1024xf32>
    %287 = arith.mulf %267, %286 : vector<8x1024xf32>
    %c0_151 = arith.constant 0 : index
    %c0_152 = arith.constant 0 : index
    %288 = vector.load %arg13[%c0_151, %c0_152] : memref<8x1xf32, #tpu.memory_space<vmem>>, vector<8x1xf32>
    %289 = vector.broadcast %288 : vector<8x1xf32> to vector<8x1024xf32>
    %290 = arith.addf %287, %289 : vector<8x1024xf32>
    %c0_153 = arith.constant 0 : index
    %c0_154 = arith.constant 0 : index
    %291 = vector.load %arg14[%c0_153, %c0_154] : memref<8x8xf32, #tpu.memory_space<vmem>>, vector<8x8xf32>
    %cst_155 = arith.constant dense<0.000000e+00> : vector<8x1024xf32>
    %292 = tpu.matmul %291, %290, %cst_155 {dimension_numbers = #tpu.dot_dimension_numbers<[1], [0], [0], [1], [0, 0, 1, 1], [], []>} : vector<8x8xf32>, vector<8x1024xf32>, vector<8x1024xf32> -> vector<8x1024xf32>
    %c0_156 = arith.constant 0 : index
    %c0_157 = arith.constant 0 : index
    %293 = vector.load %arg15[%c0_156, %c0_157] : memref<8x1xf32, #tpu.memory_space<vmem>>, vector<8x1xf32>
    %294 = vector.broadcast %293 : vector<8x1xf32> to vector<8x1024xf32>
    %295 = arith.addf %292, %294 : vector<8x1024xf32>
    %296 = arith.addf %64, %295 : vector<8x1024xf32>
    %297 = vector.broadcast %0 : vector<1x1024xf32> to vector<8x1024xf32>
    %298 = arith.mulf %296, %297 : vector<8x1024xf32>
    %c111_i32_158 = arith.constant 111 : i32
    %299 = tpu.dynamic_rotate %298 by %c111_i32_158 dim 1 : vector<8x1024xf32>, i32 -> vector<8x1024xf32>
    %c0_159 = arith.constant 0 : index
    %c0_160 = arith.constant 0 : index
    %c0_161 = arith.constant 0 : index
    %300 = vector.load %arg16[%c0_159, %c0_160, %c0_161] : memref<27x8x1xf32, #tpu.memory_space<vmem>>, vector<1x8x1xf32>
    %301 = vector.shape_cast %300 : vector<1x8x1xf32> to vector<8x1xf32>
    %302 = vector.broadcast %301 : vector<8x1xf32> to vector<8x1024xf32>
    %303 = arith.mulf %299, %302 : vector<8x1024xf32>
    %c110_i32_162 = arith.constant 110 : i32
    %304 = tpu.dynamic_rotate %298 by %c110_i32_162 dim 1 : vector<8x1024xf32>, i32 -> vector<8x1024xf32>
    %c1_163 = arith.constant 1 : index
    %c0_164 = arith.constant 0 : index
    %c0_165 = arith.constant 0 : index
    %305 = vector.load %arg16[%c1_163, %c0_164, %c0_165] : memref<27x8x1xf32, #tpu.memory_space<vmem>>, vector<1x8x1xf32>
    %306 = vector.shape_cast %305 : vector<1x8x1xf32> to vector<8x1xf32>
    %307 = vector.broadcast %306 : vector<8x1xf32> to vector<8x1024xf32>
    %308 = arith.mulf %304, %307 : vector<8x1024xf32>
    %309 = arith.addf %303, %308 : vector<8x1024xf32>
    %c109_i32_166 = arith.constant 109 : i32
    %310 = tpu.dynamic_rotate %298 by %c109_i32_166 dim 1 : vector<8x1024xf32>, i32 -> vector<8x1024xf32>
    %c2_167 = arith.constant 2 : index
    %c0_168 = arith.constant 0 : index
    %c0_169 = arith.constant 0 : index
    %311 = vector.load %arg16[%c2_167, %c0_168, %c0_169] : memref<27x8x1xf32, #tpu.memory_space<vmem>>, vector<1x8x1xf32>
    %312 = vector.shape_cast %311 : vector<1x8x1xf32> to vector<8x1xf32>
    %313 = vector.broadcast %312 : vector<8x1xf32> to vector<8x1024xf32>
    %314 = arith.mulf %310, %313 : vector<8x1024xf32>
    %315 = arith.addf %309, %314 : vector<8x1024xf32>
    %c101_i32_170 = arith.constant 101 : i32
    %316 = tpu.dynamic_rotate %298 by %c101_i32_170 dim 1 : vector<8x1024xf32>, i32 -> vector<8x1024xf32>
    %c3_171 = arith.constant 3 : index
    %c0_172 = arith.constant 0 : index
    %c0_173 = arith.constant 0 : index
    %317 = vector.load %arg16[%c3_171, %c0_172, %c0_173] : memref<27x8x1xf32, #tpu.memory_space<vmem>>, vector<1x8x1xf32>
    %318 = vector.shape_cast %317 : vector<1x8x1xf32> to vector<8x1xf32>
    %319 = vector.broadcast %318 : vector<8x1xf32> to vector<8x1024xf32>
    %320 = arith.mulf %316, %319 : vector<8x1024xf32>
    %321 = arith.addf %315, %320 : vector<8x1024xf32>
    %c100_i32_174 = arith.constant 100 : i32
    %322 = tpu.dynamic_rotate %298 by %c100_i32_174 dim 1 : vector<8x1024xf32>, i32 -> vector<8x1024xf32>
    %c4_175 = arith.constant 4 : index
    %c0_176 = arith.constant 0 : index
    %c0_177 = arith.constant 0 : index
    %323 = vector.load %arg16[%c4_175, %c0_176, %c0_177] : memref<27x8x1xf32, #tpu.memory_space<vmem>>, vector<1x8x1xf32>
    %324 = vector.shape_cast %323 : vector<1x8x1xf32> to vector<8x1xf32>
    %325 = vector.broadcast %324 : vector<8x1xf32> to vector<8x1024xf32>
    %326 = arith.mulf %322, %325 : vector<8x1024xf32>
    %327 = arith.addf %321, %326 : vector<8x1024xf32>
    %c99_i32_178 = arith.constant 99 : i32
    %328 = tpu.dynamic_rotate %298 by %c99_i32_178 dim 1 : vector<8x1024xf32>, i32 -> vector<8x1024xf32>
    %c5_179 = arith.constant 5 : index
    %c0_180 = arith.constant 0 : index
    %c0_181 = arith.constant 0 : index
    %329 = vector.load %arg16[%c5_179, %c0_180, %c0_181] : memref<27x8x1xf32, #tpu.memory_space<vmem>>, vector<1x8x1xf32>
    %330 = vector.shape_cast %329 : vector<1x8x1xf32> to vector<8x1xf32>
    %331 = vector.broadcast %330 : vector<8x1xf32> to vector<8x1024xf32>
    %332 = arith.mulf %328, %331 : vector<8x1024xf32>
    %333 = arith.addf %327, %332 : vector<8x1024xf32>
    %c91_i32_182 = arith.constant 91 : i32
    %334 = tpu.dynamic_rotate %298 by %c91_i32_182 dim 1 : vector<8x1024xf32>, i32 -> vector<8x1024xf32>
    %c6_183 = arith.constant 6 : index
    %c0_184 = arith.constant 0 : index
    %c0_185 = arith.constant 0 : index
    %335 = vector.load %arg16[%c6_183, %c0_184, %c0_185] : memref<27x8x1xf32, #tpu.memory_space<vmem>>, vector<1x8x1xf32>
    %336 = vector.shape_cast %335 : vector<1x8x1xf32> to vector<8x1xf32>
    %337 = vector.broadcast %336 : vector<8x1xf32> to vector<8x1024xf32>
    %338 = arith.mulf %334, %337 : vector<8x1024xf32>
    %339 = arith.addf %333, %338 : vector<8x1024xf32>
    %c90_i32_186 = arith.constant 90 : i32
    %340 = tpu.dynamic_rotate %298 by %c90_i32_186 dim 1 : vector<8x1024xf32>, i32 -> vector<8x1024xf32>
    %c7_187 = arith.constant 7 : index
    %c0_188 = arith.constant 0 : index
    %c0_189 = arith.constant 0 : index
    %341 = vector.load %arg16[%c7_187, %c0_188, %c0_189] : memref<27x8x1xf32, #tpu.memory_space<vmem>>, vector<1x8x1xf32>
    %342 = vector.shape_cast %341 : vector<1x8x1xf32> to vector<8x1xf32>
    %343 = vector.broadcast %342 : vector<8x1xf32> to vector<8x1024xf32>
    %344 = arith.mulf %340, %343 : vector<8x1024xf32>
    %345 = arith.addf %339, %344 : vector<8x1024xf32>
    %c89_i32_190 = arith.constant 89 : i32
    %346 = tpu.dynamic_rotate %298 by %c89_i32_190 dim 1 : vector<8x1024xf32>, i32 -> vector<8x1024xf32>
    %c8_191 = arith.constant 8 : index
    %c0_192 = arith.constant 0 : index
    %c0_193 = arith.constant 0 : index
    %347 = vector.load %arg16[%c8_191, %c0_192, %c0_193] : memref<27x8x1xf32, #tpu.memory_space<vmem>>, vector<1x8x1xf32>
    %348 = vector.shape_cast %347 : vector<1x8x1xf32> to vector<8x1xf32>
    %349 = vector.broadcast %348 : vector<8x1xf32> to vector<8x1024xf32>
    %350 = arith.mulf %346, %349 : vector<8x1024xf32>
    %351 = arith.addf %345, %350 : vector<8x1024xf32>
    %c11_i32_194 = arith.constant 11 : i32
    %352 = tpu.dynamic_rotate %298 by %c11_i32_194 dim 1 : vector<8x1024xf32>, i32 -> vector<8x1024xf32>
    %c9_195 = arith.constant 9 : index
    %c0_196 = arith.constant 0 : index
    %c0_197 = arith.constant 0 : index
    %353 = vector.load %arg16[%c9_195, %c0_196, %c0_197] : memref<27x8x1xf32, #tpu.memory_space<vmem>>, vector<1x8x1xf32>
    %354 = vector.shape_cast %353 : vector<1x8x1xf32> to vector<8x1xf32>
    %355 = vector.broadcast %354 : vector<8x1xf32> to vector<8x1024xf32>
    %356 = arith.mulf %352, %355 : vector<8x1024xf32>
    %357 = arith.addf %351, %356 : vector<8x1024xf32>
    %c10_i32_198 = arith.constant 10 : i32
    %358 = tpu.dynamic_rotate %298 by %c10_i32_198 dim 1 : vector<8x1024xf32>, i32 -> vector<8x1024xf32>
    %c10_199 = arith.constant 10 : index
    %c0_200 = arith.constant 0 : index
    %c0_201 = arith.constant 0 : index
    %359 = vector.load %arg16[%c10_199, %c0_200, %c0_201] : memref<27x8x1xf32, #tpu.memory_space<vmem>>, vector<1x8x1xf32>
    %360 = vector.shape_cast %359 : vector<1x8x1xf32> to vector<8x1xf32>
    %361 = vector.broadcast %360 : vector<8x1xf32> to vector<8x1024xf32>
    %362 = arith.mulf %358, %361 : vector<8x1024xf32>
    %363 = arith.addf %357, %362 : vector<8x1024xf32>
    %c9_i32_202 = arith.constant 9 : i32
    %364 = tpu.dynamic_rotate %298 by %c9_i32_202 dim 1 : vector<8x1024xf32>, i32 -> vector<8x1024xf32>
    %c11_203 = arith.constant 11 : index
    %c0_204 = arith.constant 0 : index
    %c0_205 = arith.constant 0 : index
    %365 = vector.load %arg16[%c11_203, %c0_204, %c0_205] : memref<27x8x1xf32, #tpu.memory_space<vmem>>, vector<1x8x1xf32>
    %366 = vector.shape_cast %365 : vector<1x8x1xf32> to vector<8x1xf32>
    %367 = vector.broadcast %366 : vector<8x1xf32> to vector<8x1024xf32>
    %368 = arith.mulf %364, %367 : vector<8x1024xf32>
    %369 = arith.addf %363, %368 : vector<8x1024xf32>
    %c1_i32_206 = arith.constant 1 : i32
    %370 = tpu.dynamic_rotate %298 by %c1_i32_206 dim 1 : vector<8x1024xf32>, i32 -> vector<8x1024xf32>
    %c12_207 = arith.constant 12 : index
    %c0_208 = arith.constant 0 : index
    %c0_209 = arith.constant 0 : index
    %371 = vector.load %arg16[%c12_207, %c0_208, %c0_209] : memref<27x8x1xf32, #tpu.memory_space<vmem>>, vector<1x8x1xf32>
    %372 = vector.shape_cast %371 : vector<1x8x1xf32> to vector<8x1xf32>
    %373 = vector.broadcast %372 : vector<8x1xf32> to vector<8x1024xf32>
    %374 = arith.mulf %370, %373 : vector<8x1024xf32>
    %375 = arith.addf %369, %374 : vector<8x1024xf32>
    %c13_210 = arith.constant 13 : index
    %c0_211 = arith.constant 0 : index
    %c0_212 = arith.constant 0 : index
    %376 = vector.load %arg16[%c13_210, %c0_211, %c0_212] : memref<27x8x1xf32, #tpu.memory_space<vmem>>, vector<1x8x1xf32>
    %377 = vector.shape_cast %376 : vector<1x8x1xf32> to vector<8x1xf32>
    %378 = vector.broadcast %377 : vector<8x1xf32> to vector<8x1024xf32>
    %379 = arith.mulf %298, %378 : vector<8x1024xf32>
    %380 = arith.addf %375, %379 : vector<8x1024xf32>
    %c1023_i32_213 = arith.constant 1023 : i32
    %381 = tpu.dynamic_rotate %298 by %c1023_i32_213 dim 1 : vector<8x1024xf32>, i32 -> vector<8x1024xf32>
    %c14_214 = arith.constant 14 : index
    %c0_215 = arith.constant 0 : index
    %c0_216 = arith.constant 0 : index
    %382 = vector.load %arg16[%c14_214, %c0_215, %c0_216] : memref<27x8x1xf32, #tpu.memory_space<vmem>>, vector<1x8x1xf32>
    %383 = vector.shape_cast %382 : vector<1x8x1xf32> to vector<8x1xf32>
    %384 = vector.broadcast %383 : vector<8x1xf32> to vector<8x1024xf32>
    %385 = arith.mulf %381, %384 : vector<8x1024xf32>
    %386 = arith.addf %380, %385 : vector<8x1024xf32>
    %c1015_i32_217 = arith.constant 1015 : i32
    %387 = tpu.dynamic_rotate %298 by %c1015_i32_217 dim 1 : vector<8x1024xf32>, i32 -> vector<8x1024xf32>
    %c15_218 = arith.constant 15 : index
    %c0_219 = arith.constant 0 : index
    %c0_220 = arith.constant 0 : index
    %388 = vector.load %arg16[%c15_218, %c0_219, %c0_220] : memref<27x8x1xf32, #tpu.memory_space<vmem>>, vector<1x8x1xf32>
    %389 = vector.shape_cast %388 : vector<1x8x1xf32> to vector<8x1xf32>
    %390 = vector.broadcast %389 : vector<8x1xf32> to vector<8x1024xf32>
    %391 = arith.mulf %387, %390 : vector<8x1024xf32>
    %392 = arith.addf %386, %391 : vector<8x1024xf32>
    %c1014_i32_221 = arith.constant 1014 : i32
    %393 = tpu.dynamic_rotate %298 by %c1014_i32_221 dim 1 : vector<8x1024xf32>, i32 -> vector<8x1024xf32>
    %c16_222 = arith.constant 16 : index
    %c0_223 = arith.constant 0 : index
    %c0_224 = arith.constant 0 : index
    %394 = vector.load %arg16[%c16_222, %c0_223, %c0_224] : memref<27x8x1xf32, #tpu.memory_space<vmem>>, vector<1x8x1xf32>
    %395 = vector.shape_cast %394 : vector<1x8x1xf32> to vector<8x1xf32>
    %396 = vector.broadcast %395 : vector<8x1xf32> to vector<8x1024xf32>
    %397 = arith.mulf %393, %396 : vector<8x1024xf32>
    %398 = arith.addf %392, %397 : vector<8x1024xf32>
    %c1013_i32_225 = arith.constant 1013 : i32
    %399 = tpu.dynamic_rotate %298 by %c1013_i32_225 dim 1 : vector<8x1024xf32>, i32 -> vector<8x1024xf32>
    %c17_226 = arith.constant 17 : index
    %c0_227 = arith.constant 0 : index
    %c0_228 = arith.constant 0 : index
    %400 = vector.load %arg16[%c17_226, %c0_227, %c0_228] : memref<27x8x1xf32, #tpu.memory_space<vmem>>, vector<1x8x1xf32>
    %401 = vector.shape_cast %400 : vector<1x8x1xf32> to vector<8x1xf32>
    %402 = vector.broadcast %401 : vector<8x1xf32> to vector<8x1024xf32>
    %403 = arith.mulf %399, %402 : vector<8x1024xf32>
    %404 = arith.addf %398, %403 : vector<8x1024xf32>
    %c935_i32_229 = arith.constant 935 : i32
    %405 = tpu.dynamic_rotate %298 by %c935_i32_229 dim 1 : vector<8x1024xf32>, i32 -> vector<8x1024xf32>
    %c18_230 = arith.constant 18 : index
    %c0_231 = arith.constant 0 : index
    %c0_232 = arith.constant 0 : index
    %406 = vector.load %arg16[%c18_230, %c0_231, %c0_232] : memref<27x8x1xf32, #tpu.memory_space<vmem>>, vector<1x8x1xf32>
    %407 = vector.shape_cast %406 : vector<1x8x1xf32> to vector<8x1xf32>
    %408 = vector.broadcast %407 : vector<8x1xf32> to vector<8x1024xf32>
    %409 = arith.mulf %405, %408 : vector<8x1024xf32>
    %410 = arith.addf %404, %409 : vector<8x1024xf32>
    %c934_i32_233 = arith.constant 934 : i32
    %411 = tpu.dynamic_rotate %298 by %c934_i32_233 dim 1 : vector<8x1024xf32>, i32 -> vector<8x1024xf32>
    %c19_234 = arith.constant 19 : index
    %c0_235 = arith.constant 0 : index
    %c0_236 = arith.constant 0 : index
    %412 = vector.load %arg16[%c19_234, %c0_235, %c0_236] : memref<27x8x1xf32, #tpu.memory_space<vmem>>, vector<1x8x1xf32>
    %413 = vector.shape_cast %412 : vector<1x8x1xf32> to vector<8x1xf32>
    %414 = vector.broadcast %413 : vector<8x1xf32> to vector<8x1024xf32>
    %415 = arith.mulf %411, %414 : vector<8x1024xf32>
    %416 = arith.addf %410, %415 : vector<8x1024xf32>
    %c933_i32_237 = arith.constant 933 : i32
    %417 = tpu.dynamic_rotate %298 by %c933_i32_237 dim 1 : vector<8x1024xf32>, i32 -> vector<8x1024xf32>
    %c20_238 = arith.constant 20 : index
    %c0_239 = arith.constant 0 : index
    %c0_240 = arith.constant 0 : index
    %418 = vector.load %arg16[%c20_238, %c0_239, %c0_240] : memref<27x8x1xf32, #tpu.memory_space<vmem>>, vector<1x8x1xf32>
    %419 = vector.shape_cast %418 : vector<1x8x1xf32> to vector<8x1xf32>
    %420 = vector.broadcast %419 : vector<8x1xf32> to vector<8x1024xf32>
    %421 = arith.mulf %417, %420 : vector<8x1024xf32>
    %422 = arith.addf %416, %421 : vector<8x1024xf32>
    %c925_i32_241 = arith.constant 925 : i32
    %423 = tpu.dynamic_rotate %298 by %c925_i32_241 dim 1 : vector<8x1024xf32>, i32 -> vector<8x1024xf32>
    %c21_242 = arith.constant 21 : index
    %c0_243 = arith.constant 0 : index
    %c0_244 = arith.constant 0 : index
    %424 = vector.load %arg16[%c21_242, %c0_243, %c0_244] : memref<27x8x1xf32, #tpu.memory_space<vmem>>, vector<1x8x1xf32>
    %425 = vector.shape_cast %424 : vector<1x8x1xf32> to vector<8x1xf32>
    %426 = vector.broadcast %425 : vector<8x1xf32> to vector<8x1024xf32>
    %427 = arith.mulf %423, %426 : vector<8x1024xf32>
    %428 = arith.addf %422, %427 : vector<8x1024xf32>
    %c924_i32_245 = arith.constant 924 : i32
    %429 = tpu.dynamic_rotate %298 by %c924_i32_245 dim 1 : vector<8x1024xf32>, i32 -> vector<8x1024xf32>
    %c22_246 = arith.constant 22 : index
    %c0_247 = arith.constant 0 : index
    %c0_248 = arith.constant 0 : index
    %430 = vector.load %arg16[%c22_246, %c0_247, %c0_248] : memref<27x8x1xf32, #tpu.memory_space<vmem>>, vector<1x8x1xf32>
    %431 = vector.shape_cast %430 : vector<1x8x1xf32> to vector<8x1xf32>
    %432 = vector.broadcast %431 : vector<8x1xf32> to vector<8x1024xf32>
    %433 = arith.mulf %429, %432 : vector<8x1024xf32>
    %434 = arith.addf %428, %433 : vector<8x1024xf32>
    %c923_i32_249 = arith.constant 923 : i32
    %435 = tpu.dynamic_rotate %298 by %c923_i32_249 dim 1 : vector<8x1024xf32>, i32 -> vector<8x1024xf32>
    %c23_250 = arith.constant 23 : index
    %c0_251 = arith.constant 0 : index
    %c0_252 = arith.constant 0 : index
    %436 = vector.load %arg16[%c23_250, %c0_251, %c0_252] : memref<27x8x1xf32, #tpu.memory_space<vmem>>, vector<1x8x1xf32>
    %437 = vector.shape_cast %436 : vector<1x8x1xf32> to vector<8x1xf32>
    %438 = vector.broadcast %437 : vector<8x1xf32> to vector<8x1024xf32>
    %439 = arith.mulf %435, %438 : vector<8x1024xf32>
    %440 = arith.addf %434, %439 : vector<8x1024xf32>
    %c915_i32_253 = arith.constant 915 : i32
    %441 = tpu.dynamic_rotate %298 by %c915_i32_253 dim 1 : vector<8x1024xf32>, i32 -> vector<8x1024xf32>
    %c24_254 = arith.constant 24 : index
    %c0_255 = arith.constant 0 : index
    %c0_256 = arith.constant 0 : index
    %442 = vector.load %arg16[%c24_254, %c0_255, %c0_256] : memref<27x8x1xf32, #tpu.memory_space<vmem>>, vector<1x8x1xf32>
    %443 = vector.shape_cast %442 : vector<1x8x1xf32> to vector<8x1xf32>
    %444 = vector.broadcast %443 : vector<8x1xf32> to vector<8x1024xf32>
    %445 = arith.mulf %441, %444 : vector<8x1024xf32>
    %446 = arith.addf %440, %445 : vector<8x1024xf32>
    %c914_i32_257 = arith.constant 914 : i32
    %447 = tpu.dynamic_rotate %298 by %c914_i32_257 dim 1 : vector<8x1024xf32>, i32 -> vector<8x1024xf32>
    %c25_258 = arith.constant 25 : index
    %c0_259 = arith.constant 0 : index
    %c0_260 = arith.constant 0 : index
    %448 = vector.load %arg16[%c25_258, %c0_259, %c0_260] : memref<27x8x1xf32, #tpu.memory_space<vmem>>, vector<1x8x1xf32>
    %449 = vector.shape_cast %448 : vector<1x8x1xf32> to vector<8x1xf32>
    %450 = vector.broadcast %449 : vector<8x1xf32> to vector<8x1024xf32>
    %451 = arith.mulf %447, %450 : vector<8x1024xf32>
    %452 = arith.addf %446, %451 : vector<8x1024xf32>
    %c913_i32_261 = arith.constant 913 : i32
    %453 = tpu.dynamic_rotate %298 by %c913_i32_261 dim 1 : vector<8x1024xf32>, i32 -> vector<8x1024xf32>
    %c26_262 = arith.constant 26 : index
    %c0_263 = arith.constant 0 : index
    %c0_264 = arith.constant 0 : index
    %454 = vector.load %arg16[%c26_262, %c0_263, %c0_264] : memref<27x8x1xf32, #tpu.memory_space<vmem>>, vector<1x8x1xf32>
    %455 = vector.shape_cast %454 : vector<1x8x1xf32> to vector<8x1xf32>
    %456 = vector.broadcast %455 : vector<8x1xf32> to vector<8x1024xf32>
    %457 = arith.mulf %453, %456 : vector<8x1024xf32>
    %458 = arith.addf %452, %457 : vector<8x1024xf32>
    %c0_265 = arith.constant 0 : index
    %c0_266 = arith.constant 0 : index
    %459 = vector.load %arg17[%c0_265, %c0_266] : memref<8x1xf32, #tpu.memory_space<vmem>>, vector<8x1xf32>
    %460 = vector.broadcast %459 : vector<8x1xf32> to vector<8x1024xf32>
    %461 = arith.addf %458, %460 : vector<8x1024xf32>
    %462 = vector.broadcast %1 : vector<1x1024xf32> to vector<8x1024xf32>
    %463 = arith.mulf %461, %462 : vector<8x1024xf32>
    %cst_267 = arith.constant dense<0.000000e+00> : vector<8xf32>
    %464 = vector.multi_reduction <add>, %463, %cst_267 [1] : vector<8x1024xf32> to vector<8xf32>
    %465 = vector.shape_cast %464 : vector<8xf32> to vector<8x1xf32>
    %cst_268 = arith.constant 1.562500e-02 : f32
    %466 = vector.broadcast %cst_268 : f32 to vector<8x1xf32>
    %467 = arith.mulf %465, %466 : vector<8x1xf32>
    %468 = arith.mulf %463, %461 : vector<8x1024xf32>
    %cst_269 = arith.constant dense<0.000000e+00> : vector<8xf32>
    %469 = vector.multi_reduction <add>, %468, %cst_269 [1] : vector<8x1024xf32> to vector<8xf32>
    %470 = vector.shape_cast %469 : vector<8xf32> to vector<8x1xf32>
    %cst_270 = arith.constant 1.562500e-02 : f32
    %471 = vector.broadcast %cst_270 : f32 to vector<8x1xf32>
    %472 = arith.mulf %470, %471 : vector<8x1xf32>
    %473 = arith.mulf %467, %467 : vector<8x1xf32>
    %474 = arith.subf %472, %473 : vector<8x1xf32>
    %cst_271 = arith.constant 0.000000e+00 : f32
    %475 = vector.broadcast %cst_271 : f32 to vector<8x1xf32>
    %476 = arith.maximumf %474, %475 : vector<8x1xf32>
    %cst_272 = arith.constant 9.99999974E-6 : f32
    %477 = vector.broadcast %cst_272 : f32 to vector<8x1xf32>
    %478 = arith.addf %476, %477 : vector<8x1xf32>
    %479 = math.rsqrt %478 : vector<8x1xf32>
    %c0_273 = arith.constant 0 : index
    %c0_274 = arith.constant 0 : index
    %480 = vector.load %arg18[%c0_273, %c0_274] : memref<8x1xf32, #tpu.memory_space<vmem>>, vector<8x1xf32>
    %481 = arith.mulf %479, %480 : vector<8x1xf32>
    %c0_275 = arith.constant 0 : index
    %c0_276 = arith.constant 0 : index
    %482 = vector.load %arg19[%c0_275, %c0_276] : memref<8x1xf32, #tpu.memory_space<vmem>>, vector<8x1xf32>
    %483 = arith.mulf %481, %467 : vector<8x1xf32>
    %484 = arith.subf %482, %483 : vector<8x1xf32>
    %485 = vector.broadcast %481 : vector<8x1xf32> to vector<8x1024xf32>
    %486 = arith.mulf %461, %485 : vector<8x1024xf32>
    %487 = vector.broadcast %484 : vector<8x1xf32> to vector<8x1024xf32>
    %488 = arith.addf %486, %487 : vector<8x1024xf32>
    %c0_277 = arith.constant 0 : index
    %c0_278 = arith.constant 0 : index
    %489 = vector.load %arg20[%c0_277, %c0_278] : memref<16x8xf32, #tpu.memory_space<vmem>>, vector<16x8xf32>
    %cst_279 = arith.constant dense<0.000000e+00> : vector<16x1024xf32>
    %490 = tpu.matmul %489, %488, %cst_279 {dimension_numbers = #tpu.dot_dimension_numbers<[1], [0], [0], [1], [0, 0, 1, 1], [], []>} : vector<16x8xf32>, vector<8x1024xf32>, vector<16x1024xf32> -> vector<16x1024xf32>
    %c0_280 = arith.constant 0 : index
    %c0_281 = arith.constant 0 : index
    %491 = vector.load %arg21[%c0_280, %c0_281] : memref<16x1xf32, #tpu.memory_space<vmem>>, vector<16x1xf32>
    %492 = vector.broadcast %491 : vector<16x1xf32> to vector<16x1024xf32>
    %493 = arith.addf %490, %492 : vector<16x1024xf32>
    %cst_282 = arith.constant 5.000000e-01 : f32
    %494 = vector.broadcast %cst_282 : f32 to vector<16x1024xf32>
    %495 = arith.mulf %494, %493 : vector<16x1024xf32>
    %cst_283 = arith.constant 0.707106769 : f32
    %496 = vector.broadcast %cst_283 : f32 to vector<16x1024xf32>
    %497 = arith.mulf %493, %496 : vector<16x1024xf32>
    %498 = math.erf %497 : vector<16x1024xf32>
    %cst_284 = arith.constant 1.000000e+00 : f32
    %499 = vector.broadcast %cst_284 : f32 to vector<16x1024xf32>
    %500 = arith.addf %499, %498 : vector<16x1024xf32>
    %501 = arith.mulf %495, %500 : vector<16x1024xf32>
    %502 = vector.broadcast %1 : vector<1x1024xf32> to vector<16x1024xf32>
    %503 = arith.mulf %501, %502 : vector<16x1024xf32>
    %504 = arith.mulf %503, %501 : vector<16x1024xf32>
    %cst_285 = arith.constant dense<0.000000e+00> : vector<16xf32>
    %505 = vector.multi_reduction <add>, %504, %cst_285 [1] : vector<16x1024xf32> to vector<16xf32>
    %506 = vector.shape_cast %505 : vector<16xf32> to vector<16x1xf32>
    %507 = math.sqrt %506 : vector<16x1xf32>
    %cst_286 = arith.constant dense<0.000000e+00> : vector<1xf32>
    %508 = vector.multi_reduction <add>, %507, %cst_286 [0] : vector<16x1xf32> to vector<1xf32>
    %509 = vector.shape_cast %508 : vector<1xf32> to vector<1x1xf32>
    %cst_287 = arith.constant 1.600000e+01 : f32
    %510 = vector.broadcast %cst_287 : f32 to vector<1x1xf32>
    %511 = arith.divf %509, %510 : vector<1x1xf32>
    %cst_288 = arith.constant 9.99999997E-7 : f32
    %512 = vector.broadcast %cst_288 : f32 to vector<1x1xf32>
    %513 = arith.addf %511, %512 : vector<1x1xf32>
    %c0_289 = arith.constant 0 : index
    %c0_290 = arith.constant 0 : index
    %514 = vector.load %arg22[%c0_289, %c0_290] : memref<16x1xf32, #tpu.memory_space<vmem>>, vector<16x1xf32>
    %515 = vector.broadcast %513 : vector<1x1xf32> to vector<16x1xf32>
    %516 = arith.divf %507, %515 : vector<16x1xf32>
    %517 = arith.mulf %514, %516 : vector<16x1xf32>
    %cst_291 = arith.constant 1.000000e+00 : f32
    %518 = vector.broadcast %cst_291 : f32 to vector<16x1xf32>
    %519 = arith.addf %518, %517 : vector<16x1xf32>
    %520 = vector.broadcast %519 : vector<16x1xf32> to vector<16x1024xf32>
    %521 = arith.mulf %501, %520 : vector<16x1024xf32>
    %c0_292 = arith.constant 0 : index
    %c0_293 = arith.constant 0 : index
    %522 = vector.load %arg23[%c0_292, %c0_293] : memref<16x1xf32, #tpu.memory_space<vmem>>, vector<16x1xf32>
    %523 = vector.broadcast %522 : vector<16x1xf32> to vector<16x1024xf32>
    %524 = arith.addf %521, %523 : vector<16x1024xf32>
    %c0_294 = arith.constant 0 : index
    %c0_295 = arith.constant 0 : index
    %525 = vector.load %arg24[%c0_294, %c0_295] : memref<16x16xf32, #tpu.memory_space<vmem>>, vector<16x16xf32>
    %cst_296 = arith.constant dense<0.000000e+00> : vector<16x1024xf32>
    %526 = tpu.matmul %525, %524, %cst_296 {dimension_numbers = #tpu.dot_dimension_numbers<[1], [0], [0], [1], [0, 0, 1, 1], [], []>} : vector<16x16xf32>, vector<16x1024xf32>, vector<16x1024xf32> -> vector<16x1024xf32>
    %c0_297 = arith.constant 0 : index
    %c0_298 = arith.constant 0 : index
    %527 = vector.load %arg25[%c0_297, %c0_298] : memref<16x1xf32, #tpu.memory_space<vmem>>, vector<16x1xf32>
    %528 = vector.broadcast %527 : vector<16x1xf32> to vector<16x1024xf32>
    %529 = arith.addf %526, %528 : vector<16x1024xf32>
    %c0_299 = arith.constant 0 : index
    %c0_300 = arith.constant 0 : index
    %530 = vector.load %arg26[%c0_299, %c0_300] : memref<16x8xf32, #tpu.memory_space<vmem>>, vector<16x8xf32>
    %cst_301 = arith.constant dense<0.000000e+00> : vector<16x1024xf32>
    %531 = tpu.matmul %530, %298, %cst_301 {dimension_numbers = #tpu.dot_dimension_numbers<[1], [0], [0], [1], [0, 0, 1, 1], [], []>} : vector<16x8xf32>, vector<8x1024xf32>, vector<16x1024xf32> -> vector<16x1024xf32>
    %c0_302 = arith.constant 0 : index
    %c0_303 = arith.constant 0 : index
    %532 = vector.load %arg27[%c0_302, %c0_303] : memref<16x1xf32, #tpu.memory_space<vmem>>, vector<16x1xf32>
    %533 = vector.broadcast %532 : vector<16x1xf32> to vector<16x1024xf32>
    %534 = arith.addf %531, %533 : vector<16x1024xf32>
    %535 = arith.addf %529, %534 : vector<16x1024xf32>
    %536 = vector.broadcast %1 : vector<1x1024xf32> to vector<16x1024xf32>
    %537 = arith.mulf %535, %536 : vector<16x1024xf32>
    %c0_304 = arith.constant 0 : index
    %c0_305 = arith.constant 0 : index
    %c0_306 = arith.constant 0 : index
    %538 = vector.load %arg28[%c0_304, %c0_305, %c0_306] : memref<1x16x1024xf32, #tpu.memory_space<vmem>>, vector<1x16x1024xf32>
    %539 = vector.shape_cast %538 : vector<1x16x1024xf32> to vector<16x1024xf32>
    %540 = vector.shape_cast %537 : vector<16x1024xf32> to vector<1x16x1024xf32>
    tpu.vector_store %arg28[%c0_304, %c0_305, %c0_306], %540 {strides = array<i32>} : memref<1x16x1024xf32, #tpu.memory_space<vmem>>, vector<1x16x1024xf32>,
    return
  }
  func.func @transform_0(%arg0: i32) -> (i32, i32, i32) {
    %c0_i32 = arith.constant 0 : i32
    %c0_i32_0 = arith.constant 0 : i32
    %c0_i32_1 = arith.constant 0 : i32
    return %arg0, %c0_i32, %c0_i32_0 : i32, i32, i32
  }
  func.func @transform_1(%arg0: i32) -> (i32, i32) {
    %c0_i32 = arith.constant 0 : i32
    %c0_i32_0 = arith.constant 0 : i32
    %c0_i32_1 = arith.constant 0 : i32
    return %c0_i32, %c0_i32_0 : i32, i32
  }
  func.func @transform_2(%arg0: i32) -> (i32, i32) {
    %c0_i32 = arith.constant 0 : i32
    %c0_i32_0 = arith.constant 0 : i32
    %c0_i32_1 = arith.constant 0 : i32
    return %c0_i32, %c0_i32_0 : i32, i32
  }
  func.func @transform_3(%arg0: i32) -> (i32, i32) {
    %c0_i32 = arith.constant 0 : i32
    %c0_i32_0 = arith.constant 0 : i32
    %c0_i32_1 = arith.constant 0 : i32
    return %c0_i32, %c0_i32_0 : i32, i32
  }
  func.func @transform_4(%arg0: i32) -> (i32, i32) {
    %c0_i32 = arith.constant 0 : i32
    %c0_i32_0 = arith.constant 0 : i32
    %c0_i32_1 = arith.constant 0 : i32
    return %c0_i32, %c0_i32_0 : i32, i32
  }
  func.func @transform_5(%arg0: i32) -> (i32, i32, i32) {
    %c0_i32 = arith.constant 0 : i32
    %c0_i32_0 = arith.constant 0 : i32
    %c0_i32_1 = arith.constant 0 : i32
    %c0_i32_2 = arith.constant 0 : i32
    return %c0_i32, %c0_i32_0, %c0_i32_1 : i32, i32, i32
  }
  func.func @transform_6(%arg0: i32) -> (i32, i32) {
    %c0_i32 = arith.constant 0 : i32
    %c0_i32_0 = arith.constant 0 : i32
    %c0_i32_1 = arith.constant 0 : i32
    return %c0_i32, %c0_i32_0 : i32, i32
  }
  func.func @transform_7(%arg0: i32) -> (i32, i32) {
    %c0_i32 = arith.constant 0 : i32
    %c0_i32_0 = arith.constant 0 : i32
    %c0_i32_1 = arith.constant 0 : i32
    return %c0_i32, %c0_i32_0 : i32, i32
  }
  func.func @transform_8(%arg0: i32) -> (i32, i32) {
    %c0_i32 = arith.constant 0 : i32
    %c0_i32_0 = arith.constant 0 : i32
    %c0_i32_1 = arith.constant 0 : i32
    return %c0_i32, %c0_i32_0 : i32, i32
  }
  func.func @transform_9(%arg0: i32) -> (i32, i32) {
    %c0_i32 = arith.constant 0 : i32
    %c0_i32_0 = arith.constant 0 : i32
    %c0_i32_1 = arith.constant 0 : i32
    return %c0_i32, %c0_i32_0 : i32, i32
  }
  func.func @transform_10(%arg0: i32) -> (i32, i32) {
    %c0_i32 = arith.constant 0 : i32
    %c0_i32_0 = arith.constant 0 : i32
    %c0_i32_1 = arith.constant 0 : i32
    return %c0_i32, %c0_i32_0 : i32, i32
  }
  func.func @transform_11(%arg0: i32) -> (i32, i32) {
    %c0_i32 = arith.constant 0 : i32
    %c0_i32_0 = arith.constant 0 : i32
    %c0_i32_1 = arith.constant 0 : i32
    return %c0_i32, %c0_i32_0 : i32, i32
  }
  func.func @transform_12(%arg0: i32) -> (i32, i32) {
    %c0_i32 = arith.constant 0 : i32
    %c0_i32_0 = arith.constant 0 : i32
    %c0_i32_1 = arith.constant 0 : i32
    return %c0_i32, %c0_i32_0 : i32, i32
  }
  func.func @transform_13(%arg0: i32) -> (i32, i32) {
    %c0_i32 = arith.constant 0 : i32
    %c0_i32_0 = arith.constant 0 : i32
    %c0_i32_1 = arith.constant 0 : i32
    return %c0_i32, %c0_i32_0 : i32, i32
  }
  func.func @transform_14(%arg0: i32) -> (i32, i32) {
    %c0_i32 = arith.constant 0 : i32
    %c0_i32_0 = arith.constant 0 : i32
    %c0_i32_1 = arith.constant 0 : i32
    return %c0_i32, %c0_i32_0 : i32, i32
  }
  func.func @transform_15(%arg0: i32) -> (i32, i32, i32) {
    %c0_i32 = arith.constant 0 : i32
    %c0_i32_0 = arith.constant 0 : i32
    %c0_i32_1 = arith.constant 0 : i32
    %c0_i32_2 = arith.constant 0 : i32
    return %c0_i32, %c0_i32_0, %c0_i32_1 : i32, i32, i32
  }
  func.func @transform_16(%arg0: i32) -> (i32, i32) {
    %c0_i32 = arith.constant 0 : i32
    %c0_i32_0 = arith.constant 0 : i32
    %c0_i32_1 = arith.constant 0 : i32
    return %c0_i32, %c0_i32_0 : i32, i32
  }
  func.func @transform_17(%arg0: i32) -> (i32, i32) {
    %c0_i32 = arith.constant 0 : i32
    %c0_i32_0 = arith.constant 0 : i32
    %c0_i32_1 = arith.constant 0 : i32
    return %c0_i32, %c0_i32_0 : i32, i32
  }
  func.func @transform_18(%arg0: i32) -> (i32, i32) {
    %c0_i32 = arith.constant 0 : i32
    %c0_i32_0 = arith.constant 0 : i32
    %c0_i32_1 = arith.constant 0 : i32
    return %c0_i32, %c0_i32_0 : i32, i32
  }
  func.func @transform_19(%arg0: i32) -> (i32, i32) {
    %c0_i32 = arith.constant 0 : i32
    %c0_i32_0 = arith.constant 0 : i32
    %c0_i32_1 = arith.constant 0 : i32
    return %c0_i32, %c0_i32_0 : i32, i32
  }
  func.func @transform_20(%arg0: i32) -> (i32, i32) {
    %c0_i32 = arith.constant 0 : i32
    %c0_i32_0 = arith.constant 0 : i32
    %c0_i32_1 = arith.constant 0 : i32
    return %c0_i32, %c0_i32_0 : i32, i32
  }
  func.func @transform_21(%arg0: i32) -> (i32, i32) {
    %c0_i32 = arith.constant 0 : i32
    %c0_i32_0 = arith.constant 0 : i32
    %c0_i32_1 = arith.constant 0 : i32
    return %c0_i32, %c0_i32_0 : i32, i32
  }
  func.func @transform_22(%arg0: i32) -> (i32, i32) {
    %c0_i32 = arith.constant 0 : i32
    %c0_i32_0 = arith.constant 0 : i32
    %c0_i32_1 = arith.constant 0 : i32
    return %c0_i32, %c0_i32_0 : i32, i32
  }
  func.func @transform_23(%arg0: i32) -> (i32, i32) {
    %c0_i32 = arith.constant 0 : i32
    %c0_i32_0 = arith.constant 0 : i32
    %c0_i32_1 = arith.constant 0 : i32
    return %c0_i32, %c0_i32_0 : i32, i32
  }
  func.func @transform_24(%arg0: i32) -> (i32, i32) {
    %c0_i32 = arith.constant 0 : i32
    %c0_i32_0 = arith.constant 0 : i32
    %c0_i32_1 = arith.constant 0 : i32
    return %c0_i32, %c0_i32_0 : i32, i32
  }
  func.func @transform_25(%arg0: i32) -> (i32, i32) {
    %c0_i32 = arith.constant 0 : i32
    %c0_i32_0 = arith.constant 0 : i32
    %c0_i32_1 = arith.constant 0 : i32
    return %c0_i32, %c0_i32_0 : i32, i32
  }
  func.func @transform_26(%arg0: i32) -> (i32, i32) {
    %c0_i32 = arith.constant 0 : i32
    %c0_i32_0 = arith.constant 0 : i32
    %c0_i32_1 = arith.constant 0 : i32
    return %c0_i32, %c0_i32_0 : i32, i32
  }
  func.func @transform_27(%arg0: i32) -> (i32, i32, i32) {
    %c0_i32 = arith.constant 0 : i32
    %c0_i32_0 = arith.constant 0 : i32
    %c0_i32_1 = arith.constant 0 : i32
    return %arg0, %c0_i32, %c0_i32_0 : i32, i32, i32
  }
}

</mosaic_0001>

<llo_original>
// kernel: encoder_forward.1
$region0: #{encoder_forward.1}
  #allocation0 [shape = 'u32[]', space=smem, size = 0x4, offset = 0x4, fixed_abs, tag = 'smem constant byte address 0x4 - core index']
  #allocation1 [shape = 'u32[72,128]{1,0:T(1,128)}', space=vmem, size = 0x9000, scoped, tag = 'internal scratch']
  #allocation2 [shape = 'f32[216,1024]{1,0:T(8,128)}', space=vmem, size = 0xd8000, scoped, tag = 'scratch operand']
  %s0 = inlined_call_operand.vmem [shape: f32[2,8,1024], index: 0, kind: input, shape index: {}]
  %s1 = inlined_call_operand.vmem [shape: f32[1,1024], index: 1, kind: input, shape index: {}]
  %s2 = inlined_call_operand.vmem [shape: f32[1,1024], index: 2, kind: input, shape index: {}]
  %s3 = inlined_call_operand.vmem [shape: f32[8,216], index: 3, kind: input, shape index: {}]
  %s4 = inlined_call_operand.vmem [shape: f32[8,1], index: 4, kind: input, shape index: {}]
  %s5 = inlined_call_operand.vmem [shape: f32[27,8,1], index: 5, kind: input, shape index: {}]
  %s6 = inlined_call_operand.vmem [shape: f32[8,1], index: 6, kind: input, shape index: {}]
  %s7 = inlined_call_operand.vmem [shape: f32[8,1], index: 7, kind: input, shape index: {}]
  %s8 = inlined_call_operand.vmem [shape: f32[8,1], index: 8, kind: input, shape index: {}]
  %s9 = inlined_call_operand.vmem [shape: f32[8,8], index: 9, kind: input, shape index: {}]
  %s10 = inlined_call_operand.vmem [shape: f32[8,1], index: 10, kind: input, shape index: {}]
  %s11 = inlined_call_operand.vmem [shape: f32[8,1], index: 11, kind: input, shape index: {}]
  %s12 = inlined_call_operand.vmem [shape: f32[8,1], index: 12, kind: input, shape index: {}]
  %s13 = inlined_call_operand.vmem [shape: f32[8,8], index: 13, kind: input, shape index: {}]
  %s14 = inlined_call_operand.vmem [shape: f32[8,1], index: 14, kind: input, shape index: {}]
  %s15 = inlined_call_operand.vmem [shape: f32[27,8,1], index: 15, kind: input, shape index: {}]
  %s16 = inlined_call_operand.vmem [shape: f32[8,1], index: 16, kind: input, shape index: {}]
  %s17 = inlined_call_operand.vmem [shape: f32[8,1], index: 17, kind: input, shape index: {}]
  %s18 = inlined_call_operand.vmem [shape: f32[8,1], index: 18, kind: input, shape index: {}]
  %s19 = inlined_call_operand.vmem [shape: f32[16,8], index: 19, kind: input, shape index: {}]
  %s20 = inlined_call_operand.vmem [shape: f32[16,1], index: 20, kind: input, shape index: {}]
  %s21 = inlined_call_operand.vmem [shape: f32[16,1], index: 21, kind: input, shape index: {}]
  %s22 = inlined_call_operand.vmem [shape: f32[16,1], index: 22, kind: input, shape index: {}]
  %s23 = inlined_call_operand.vmem [shape: f32[16,16], index: 23, kind: input, shape index: {}]
  %s24 = inlined_call_operand.vmem [shape: f32[16,1], index: 24, kind: input, shape index: {}]
  %s25 = inlined_call_operand.vmem [shape: f32[16,8], index: 25, kind: input, shape index: {}]
  %s26 = inlined_call_operand.vmem [shape: f32[16,1], index: 26, kind: input, shape index: {}]
  %s27 = inlined_call_operand.vmem [shape: f32[2,16,1024], index: 27, kind: output, shape index: {}]
  %s28 = sld [smem:[#allocation0]]
  $region141: #{encoder_forward.1} parent=0
    _
  %s30 = ssub.s32 1, %s28
  %s31 = scalar_select 0, %s30, %s28
  loop: start=0, step=1, limit=4
  $region2: #{encoder_forward.1} parent=0 // loop_pre_header
    _
  $region3: #{encoder_forward.1} parent=0 // loop_header
    %s33 = sphi 0, %s37
    %p34 = scmp.ge.s32.totalorder %s33, 4
    %s43 = sphi 0, %s45
    %s46 = sphi 0, %s43
    %s47 = sphi 0, %s46
    %s63 = sphi 0, %s47
    %s67 = sphi 0, %s67
    %s69 = sphi 0, %s67
    %s70 = sphi 0, %s69
    %s84 = sphi 0, %s70
    %s88 = sphi 0, %s88
    %s90 = sphi 0, %s88
    %s91 = sphi 0, %s90
    %s105 = sphi 0, %s91
    %s109 = sphi 0, %s109
    %s111 = sphi 0, %s109
    %s112 = sphi 0, %s111
    %s126 = sphi 0, %s112
    %s130 = sphi 0, %s130
    %s132 = sphi 0, %s130
    %s133 = sphi 0, %s132
    %s147 = sphi 0, %s133
    %s151 = sphi 0, %s151
    %s153 = sphi 0, %s151
    %s154 = sphi 0, %s153
    %s168 = sphi 0, %s154
    %s172 = sphi 0, %s172
    %s174 = sphi 0, %s172
    %s175 = sphi 0, %s174
    %s189 = sphi 0, %s175
    %s193 = sphi 0, %s193
    %s195 = sphi 0, %s193
    %s196 = sphi 0, %s195
    %s210 = sphi 0, %s196
    %s214 = sphi 0, %s214
    %s216 = sphi 0, %s214
    %s217 = sphi 0, %s216
    %s231 = sphi 0, %s217
    %s235 = sphi 0, %s235
    %s237 = sphi 0, %s235
    %s238 = sphi 0, %s237
    %s252 = sphi 0, %s238
    %s256 = sphi 0, %s256
    %s258 = sphi 0, %s256
    %s259 = sphi 0, %s258
    %s273 = sphi 0, %s259
    %s277 = sphi 0, %s277
    %s279 = sphi 0, %s277
    %s280 = sphi 0, %s279
    %s294 = sphi 0, %s280
    %s298 = sphi 0, %s298
    %s300 = sphi 0, %s298
    %s301 = sphi 0, %s300
    %s315 = sphi 0, %s301
    %s319 = sphi 0, %s319
    %s321 = sphi 0, %s319
    %s322 = sphi 0, %s321
    %s336 = sphi 0, %s322
    %s340 = sphi 0, %s340
    %s342 = sphi 0, %s340
    %s343 = sphi 0, %s342
    %s357 = sphi 0, %s343
    %s361 = sphi 0, %s361
    %s363 = sphi 0, %s361
    %s364 = sphi 0, %s363
    %s378 = sphi 0, %s364
    %s382 = sphi 0, %s382
    %s384 = sphi 0, %s382
    %s385 = sphi 0, %s384
    %s399 = sphi 0, %s385
    %s403 = sphi 0, %s403
    %s405 = sphi 0, %s403
    %s406 = sphi 0, %s405
    %s420 = sphi 0, %s406
    %s424 = sphi 0, %s424
    %s426 = sphi 0, %s424
    %s427 = sphi 0, %s426
    %s441 = sphi 0, %s427
    %s445 = sphi 0, %s445
    %s447 = sphi 0, %s445
    %s448 = sphi 0, %s447
    %s462 = sphi 0, %s448
    %s466 = sphi 0, %s466
    %s468 = sphi 0, %s466
    %s469 = sphi 0, %s468
    %s483 = sphi 0, %s469
    %s487 = sphi 0, %s487
    %s489 = sphi 0, %s487
    %s490 = sphi 0, %s489
    %s504 = sphi 0, %s490
    %s508 = sphi 0, %s508
    %s510 = sphi 0, %s508
    %s511 = sphi 0, %s510
    %s525 = sphi 0, %s511
    %s529 = sphi 0, %s529
    %s531 = sphi 0, %s529
    %s532 = sphi 0, %s531
    %s546 = sphi 0, %s532
    %s550 = sphi 0, %s550
    %s552 = sphi 0, %s550
    %s553 = sphi 0, %s552
    %s567 = sphi 0, %s553
    %s571 = sphi 0, %s571
    %s573 = sphi 0, %s571
    %s574 = sphi 0, %s573
    %s588 = sphi 0, %s574
    %s592 = sphi 0, %s592
    %s594 = sphi 0, %s592
    %s595 = sphi 0, %s594
    %s609 = sphi 0, %s595
    %s615 = sphi 0, %s617
    %s618 = sphi 0, %s615
    %s619 = sphi 0, %s618
    %s635 = sphi 0, %s619
  $region4: #{encoder_forward.1} parent=0 // loop_header_branch
    %36 = sbr.rel (%p34) target = $region8
  $region5: #{encoder_forward.1} parent=0 // loop_body
    %s38 = ssub.s32 %s33, 1
    %s39 = ssub.s32 %s33, 2
    %s40 = sadd.s32 %s33, 1
    %s41 = ssub.s32 %s33, %s40
    %p42 = scmp.eq.s32.totalorder %s41, 0
    %s44 = sadd.s32 %s43, 1
    %s45 = scalar_select %p42, %s43, %s44
    %p48 = pneg %p42
    %p49 = scmp.eq.s32.totalorder %s33, 1
    %p50 = por %p48, %p49
    %p51 = scmp.ne.s32.totalorder %s43, %s46
    %p52 = scmp.eq.s32.totalorder %s33, 0
    %p53 = por %p51, %p52
    %p54 = scmp.ne.s32.totalorder %s43, %s46
    %p55 = scmp.eq.s32.totalorder %s38, 1
    %p56 = por %p54, %p55
    %p57 = scmp.ne.s32.totalorder %s46, %s47
    %p58 = scmp.eq.s32.totalorder %s38, 0
    %p59 = por %p57, %p58
    %p60 = scmp.ne.s32.totalorder %s46, %s47
    %p61 = scmp.eq.s32.totalorder %s39, 1
    %p62 = por %p60, %p61
    %p64 = scmp.ne.s32.totalorder %s47, %s63
    %p65 = scmp.eq.s32.totalorder %s39, 0
    %p66 = por %p64, %p65
    %s68 = sadd.s32 %s67, 1
    %p71 = scmp.eq.s32.totalorder %s33, 1
    %p72 = scmp.ne.s32.totalorder %s67, %s69
    %p73 = scmp.eq.s32.totalorder %s33, 0
    %p74 = por %p72, %p73
    %p75 = scmp.ne.s32.totalorder %s67, %s69
    %p76 = scmp.eq.s32.totalorder %s38, 1
    %p77 = por %p75, %p76
    %p78 = scmp.ne.s32.totalorder %s69, %s70
    %p79 = scmp.eq.s32.totalorder %s38, 0
    %p80 = por %p78, %p79
    %p81 = scmp.ne.s32.totalorder %s69, %s70
    %p82 = scmp.eq.s32.totalorder %s39, 1
    %p83 = por %p81, %p82
    %p85 = scmp.ne.s32.totalorder %s70, %s84
    %p86 = scmp.eq.s32.totalorder %s39, 0
    %p87 = por %p85, %p86
    %s89 = sadd.s32 %s88, 1
    %p92 = scmp.eq.s32.totalorder %s33, 1
    %p93 = scmp.ne.s32.totalorder %s88, %s90
    %p94 = scmp.eq.s32.totalorder %s33, 0
    %p95 = por %p93, %p94
    %p96 = scmp.ne.s32.totalorder %s88, %s90
    %p97 = scmp.eq.s32.totalorder %s38, 1
    %p98 = por %p96, %p97
    %p99 = scmp.ne.s32.totalorder %s90, %s91
    %p100 = scmp.eq.s32.totalorder %s38, 0
    %p101 = por %p99, %p100
    %p102 = scmp.ne.s32.totalorder %s90, %s91
    %p103 = scmp.eq.s32.totalorder %s39, 1
    %p104 = por %p102, %p103
    %p106 = scmp.ne.s32.totalorder %s91, %s105
    %p107 = scmp.eq.s32.totalorder %s39, 0
    %p108 = por %p106, %p107
    %s110 = sadd.s32 %s109, 1
    %p113 = scmp.eq.s32.totalorder %s33, 1
    %p114 = scmp.ne.s32.totalorder %s109, %s111
    %p115 = scmp.eq.s32.totalorder %s33, 0
    %p116 = por %p114, %p115
    %p117 = scmp.ne.s32.totalorder %s109, %s111
    %p118 = scmp.eq.s32.totalorder %s38, 1
    %p119 = por %p117, %p118
    %p120 = scmp.ne.s32.totalorder %s111, %s112
    %p121 = scmp.eq.s32.totalorder %s38, 0
    %p122 = por %p120, %p121
    %p123 = scmp.ne.s32.totalorder %s111, %s112
    %p124 = scmp.eq.s32.totalorder %s39, 1
    %p125 = por %p123, %p124
    %p127 = scmp.ne.s32.totalorder %s112, %s126
    %p128 = scmp.eq.s32.totalorder %s39, 0
    %p129 = por %p127, %p128
    %s131 = sadd.s32 %s130, 1
    %p134 = scmp.eq.s32.totalorder %s33, 1
    %p135 = scmp.ne.s32.totalorder %s130, %s132
    %p136 = scmp.eq.s32.totalorder %s33, 0
    %p137 = por %p135, %p136
    %p138 = scmp.ne.s32.totalorder %s130, %s132
    %p139 = scmp.eq.s32.totalorder %s38, 1
    %p140 = por %p138, %p139
    %p141 = scmp.ne.s32.totalorder %s132, %s133
    %p142 = scmp.eq.s32.totalorder %s38, 0
    %p143 = por %p141, %p142
    %p144 = scmp.ne.s32.totalorder %s132, %s133
    %p145 = scmp.eq.s32.totalorder %s39, 1
    %p146 = por %p144, %p145
    %p148 = scmp.ne.s32.totalorder %s133, %s147
    %p149 = scmp.eq.s32.totalorder %s39, 0
    %p150 = por %p148, %p149
    %s152 = sadd.s32 %s151, 1
    %p155 = scmp.eq.s32.totalorder %s33, 1
    %p156 = scmp.ne.s32.totalorder %s151, %s153
    %p157 = scmp.eq.s32.totalorder %s33, 0
    %p158 = por %p156, %p157
    %p159 = scmp.ne.s32.totalorder %s151, %s153
    %p160 = scmp.eq.s32.totalorder %s38, 1
    %p161 = por %p159, %p160
    %p162 = scmp.ne.s32.totalorder %s153, %s154
    %p163 = scmp.eq.s32.totalorder %s38, 0
    %p164 = por %p162, %p163
    %p165 = scmp.ne.s32.totalorder %s153, %s154
    %p166 = scmp.eq.s32.totalorder %s39, 1
    %p167 = por %p165, %p166
    %p169 = scmp.ne.s32.totalorder %s154, %s168
    %p170 = scmp.eq.s32.totalorder %s39, 0
    %p171 = por %p169, %p170
    %s173 = sadd.s32 %s172, 1
    %p176 = scmp.eq.s32.totalorder %s33, 1
    %p177 = scmp.ne.s32.totalorder %s172, %s174
    %p178 = scmp.eq.s32.totalorder %s33, 0
    %p179 = por %p177, %p178
    %p180 = scmp.ne.s32.totalorder %s172, %s174
    %p181 = scmp.eq.s32.totalorder %s38, 1
    %p182 = por %p180, %p181
    %p183 = scmp.ne.s32.totalorder %s174, %s175
    %p184 = scmp.eq.s32.totalorder %s38, 0
    %p185 = por %p183, %p184
    %p186 = scmp.ne.s32.totalorder %s174, %s175
    %p187 = scmp.eq.s32.totalorder %s39, 1
    %p188 = por %p186, %p187
    %p190 = scmp.ne.s32.totalorder %s175, %s189
    %p191 = scmp.eq.s32.totalorder %s39, 0
    %p192 = por %p190, %p191
    %s194 = sadd.s32 %s193, 1
    %p197 = scmp.eq.s32.totalorder %s33, 1
    %p198 = scmp.ne.s32.totalorder %s193, %s195
    %p199 = scmp.eq.s32.totalorder %s33, 0
    %p200 = por %p198, %p199
    %p201 = scmp.ne.s32.totalorder %s193, %s195
    %p202 = scmp.eq.s32.totalorder %s38, 1
    %p203 = por %p201, %p202
    %p204 = scmp.ne.s32.totalorder %s195, %s196
    %p205 = scmp.eq.s32.totalorder %s38, 0
    %p206 = por %p204, %p205
    %p207 = scmp.ne.s32.totalorder %s195, %s196
    %p208 = scmp.eq.s32.totalorder %s39, 1
    %p209 = por %p207, %p208
    %p211 = scmp.ne.s32.totalorder %s196, %s210
    %p212 = scmp.eq.s32.totalorder %s39, 0
    %p213 = por %p211, %p212
    %s215 = sadd.s32 %s214, 1
    %p218 = scmp.eq.s32.totalorder %s33, 1
    %p219 = scmp.ne.s32.totalorder %s214, %s216
    %p220 = scmp.eq.s32.totalorder %s33, 0
    %p221 = por %p219, %p220
    %p222 = scmp.ne.s32.totalorder %s214, %s216
    %p223 = scmp.eq.s32.totalorder %s38, 1
    %p224 = por %p222, %p223
    %p225 = scmp.ne.s32.totalorder %s216, %s217
    %p226 = scmp.eq.s32.totalorder %s38, 0
    %p227 = por %p225, %p226
    %p228 = scmp.ne.s32.totalorder %s216, %s217
    %p229 = scmp.eq.s32.totalorder %s39, 1
    %p230 = por %p228, %p229
    %p232 = scmp.ne.s32.totalorder %s217, %s231
    %p233 = scmp.eq.s32.totalorder %s39, 0
    %p234 = por %p232, %p233
    %s236 = sadd.s32 %s235, 1
    %p239 = scmp.eq.s32.totalorder %s33, 1
    %p240 = scmp.ne.s32.totalorder %s235, %s237
    %p241 = scmp.eq.s32.totalorder %s33, 0
    %p242 = por %p240, %p241
    %p243 = scmp.ne.s32.totalorder %s235, %s237
    %p244 = scmp.eq.s32.totalorder %s38, 1
    %p245 = por %p243, %p244
    %p246 = scmp.ne.s32.totalorder %s237, %s238
    %p247 = scmp.eq.s32.totalorder %s38, 0
    %p248 = por %p246, %p247
    %p249 = scmp.ne.s32.totalorder %s237, %s238
    %p250 = scmp.eq.s32.totalorder %s39, 1
    %p251 = por %p249, %p250
    %p253 = scmp.ne.s32.totalorder %s238, %s252
    %p254 = scmp.eq.s32.totalorder %s39, 0
    %p255 = por %p253, %p254
    %s257 = sadd.s32 %s256, 1
    %p260 = scmp.eq.s32.totalorder %s33, 1
    %p261 = scmp.ne.s32.totalorder %s256, %s258
    %p262 = scmp.eq.s32.totalorder %s33, 0
    %p263 = por %p261, %p262
    %p264 = scmp.ne.s32.totalorder %s256, %s258
    %p265 = scmp.eq.s32.totalorder %s38, 1
    %p266 = por %p264, %p265
    %p267 = scmp.ne.s32.totalorder %s258, %s259
    %p268 = scmp.eq.s32.totalorder %s38, 0
    %p269 = por %p267, %p268
    %p270 = scmp.ne.s32.totalorder %s258, %s259
    %p271 = scmp.eq.s32.totalorder %s39, 1
    %p272 = por %p270, %p271
    %p274 = scmp.ne.s32.totalorder %s259, %s273
    %p275 = scmp.eq.s32.totalorder %s39, 0
    %p276 = por %p274, %p275
    %s278 = sadd.s32 %s277, 1
    %p281 = scmp.eq.s32.totalorder %s33, 1
    %p282 = scmp.ne.s32.totalorder %s277, %s279
    %p283 = scmp.eq.s32.totalorder %s33, 0
    %p284 = por %p282, %p283
    %p285 = scmp.ne.s32.totalorder %s277, %s279
    %p286 = scmp.eq.s32.totalorder %s38, 1
    %p287 = por %p285, %p286
    %p288 = scmp.ne.s32.totalorder %s279, %s280
    %p289 = scmp.eq.s32.totalorder %s38, 0
    %p290 = por %p288, %p289
    %p291 = scmp.ne.s32.totalorder %s279, %s280
    %p292 = scmp.eq.s32.totalorder %s39, 1
    %p293 = por %p291, %p292
    %p295 = scmp.ne.s32.totalorder %s280, %s294
    %p296 = scmp.eq.s32.totalorder %s39, 0
    %p297 = por %p295, %p296
    %s299 = sadd.s32 %s298, 1
    %p302 = scmp.eq.s32.totalorder %s33, 1
    %p303 = scmp.ne.s32.totalorder %s298, %s300
    %p304 = scmp.eq.s32.totalorder %s33, 0
    %p305 = por %p303, %p304
    %p306 = scmp.ne.s32.totalorder %s298, %s300
    %p307 = scmp.eq.s32.totalorder %s38, 1
    %p308 = por %p306, %p307
    %p309 = scmp.ne.s32.totalorder %s300, %s301
    %p310 = scmp.eq.s32.totalorder %s38, 0
    %p311 = por %p309, %p310
    %p312 = scmp.ne.s32.totalorder %s300, %s301
    %p313 = scmp.eq.s32.totalorder %s39, 1
    %p314 = por %p312, %p313
    %p316 = scmp.ne.s32.totalorder %s301, %s315
    %p317 = scmp.eq.s32.totalorder %s39, 0
    %p318 = por %p316, %p317
    %s320 = sadd.s32 %s319, 1
    %p323 = scmp.eq.s32.totalorder %s33, 1
    %p324 = scmp.ne.s32.totalorder %s319, %s321
    %p325 = scmp.eq.s32.totalorder %s33, 0
    %p326 = por %p324, %p325
    %p327 = scmp.ne.s32.totalorder %s319, %s321
    %p328 = scmp.eq.s32.totalorder %s38, 1
    %p329 = por %p327, %p328
    %p330 = scmp.ne.s32.totalorder %s321, %s322
    %p331 = scmp.eq.s32.totalorder %s38, 0
    %p332 = por %p330, %p331
    %p333 = scmp.ne.s32.totalorder %s321, %s322
    %p334 = scmp.eq.s32.totalorder %s39, 1
    %p335 = por %p333, %p334
    %p337 = scmp.ne.s32.totalorder %s322, %s336
    %p338 = scmp.eq.s32.totalorder %s39, 0
    %p339 = por %p337, %p338
    %s341 = sadd.s32 %s340, 1
    %p344 = scmp.eq.s32.totalorder %s33, 1
    %p345 = scmp.ne.s32.totalorder %s340, %s342
    %p346 = scmp.eq.s32.totalorder %s33, 0
    %p347 = por %p345, %p346
    %p348 = scmp.ne.s32.totalorder %s340, %s342
    %p349 = scmp.eq.s32.totalorder %s38, 1
    %p350 = por %p348, %p349
    %p351 = scmp.ne.s32.totalorder %s342, %s343
    %p352 = scmp.eq.s32.totalorder %s38, 0
    %p353 = por %p351, %p352
    %p354 = scmp.ne.s32.totalorder %s342, %s343
    %p355 = scmp.eq.s32.totalorder %s39, 1
    %p356 = por %p354, %p355
    %p358 = scmp.ne.s32.totalorder %s343, %s357
    %p359 = scmp.eq.s32.totalorder %s39, 0
    %p360 = por %p358, %p359
    %s362 = sadd.s32 %s361, 1
    %p365 = scmp.eq.s32.totalorder %s33, 1
    %p366 = scmp.ne.s32.totalorder %s361, %s363
    %p367 = scmp.eq.s32.totalorder %s33, 0
    %p368 = por %p366, %p367
    %p369 = scmp.ne.s32.totalorder %s361, %s363
    %p370 = scmp.eq.s32.totalorder %s38, 1
    %p371 = por %p369, %p370
    %p372 = scmp.ne.s32.totalorder %s363, %s364
    %p373 = scmp.eq.s32.totalorder %s38, 0
    %p374 = por %p372, %p373
    %p375 = scmp.ne.s32.totalorder %s363, %s364
    %p376 = scmp.eq.s32.totalorder %s39, 1
    %p377 = por %p375, %p376
    %p379 = scmp.ne.s32.totalorder %s364, %s378
    %p380 = scmp.eq.s32.totalorder %s39, 0
    %p381 = por %p379, %p380
    %s383 = sadd.s32 %s382, 1
    %p386 = scmp.eq.s32.totalorder %s33, 1
    %p387 = scmp.ne.s32.totalorder %s382, %s384
    %p388 = scmp.eq.s32.totalorder %s33, 0
    %p389 = por %p387, %p388
    %p390 = scmp.ne.s32.totalorder %s382, %s384
    %p391 = scmp.eq.s32.totalorder %s38, 1
    %p392 = por %p390, %p391
    %p393 = scmp.ne.s32.totalorder %s384, %s385
    %p394 = scmp.eq.s32.totalorder %s38, 0
    %p395 = por %p393, %p394
    %p396 = scmp.ne.s32.totalorder %s384, %s385
    %p397 = scmp.eq.s32.totalorder %s39, 1
    %p398 = por %p396, %p397
    %p400 = scmp.ne.s32.totalorder %s385, %s399
    %p401 = scmp.eq.s32.totalorder %s39, 0
    %p402 = por %p400, %p401
    %s404 = sadd.s32 %s403, 1
    %p407 = scmp.eq.s32.totalorder %s33, 1
    %p408 = scmp.ne.s32.totalorder %s403, %s405
    %p409 = scmp.eq.s32.totalorder %s33, 0
    %p410 = por %p408, %p409
    %p411 = scmp.ne.s32.totalorder %s403, %s405
    %p412 = scmp.eq.s32.totalorder %s38, 1
    %p413 = por %p411, %p412
    %p414 = scmp.ne.s32.totalorder %s405, %s406
    %p415 = scmp.eq.s32.totalorder %s38, 0
    %p416 = por %p414, %p415
    %p417 = scmp.ne.s32.totalorder %s405, %s406
    %p418 = scmp.eq.s32.totalorder %s39, 1
    %p419 = por %p417, %p418
    %p421 = scmp.ne.s32.totalorder %s406, %s420
    %p422 = scmp.eq.s32.totalorder %s39, 0
    %p423 = por %p421, %p422
    %s425 = sadd.s32 %s424, 1
    %p428 = scmp.eq.s32.totalorder %s33, 1
    %p429 = scmp.ne.s32.totalorder %s424, %s426
    %p430 = scmp.eq.s32.totalorder %s33, 0
    %p431 = por %p429, %p430
    %p432 = scmp.ne.s32.totalorder %s424, %s426
    %p433 = scmp.eq.s32.totalorder %s38, 1
    %p434 = por %p432, %p433
    %p435 = scmp.ne.s32.totalorder %s426, %s427
    %p436 = scmp.eq.s32.totalorder %s38, 0
    %p437 = por %p435, %p436
    %p438 = scmp.ne.s32.totalorder %s426, %s427
    %p439 = scmp.eq.s32.totalorder %s39, 1
    %p440 = por %p438, %p439
    %p442 = scmp.ne.s32.totalorder %s427, %s441
    %p443 = scmp.eq.s32.totalorder %s39, 0
    %p444 = por %p442, %p443
    %s446 = sadd.s32 %s445, 1
    %p449 = scmp.eq.s32.totalorder %s33, 1
    %p450 = scmp.ne.s32.totalorder %s445, %s447
    %p451 = scmp.eq.s32.totalorder %s33, 0
    %p452 = por %p450, %p451
    %p453 = scmp.ne.s32.totalorder %s445, %s447
    %p454 = scmp.eq.s32.totalorder %s38, 1
    %p455 = por %p453, %p454
    %p456 = scmp.ne.s32.totalorder %s447, %s448
    %p457 = scmp.eq.s32.totalorder %s38, 0
    %p458 = por %p456, %p457
    %p459 = scmp.ne.s32.totalorder %s447, %s448
    %p460 = scmp.eq.s32.totalorder %s39, 1
    %p461 = por %p459, %p460
    %p463 = scmp.ne.s32.totalorder %s448, %s462
    %p464 = scmp.eq.s32.totalorder %s39, 0
    %p465 = por %p463, %p464
    %s467 = sadd.s32 %s466, 1
    %p470 = scmp.eq.s32.totalorder %s33, 1
    %p471 = scmp.ne.s32.totalorder %s466, %s468
    %p472 = scmp.eq.s32.totalorder %s33, 0
    %p473 = por %p471, %p472
    %p474 = scmp.ne.s32.totalorder %s466, %s468
    %p475 = scmp.eq.s32.totalorder %s38, 1
    %p476 = por %p474, %p475
    %p477 = scmp.ne.s32.totalorder %s468, %s469
    %p478 = scmp.eq.s32.totalorder %s38, 0
    %p479 = por %p477, %p478
    %p480 = scmp.ne.s32.totalorder %s468, %s469
    %p481 = scmp.eq.s32.totalorder %s39, 1
    %p482 = por %p480, %p481
    %p484 = scmp.ne.s32.totalorder %s469, %s483
    %p485 = scmp.eq.s32.totalorder %s39, 0
    %p486 = por %p484, %p485
    %s488 = sadd.s32 %s487, 1
    %p491 = scmp.eq.s32.totalorder %s33, 1
    %p492 = scmp.ne.s32.totalorder %s487, %s489
    %p493 = scmp.eq.s32.totalorder %s33, 0
    %p494 = por %p492, %p493
    %p495 = scmp.ne.s32.totalorder %s487, %s489
    %p496 = scmp.eq.s32.totalorder %s38, 1
    %p497 = por %p495, %p496
    %p498 = scmp.ne.s32.totalorder %s489, %s490
    %p499 = scmp.eq.s32.totalorder %s38, 0
    %p500 = por %p498, %p499
    %p501 = scmp.ne.s32.totalorder %s489, %s490
    %p502 = scmp.eq.s32.totalorder %s39, 1
    %p503 = por %p501, %p502
    %p505 = scmp.ne.s32.totalorder %s490, %s504
    %p506 = scmp.eq.s32.totalorder %s39, 0
    %p507 = por %p505, %p506
    %s509 = sadd.s32 %s508, 1
    %p512 = scmp.eq.s32.totalorder %s33, 1
    %p513 = scmp.ne.s32.totalorder %s508, %s510
    %p514 = scmp.eq.s32.totalorder %s33, 0
    %p515 = por %p513, %p514
    %p516 = scmp.ne.s32.totalorder %s508, %s510
    %p517 = scmp.eq.s32.totalorder %s38, 1
    %p518 = por %p516, %p517
    %p519 = scmp.ne.s32.totalorder %s510, %s511
    %p520 = scmp.eq.s32.totalorder %s38, 0
    %p521 = por %p519, %p520
    %p522 = scmp.ne.s32.totalorder %s510, %s511
    %p523 = scmp.eq.s32.totalorder %s39, 1
    %p524 = por %p522, %p523
    %p526 = scmp.ne.s32.totalorder %s511, %s525
    %p527 = scmp.eq.s32.totalorder %s39, 0
    %p528 = por %p526, %p527
    %s530 = sadd.s32 %s529, 1
    %p533 = scmp.eq.s32.totalorder %s33, 1
    %p534 = scmp.ne.s32.totalorder %s529, %s531
    %p535 = scmp.eq.s32.totalorder %s33, 0
    %p536 = por %p534, %p535
    %p537 = scmp.ne.s32.totalorder %s529, %s531
    %p538 = scmp.eq.s32.totalorder %s38, 1
    %p539 = por %p537, %p538
    %p540 = scmp.ne.s32.totalorder %s531, %s532
    %p541 = scmp.eq.s32.totalorder %s38, 0
    %p542 = por %p540, %p541
    %p543 = scmp.ne.s32.totalorder %s531, %s532
    %p544 = scmp.eq.s32.totalorder %s39, 1
    %p545 = por %p543, %p544
    %p547 = scmp.ne.s32.totalorder %s532, %s546
    %p548 = scmp.eq.s32.totalorder %s39, 0
    %p549 = por %p547, %p548
    %s551 = sadd.s32 %s550, 1
    %p554 = scmp.eq.s32.totalorder %s33, 1
    %p555 = scmp.ne.s32.totalorder %s550, %s552
    %p556 = scmp.eq.s32.totalorder %s33, 0
    %p557 = por %p555, %p556
    %p558 = scmp.ne.s32.totalorder %s550, %s552
    %p559 = scmp.eq.s32.totalorder %s38, 1
    %p560 = por %p558, %p559
    %p561 = scmp.ne.s32.totalorder %s552, %s553
    %p562 = scmp.eq.s32.totalorder %s38, 0
    %p563 = por %p561, %p562
    %p564 = scmp.ne.s32.totalorder %s552, %s553
    %p565 = scmp.eq.s32.totalorder %s39, 1
    %p566 = por %p564, %p565
    %p568 = scmp.ne.s32.totalorder %s553, %s567
    %p569 = scmp.eq.s32.totalorder %s39, 0
    %p570 = por %p568, %p569
    %s572 = sadd.s32 %s571, 1
    %p575 = scmp.eq.s32.totalorder %s33, 1
    %p576 = scmp.ne.s32.totalorder %s571, %s573
    %p577 = scmp.eq.s32.totalorder %s33, 0
    %p578 = por %p576, %p577
    %p579 = scmp.ne.s32.totalorder %s571, %s573
    %p580 = scmp.eq.s32.totalorder %s38, 1
    %p581 = por %p579, %p580
    %p582 = scmp.ne.s32.totalorder %s573, %s574
    %p583 = scmp.eq.s32.totalorder %s38, 0
    %p584 = por %p582, %p583
    %p585 = scmp.ne.s32.totalorder %s573, %s574
    %p586 = scmp.eq.s32.totalorder %s39, 1
    %p587 = por %p585, %p586
    %p589 = scmp.ne.s32.totalorder %s574, %s588
    %p590 = scmp.eq.s32.totalorder %s39, 0
    %p591 = por %p589, %p590
    %s593 = sadd.s32 %s592, 1
    %p596 = scmp.eq.s32.totalorder %s33, 1
    %p597 = scmp.ne.s32.totalorder %s592, %s594
    %p598 = scmp.eq.s32.totalorder %s33, 0
    %p599 = por %p597, %p598
    %p600 = scmp.ne.s32.totalorder %s592, %s594
    %p601 = scmp.eq.s32.totalorder %s38, 1
    %p602 = por %p600, %p601
    %p603 = scmp.ne.s32.totalorder %s594, %s595
    %p604 = scmp.eq.s32.totalorder %s38, 0
    %p605 = por %p603, %p604
    %p606 = scmp.ne.s32.totalorder %s594, %s595
    %p607 = scmp.eq.s32.totalorder %s39, 1
    %p608 = por %p606, %p607
    %p610 = scmp.ne.s32.totalorder %s595, %s609
    %p611 = scmp.eq.s32.totalorder %s39, 0
    %p612 = por %p610, %p611
    %s613 = ssub.s32 %s33, %s40
    %p614 = scmp.eq.s32.totalorder %s613, 0
    %s616 = sadd.s32 %s615, 1
    %s617 = scalar_select %p614, %s615, %s616
    %p620 = pneg %p614
    %p621 = scmp.eq.s32.totalorder %s33, 1
    %p622 = por %p620, %p621
    %p623 = scmp.ne.s32.totalorder %s615, %s618
    %p624 = scmp.eq.s32.totalorder %s33, 0
    %p625 = por %p623, %p624
    %p626 = scmp.ne.s32.totalorder %s615, %s618
    %p627 = scmp.eq.s32.totalorder %s38, 1
    %p628 = por %p626, %p627
    %p629 = scmp.ne.s32.totalorder %s618, %s619
    %p630 = scmp.eq.s32.totalorder %s38, 0
    %p631 = por %p629, %p630
    %p632 = scmp.ne.s32.totalorder %s618, %s619
    %p633 = scmp.eq.s32.totalorder %s39, 1
    %p634 = por %p632, %p633
    %p636 = scmp.ne.s32.totalorder %s619, %s635
    %p637 = scmp.eq.s32.totalorder %s39, 0
    %p638 = por %p636, %p637
    %p639 = scmp.le.s32.totalorder 1, %s33
    %p640 = scmp.lt.s32.totalorder %s33, 3
    %p641 = pnand %p639, %p640
    %p642 = pneg %p641
    // Predicated region
    $region9: #{encoder_forward.1} parent=5 // pred_check
      _
    $region10: #{encoder_forward.1} parent=5 // pred_check_branch
      %644 = sbr.rel (%p641) target = $region12
    $region11: #{encoder_forward.1} parent=5 // pred_region
      %s645 = ssub.s32 %s33, 1
      // Predicated region
      $region13: #{encoder_forward.1} parent=11 // pred_check
        %p646 = pneg %p80
      $region14: #{encoder_forward.1} parent=11 // pred_check_branch
        %648 = sbr.rel (%p646) target = $region16
      $region15: #{encoder_forward.1} parent=11 // pred_region
        _
      $region16: #{encoder_forward.1} parent=11 // pred_fallthru
        _
      // Predicated region
      $region17: #{encoder_forward.1} parent=11 // pred_check
        %p649 = pneg %p101
      $region18: #{encoder_forward.1} parent=11 // pred_check_branch
        %651 = sbr.rel (%p649) target = $region20
      $region19: #{encoder_forward.1} parent=11 // pred_region
        _
      $region20: #{encoder_forward.1} parent=11 // pred_fallthru
        _
      // Predicated region
      $region21: #{encoder_forward.1} parent=11 // pred_check
        %p652 = pneg %p122
      $region22: #{encoder_forward.1} parent=11 // pred_check_branch
        %654 = sbr.rel (%p652) target = $region24
      $region23: #{encoder_forward.1} parent=11 // pred_region
        _
      $region24: #{encoder_forward.1} parent=11 // pred_fallthru
        _
      // Predicated region
      $region25: #{encoder_forward.1} parent=11 // pred_check
        %p655 = pneg %p143
      $region26: #{encoder_forward.1} parent=11 // pred_check_branch
        %657 = sbr.rel (%p655) target = $region28
      $region27: #{encoder_forward.1} parent=11 // pred_region
        _
      $region28: #{encoder_forward.1} parent=11 // pred_fallthru
        _
      // Predicated region
      $region29: #{encoder_forward.1} parent=11 // pred_check
        %p658 = pneg %p164
      $region30: #{encoder_forward.1} parent=11 // pred_check_branch
        %660 = sbr.rel (%p658) target = $region32
      $region31: #{encoder_forward.1} parent=11 // pred_region
        _
      $region32: #{encoder_forward.1} parent=11 // pred_fallthru
        _
      // Predicated region
      $region33: #{encoder_forward.1} parent=11 // pred_check
        %p661 = pneg %p185
      $region34: #{encoder_forward.1} parent=11 // pred_check_branch
        %663 = sbr.rel (%p661) target = $region36
      $region35: #{encoder_forward.1} parent=11 // pred_region
        _
      $region36: #{encoder_forward.1} parent=11 // pred_fallthru
        _
      // Predicated region
      $region37: #{encoder_forward.1} parent=11 // pred_check
        %p664 = pneg %p206
      $region38: #{encoder_forward.1} parent=11 // pred_check_branch
        %666 = sbr.rel (%p664) target = $region40
      $region39: #{encoder_forward.1} parent=11 // pred_region
        _
      $region40: #{encoder_forward.1} parent=11 // pred_fallthru
        _
      // Predicated region
      $region41: #{encoder_forward.1} parent=11 // pred_check
        %p667 = pneg %p227
      $region42: #{encoder_forward.1} parent=11 // pred_check_branch
        %669 = sbr.rel (%p667) target = $region44
      $region43: #{encoder_forward.1} parent=11 // pred_region
        _
      $region44: #{encoder_forward.1} parent=11 // pred_fallthru
        _
      // Predicated region
      $region45: #{encoder_forward.1} parent=11 // pred_check
        %p670 = pneg %p248
      $region46: #{encoder_forward.1} parent=11 // pred_check_branch
        %672 = sbr.rel (%p670) target = $region48
      $region47: #{encoder_forward.1} parent=11 // pred_region
        _
      $region48: #{encoder_forward.1} parent=11 // pred_fallthru
        _
      // Predicated region
      $region49: #{encoder_forward.1} parent=11 // pred_check
        %p673 = pneg %p269
      $region50: #{encoder_forward.1} parent=11 // pred_check_branch
        %675 = sbr.rel (%p673) target = $region52
      $region51: #{encoder_forward.1} parent=11 // pred_region
        _
      $region52: #{encoder_forward.1} parent=11 // pred_fallthru
        _
      // Predicated region
      $region53: #{encoder_forward.1} parent=11 // pred_check
        %p676 = pneg %p290
      $region54: #{encoder_forward.1} parent=11 // pred_check_branch
        %678 = sbr.rel (%p676) target = $region56
      $region55: #{encoder_forward.1} parent=11 // pred_region
        _
      $region56: #{encoder_forward.1} parent=11 // pred_fallthru
        _
      // Predicated region
      $region57: #{encoder_forward.1} parent=11 // pred_check
        %p679 = pneg %p311
      $region58: #{encoder_forward.1} parent=11 // pred_check_branch
        %681 = sbr.rel (%p679) target = $region60
      $region59: #{encoder_forward.1} parent=11 // pred_region
        _
      $region60: #{encoder_forward.1} parent=11 // pred_fallthru
        _
      // Predicated region
      $region61: #{encoder_forward.1} parent=11 // pred_check
        %p682 = pneg %p332
      $region62: #{encoder_forward.1} parent=11 // pred_check_branch
        %684 = sbr.rel (%p682) target = $region64
      $region63: #{encoder_forward.1} parent=11 // pred_region
        _
      $region64: #{encoder_forward.1} parent=11 // pred_fallthru
        _
      // Predicated region
      $region65: #{encoder_forward.1} parent=11 // pred_check
        %p685 = pneg %p353
      $region66: #{encoder_forward.1} parent=11 // pred_check_branch
        %687 = sbr.rel (%p685) target = $region68
      $region67: #{encoder_forward.1} parent=11 // pred_region
        _
      $region68: #{encoder_forward.1} parent=11 // pred_fallthru
        _
      // Predicated region
      $region69: #{encoder_forward.1} parent=11 // pred_check
        %p688 = pneg %p374
      $region70: #{encoder_forward.1} parent=11 // pred_check_branch
        %690 = sbr.rel (%p688) target = $region72
      $region71: #{encoder_forward.1} parent=11 // pred_region
        _
      $region72: #{encoder_forward.1} parent=11 // pred_fallthru
        _
      // Predicated region
      $region73: #{encoder_forward.1} parent=11 // pred_check
        %p691 = pneg %p395
      $region74: #{encoder_forward.1} parent=11 // pred_check_branch
        %693 = sbr.rel (%p691) target = $region76
      $region75: #{encoder_forward.1} parent=11 // pred_region
        _
      $region76: #{encoder_forward.1} parent=11 // pred_fallthru
        _
      // Predicated region
      $region77: #{encoder_forward.1} parent=11 // pred_check
        %p694 = pneg %p416
      $region78: #{encoder_forward.1} parent=11 // pred_check_branch
        %696 = sbr.rel (%p694) target = $region80
      $region79: #{encoder_forward.1} parent=11 // pred_region
        _
      $region80: #{encoder_forward.1} parent=11 // pred_fallthru
        _
      // Predicated region
      $region81: #{encoder_forward.1} parent=11 // pred_check
        %p697 = pneg %p437
      $region82: #{encoder_forward.1} parent=11 // pred_check_branch
        %699 = sbr.rel (%p697) target = $region84
      $region83: #{encoder_forward.1} parent=11 // pred_region
        _
      $region84: #{encoder_forward.1} parent=11 // pred_fallthru
        _
      // Predicated region
      $region85: #{encoder_forward.1} parent=11 // pred_check
        %p700 = pneg %p458
      $region86: #{encoder_forward.1} parent=11 // pred_check_branch
        %702 = sbr.rel (%p700) target = $region88
      $region87: #{encoder_forward.1} parent=11 // pred_region
        _
      $region88: #{encoder_forward.1} parent=11 // pred_fallthru
        _
      // Predicated region
      $region89: #{encoder_forward.1} parent=11 // pred_check
        %p703 = pneg %p479
      $region90: #{encoder_forward.1} parent=11 // pred_check_branch
        %705 = sbr.rel (%p703) target = $region92
      $region91: #{encoder_forward.1} parent=11 // pred_region
        _
      $region92: #{encoder_forward.1} parent=11 // pred_fallthru
        _
      // Predicated region
      $region93: #{encoder_forward.1} parent=11 // pred_check
        %p706 = pneg %p500
      $region94: #{encoder_forward.1} parent=11 // pred_check_branch
        %708 = sbr.rel (%p706) target = $region96
      $region95: #{encoder_forward.1} parent=11 // pred_region
        _
      $region96: #{encoder_forward.1} parent=11 // pred_fallthru
        _
      // Predicated region
      $region97: #{encoder_forward.1} parent=11 // pred_check
        %p709 = pneg %p521
      $region98: #{encoder_forward.1} parent=11 // pred_check_branch
        %711 = sbr.rel (%p709) target = $region100
      $region99: #{encoder_forward.1} parent=11 // pred_region
        _
      $region100: #{encoder_forward.1} parent=11 // pred_fallthru
        _
      // Predicated region
      $region101: #{encoder_forward.1} parent=11 // pred_check
        %p712 = pneg %p542
      $region102: #{encoder_forward.1} parent=11 // pred_check_branch
        %714 = sbr.rel (%p712) target = $region104
      $region103: #{encoder_forward.1} parent=11 // pred_region
        _
      $region104: #{encoder_forward.1} parent=11 // pred_fallthru
        _
      // Predicated region
      $region105: #{encoder_forward.1} parent=11 // pred_check
        %p715 = pneg %p563
      $region106: #{encoder_forward.1} parent=11 // pred_check_branch
        %717 = sbr.rel (%p715) target = $region108
      $region107: #{encoder_forward.1} parent=11 // pred_region
        _
      $region108: #{encoder_forward.1} parent=11 // pred_fallthru
        _
      // Predicated region
      $region109: #{encoder_forward.1} parent=11 // pred_check
        %p718 = pneg %p584
      $region110: #{encoder_forward.1} parent=11 // pred_check_branch
        %720 = sbr.rel (%p718) target = $region112
      $region111: #{encoder_forward.1} parent=11 // pred_region
        _
      $region112: #{encoder_forward.1} parent=11 // pred_fallthru
        _
      // Predicated region
      $region113: #{encoder_forward.1} parent=11 // pred_check
        %p721 = pneg %p605
      $region114: #{encoder_forward.1} parent=11 // pred_check_branch
        %723 = sbr.rel (%p721) target = $region116
      $region115: #{encoder_forward.1} parent=11 // pred_region
        _
      $region116: #{encoder_forward.1} parent=11 // pred_fallthru
        _
    $region12: #{encoder_forward.1} parent=5 // pred_fallthru
      _
    %p724 = scmp.lt.s32.totalorder %s33, 2
    // Predicated region
    $region117: #{encoder_forward.1} parent=5 // pred_check
      %p725 = pneg %p724
    $region118: #{encoder_forward.1} parent=5 // pred_check_branch
      %727 = sbr.rel (%p725) target = $region120
    $region119: #{encoder_forward.1} parent=5 // pred_region
      // Predicated region
      $region121: #{encoder_forward.1} parent=119 // pred_check
        %p728 = pneg %p53
      $region122: #{encoder_forward.1} parent=119 // pred_check_branch
        %730 = sbr.rel (%p728) target = $region124
      $region123: #{encoder_forward.1} parent=119 // pred_region
        %p731 = scmp.lt.s32.totalorder %s33, 1
        %s732 = scalar_select %p731, %s33, 1
        %s733 = smul.addr %s732, 8
        %s734 = smul.addr %s733, 8
        %s735 = scalar_lea.vmem %s0, %s734
      $region124: #{encoder_forward.1} parent=119 // pred_fallthru
        _
    $region120: #{encoder_forward.1} parent=5 // pred_fallthru
      _
    %p736 = scmp.le.s32.totalorder 1, %s33
    %p737 = scmp.lt.s32.totalorder %s33, 3
    %p738 = pnand %p736, %p737
    %p739 = pneg %p738
    // Predicated region
    $region125: #{encoder_forward.1} parent=5 // pred_check
      _
    $region126: #{encoder_forward.1} parent=5 // pred_check_branch
      %741 = sbr.rel (%p738) target = $region128
    $region127: #{encoder_forward.1} parent=5 // pred_region
      %s742 = ssub.s32 %s33, 1
      %p743 = scmp.lt.s32.totalorder %s38, 1
      %s744 = scalar_select %p743, %s38, 1
      %s745 = smul.addr %s744, 8
      %s746 = smul.addr %s745, 8
      %s747 = scalar_lea.vmem %s0, %s746
      %p748 = pneg %p59
      %p749 = pneg %p56
      %p750 = pneg %p80
      %p751 = pneg %p77
      %p752 = pneg %p101
      %p753 = pneg %p98
      %p754 = pneg %p122
      %p755 = pneg %p119
      %p756 = pneg %p143
      %p757 = pneg %p140
      %p758 = pneg %p164
      %p759 = pneg %p161
      %p760 = pneg %p185
      %p761 = pneg %p182
      %p762 = pneg %p206
      %p763 = pneg %p203
      %p764 = pneg %p227
      %p765 = pneg %p224
      %p766 = pneg %p248
      %p767 = pneg %p245
      %p768 = pneg %p269
      %p769 = pneg %p266
      %p770 = pneg %p290
      %p771 = pneg %p287
      %p772 = pneg %p311
      %p773 = pneg %p308
      %p774 = pneg %p332
      %p775 = pneg %p329
      %p776 = pneg %p353
      %p777 = pneg %p350
      %p778 = pneg %p374
      %p779 = pneg %p371
      %p780 = pneg %p395
      %p781 = pneg %p392
      %p782 = pneg %p416
      %p783 = pneg %p413
      %p784 = pneg %p437
      %p785 = pneg %p434
      %p786 = pneg %p458
      %p787 = pneg %p455
      %p788 = pneg %p479
      %p789 = pneg %p476
      %p790 = pneg %p500
      %p791 = pneg %p497
      %p792 = pneg %p521
      %p793 = pneg %p518
      %p794 = pneg %p542
      %p795 = pneg %p539
      %p796 = pneg %p563
      %p797 = pneg %p560
      %p798 = pneg %p584
      %p799 = pneg %p581
      %p800 = pneg %p605
      %p801 = pneg %p602
      %p802 = pneg %p631
      %p803 = pneg %p628
      %p804 = scmp.lt.s32.totalorder %s38, 1
      %s805 = scalar_select %p804, %s38, 1
      %s806 = smul.addr %s805, 16
      %s807 = smul.addr %s806, 8
      %s808 = scalar_lea.vmem %s27, %s807
      %p809 = scmp.lt.s32.totalorder %s38, 1
      %s810 = scalar_select %p809, %s38, 1
      %s811 = smul.addr %s810, 8
      %s812 = smul.addr %s811, 8
      %s813 = scalar_lea.vmem %s0, %s812
      %p814 = scmp.lt.s32.totalorder %s38, 1
      %s815 = scalar_select %p814, %s38, 1
      %s816 = smul.addr %s815, 16
      %s817 = smul.addr %s816, 8
      %s818 = scalar_lea.vmem %s27, %s817
      %v819 = vld [vmem:[%s1] sm:$0xff]
      %v820 = vld [vmem:[%s2] sm:$0xff]
      %v821 = vld [vmem:[%s813] sm:$0xff]
      %v822 = vld [vmem:[%s813 + $0x8] sm:$0xff]
      %v823 = vld [vmem:[%s813 + $0x10] sm:$0xff]
      %v824 = vld [vmem:[%s813 + $0x18] sm:$0xff]
      %v825 = vld [vmem:[%s813 + $0x20] sm:$0xff]
      %v826 = vld [vmem:[%s813 + $0x28] sm:$0xff]
      %v827 = vld [vmem:[%s813 + $0x30] sm:$0xff]
      %v828 = vld [vmem:[%s813 + $0x38] sm:$0xff]
      %829 = vrot.lane.b32.xlu0 %v821, 111
      %v830 = vpop.permute.xlu0 %829
      %831 = vrot.lane.b32.xlu0 %v822, 111
      %v832 = vpop.permute.xlu0 %831
      %833 = vrot.lane.b32.xlu0 %v823, 111
      %v834 = vpop.permute.xlu0 %833
      %835 = vrot.lane.b32.xlu0 %v824, 111
      %v836 = vpop.permute.xlu0 %835
      %837 = vrot.lane.b32.xlu0 %v825, 111
      %v838 = vpop.permute.xlu0 %837
      %839 = vrot.lane.b32.xlu0 %v826, 111
      %v840 = vpop.permute.xlu0 %839
      %841 = vrot.lane.b32.xlu0 %v827, 111
      %v842 = vpop.permute.xlu0 %841
      %843 = vrot.lane.b32.xlu0 %v828, 111
      %v844 = vpop.permute.xlu0 %843
      %v845 = vlaneseq
      %v846 = vand.u32 %v845, 127
      %vm847 = vcmp.lt.s32.totalorder %v846, 111
      %v848 = vsel %vm847, %v842, %v844
      %v849 = vsel %vm847, %v840, %v842
      %v850 = vsel %vm847, %v838, %v840
      %v851 = vsel %vm847, %v836, %v838
      %v852 = vsel %vm847, %v834, %v836
      %v853 = vsel %vm847, %v832, %v834
      %v854 = vsel %vm847, %v830, %v832
      %v855 = vsel %vm847, %v844, %v830
      %856 = vst [vmem:[#allocation2] sm:$0xff] %v855
      %857 = vst [vmem:[#allocation2 + $0x8] sm:$0xff] %v854
      %858 = vst [vmem:[#allocation2 + $0x10] sm:$0xff] %v853
      %859 = vst [vmem:[#allocation2 + $0x18] sm:$0xff] %v852
      %860 = vst [vmem:[#allocation2 + $0x20] sm:$0xff] %v851
      %861 = vst [vmem:[#allocation2 + $0x28] sm:$0xff] %v850
      %862 = vst [vmem:[#allocation2 + $0x30] sm:$0xff] %v849
      %863 = vst [vmem:[#allocation2 + $0x38] sm:$0xff] %v848
      %864 = vrot.lane.b32.xlu0 %v821, 110
      %v865 = vpop.permute.xlu0 %864
      %866 = vrot.lane.b32.xlu0 %v822, 110
      %v867 = vpop.permute.xlu0 %866
      %868 = vrot.lane.b32.xlu0 %v823, 110
      %v869 = vpop.permute.xlu0 %868
      %870 = vrot.lane.b32.xlu0 %v824, 110
      %v871 = vpop.permute.xlu0 %870
      %872 = vrot.lane.b32.xlu0 %v825, 110
      %v873 = vpop.permute.xlu0 %872
      %874 = vrot.lane.b32.xlu0 %v826, 110
      %v875 = vpop.permute.xlu0 %874
      %876 = vrot.lane.b32.xlu0 %v827, 110
      %v877 = vpop.permute.xlu0 %876
      %878 = vrot.lane.b32.xlu0 %v828, 110
      %v879 = vpop.permute.xlu0 %878
      %vm880 = vcmp.lt.s32.totalorder %v846, 110
      %v881 = vsel %vm880, %v877, %v879
      %v882 = vsel %vm880, %v875, %v877
      %v883 = vsel %vm880, %v873, %v875
      %v884 = vsel %vm880, %v871, %v873
      %v885 = vsel %vm880, %v869, %v871
      %v886 = vsel %vm880, %v867, %v869
      %v887 = vsel %vm880, %v865, %v867
      %v888 = vsel %vm880, %v879, %v865
      %889 = vst [vmem:[#allocation2 + $0x40] sm:$0xff] %v888
      %890 = vst [vmem:[#allocation2 + $0x48] sm:$0xff] %v887
      %891 = vst [vmem:[#allocation2 + $0x50] sm:$0xff] %v886
      %892 = vst [vmem:[#allocation2 + $0x58] sm:$0xff] %v885
      %893 = vst [vmem:[#allocation2 + $0x60] sm:$0xff] %v884
      %894 = vst [vmem:[#allocation2 + $0x68] sm:$0xff] %v883
      %895 = vst [vmem:[#allocation2 + $0x70] sm:$0xff] %v882
      %896 = vst [vmem:[#allocation2 + $0x78] sm:$0xff] %v881
      %897 = vrot.lane.b32.xlu0 %v821, 109
      %v898 = vpop.permute.xlu0 %897
      %899 = vrot.lane.b32.xlu0 %v822, 109
      %v900 = vpop.permute.xlu0 %899
      %901 = vrot.lane.b32.xlu0 %v823, 109
      %v902 = vpop.permute.xlu0 %901
      %903 = vrot.lane.b32.xlu0 %v824, 109
      %v904 = vpop.permute.xlu0 %903
      %905 = vrot.lane.b32.xlu0 %v825, 109
      %v906 = vpop.permute.xlu0 %905
      %907 = vrot.lane.b32.xlu0 %v826, 109
      %v908 = vpop.permute.xlu0 %907
      %909 = vrot.lane.b32.xlu0 %v827, 109
      %v910 = vpop.permute.xlu0 %909
      %911 = vrot.lane.b32.xlu0 %v828, 109
      %v912 = vpop.permute.xlu0 %911
      %vm913 = vcmp.lt.s32.totalorder %v846, 109
      %v914 = vsel %vm913, %v910, %v912
      %v915 = vsel %vm913, %v908, %v910
      %v916 = vsel %vm913, %v906, %v908
      %v917 = vsel %vm913, %v904, %v906
      %v918 = vsel %vm913, %v902, %v904
      %v919 = vsel %vm913, %v900, %v902
      %v920 = vsel %vm913, %v898, %v900
      %v921 = vsel %vm913, %v912, %v898
      %922 = vst [vmem:[#allocation2 + $0x80] sm:$0xff] %v921
      %923 = vst [vmem:[#allocation2 + $0x88] sm:$0xff] %v920
      %924 = vst [vmem:[#allocation2 + $0x90] sm:$0xff] %v919
      %925 = vst [vmem:[#allocation2 + $0x98] sm:$0xff] %v918
      %926 = vst [vmem:[#allocation2 + $0xa0] sm:$0xff] %v917
      %927 = vst [vmem:[#allocation2 + $0xa8] sm:$0xff] %v916
      %928 = vst [vmem:[#allocation2 + $0xb0] sm:$0xff] %v915
      %929 = vst [vmem:[#allocation2 + $0xb8] sm:$0xff] %v914
      %930 = vrot.lane.b32.xlu0 %v821, 101
      %v931 = vpop.permute.xlu0 %930
      %932 = vrot.lane.b32.xlu0 %v822, 101
      %v933 = vpop.permute.xlu0 %932
      %934 = vrot.lane.b32.xlu0 %v823, 101
      %v935 = vpop.permute.xlu0 %934
      %936 = vrot.lane.b32.xlu0 %v824, 101
      %v937 = vpop.permute.xlu0 %936
      %938 = vrot.lane.b32.xlu0 %v825, 101
      %v939 = vpop.permute.xlu0 %938
      %940 = vrot.lane.b32.xlu0 %v826, 101
      %v941 = vpop.permute.xlu0 %940
      %942 = vrot.lane.b32.xlu0 %v827, 101
      %v943 = vpop.permute.xlu0 %942
      %944 = vrot.lane.b32.xlu0 %v828, 101
      %v945 = vpop.permute.xlu0 %944
      %vm946 = vcmp.lt.s32.totalorder %v846, 101
      %v947 = vsel %vm946, %v943, %v945
      %v948 = vsel %vm946, %v941, %v943
      %v949 = vsel %vm946, %v939, %v941
      %v950 = vsel %vm946, %v937, %v939
      %v951 = vsel %vm946, %v935, %v937
      %v952 = vsel %vm946, %v933, %v935
      %v953 = vsel %vm946, %v931, %v933
      %v954 = vsel %vm946, %v945, %v931
      %955 = vst [vmem:[#allocation2 + $0xc0] sm:$0xff] %v954
      %956 = vst [vmem:[#allocation2 + $0xc8] sm:$0xff] %v953
      %957 = vst [vmem:[#allocation2 + $0xd0] sm:$0xff] %v952
      %958 = vst [vmem:[#allocation2 + $0xd8] sm:$0xff] %v951
      %959 = vst [vmem:[#allocation2 + $0xe0] sm:$0xff] %v950
      %960 = vst [vmem:[#allocation2 + $0xe8] sm:$0xff] %v949
      %961 = vst [vmem:[#allocation2 + $0xf0] sm:$0xff] %v948
      %962 = vst [vmem:[#allocation2 + $0xf8] sm:$0xff] %v947
      %963 = vrot.lane.b32.xlu0 %v821, 100
      %v964 = vpop.permute.xlu0 %963
      %965 = vrot.lane.b32.xlu0 %v822, 100
      %v966 = vpop.permute.xlu0 %965
      %967 = vrot.lane.b32.xlu0 %v823, 100
      %v968 = vpop.permute.xlu0 %967
      %969 = vrot.lane.b32.xlu0 %v824, 100
      %v970 = vpop.permute.xlu0 %969
      %971 = vrot.lane.b32.xlu0 %v825, 100
      %v972 = vpop.permute.xlu0 %971
      %973 = vrot.lane.b32.xlu0 %v826, 100
      %v974 = vpop.permute.xlu0 %973
      %975 = vrot.lane.b32.xlu0 %v827, 100
      %v976 = vpop.permute.xlu0 %975
      %977 = vrot.lane.b32.xlu0 %v828, 100
      %v978 = vpop.permute.xlu0 %977
      %vm979 = vcmp.lt.s32.totalorder %v846, 100
      %v980 = vsel %vm979, %v976, %v978
      %v981 = vsel %vm979, %v974, %v976
      %v982 = vsel %vm979, %v972, %v974
      %v983 = vsel %vm979, %v970, %v972
      %v984 = vsel %vm979, %v968, %v970
      %v985 = vsel %vm979, %v966, %v968
      %v986 = vsel %vm979, %v964, %v966
      %v987 = vsel %vm979, %v978, %v964
      %988 = vst [vmem:[#allocation2 + $0x100] sm:$0xff] %v987
      %989 = vst [vmem:[#allocation2 + $0x108] sm:$0xff] %v986
      %990 = vst [vmem:[#allocation2 + $0x110] sm:$0xff] %v985
      %991 = vst [vmem:[#allocation2 + $0x118] sm:$0xff] %v984
      %992 = vst [vmem:[#allocation2 + $0x120] sm:$0xff] %v983
      %993 = vst [vmem:[#allocation2 + $0x128] sm:$0xff] %v982
      %994 = vst [vmem:[#allocation2 + $0x130] sm:$0xff] %v981
      %995 = vst [vmem:[#allocation2 + $0x138] sm:$0xff] %v980
      %996 = vrot.lane.b32.xlu0 %v821, 99
      %v997 = vpop.permute.xlu0 %996
      %998 = vrot.lane.b32.xlu0 %v822, 99
      %v999 = vpop.permute.xlu0 %998
      %1000 = vrot.lane.b32.xlu0 %v823, 99
      %v1001 = vpop.permute.xlu0 %1000
      %1002 = vrot.lane.b32.xlu0 %v824, 99
      %v1003 = vpop.permute.xlu0 %1002
      %1004 = vrot.lane.b32.xlu0 %v825, 99
      %v1005 = vpop.permute.xlu0 %1004
      %1006 = vrot.lane.b32.xlu0 %v826, 99
      %v1007 = vpop.permute.xlu0 %1006
      %1008 = vrot.lane.b32.xlu0 %v827, 99
      %v1009 = vpop.permute.xlu0 %1008
      %1010 = vrot.lane.b32.xlu0 %v828, 99
      %v1011 = vpop.permute.xlu0 %1010
      %vm1012 = vcmp.lt.s32.totalorder %v846, 99
      %v1013 = vsel %vm1012, %v1009, %v1011
      %v1014 = vsel %vm1012, %v1007, %v1009
      %v1015 = vsel %vm1012, %v1005, %v1007
      %v1016 = vsel %vm1012, %v1003, %v1005
      %v1017 = vsel %vm1012, %v1001, %v1003
      %v1018 = vsel %vm1012, %v999, %v1001
      %v1019 = vsel %vm1012, %v997, %v999
      %v1020 = vsel %vm1012, %v1011, %v997
      %1021 = vst [vmem:[#allocation2 + $0x140] sm:$0xff] %v1020
      %1022 = vst [vmem:[#allocation2 + $0x148] sm:$0xff] %v1019
      %1023 = vst [vmem:[#allocation2 + $0x150] sm:$0xff] %v1018
      %1024 = vst [vmem:[#allocation2 + $0x158] sm:$0xff] %v1017
      %1025 = vst [vmem:[#allocation2 + $0x160] sm:$0xff] %v1016
      %1026 = vst [vmem:[#allocation2 + $0x168] sm:$0xff] %v1015
      %1027 = vst [vmem:[#allocation2 + $0x170] sm:$0xff] %v1014
      %1028 = vst [vmem:[#allocation2 + $0x178] sm:$0xff] %v1013
      %1029 = vrot.lane.b32.xlu0 %v821, 91
      %v1030 = vpop.permute.xlu0 %1029
      %1031 = vrot.lane.b32.xlu0 %v822, 91
      %v1032 = vpop.permute.xlu0 %1031
      %1033 = vrot.lane.b32.xlu0 %v823, 91
      %v1034 = vpop.permute.xlu0 %1033
      %1035 = vrot.lane.b32.xlu0 %v824, 91
      %v1036 = vpop.permute.xlu0 %1035
      %1037 = vrot.lane.b32.xlu0 %v825, 91
      %v1038 = vpop.permute.xlu0 %1037
      %1039 = vrot.lane.b32.xlu0 %v826, 91
      %v1040 = vpop.permute.xlu0 %1039
      %1041 = vrot.lane.b32.xlu0 %v827, 91
      %v1042 = vpop.permute.xlu0 %1041
      %1043 = vrot.lane.b32.xlu0 %v828, 91
      %v1044 = vpop.permute.xlu0 %1043
      %vm1045 = vcmp.lt.s32.totalorder %v846, 91
      %v1046 = vsel %vm1045, %v1042, %v1044
      %v1047 = vsel %vm1045, %v1040, %v1042
      %v1048 = vsel %vm1045, %v1038, %v1040
      %v1049 = vsel %vm1045, %v1036, %v1038
      %v1050 = vsel %vm1045, %v1034, %v1036
      %v1051 = vsel %vm1045, %v1032, %v1034
      %v1052 = vsel %vm1045, %v1030, %v1032
      %v1053 = vsel %vm1045, %v1044, %v1030
      %1054 = vst [vmem:[#allocation2 + $0x180] sm:$0xff] %v1053
      %1055 = vst [vmem:[#allocation2 + $0x188] sm:$0xff] %v1052
      %1056 = vst [vmem:[#allocation2 + $0x190] sm:$0xff] %v1051
      %1057 = vst [vmem:[#allocation2 + $0x198] sm:$0xff] %v1050
      %1058 = vst [vmem:[#allocation2 + $0x1a0] sm:$0xff] %v1049
      %1059 = vst [vmem:[#allocation2 + $0x1a8] sm:$0xff] %v1048
      %1060 = vst [vmem:[#allocation2 + $0x1b0] sm:$0xff] %v1047
      %1061 = vst [vmem:[#allocation2 + $0x1b8] sm:$0xff] %v1046
      %1062 = vrot.lane.b32.xlu0 %v821, 90
      %v1063 = vpop.permute.xlu0 %1062
      %1064 = vrot.lane.b32.xlu0 %v822, 90
      %v1065 = vpop.permute.xlu0 %1064
      %1066 = vrot.lane.b32.xlu0 %v823, 90
      %v1067 = vpop.permute.xlu0 %1066
      %1068 = vrot.lane.b32.xlu0 %v824, 90
      %v1069 = vpop.permute.xlu0 %1068
      %1070 = vrot.lane.b32.xlu0 %v825, 90
      %v1071 = vpop.permute.xlu0 %1070
      %1072 = vrot.lane.b32.xlu0 %v826, 90
      %v1073 = vpop.permute.xlu0 %1072
      %1074 = vrot.lane.b32.xlu0 %v827, 90
      %v1075 = vpop.permute.xlu0 %1074
      %1076 = vrot.lane.b32.xlu0 %v828, 90
      %v1077 = vpop.permute.xlu0 %1076
      %vm1078 = vcmp.lt.s32.totalorder %v846, 90
      %v1079 = vsel %vm1078, %v1075, %v1077
      %v1080 = vsel %vm1078, %v1073, %v1075
      %v1081 = vsel %vm1078, %v1071, %v1073
      %v1082 = vsel %vm1078, %v1069, %v1071
      %v1083 = vsel %vm1078, %v1067, %v1069
      %v1084 = vsel %vm1078, %v1065, %v1067
      %v1085 = vsel %vm1078, %v1063, %v1065
      %v1086 = vsel %vm1078, %v1077, %v1063
      %1087 = vst [vmem:[#allocation2 + $0x1c0] sm:$0xff] %v1086
      %1088 = vst [vmem:[#allocation2 + $0x1c8] sm:$0xff] %v1085
      %1089 = vst [vmem:[#allocation2 + $0x1d0] sm:$0xff] %v1084
      %1090 = vst [vmem:[#allocation2 + $0x1d8] sm:$0xff] %v1083
      %1091 = vst [vmem:[#allocation2 + $0x1e0] sm:$0xff] %v1082
      %1092 = vst [vmem:[#allocation2 + $0x1e8] sm:$0xff] %v1081
      %1093 = vst [vmem:[#allocation2 + $0x1f0] sm:$0xff] %v1080
      %1094 = vst [vmem:[#allocation2 + $0x1f8] sm:$0xff] %v1079
      %1095 = vrot.lane.b32.xlu0 %v821, 89
      %v1096 = vpop.permute.xlu0 %1095
      %1097 = vrot.lane.b32.xlu0 %v822, 89
      %v1098 = vpop.permute.xlu0 %1097
      %1099 = vrot.lane.b32.xlu0 %v823, 89
      %v1100 = vpop.permute.xlu0 %1099
      %1101 = vrot.lane.b32.xlu0 %v824, 89
      %v1102 = vpop.permute.xlu0 %1101
      %1103 = vrot.lane.b32.xlu0 %v825, 89
      %v1104 = vpop.permute.xlu0 %1103
      %1105 = vrot.lane.b32.xlu0 %v826, 89
      %v1106 = vpop.permute.xlu0 %1105
      %1107 = vrot.lane.b32.xlu0 %v827, 89
      %v1108 = vpop.permute.xlu0 %1107
      %1109 = vrot.lane.b32.xlu0 %v828, 89
      %v1110 = vpop.permute.xlu0 %1109
      %vm1111 = vcmp.lt.s32.totalorder %v846, 89
      %v1112 = vsel %vm1111, %v1108, %v1110
      %v1113 = vsel %vm1111, %v1106, %v1108
      %v1114 = vsel %vm1111, %v1104, %v1106
      %v1115 = vsel %vm1111, %v1102, %v1104
      %v1116 = vsel %vm1111, %v1100, %v1102
      %v1117 = vsel %vm1111, %v1098, %v1100
      %v1118 = vsel %vm1111, %v1096, %v1098
      %v1119 = vsel %vm1111, %v1110, %v1096
      %1120 = vst [vmem:[#allocation2 + $0x200] sm:$0xff] %v1119
      %1121 = vst [vmem:[#allocation2 + $0x208] sm:$0xff] %v1118
      %1122 = vst [vmem:[#allocation2 + $0x210] sm:$0xff] %v1117
      %1123 = vst [vmem:[#allocation2 + $0x218] sm:$0xff] %v1116
      %1124 = vst [vmem:[#allocation2 + $0x220] sm:$0xff] %v1115
      %1125 = vst [vmem:[#allocation2 + $0x228] sm:$0xff] %v1114
      %1126 = vst [vmem:[#allocation2 + $0x230] sm:$0xff] %v1113
      %1127 = vst [vmem:[#allocation2 + $0x238] sm:$0xff] %v1112
      %1128 = vrot.lane.b32.xlu0 %v821, 11
      %v1129 = vpop.permute.xlu0 %1128
      %1130 = vrot.lane.b32.xlu0 %v822, 11
      %v1131 = vpop.permute.xlu0 %1130
      %1132 = vrot.lane.b32.xlu0 %v823, 11
      %v1133 = vpop.permute.xlu0 %1132
      %1134 = vrot.lane.b32.xlu0 %v824, 11
      %v1135 = vpop.permute.xlu0 %1134
      %1136 = vrot.lane.b32.xlu0 %v825, 11
      %v1137 = vpop.permute.xlu0 %1136
      %1138 = vrot.lane.b32.xlu0 %v826, 11
      %v1139 = vpop.permute.xlu0 %1138
      %1140 = vrot.lane.b32.xlu0 %v827, 11
      %v1141 = vpop.permute.xlu0 %1140
      %1142 = vrot.lane.b32.xlu0 %v828, 11
      %v1143 = vpop.permute.xlu0 %1142
      %vm1144 = vcmp.lt.s32.totalorder %v846, 11
      %v1145 = vsel %vm1144, %v1141, %v1143
      %v1146 = vsel %vm1144, %v1139, %v1141
      %v1147 = vsel %vm1144, %v1137, %v1139
      %v1148 = vsel %vm1144, %v1135, %v1137
      %v1149 = vsel %vm1144, %v1133, %v1135
      %v1150 = vsel %vm1144, %v1131, %v1133
      %v1151 = vsel %vm1144, %v1129, %v1131
      %v1152 = vsel %vm1144, %v1143, %v1129
      %1153 = vst [vmem:[#allocation2 + $0x240] sm:$0xff] %v1152
      %1154 = vst [vmem:[#allocation2 + $0x248] sm:$0xff] %v1151
      %1155 = vst [vmem:[#allocation2 + $0x250] sm:$0xff] %v1150
      %1156 = vst [vmem:[#allocation2 + $0x258] sm:$0xff] %v1149
      %1157 = vst [vmem:[#allocation2 + $0x260] sm:$0xff] %v1148
      %1158 = vst [vmem:[#allocation2 + $0x268] sm:$0xff] %v1147
      %1159 = vst [vmem:[#allocation2 + $0x270] sm:$0xff] %v1146
      %1160 = vst [vmem:[#allocation2 + $0x278] sm:$0xff] %v1145
      %1161 = vrot.lane.b32.xlu0 %v821, 10
      %v1162 = vpop.permute.xlu0 %1161
      %1163 = vrot.lane.b32.xlu0 %v822, 10
      %v1164 = vpop.permute.xlu0 %1163
      %1165 = vrot.lane.b32.xlu0 %v823, 10
      %v1166 = vpop.permute.xlu0 %1165
      %1167 = vrot.lane.b32.xlu0 %v824, 10
      %v1168 = vpop.permute.xlu0 %1167
      %1169 = vrot.lane.b32.xlu0 %v825, 10
      %v1170 = vpop.permute.xlu0 %1169
      %1171 = vrot.lane.b32.xlu0 %v826, 10
      %v1172 = vpop.permute.xlu0 %1171
      %1173 = vrot.lane.b32.xlu0 %v827, 10
      %v1174 = vpop.permute.xlu0 %1173
      %1175 = vrot.lane.b32.xlu0 %v828, 10
      %v1176 = vpop.permute.xlu0 %1175
      %vm1177 = vcmp.lt.s32.totalorder %v846, 10
      %v1178 = vsel %vm1177, %v1174, %v1176
      %v1179 = vsel %vm1177, %v1172, %v1174
      %v1180 = vsel %vm1177, %v1170, %v1172
      %v1181 = vsel %vm1177, %v1168, %v1170
      %v1182 = vsel %vm1177, %v1166, %v1168
      %v1183 = vsel %vm1177, %v1164, %v1166
      %v1184 = vsel %vm1177, %v1162, %v1164
      %v1185 = vsel %vm1177, %v1176, %v1162
      %1186 = vst [vmem:[#allocation2 + $0x280] sm:$0xff] %v1185
      %1187 = vst [vmem:[#allocation2 + $0x288] sm:$0xff] %v1184
      %1188 = vst [vmem:[#allocation2 + $0x290] sm:$0xff] %v1183
      %1189 = vst [vmem:[#allocation2 + $0x298] sm:$0xff] %v1182
      %1190 = vst [vmem:[#allocation2 + $0x2a0] sm:$0xff] %v1181
      %1191 = vst [vmem:[#allocation2 + $0x2a8] sm:$0xff] %v1180
      %1192 = vst [vmem:[#allocation2 + $0x2b0] sm:$0xff] %v1179
      %1193 = vst [vmem:[#allocation2 + $0x2b8] sm:$0xff] %v1178
      %1194 = vrot.lane.b32.xlu0 %v821, 9
      %v1195 = vpop.permute.xlu0 %1194
      %1196 = vrot.lane.b32.xlu0 %v822, 9
      %v1197 = vpop.permute.xlu0 %1196
      %1198 = vrot.lane.b32.xlu0 %v823, 9
      %v1199 = vpop.permute.xlu0 %1198
      %1200 = vrot.lane.b32.xlu0 %v824, 9
      %v1201 = vpop.permute.xlu0 %1200
      %1202 = vrot.lane.b32.xlu0 %v825, 9
      %v1203 = vpop.permute.xlu0 %1202
      %1204 = vrot.lane.b32.xlu0 %v826, 9
      %v1205 = vpop.permute.xlu0 %1204
      %1206 = vrot.lane.b32.xlu0 %v827, 9
      %v1207 = vpop.permute.xlu0 %1206
      %1208 = vrot.lane.b32.xlu0 %v828, 9
      %v1209 = vpop.permute.xlu0 %1208
      %vm1210 = vcmp.lt.s32.totalorder %v846, 9
      %v1211 = vsel %vm1210, %v1207, %v1209
      %v1212 = vsel %vm1210, %v1205, %v1207
      %v1213 = vsel %vm1210, %v1203, %v1205
      %v1214 = vsel %vm1210, %v1201, %v1203
      %v1215 = vsel %vm1210, %v1199, %v1201
      %v1216 = vsel %vm1210, %v1197, %v1199
      %v1217 = vsel %vm1210, %v1195, %v1197
      %v1218 = vsel %vm1210, %v1209, %v1195
      %1219 = vst [vmem:[#allocation2 + $0x2c0] sm:$0xff] %v1218
      %1220 = vst [vmem:[#allocation2 + $0x2c8] sm:$0xff] %v1217
      %1221 = vst [vmem:[#allocation2 + $0x2d0] sm:$0xff] %v1216
      %1222 = vst [vmem:[#allocation2 + $0x2d8] sm:$0xff] %v1215
      %1223 = vst [vmem:[#allocation2 + $0x2e0] sm:$0xff] %v1214
      %1224 = vst [vmem:[#allocation2 + $0x2e8] sm:$0xff] %v1213
      %1225 = vst [vmem:[#allocation2 + $0x2f0] sm:$0xff] %v1212
      %1226 = vst [vmem:[#allocation2 + $0x2f8] sm:$0xff] %v1211
      %1227 = vrot.lane.b32.xlu0 %v821, 1
      %v1228 = vpop.permute.xlu0 %1227
      %1229 = vrot.lane.b32.xlu0 %v822, 1
      %v1230 = vpop.permute.xlu0 %1229
      %1231 = vrot.lane.b32.xlu0 %v823, 1
      %v1232 = vpop.permute.xlu0 %1231
      %1233 = vrot.lane.b32.xlu0 %v824, 1
      %v1234 = vpop.permute.xlu0 %1233
      %1235 = vrot.lane.b32.xlu0 %v825, 1
      %v1236 = vpop.permute.xlu0 %1235
      %1237 = vrot.lane.b32.xlu0 %v826, 1
      %v1238 = vpop.permute.xlu0 %1237
      %1239 = vrot.lane.b32.xlu0 %v827, 1
      %v1240 = vpop.permute.xlu0 %1239
      %1241 = vrot.lane.b32.xlu0 %v828, 1
      %v1242 = vpop.permute.xlu0 %1241
      %vm1243 = vcmp.lt.s32.totalorder %v846, 1
      %v1244 = vsel %vm1243, %v1240, %v1242
      %v1245 = vsel %vm1243, %v1238, %v1240
      %v1246 = vsel %vm1243, %v1236, %v1238
      %v1247 = vsel %vm1243, %v1234, %v1236
      %v1248 = vsel %vm1243, %v1232, %v1234
      %v1249 = vsel %vm1243, %v1230, %v1232
      %v1250 = vsel %vm1243, %v1228, %v1230
      %v1251 = vsel %vm1243, %v1242, %v1228
      %1252 = vst [vmem:[#allocation2 + $0x300] sm:$0xff] %v1251
      %1253 = vst [vmem:[#allocation2 + $0x308] sm:$0xff] %v1250
      %1254 = vst [vmem:[#allocation2 + $0x310] sm:$0xff] %v1249
      %1255 = vst [vmem:[#allocation2 + $0x318] sm:$0xff] %v1248
      %1256 = vst [vmem:[#allocation2 + $0x320] sm:$0xff] %v1247
      %1257 = vst [vmem:[#allocation2 + $0x328] sm:$0xff] %v1246
      %1258 = vst [vmem:[#allocation2 + $0x330] sm:$0xff] %v1245
      %1259 = vst [vmem:[#allocation2 + $0x338] sm:$0xff] %v1244
      %1260 = vst [vmem:[#allocation2 + $0x340] sm:$0xff] %v821
      %1261 = vst [vmem:[#allocation2 + $0x348] sm:$0xff] %v822
      %1262 = vst [vmem:[#allocation2 + $0x350] sm:$0xff] %v823
      %1263 = vst [vmem:[#allocation2 + $0x358] sm:$0xff] %v824
      %1264 = vst [vmem:[#allocation2 + $0x360] sm:$0xff] %v825
      %1265 = vst [vmem:[#allocation2 + $0x368] sm:$0xff] %v826
      %1266 = vst [vmem:[#allocation2 + $0x370] sm:$0xff] %v827
      %1267 = vst [vmem:[#allocation2 + $0x378] sm:$0xff] %v828
      %1268 = vrot.lane.b32.xlu0 %v821, 127
      %v1269 = vpop.permute.xlu0 %1268
      %1270 = vrot.lane.b32.xlu0 %v822, 127
      %v1271 = vpop.permute.xlu0 %1270
      %1272 = vrot.lane.b32.xlu0 %v823, 127
      %v1273 = vpop.permute.xlu0 %1272
      %1274 = vrot.lane.b32.xlu0 %v824, 127
      %v1275 = vpop.permute.xlu0 %1274
      %1276 = vrot.lane.b32.xlu0 %v825, 127
      %v1277 = vpop.permute.xlu0 %1276
      %1278 = vrot.lane.b32.xlu0 %v826, 127
      %v1279 = vpop.permute.xlu0 %1278
      %1280 = vrot.lane.b32.xlu0 %v827, 127
      %v1281 = vpop.permute.xlu0 %1280
      %1282 = vrot.lane.b32.xlu0 %v828, 127
      %v1283 = vpop.permute.xlu0 %1282
      %vm1284 = vcmp.lt.s32.totalorder %v846, 127
      %v1285 = vsel %vm1284, %v1281, %v1283
      %v1286 = vsel %vm1284, %v1279, %v1281
      %v1287 = vsel %vm1284, %v1277, %v1279
      %v1288 = vsel %vm1284, %v1275, %v1277
      %v1289 = vsel %vm1284, %v1273, %v1275
      %v1290 = vsel %vm1284, %v1271, %v1273
      %v1291 = vsel %vm1284, %v1269, %v1271
      %v1292 = vsel %vm1284, %v1283, %v1269
      %1293 = vst [vmem:[#allocation2 + $0x380] sm:$0xff] %v1291
      %1294 = vst [vmem:[#allocation2 + $0x388] sm:$0xff] %v1290
      %1295 = vst [vmem:[#allocation2 + $0x390] sm:$0xff] %v1289
      %1296 = vst [vmem:[#allocation2 + $0x398] sm:$0xff] %v1288
      %1297 = vst [vmem:[#allocation2 + $0x3a0] sm:$0xff] %v1287
      %1298 = vst [vmem:[#allocation2 + $0x3a8] sm:$0xff] %v1286
      %1299 = vst [vmem:[#allocation2 + $0x3b0] sm:$0xff] %v1285
      %1300 = vst [vmem:[#allocation2 + $0x3b8] sm:$0xff] %v1292
      %1301 = vrot.lane.b32.xlu0 %v821, 119
      %v1302 = vpop.permute.xlu0 %1301
      %1303 = vrot.lane.b32.xlu0 %v822, 119
      %v1304 = vpop.permute.xlu0 %1303
      %1305 = vrot.lane.b32.xlu0 %v823, 119
      %v1306 = vpop.permute.xlu0 %1305
      %1307 = vrot.lane.b32.xlu0 %v824, 119
      %v1308 = vpop.permute.xlu0 %1307
      %1309 = vrot.lane.b32.xlu0 %v825, 119
      %v1310 = vpop.permute.xlu0 %1309
      %1311 = vrot.lane.b32.xlu0 %v826, 119
      %v1312 = vpop.permute.xlu0 %1311
      %1313 = vrot.lane.b32.xlu0 %v827, 119
      %v1314 = vpop.permute.xlu0 %1313
      %1315 = vrot.lane.b32.xlu0 %v828, 119
      %v1316 = vpop.permute.xlu0 %1315
      %vm1317 = vcmp.lt.s32.totalorder %v846, 119
      %v1318 = vsel %vm1317, %v1314, %v1316
      %v1319 = vsel %vm1317, %v1312, %v1314
      %v1320 = vsel %vm1317, %v1310, %v1312
      %v1321 = vsel %vm1317, %v1308, %v1310
      %v1322 = vsel %vm1317, %v1306, %v1308
      %v1323 = vsel %vm1317, %v1304, %v1306
      %v1324 = vsel %vm1317, %v1302, %v1304
      %v1325 = vsel %vm1317, %v1316, %v1302
      %1326 = vst [vmem:[#allocation2 + $0x3c0] sm:$0xff] %v1324
      %1327 = vst [vmem:[#allocation2 + $0x3c8] sm:$0xff] %v1323
      %1328 = vst [vmem:[#allocation2 + $0x3d0] sm:$0xff] %v1322
      %1329 = vst [vmem:[#allocation2 + $0x3d8] sm:$0xff] %v1321
      %1330 = vst [vmem:[#allocation2 + $0x3e0] sm:$0xff] %v1320
      %1331 = vst [vmem:[#allocation2 + $0x3e8] sm:$0xff] %v1319
      %1332 = vst [vmem:[#allocation2 + $0x3f0] sm:$0xff] %v1318
      %1333 = vst [vmem:[#allocation2 + $0x3f8] sm:$0xff] %v1325
      %1334 = vrot.lane.b32.xlu0 %v821, 118
      %v1335 = vpop.permute.xlu0 %1334
      %1336 = vrot.lane.b32.xlu0 %v822, 118
      %v1337 = vpop.permute.xlu0 %1336
      %1338 = vrot.lane.b32.xlu0 %v823, 118
      %v1339 = vpop.permute.xlu0 %1338
      %1340 = vrot.lane.b32.xlu0 %v824, 118
      %v1341 = vpop.permute.xlu0 %1340
      %1342 = vrot.lane.b32.xlu0 %v825, 118
      %v1343 = vpop.permute.xlu0 %1342
      %1344 = vrot.lane.b32.xlu0 %v826, 118
      %v1345 = vpop.permute.xlu0 %1344
      %1346 = vrot.lane.b32.xlu0 %v827, 118
      %v1347 = vpop.permute.xlu0 %1346
      %1348 = vrot.lane.b32.xlu0 %v828, 118
      %v1349 = vpop.permute.xlu0 %1348
      %vm1350 = vcmp.lt.s32.totalorder %v846, 118
      %v1351 = vsel %vm1350, %v1347, %v1349
      %v1352 = vsel %vm1350, %v1345, %v1347
      %v1353 = vsel %vm1350, %v1343, %v1345
      %v1354 = vsel %vm1350, %v1341, %v1343
      %v1355 = vsel %vm1350, %v1339, %v1341
      %v1356 = vsel %vm1350, %v1337, %v1339
      %v1357 = vsel %vm1350, %v1335, %v1337
      %v1358 = vsel %vm1350, %v1349, %v1335
      %1359 = vst [vmem:[#allocation2 + $0x400] sm:$0xff] %v1357
      %1360 = vst [vmem:[#allocation2 + $0x408] sm:$0xff] %v1356
      %1361 = vst [vmem:[#allocation2 + $0x410] sm:$0xff] %v1355
      %1362 = vst [vmem:[#allocation2 + $0x418] sm:$0xff] %v1354
      %1363 = vst [vmem:[#allocation2 + $0x420] sm:$0xff] %v1353
      %1364 = vst [vmem:[#allocation2 + $0x428] sm:$0xff] %v1352
      %1365 = vst [vmem:[#allocation2 + $0x430] sm:$0xff] %v1351
      %1366 = vst [vmem:[#allocation2 + $0x438] sm:$0xff] %v1358
      %1367 = vrot.lane.b32.xlu0 %v821, 117
      %v1368 = vpop.permute.xlu0 %1367
      %1369 = vrot.lane.b32.xlu0 %v822, 117
      %v1370 = vpop.permute.xlu0 %1369
      %1371 = vrot.lane.b32.xlu0 %v823, 117
      %v1372 = vpop.permute.xlu0 %1371
      %1373 = vrot.lane.b32.xlu0 %v824, 117
      %v1374 = vpop.permute.xlu0 %1373
      %1375 = vrot.lane.b32.xlu0 %v825, 117
      %v1376 = vpop.permute.xlu0 %1375
      %1377 = vrot.lane.b32.xlu0 %v826, 117
      %v1378 = vpop.permute.xlu0 %1377
      %1379 = vrot.lane.b32.xlu0 %v827, 117
      %v1380 = vpop.permute.xlu0 %1379
      %1381 = vrot.lane.b32.xlu0 %v828, 117
      %v1382 = vpop.permute.xlu0 %1381
      %vm1383 = vcmp.lt.s32.totalorder %v846, 117
      %v1384 = vsel %vm1383, %v1380, %v1382
      %v1385 = vsel %vm1383, %v1378, %v1380
      %v1386 = vsel %vm1383, %v1376, %v1378
      %v1387 = vsel %vm1383, %v1374, %v1376
      %v1388 = vsel %vm1383, %v1372, %v1374
      %v1389 = vsel %vm1383, %v1370, %v1372
      %v1390 = vsel %vm1383, %v1368, %v1370
      %v1391 = vsel %vm1383, %v1382, %v1368
      %1392 = vst [vmem:[#allocation2 + $0x440] sm:$0xff] %v1390
      %1393 = vst [vmem:[#allocation2 + $0x448] sm:$0xff] %v1389
      %1394 = vst [vmem:[#allocation2 + $0x450] sm:$0xff] %v1388
      %1395 = vst [vmem:[#allocation2 + $0x458] sm:$0xff] %v1387
      %1396 = vst [vmem:[#allocation2 + $0x460] sm:$0xff] %v1386
      %1397 = vst [vmem:[#allocation2 + $0x468] sm:$0xff] %v1385
      %1398 = vst [vmem:[#allocation2 + $0x470] sm:$0xff] %v1384
      %1399 = vst [vmem:[#allocation2 + $0x478] sm:$0xff] %v1391
      %1400 = vrot.lane.b32.xlu0 %v821, 39
      %v1401 = vpop.permute.xlu0 %1400
      %1402 = vrot.lane.b32.xlu0 %v822, 39
      %v1403 = vpop.permute.xlu0 %1402
      %1404 = vrot.lane.b32.xlu0 %v823, 39
      %v1405 = vpop.permute.xlu0 %1404
      %1406 = vrot.lane.b32.xlu0 %v824, 39
      %v1407 = vpop.permute.xlu0 %1406
      %1408 = vrot.lane.b32.xlu0 %v825, 39
      %v1409 = vpop.permute.xlu0 %1408
      %1410 = vrot.lane.b32.xlu0 %v826, 39
      %v1411 = vpop.permute.xlu0 %1410
      %1412 = vrot.lane.b32.xlu0 %v827, 39
      %v1413 = vpop.permute.xlu0 %1412
      %1414 = vrot.lane.b32.xlu0 %v828, 39
      %v1415 = vpop.permute.xlu0 %1414
      %vm1416 = vcmp.lt.s32.totalorder %v846, 39
      %v1417 = vsel %vm1416, %v1413, %v1415
      %v1418 = vsel %vm1416, %v1411, %v1413
      %v1419 = vsel %vm1416, %v1409, %v1411
      %v1420 = vsel %vm1416, %v1407, %v1409
      %v1421 = vsel %vm1416, %v1405, %v1407
      %v1422 = vsel %vm1416, %v1403, %v1405
      %v1423 = vsel %vm1416, %v1401, %v1403
      %v1424 = vsel %vm1416, %v1415, %v1401
      %1425 = vst [vmem:[#allocation2 + $0x480] sm:$0xff] %v1423
      %1426 = vst [vmem:[#allocation2 + $0x488] sm:$0xff] %v1422
      %1427 = vst [vmem:[#allocation2 + $0x490] sm:$0xff] %v1421
      %1428 = vst [vmem:[#allocation2 + $0x498] sm:$0xff] %v1420
      %1429 = vst [vmem:[#allocation2 + $0x4a0] sm:$0xff] %v1419
      %1430 = vst [vmem:[#allocation2 + $0x4a8] sm:$0xff] %v1418
      %1431 = vst [vmem:[#allocation2 + $0x4b0] sm:$0xff] %v1417
      %1432 = vst [vmem:[#allocation2 + $0x4b8] sm:$0xff] %v1424
      %1433 = vrot.lane.b32.xlu0 %v821, 38
      %v1434 = vpop.permute.xlu0 %1433
      %1435 = vrot.lane.b32.xlu0 %v822, 38
      %v1436 = vpop.permute.xlu0 %1435
      %1437 = vrot.lane.b32.xlu0 %v823, 38
      %v1438 = vpop.permute.xlu0 %1437
      %1439 = vrot.lane.b32.xlu0 %v824, 38
      %v1440 = vpop.permute.xlu0 %1439
      %1441 = vrot.lane.b32.xlu0 %v825, 38
      %v1442 = vpop.permute.xlu0 %1441
      %1443 = vrot.lane.b32.xlu0 %v826, 38
      %v1444 = vpop.permute.xlu0 %1443
      %1445 = vrot.lane.b32.xlu0 %v827, 38
      %v1446 = vpop.permute.xlu0 %1445
      %1447 = vrot.lane.b32.xlu0 %v828, 38
      %v1448 = vpop.permute.xlu0 %1447
      %vm1449 = vcmp.lt.s32.totalorder %v846, 38
      %v1450 = vsel %vm1449, %v1446, %v1448
      %v1451 = vsel %vm1449, %v1444, %v1446
      %v1452 = vsel %vm1449, %v1442, %v1444
      %v1453 = vsel %vm1449, %v1440, %v1442
      %v1454 = vsel %vm1449, %v1438, %v1440
      %v1455 = vsel %vm1449, %v1436, %v1438
      %v1456 = vsel %vm1449, %v1434, %v1436
      %v1457 = vsel %vm1449, %v1448, %v1434
      %1458 = vst [vmem:[#allocation2 + $0x4c0] sm:$0xff] %v1456
      %1459 = vst [vmem:[#allocation2 + $0x4c8] sm:$0xff] %v1455
      %1460 = vst [vmem:[#allocation2 + $0x4d0] sm:$0xff] %v1454
      %1461 = vst [vmem:[#allocation2 + $0x4d8] sm:$0xff] %v1453
      %1462 = vst [vmem:[#allocation2 + $0x4e0] sm:$0xff] %v1452
      %1463 = vst [vmem:[#allocation2 + $0x4e8] sm:$0xff] %v1451
      %1464 = vst [vmem:[#allocation2 + $0x4f0] sm:$0xff] %v1450
      %1465 = vst [vmem:[#allocation2 + $0x4f8] sm:$0xff] %v1457
      %1466 = vrot.lane.b32.xlu0 %v821, 37
      %v1467 = vpop.permute.xlu0 %1466
      %1468 = vrot.lane.b32.xlu0 %v822, 37
      %v1469 = vpop.permute.xlu0 %1468
      %1470 = vrot.lane.b32.xlu0 %v823, 37
      %v1471 = vpop.permute.xlu0 %1470
      %1472 = vrot.lane.b32.xlu0 %v824, 37
      %v1473 = vpop.permute.xlu0 %1472
      %1474 = vrot.lane.b32.xlu0 %v825, 37
      %v1475 = vpop.permute.xlu0 %1474
      %1476 = vrot.lane.b32.xlu0 %v826, 37
      %v1477 = vpop.permute.xlu0 %1476
      %1478 = vrot.lane.b32.xlu0 %v827, 37
      %v1479 = vpop.permute.xlu0 %1478
      %1480 = vrot.lane.b32.xlu0 %v828, 37
      %v1481 = vpop.permute.xlu0 %1480
      %vm1482 = vcmp.lt.s32.totalorder %v846, 37
      %v1483 = vsel %vm1482, %v1479, %v1481
      %v1484 = vsel %vm1482, %v1477, %v1479
      %v1485 = vsel %vm1482, %v1475, %v1477
      %v1486 = vsel %vm1482, %v1473, %v1475
      %v1487 = vsel %vm1482, %v1471, %v1473
      %v1488 = vsel %vm1482, %v1469, %v1471
      %v1489 = vsel %vm1482, %v1467, %v1469
      %v1490 = vsel %vm1482, %v1481, %v1467
      %1491 = vst [vmem:[#allocation2 + $0x500] sm:$0xff] %v1489
      %1492 = vst [vmem:[#allocation2 + $0x508] sm:$0xff] %v1488
      %1493 = vst [vmem:[#allocation2 + $0x510] sm:$0xff] %v1487
      %1494 = vst [vmem:[#allocation2 + $0x518] sm:$0xff] %v1486
      %1495 = vst [vmem:[#allocation2 + $0x520] sm:$0xff] %v1485
      %1496 = vst [vmem:[#allocation2 + $0x528] sm:$0xff] %v1484
      %1497 = vst [vmem:[#allocation2 + $0x530] sm:$0xff] %v1483
      %1498 = vst [vmem:[#allocation2 + $0x538] sm:$0xff] %v1490
      %1499 = vrot.lane.b32.xlu0 %v821, 29
      %v1500 = vpop.permute.xlu0 %1499
      %1501 = vrot.lane.b32.xlu0 %v822, 29
      %v1502 = vpop.permute.xlu0 %1501
      %1503 = vrot.lane.b32.xlu0 %v823, 29
      %v1504 = vpop.permute.xlu0 %1503
      %1505 = vrot.lane.b32.xlu0 %v824, 29
      %v1506 = vpop.permute.xlu0 %1505
      %1507 = vrot.lane.b32.xlu0 %v825, 29
      %v1508 = vpop.permute.xlu0 %1507
      %1509 = vrot.lane.b32.xlu0 %v826, 29
      %v1510 = vpop.permute.xlu0 %1509
      %1511 = vrot.lane.b32.xlu0 %v827, 29
      %v1512 = vpop.permute.xlu0 %1511
      %1513 = vrot.lane.b32.xlu0 %v828, 29
      %v1514 = vpop.permute.xlu0 %1513
      %vm1515 = vcmp.lt.s32.totalorder %v846, 29
      %v1516 = vsel %vm1515, %v1512, %v1514
      %v1517 = vsel %vm1515, %v1510, %v1512
      %v1518 = vsel %vm1515, %v1508, %v1510
      %v1519 = vsel %vm1515, %v1506, %v1508
      %v1520 = vsel %vm1515, %v1504, %v1506
      %v1521 = vsel %vm1515, %v1502, %v1504
      %v1522 = vsel %vm1515, %v1500, %v1502
      %v1523 = vsel %vm1515, %v1514, %v1500
      %1524 = vst [vmem:[#allocation2 + $0x540] sm:$0xff] %v1522
      %1525 = vst [vmem:[#allocation2 + $0x548] sm:$0xff] %v1521
      %1526 = vst [vmem:[#allocation2 + $0x550] sm:$0xff] %v1520
      %1527 = vst [vmem:[#allocation2 + $0x558] sm:$0xff] %v1519
      %1528 = vst [vmem:[#allocation2 + $0x560] sm:$0xff] %v1518
      %1529 = vst [vmem:[#allocation2 + $0x568] sm:$0xff] %v1517
      %1530 = vst [vmem:[#allocation2 + $0x570] sm:$0xff] %v1516
      %1531 = vst [vmem:[#allocation2 + $0x578] sm:$0xff] %v1523
      %1532 = vrot.lane.b32.xlu0 %v821, 28
      %v1533 = vpop.permute.xlu0 %1532
      %1534 = vrot.lane.b32.xlu0 %v822, 28
      %v1535 = vpop.permute.xlu0 %1534
      %1536 = vrot.lane.b32.xlu0 %v823, 28
      %v1537 = vpop.permute.xlu0 %1536
      %1538 = vrot.lane.b32.xlu0 %v824, 28
      %v1539 = vpop.permute.xlu0 %1538
      %1540 = vrot.lane.b32.xlu0 %v825, 28
      %v1541 = vpop.permute.xlu0 %1540
      %1542 = vrot.lane.b32.xlu0 %v826, 28
      %v1543 = vpop.permute.xlu0 %1542
      %1544 = vrot.lane.b32.xlu0 %v827, 28
      %v1545 = vpop.permute.xlu0 %1544
      %1546 = vrot.lane.b32.xlu0 %v828, 28
      %v1547 = vpop.permute.xlu0 %1546
      %vm1548 = vcmp.lt.s32.totalorder %v846, 28
      %v1549 = vsel %vm1548, %v1545, %v1547
      %v1550 = vsel %vm1548, %v1543, %v1545
      %v1551 = vsel %vm1548, %v1541, %v1543
      %v1552 = vsel %vm1548, %v1539, %v1541
      %v1553 = vsel %vm1548, %v1537, %v1539
      %v1554 = vsel %vm1548, %v1535, %v1537
      %v1555 = vsel %vm1548, %v1533, %v1535
      %v1556 = vsel %vm1548, %v1547, %v1533
      %1557 = vst [vmem:[#allocation2 + $0x580] sm:$0xff] %v1555
      %1558 = vst [vmem:[#allocation2 + $0x588] sm:$0xff] %v1554
      %1559 = vst [vmem:[#allocation2 + $0x590] sm:$0xff] %v1553
      %1560 = vst [vmem:[#allocation2 + $0x598] sm:$0xff] %v1552
      %1561 = vst [vmem:[#allocation2 + $0x5a0] sm:$0xff] %v1551
      %1562 = vst [vmem:[#allocation2 + $0x5a8] sm:$0xff] %v1550
      %1563 = vst [vmem:[#allocation2 + $0x5b0] sm:$0xff] %v1549
      %1564 = vst [vmem:[#allocation2 + $0x5b8] sm:$0xff] %v1556
      %1565 = vrot.lane.b32.xlu0 %v821, 27
      %v1566 = vpop.permute.xlu0 %1565
      %1567 = vrot.lane.b32.xlu0 %v822, 27
      %v1568 = vpop.permute.xlu0 %1567
      %1569 = vrot.lane.b32.xlu0 %v823, 27
      %v1570 = vpop.permute.xlu0 %1569
      %1571 = vrot.lane.b32.xlu0 %v824, 27
      %v1572 = vpop.permute.xlu0 %1571
      %1573 = vrot.lane.b32.xlu0 %v825, 27
      %v1574 = vpop.permute.xlu0 %1573
      %1575 = vrot.lane.b32.xlu0 %v826, 27
      %v1576 = vpop.permute.xlu0 %1575
      %1577 = vrot.lane.b32.xlu0 %v827, 27
      %v1578 = vpop.permute.xlu0 %1577
      %1579 = vrot.lane.b32.xlu0 %v828, 27
      %v1580 = vpop.permute.xlu0 %1579
      %vm1581 = vcmp.lt.s32.totalorder %v846, 27
      %v1582 = vsel %vm1581, %v1578, %v1580
      %v1583 = vsel %vm1581, %v1576, %v1578
      %v1584 = vsel %vm1581, %v1574, %v1576
      %v1585 = vsel %vm1581, %v1572, %v1574
      %v1586 = vsel %vm1581, %v1570, %v1572
      %v1587 = vsel %vm1581, %v1568, %v1570
      %v1588 = vsel %vm1581, %v1566, %v1568
      %v1589 = vsel %vm1581, %v1580, %v1566
      %1590 = vst [vmem:[#allocation2 + $0x5c0] sm:$0xff] %v1588
      %1591 = vst [vmem:[#allocation2 + $0x5c8] sm:$0xff] %v1587
      %1592 = vst [vmem:[#allocation2 + $0x5d0] sm:$0xff] %v1586
      %1593 = vst [vmem:[#allocation2 + $0x5d8] sm:$0xff] %v1585
      %1594 = vst [vmem:[#allocation2 + $0x5e0] sm:$0xff] %v1584
      %1595 = vst [vmem:[#allocation2 + $0x5e8] sm:$0xff] %v1583
      %1596 = vst [vmem:[#allocation2 + $0x5f0] sm:$0xff] %v1582
      %1597 = vst [vmem:[#allocation2 + $0x5f8] sm:$0xff] %v1589
      %1598 = vrot.lane.b32.xlu0 %v821, 19
      %v1599 = vpop.permute.xlu0 %1598
      %1600 = vrot.lane.b32.xlu0 %v822, 19
      %v1601 = vpop.permute.xlu0 %1600
      %1602 = vrot.lane.b32.xlu0 %v823, 19
      %v1603 = vpop.permute.xlu0 %1602
      %1604 = vrot.lane.b32.xlu0 %v824, 19
      %v1605 = vpop.permute.xlu0 %1604
      %1606 = vrot.lane.b32.xlu0 %v825, 19
      %v1607 = vpop.permute.xlu0 %1606
      %1608 = vrot.lane.b32.xlu0 %v826, 19
      %v1609 = vpop.permute.xlu0 %1608
      %1610 = vrot.lane.b32.xlu0 %v827, 19
      %v1611 = vpop.permute.xlu0 %1610
      %1612 = vrot.lane.b32.xlu0 %v828, 19
      %v1613 = vpop.permute.xlu0 %1612
      %vm1614 = vcmp.lt.s32.totalorder %v846, 19
      %v1615 = vsel %vm1614, %v1611, %v1613
      %v1616 = vsel %vm1614, %v1609, %v1611
      %v1617 = vsel %vm1614, %v1607, %v1609
      %v1618 = vsel %vm1614, %v1605, %v1607
      %v1619 = vsel %vm1614, %v1603, %v1605
      %v1620 = vsel %vm1614, %v1601, %v1603
      %v1621 = vsel %vm1614, %v1599, %v1601
      %v1622 = vsel %vm1614, %v1613, %v1599
      %1623 = vst [vmem:[#allocation2 + $0x600] sm:$0xff] %v1621
      %1624 = vst [vmem:[#allocation2 + $0x608] sm:$0xff] %v1620
      %1625 = vst [vmem:[#allocation2 + $0x610] sm:$0xff] %v1619
      %1626 = vst [vmem:[#allocation2 + $0x618] sm:$0xff] %v1618
      %1627 = vst [vmem:[#allocation2 + $0x620] sm:$0xff] %v1617
      %1628 = vst [vmem:[#allocation2 + $0x628] sm:$0xff] %v1616
      %1629 = vst [vmem:[#allocation2 + $0x630] sm:$0xff] %v1615
      %1630 = vst [vmem:[#allocation2 + $0x638] sm:$0xff] %v1622
      %1631 = vrot.lane.b32.xlu0 %v821, 18
      %v1632 = vpop.permute.xlu0 %1631
      %1633 = vrot.lane.b32.xlu0 %v822, 18
      %v1634 = vpop.permute.xlu0 %1633
      %1635 = vrot.lane.b32.xlu0 %v823, 18
      %v1636 = vpop.permute.xlu0 %1635
      %1637 = vrot.lane.b32.xlu0 %v824, 18
      %v1638 = vpop.permute.xlu0 %1637
      %1639 = vrot.lane.b32.xlu0 %v825, 18
      %v1640 = vpop.permute.xlu0 %1639
      %1641 = vrot.lane.b32.xlu0 %v826, 18
      %v1642 = vpop.permute.xlu0 %1641
      %1643 = vrot.lane.b32.xlu0 %v827, 18
      %v1644 = vpop.permute.xlu0 %1643
      %1645 = vrot.lane.b32.xlu0 %v828, 18
      %v1646 = vpop.permute.xlu0 %1645
      %vm1647 = vcmp.lt.s32.totalorder %v846, 18
      %v1648 = vsel %vm1647, %v1644, %v1646
      %v1649 = vsel %vm1647, %v1642, %v1644
      %v1650 = vsel %vm1647, %v1640, %v1642
      %v1651 = vsel %vm1647, %v1638, %v1640
      %v1652 = vsel %vm1647, %v1636, %v1638
      %v1653 = vsel %vm1647, %v1634, %v1636
      %v1654 = vsel %vm1647, %v1632, %v1634
      %v1655 = vsel %vm1647, %v1646, %v1632
      %1656 = vst [vmem:[#allocation2 + $0x640] sm:$0xff] %v1654
      %1657 = vst [vmem:[#allocation2 + $0x648] sm:$0xff] %v1653
      %1658 = vst [vmem:[#allocation2 + $0x650] sm:$0xff] %v1652
      %1659 = vst [vmem:[#allocation2 + $0x658] sm:$0xff] %v1651
      %1660 = vst [vmem:[#allocation2 + $0x660] sm:$0xff] %v1650
      %1661 = vst [vmem:[#allocation2 + $0x668] sm:$0xff] %v1649
      %1662 = vst [vmem:[#allocation2 + $0x670] sm:$0xff] %v1648
      %1663 = vst [vmem:[#allocation2 + $0x678] sm:$0xff] %v1655
      %1664 = vrot.lane.b32.xlu0 %v821, 17
      %v1665 = vpop.permute.xlu0 %1664
      %1666 = vrot.lane.b32.xlu0 %v822, 17
      %v1667 = vpop.permute.xlu0 %1666
      %1668 = vrot.lane.b32.xlu0 %v823, 17
      %v1669 = vpop.permute.xlu0 %1668
      %1670 = vrot.lane.b32.xlu0 %v824, 17
      %v1671 = vpop.permute.xlu0 %1670
      %1672 = vrot.lane.b32.xlu0 %v825, 17
      %v1673 = vpop.permute.xlu0 %1672
      %1674 = vrot.lane.b32.xlu0 %v826, 17
      %v1675 = vpop.permute.xlu0 %1674
      %1676 = vrot.lane.b32.xlu0 %v827, 17
      %v1677 = vpop.permute.xlu0 %1676
      %1678 = vrot.lane.b32.xlu0 %v828, 17
      %v1679 = vpop.permute.xlu0 %1678
      %vm1680 = vcmp.lt.s32.totalorder %v846, 17
      %v1681 = vsel %vm1680, %v1677, %v1679
      %v1682 = vsel %vm1680, %v1675, %v1677
      %v1683 = vsel %vm1680, %v1673, %v1675
      %v1684 = vsel %vm1680, %v1671, %v1673
      %v1685 = vsel %vm1680, %v1669, %v1671
      %v1686 = vsel %vm1680, %v1667, %v1669
      %v1687 = vsel %vm1680, %v1665, %v1667
      %v1688 = vsel %vm1680, %v1679, %v1665
      %1689 = vst [vmem:[#allocation2 + $0x680] sm:$0xff] %v1687
      %1690 = vst [vmem:[#allocation2 + $0x688] sm:$0xff] %v1686
      %1691 = vst [vmem:[#allocation2 + $0x690] sm:$0xff] %v1685
      %1692 = vst [vmem:[#allocation2 + $0x698] sm:$0xff] %v1684
      %1693 = vst [vmem:[#allocation2 + $0x6a0] sm:$0xff] %v1683
      %1694 = vst [vmem:[#allocation2 + $0x6a8] sm:$0xff] %v1682
      %1695 = vst [vmem:[#allocation2 + $0x6b0] sm:$0xff] %v1681
      %1696 = vst [vmem:[#allocation2 + $0x6b8] sm:$0xff] %v1688
      %v1697 = vld [vmem:[%s3] sm:$0xff]
      %v1698 = vld [vmem:[%s3 + $0x8] sm:$0xff]
      %v1699 = vld [vmem:[#allocation2] sm:$0xff]
      %v1700 = vld [vmem:[#allocation2 + $0x8] sm:$0xff]
      %v1701 = vld [vmem:[#allocation2 + $0x10] sm:$0xff]
      %v1702 = vld [vmem:[#allocation2 + $0x18] sm:$0xff]
      %v1703 = vld [vmem:[#allocation2 + $0x20] sm:$0xff]
      %v1704 = vld [vmem:[#allocation2 + $0x28] sm:$0xff]
      %v1705 = vld [vmem:[#allocation2 + $0x30] sm:$0xff]
      %v1706 = vld [vmem:[#allocation2 + $0x38] sm:$0xff]
      %v1707 = vld [vmem:[#allocation2 + $0x40] sm:$0xff]
      %v1708 = vld [vmem:[#allocation2 + $0x48] sm:$0xff]
      %v1709 = vld [vmem:[#allocation2 + $0x50] sm:$0xff]
      %v1710 = vld [vmem:[#allocation2 + $0x58] sm:$0xff]
      %v1711 = vld [vmem:[#allocation2 + $0x60] sm:$0xff]
      %v1712 = vld [vmem:[#allocation2 + $0x68] sm:$0xff]
      %v1713 = vld [vmem:[#allocation2 + $0x70] sm:$0xff]
      %v1714 = vld [vmem:[#allocation2 + $0x78] sm:$0xff]
      %v1715 = vld [vmem:[#allocation2 + $0x80] sm:$0xff]
      %v1716 = vld [vmem:[#allocation2 + $0x88] sm:$0xff]
      %v1717 = vld [vmem:[#allocation2 + $0x90] sm:$0xff]
      %v1718 = vld [vmem:[#allocation2 + $0x98] sm:$0xff]
      %v1719 = vld [vmem:[#allocation2 + $0xa0] sm:$0xff]
      %v1720 = vld [vmem:[#allocation2 + $0xa8] sm:$0xff]
      %v1721 = vld [vmem:[#allocation2 + $0xb0] sm:$0xff]
      %v1722 = vld [vmem:[#allocation2 + $0xb8] sm:$0xff]
      %v1723 = vld [vmem:[#allocation2 + $0xc0] sm:$0xff]
      %v1724 = vld [vmem:[#allocation2 + $0xc8] sm:$0xff]
      %v1725 = vld [vmem:[#allocation2 + $0xd0] sm:$0xff]
      %v1726 = vld [vmem:[#allocation2 + $0xd8] sm:$0xff]
      %v1727 = vld [vmem:[#allocation2 + $0xe0] sm:$0xff]
      %v1728 = vld [vmem:[#allocation2 + $0xe8] sm:$0xff]
      %v1729 = vld [vmem:[#allocation2 + $0xf0] sm:$0xff]
      %v1730 = vld [vmem:[#allocation2 + $0xf8] sm:$0xff]
      %v1731 = vld [vmem:[#allocation2 + $0x100] sm:$0xff]
      %v1732 = vld [vmem:[#allocation2 + $0x108] sm:$0xff]
      %v1733 = vld [vmem:[#allocation2 + $0x110] sm:$0xff]
      %v1734 = vld [vmem:[#allocation2 + $0x118] sm:$0xff]
      %v1735 = vld [vmem:[#allocation2 + $0x120] sm:$0xff]
      %v1736 = vld [vmem:[#allocation2 + $0x128] sm:$0xff]
      %v1737 = vld [vmem:[#allocation2 + $0x130] sm:$0xff]
      %v1738 = vld [vmem:[#allocation2 + $0x138] sm:$0xff]
      %v1739 = vld [vmem:[#allocation2 + $0x140] sm:$0xff]
      %v1740 = vld [vmem:[#allocation2 + $0x148] sm:$0xff]
      %v1741 = vld [vmem:[#allocation2 + $0x150] sm:$0xff]
      %v1742 = vld [vmem:[#allocation2 + $0x158] sm:$0xff]
      %v1743 = vld [vmem:[#allocation2 + $0x160] sm:$0xff]
      %v1744 = vld [vmem:[#allocation2 + $0x168] sm:$0xff]
      %v1745 = vld [vmem:[#allocation2 + $0x170] sm:$0xff]
      %v1746 = vld [vmem:[#allocation2 + $0x178] sm:$0xff]
      %v1747 = vld [vmem:[#allocation2 + $0x180] sm:$0xff]
      %v1748 = vld [vmem:[#allocation2 + $0x188] sm:$0xff]
      %v1749 = vld [vmem:[#allocation2 + $0x190] sm:$0xff]
      %v1750 = vld [vmem:[#allocation2 + $0x198] sm:$0xff]
      %v1751 = vld [vmem:[#allocation2 + $0x1a0] sm:$0xff]
      %v1752 = vld [vmem:[#allocation2 + $0x1a8] sm:$0xff]
      %v1753 = vld [vmem:[#allocation2 + $0x1b0] sm:$0xff]
      %v1754 = vld [vmem:[#allocation2 + $0x1b8] sm:$0xff]
      %v1755 = vld [vmem:[#allocation2 + $0x1c0] sm:$0xff]
      %v1756 = vld [vmem:[#allocation2 + $0x1c8] sm:$0xff]
      %v1757 = vld [vmem:[#allocation2 + $0x1d0] sm:$0xff]
      %v1758 = vld [vmem:[#allocation2 + $0x1d8] sm:$0xff]
      %v1759 = vld [vmem:[#allocation2 + $0x1e0] sm:$0xff]
      %v1760 = vld [vmem:[#allocation2 + $0x1e8] sm:$0xff]
      %v1761 = vld [vmem:[#allocation2 + $0x1f0] sm:$0xff]
      %v1762 = vld [vmem:[#allocation2 + $0x1f8] sm:$0xff]
      %v1763 = vld [vmem:[#allocation2 + $0x200] sm:$0xff]
      %v1764 = vld [vmem:[#allocation2 + $0x208] sm:$0xff]
      %v1765 = vld [vmem:[#allocation2 + $0x210] sm:$0xff]
      %v1766 = vld [vmem:[#allocation2 + $0x218] sm:$0xff]
      %v1767 = vld [vmem:[#allocation2 + $0x220] sm:$0xff]
      %v1768 = vld [vmem:[#allocation2 + $0x228] sm:$0xff]
      %v1769 = vld [vmem:[#allocation2 + $0x230] sm:$0xff]
      %v1770 = vld [vmem:[#allocation2 + $0x238] sm:$0xff]
      %v1771 = vld [vmem:[#allocation2 + $0x240] sm:$0xff]
      %v1772 = vld [vmem:[#allocation2 + $0x248] sm:$0xff]
      %v1773 = vld [vmem:[#allocation2 + $0x250] sm:$0xff]
      %v1774 = vld [vmem:[#allocation2 + $0x258] sm:$0xff]
      %v1775 = vld [vmem:[#allocation2 + $0x260] sm:$0xff]
      %v1776 = vld [vmem:[#allocation2 + $0x268] sm:$0xff]
      %v1777 = vld [vmem:[#allocation2 + $0x270] sm:$0xff]
      %v1778 = vld [vmem:[#allocation2 + $0x278] sm:$0xff]
      %v1779 = vld [vmem:[#allocation2 + $0x280] sm:$0xff]
      %v1780 = vld [vmem:[#allocation2 + $0x288] sm:$0xff]
      %v1781 = vld [vmem:[#allocation2 + $0x290] sm:$0xff]
      %v1782 = vld [vmem:[#allocation2 + $0x298] sm:$0xff]
      %v1783 = vld [vmem:[#allocation2 + $0x2a0] sm:$0xff]
      %v1784 = vld [vmem:[#allocation2 + $0x2a8] sm:$0xff]
      %v1785 = vld [vmem:[#allocation2 + $0x2b0] sm:$0xff]
      %v1786 = vld [vmem:[#allocation2 + $0x2b8] sm:$0xff]
      %v1787 = vld [vmem:[#allocation2 + $0x2c0] sm:$0xff]
      %v1788 = vld [vmem:[#allocation2 + $0x2c8] sm:$0xff]
      %v1789 = vld [vmem:[#allocation2 + $0x2d0] sm:$0xff]
      %v1790 = vld [vmem:[#allocation2 + $0x2d8] sm:$0xff]
      %v1791 = vld [vmem:[#allocation2 + $0x2e0] sm:$0xff]
      %v1792 = vld [vmem:[#allocation2 + $0x2e8] sm:$0xff]
      %v1793 = vld [vmem:[#allocation2 + $0x2f0] sm:$0xff]
      %v1794 = vld [vmem:[#allocation2 + $0x2f8] sm:$0xff]
      %v1795 = vld [vmem:[#allocation2 + $0x300] sm:$0xff]
      %v1796 = vld [vmem:[#allocation2 + $0x308] sm:$0xff]
      %v1797 = vld [vmem:[#allocation2 + $0x310] sm:$0xff]
      %v1798 = vld [vmem:[#allocation2 + $0x318] sm:$0xff]
      %v1799 = vld [vmem:[#allocation2 + $0x320] sm:$0xff]
      %v1800 = vld [vmem:[#allocation2 + $0x328] sm:$0xff]
      %v1801 = vld [vmem:[#allocation2 + $0x330] sm:$0xff]
      %v1802 = vld [vmem:[#allocation2 + $0x338] sm:$0xff]
      %v1803 = vld [vmem:[#allocation2 + $0x340] sm:$0xff]
      %v1804 = vld [vmem:[#allocation2 + $0x348] sm:$0xff]
      %v1805 = vld [vmem:[#allocation2 + $0x350] sm:$0xff]
      %v1806 = vld [vmem:[#allocation2 + $0x358] sm:$0xff]
      %v1807 = vld [vmem:[#allocation2 + $0x360] sm:$0xff]
      %v1808 = vld [vmem:[#allocation2 + $0x368] sm:$0xff]
      %v1809 = vld [vmem:[#allocation2 + $0x370] sm:$0xff]
      %v1810 = vld [vmem:[#allocation2 + $0x378] sm:$0xff]
      %v1811 = vld [vmem:[#allocation2 + $0x380] sm:$0xff]
      %v1812 = vld [vmem:[#allocation2 + $0x388] sm:$0xff]
      %v1813 = vld [vmem:[#allocation2 + $0x390] sm:$0xff]
      %v1814 = vld [vmem:[#allocation2 + $0x398] sm:$0xff]
      %v1815 = vld [vmem:[#allocation2 + $0x3a0] sm:$0xff]
      %v1816 = vld [vmem:[#allocation2 + $0x3a8] sm:$0xff]
      %v1817 = vld [vmem:[#allocation2 + $0x3b0] sm:$0xff]
      %v1818 = vld [vmem:[#allocation2 + $0x3b8] sm:$0xff]
      %v1819 = vld [vmem:[#allocation2 + $0x3c0] sm:$0xff]
      %v1820 = vld [vmem:[#allocation2 + $0x3c8] sm:$0xff]
      %v1821 = vld [vmem:[#allocation2 + $0x3d0] sm:$0xff]
      %v1822 = vld [vmem:[#allocation2 + $0x3d8] sm:$0xff]
      %v1823 = vld [vmem:[#allocation2 + $0x3e0] sm:$0xff]
      %v1824 = vld [vmem:[#allocation2 + $0x3e8] sm:$0xff]
      %v1825 = vld [vmem:[#allocation2 + $0x3f0] sm:$0xff]
      %v1826 = vld [vmem:[#allocation2 + $0x3f8] sm:$0xff]
      %v1827 = vld [vmem:[#allocation2 + $0x400] sm:$0xff]
      %v1828 = vld [vmem:[#allocation2 + $0x408] sm:$0xff]
      %v1829 = vld [vmem:[#allocation2 + $0x410] sm:$0xff]
      %v1830 = vld [vmem:[#allocation2 + $0x418] sm:$0xff]
      %v1831 = vld [vmem:[#allocation2 + $0x420] sm:$0xff]
      %v1832 = vld [vmem:[#allocation2 + $0x428] sm:$0xff]
      %v1833 = vld [vmem:[#allocation2 + $0x430] sm:$0xff]
      %v1834 = vld [vmem:[#allocation2 + $0x438] sm:$0xff]
      %v1835 = vld [vmem:[#allocation2 + $0x440] sm:$0xff]
      %v1836 = vld [vmem:[#allocation2 + $0x448] sm:$0xff]
      %v1837 = vld [vmem:[#allocation2 + $0x450] sm:$0xff]
      %v1838 = vld [vmem:[#allocation2 + $0x458] sm:$0xff]
      %v1839 = vld [vmem:[#allocation2 + $0x460] sm:$0xff]
      %v1840 = vld [vmem:[#allocation2 + $0x468] sm:$0xff]
      %v1841 = vld [vmem:[#allocation2 + $0x470] sm:$0xff]
      %v1842 = vld [vmem:[#allocation2 + $0x478] sm:$0xff]
      %v1843 = vld [vmem:[#allocation2 + $0x480] sm:$0xff]
      %v1844 = vld [vmem:[#allocation2 + $0x488] sm:$0xff]
      %v1845 = vld [vmem:[#allocation2 + $0x490] sm:$0xff]
      %v1846 = vld [vmem:[#allocation2 + $0x498] sm:$0xff]
      %v1847 = vld [vmem:[#allocation2 + $0x4a0] sm:$0xff]
      %v1848 = vld [vmem:[#allocation2 + $0x4a8] sm:$0xff]
      %v1849 = vld [vmem:[#allocation2 + $0x4b0] sm:$0xff]
      %v1850 = vld [vmem:[#allocation2 + $0x4b8] sm:$0xff]
      %v1851 = vld [vmem:[#allocation2 + $0x4c0] sm:$0xff]
      %v1852 = vld [vmem:[#allocation2 + $0x4c8] sm:$0xff]
      %v1853 = vld [vmem:[#allocation2 + $0x4d0] sm:$0xff]
      %v1854 = vld [vmem:[#allocation2 + $0x4d8] sm:$0xff]
      %v1855 = vld [vmem:[#allocation2 + $0x4e0] sm:$0xff]
      %v1856 = vld [vmem:[#allocation2 + $0x4e8] sm:$0xff]
      %v1857 = vld [vmem:[#allocation2 + $0x4f0] sm:$0xff]
      %v1858 = vld [vmem:[#allocation2 + $0x4f8] sm:$0xff]
      %v1859 = vld [vmem:[#allocation2 + $0x500] sm:$0xff]
      %v1860 = vld [vmem:[#allocation2 + $0x508] sm:$0xff]
      %v1861 = vld [vmem:[#allocation2 + $0x510] sm:$0xff]
      %v1862 = vld [vmem:[#allocation2 + $0x518] sm:$0xff]
      %v1863 = vld [vmem:[#allocation2 + $0x520] sm:$0xff]
      %v1864 = vld [vmem:[#allocation2 + $0x528] sm:$0xff]
      %v1865 = vld [vmem:[#allocation2 + $0x530] sm:$0xff]
      %v1866 = vld [vmem:[#allocation2 + $0x538] sm:$0xff]
      %v1867 = vld [vmem:[#allocation2 + $0x540] sm:$0xff]
      %v1868 = vld [vmem:[#allocation2 + $0x548] sm:$0xff]
      %v1869 = vld [vmem:[#allocation2 + $0x550] sm:$0xff]
      %v1870 = vld [vmem:[#allocation2 + $0x558] sm:$0xff]
      %v1871 = vld [vmem:[#allocation2 + $0x560] sm:$0xff]
      %v1872 = vld [vmem:[#allocation2 + $0x568] sm:$0xff]
      %v1873 = vld [vmem:[#allocation2 + $0x570] sm:$0xff]
      %v1874 = vld [vmem:[#allocation2 + $0x578] sm:$0xff]
      %v1875 = vld [vmem:[#allocation2 + $0x580] sm:$0xff]
      %v1876 = vld [vmem:[#allocation2 + $0x588] sm:$0xff]
      %v1877 = vld [vmem:[#allocation2 + $0x590] sm:$0xff]
      %v1878 = vld [vmem:[#allocation2 + $0x598] sm:$0xff]
      %v1879 = vld [vmem:[#allocation2 + $0x5a0] sm:$0xff]
      %v1880 = vld [vmem:[#allocation2 + $0x5a8] sm:$0xff]
      %v1881 = vld [vmem:[#allocation2 + $0x5b0] sm:$0xff]
      %v1882 = vld [vmem:[#allocation2 + $0x5b8] sm:$0xff]
      %v1883 = vld [vmem:[#allocation2 + $0x5c0] sm:$0xff]
      %v1884 = vld [vmem:[#allocation2 + $0x5c8] sm:$0xff]
      %v1885 = vld [vmem:[#allocation2 + $0x5d0] sm:$0xff]
      %v1886 = vld [vmem:[#allocation2 + $0x5d8] sm:$0xff]
      %v1887 = vld [vmem:[#allocation2 + $0x5e0] sm:$0xff]
      %v1888 = vld [vmem:[#allocation2 + $0x5e8] sm:$0xff]
      %v1889 = vld [vmem:[#allocation2 + $0x5f0] sm:$0xff]
      %v1890 = vld [vmem:[#allocation2 + $0x5f8] sm:$0xff]
      %v1891 = vld [vmem:[#allocation2 + $0x600] sm:$0xff]
      %v1892 = vld [vmem:[#allocation2 + $0x608] sm:$0xff]
      %v1893 = vld [vmem:[#allocation2 + $0x610] sm:$0xff]
      %v1894 = vld [vmem:[#allocation2 + $0x618] sm:$0xff]
      %v1895 = vld [vmem:[#allocation2 + $0x620] sm:$0xff]
      %v1896 = vld [vmem:[#allocation2 + $0x628] sm:$0xff]
      %v1897 = vld [vmem:[#allocation2 + $0x630] sm:$0xff]
      %v1898 = vld [vmem:[#allocation2 + $0x638] sm:$0xff]
      %v1899 = vld [vmem:[#allocation2 + $0x640] sm:$0xff]
      %v1900 = vld [vmem:[#allocation2 + $0x648] sm:$0xff]
      %v1901 = vld [vmem:[#allocation2 + $0x650] sm:$0xff]
      %v1902 = vld [vmem:[#allocation2 + $0x658] sm:$0xff]
      %v1903 = vld [vmem:[#allocation2 + $0x660] sm:$0xff]
      %v1904 = vld [vmem:[#allocation2 + $0x668] sm:$0xff]
      %v1905 = vld [vmem:[#allocation2 + $0x670] sm:$0xff]
      %v1906 = vld [vmem:[#allocation2 + $0x678] sm:$0xff]
      %v1907 = vld [vmem:[#allocation2 + $0x680] sm:$0xff]
      %v1908 = vld [vmem:[#allocation2 + $0x688] sm:$0xff]
      %v1909 = vld [vmem:[#allocation2 + $0x690] sm:$0xff]
      %v1910 = vld [vmem:[#allocation2 + $0x698] sm:$0xff]
      %v1911 = vld [vmem:[#allocation2 + $0x6a0] sm:$0xff]
      %v1912 = vld [vmem:[#allocation2 + $0x6a8] sm:$0xff]
      %v1913 = vld [vmem:[#allocation2 + $0x6b0] sm:$0xff]
      %v1914 = vld [vmem:[#allocation2 + $0x6b8] sm:$0xff]
      %v1915 = vld [vmem:[%s4] sm:$0xff]
      %1917 = vset.pattern.permute.xlu0 0
      %1918 = vperm.xlu0 %1917, %v1915
      %v1919 = vpop.permute.xlu0 %1918
      %vm1921 = vcmask 719872
      %v1923 = vsel %vm1921, %v1698, 0
      %1925 = vmatpush.msra.mxu0 %v1819
      %1926 = vmatpush.msra.mxu0 %v1811
      %1927 = vmatpush.msra.mxu0 %v1803
      %1928 = vmatpush.msra.mxu0 %v1795
      %1929 = vmatpush.msra.mxu0 %v1787
      %1930 = vmatpush.msra.mxu0 %v1779
      %1931 = vmatpush.msra.mxu0 %v1771
      %1932 = vmatpush.msra.mxu0 %v1763
      %1933 = vmatpush.msra.mxu0 %v1755
      %1934 = vmatpush.msra.mxu0 %v1747
      %1935 = vmatpush.msra.mxu0 %v1739
      %1936 = vmatpush.msra.mxu0 %v1731
      %1937 = vmatpush.msra.mxu0 %v1723
      %1938 = vmatpush.msra.mxu0 %v1715
      %1939 = vmatpush.msra.mxu0 %v1707
      %1940 = vmatpush.msra.mxu0 %v1699
      %1941 = vmatmul.f32.gmra.mxu0 %v1697
      %v1942 = vpop.f32.mrf.mxu0
      %v1943 = vadd.f32 %v1919, %v1942
      %1944 = vdwg.mxu0
      %1945 = vmatpush.msra.mxu0 0.0
      %1946 = vmatpush.msra.mxu0 0.0
      %1947 = vmatpush.msra.mxu0 0.0
      %1948 = vmatpush.msra.mxu0 0.0
      %1949 = vmatpush.msra.mxu0 0.0
      %1950 = vmatpush.msra.mxu0 %v1907
      %1951 = vmatpush.msra.mxu0 %v1899
      %1952 = vmatpush.msra.mxu0 %v1891
      %1953 = vmatpush.msra.mxu0 %v1883
      %1954 = vmatpush.msra.mxu0 %v1875
      %1955 = vmatpush.msra.mxu0 %v1867
      %1956 = vmatpush.msra.mxu0 %v1859
      %1957 = vmatpush.msra.mxu0 %v1851
      %1958 = vmatpush.msra.mxu0 %v1843
      %1959 = vmatpush.msra.mxu0 %v1835
      %1960 = vmatpush.msra.mxu0 %v1827
      %1961 = vmatmul.f32.gmra.mxu0 %v1923
      %v1962 = vpop.f32.mrf.mxu0
      %v1963 = vadd.f32 %v1943, %v1962
      %1964 = vdwg.mxu0
      %1965 = vmatpush.msra.mxu0 %v1820
      %1966 = vmatpush.msra.mxu0 %v1812
      %1967 = vmatpush.msra.mxu0 %v1804
      %1968 = vmatpush.msra.mxu0 %v1796
      %1969 = vmatpush.msra.mxu0 %v1788
      %1970 = vmatpush.msra.mxu0 %v1780
      %1971 = vmatpush.msra.mxu0 %v1772
      %1972 = vmatpush.msra.mxu0 %v1764
      %1973 = vmatpush.msra.mxu0 %v1756
      %1974 = vmatpush.msra.mxu0 %v1748
      %1975 = vmatpush.msra.mxu0 %v1740
      %1976 = vmatpush.msra.mxu0 %v1732
      %1977 = vmatpush.msra.mxu0 %v1724
      %1978 = vmatpush.msra.mxu0 %v1716
      %1979 = vmatpush.msra.mxu0 %v1708
      %1980 = vmatpush.msra.mxu0 %v1700
      %1981 = vmatmul.f32.gmra.mxu0 %v1697
      %v1982 = vpop.f32.mrf.mxu0
      %v1983 = vadd.f32 %v1919, %v1982
      %1984 = vdwg.mxu0
      %1985 = vmatpush.msra.mxu0 0.0
      %1986 = vmatpush.msra.mxu0 0.0
      %1987 = vmatpush.msra.mxu0 0.0
      %1988 = vmatpush.msra.mxu0 0.0
      %1989 = vmatpush.msra.mxu0 0.0
      %1990 = vmatpush.msra.mxu0 %v1908
      %1991 = vmatpush.msra.mxu0 %v1900
      %1992 = vmatpush.msra.mxu0 %v1892
      %1993 = vmatpush.msra.mxu0 %v1884
      %1994 = vmatpush.msra.mxu0 %v1876
      %1995 = vmatpush.msra.mxu0 %v1868
      %1996 = vmatpush.msra.mxu0 %v1860
      %1997 = vmatpush.msra.mxu0 %v1852
      %1998 = vmatpush.msra.mxu0 %v1844
      %1999 = vmatpush.msra.mxu0 %v1836
      %2000 = vmatpush.msra.mxu0 %v1828
      %2001 = vmatmul.f32.gmra.mxu0 %v1923
      %v2002 = vpop.f32.mrf.mxu0
      %v2003 = vadd.f32 %v1983, %v2002
      %2004 = vdwg.mxu0
      %2005 = vmatpush.msra.mxu0 %v1821
      %2006 = vmatpush.msra.mxu0 %v1813
      %2007 = vmatpush.msra.mxu0 %v1805
      %2008 = vmatpush.msra.mxu0 %v1797
      %2009 = vmatpush.msra.mxu0 %v1789
      %2010 = vmatpush.msra.mxu0 %v1781
      %2011 = vmatpush.msra.mxu0 %v1773
      %2012 = vmatpush.msra.mxu0 %v1765
      %2013 = vmatpush.msra.mxu0 %v1757
      %2014 = vmatpush.msra.mxu0 %v1749
      %2015 = vmatpush.msra.mxu0 %v1741
      %2016 = vmatpush.msra.mxu0 %v1733
      %2017 = vmatpush.msra.mxu0 %v1725
      %2018 = vmatpush.msra.mxu0 %v1717
      %2019 = vmatpush.msra.mxu0 %v1709
      %2020 = vmatpush.msra.mxu0 %v1701
      %2021 = vmatmul.f32.gmra.mxu0 %v1697
      %v2022 = vpop.f32.mrf.mxu0
      %v2023 = vadd.f32 %v1919, %v2022
      %2024 = vdwg.mxu0
      %2025 = vmatpush.msra.mxu0 0.0
      %2026 = vmatpush.msra.mxu0 0.0
      %2027 = vmatpush.msra.mxu0 0.0
      %2028 = vmatpush.msra.mxu0 0.0
      %2029 = vmatpush.msra.mxu0 0.0
      %2030 = vmatpush.msra.mxu0 %v1909
      %2031 = vmatpush.msra.mxu0 %v1901
      %2032 = vmatpush.msra.mxu0 %v1893
      %2033 = vmatpush.msra.mxu0 %v1885
      %2034 = vmatpush.msra.mxu0 %v1877
      %2035 = vmatpush.msra.mxu0 %v1869
      %2036 = vmatpush.msra.mxu0 %v1861
      %2037 = vmatpush.msra.mxu0 %v1853
      %2038 = vmatpush.msra.mxu0 %v1845
      %2039 = vmatpush.msra.mxu0 %v1837
      %2040 = vmatpush.msra.mxu0 %v1829
      %2041 = vmatmul.f32.gmra.mxu0 %v1923
      %v2042 = vpop.f32.mrf.mxu0
      %v2043 = vadd.f32 %v2023, %v2042
      %2044 = vdwg.mxu0
      %2045 = vmatpush.msra.mxu0 %v1822
      %2046 = vmatpush.msra.mxu0 %v1814
      %2047 = vmatpush.msra.mxu0 %v1806
      %2048 = vmatpush.msra.mxu0 %v1798
      %2049 = vmatpush.msra.mxu0 %v1790
      %2050 = vmatpush.msra.mxu0 %v1782
      %2051 = vmatpush.msra.mxu0 %v1774
      %2052 = vmatpush.msra.mxu0 %v1766
      %2053 = vmatpush.msra.mxu0 %v1758
      %2054 = vmatpush.msra.mxu0 %v1750
      %2055 = vmatpush.msra.mxu0 %v1742
      %2056 = vmatpush.msra.mxu0 %v1734
      %2057 = vmatpush.msra.mxu0 %v1726
      %2058 = vmatpush.msra.mxu0 %v1718
      %2059 = vmatpush.msra.mxu0 %v1710
      %2060 = vmatpush.msra.mxu0 %v1702
      %2061 = vmatmul.f32.gmra.mxu0 %v1697
      %v2062 = vpop.f32.mrf.mxu0
      %v2063 = vadd.f32 %v1919, %v2062
      %2064 = vdwg.mxu0
      %2065 = vmatpush.msra.mxu0 0.0
      %2066 = vmatpush.msra.mxu0 0.0
      %2067 = vmatpush.msra.mxu0 0.0
      %2068 = vmatpush.msra.mxu0 0.0
      %2069 = vmatpush.msra.mxu0 0.0
      %2070 = vmatpush.msra.mxu0 %v1910
      %2071 = vmatpush.msra.mxu0 %v1902
      %2072 = vmatpush.msra.mxu0 %v1894
      %2073 = vmatpush.msra.mxu0 %v1886
      %2074 = vmatpush.msra.mxu0 %v1878
      %2075 = vmatpush.msra.mxu0 %v1870
      %2076 = vmatpush.msra.mxu0 %v1862
      %2077 = vmatpush.msra.mxu0 %v1854
      %2078 = vmatpush.msra.mxu0 %v1846
      %2079 = vmatpush.msra.mxu0 %v1838
      %2080 = vmatpush.msra.mxu0 %v1830
      %2081 = vmatmul.f32.gmra.mxu0 %v1923
      %v2082 = vpop.f32.mrf.mxu0
      %v2083 = vadd.f32 %v2063, %v2082
      %2084 = vdwg.mxu0
      %2085 = vmatpush.msra.mxu0 %v1823
      %2086 = vmatpush.msra.mxu0 %v1815
      %2087 = vmatpush.msra.mxu0 %v1807
      %2088 = vmatpush.msra.mxu0 %v1799
      %2089 = vmatpush.msra.mxu0 %v1791
      %2090 = vmatpush.msra.mxu0 %v1783
      %2091 = vmatpush.msra.mxu0 %v1775
      %2092 = vmatpush.msra.mxu0 %v1767
      %2093 = vmatpush.msra.mxu0 %v1759
      %2094 = vmatpush.msra.mxu0 %v1751
      %2095 = vmatpush.msra.mxu0 %v1743
      %2096 = vmatpush.msra.mxu0 %v1735
      %2097 = vmatpush.msra.mxu0 %v1727
      %2098 = vmatpush.msra.mxu0 %v1719
      %2099 = vmatpush.msra.mxu0 %v1711
      %2100 = vmatpush.msra.mxu0 %v1703
      %2101 = vmatmul.f32.gmra.mxu0 %v1697
      %v2102 = vpop.f32.mrf.mxu0
      %v2103 = vadd.f32 %v1919, %v2102
      %2104 = vdwg.mxu0
      %2105 = vmatpush.msra.mxu0 0.0
      %2106 = vmatpush.msra.mxu0 0.0
      %2107 = vmatpush.msra.mxu0 0.0
      %2108 = vmatpush.msra.mxu0 0.0
      %2109 = vmatpush.msra.mxu0 0.0
      %2110 = vmatpush.msra.mxu0 %v1911
      %2111 = vmatpush.msra.mxu0 %v1903
      %2112 = vmatpush.msra.mxu0 %v1895
      %2113 = vmatpush.msra.mxu0 %v1887
      %2114 = vmatpush.msra.mxu0 %v1879
      %2115 = vmatpush.msra.mxu0 %v1871
      %2116 = vmatpush.msra.mxu0 %v1863
      %2117 = vmatpush.msra.mxu0 %v1855
      %2118 = vmatpush.msra.mxu0 %v1847
      %2119 = vmatpush.msra.mxu0 %v1839
      %2120 = vmatpush.msra.mxu0 %v1831
      %2121 = vmatmul.f32.gmra.mxu0 %v1923
      %v2122 = vpop.f32.mrf.mxu0
      %v2123 = vadd.f32 %v2103, %v2122
      %2124 = vdwg.mxu0
      %2125 = vmatpush.msra.mxu0 %v1824
      %2126 = vmatpush.msra.mxu0 %v1816
      %2127 = vmatpush.msra.mxu0 %v1808
      %2128 = vmatpush.msra.mxu0 %v1800
      %2129 = vmatpush.msra.mxu0 %v1792
      %2130 = vmatpush.msra.mxu0 %v1784
      %2131 = vmatpush.msra.mxu0 %v1776
      %2132 = vmatpush.msra.mxu0 %v1768
      %2133 = vmatpush.msra.mxu0 %v1760
      %2134 = vmatpush.msra.mxu0 %v1752
      %2135 = vmatpush.msra.mxu0 %v1744
      %2136 = vmatpush.msra.mxu0 %v1736
      %2137 = vmatpush.msra.mxu0 %v1728
      %2138 = vmatpush.msra.mxu0 %v1720
      %2139 = vmatpush.msra.mxu0 %v1712
      %2140 = vmatpush.msra.mxu0 %v1704
      %2141 = vmatmul.f32.gmra.mxu0 %v1697
      %v2142 = vpop.f32.mrf.mxu0
      %v2143 = vadd.f32 %v1919, %v2142
      %2144 = vdwg.mxu0
      %2145 = vmatpush.msra.mxu0 0.0
      %2146 = vmatpush.msra.mxu0 0.0
      %2147 = vmatpush.msra.mxu0 0.0
      %2148 = vmatpush.msra.mxu0 0.0
      %2149 = vmatpush.msra.mxu0 0.0
      %2150 = vmatpush.msra.mxu0 %v1912
      %2151 = vmatpush.msra.mxu0 %v1904
      %2152 = vmatpush.msra.mxu0 %v1896
      %2153 = vmatpush.msra.mxu0 %v1888
      %2154 = vmatpush.msra.mxu0 %v1880
      %2155 = vmatpush.msra.mxu0 %v1872
      %2156 = vmatpush.msra.mxu0 %v1864
      %2157 = vmatpush.msra.mxu0 %v1856
      %2158 = vmatpush.msra.mxu0 %v1848
      %2159 = vmatpush.msra.mxu0 %v1840
      %2160 = vmatpush.msra.mxu0 %v1832
      %2161 = vmatmul.f32.gmra.mxu0 %v1923
      %v2162 = vpop.f32.mrf.mxu0
      %v2163 = vadd.f32 %v2143, %v2162
      %2164 = vdwg.mxu0
      %2165 = vmatpush.msra.mxu0 %v1825
      %2166 = vmatpush.msra.mxu0 %v1817
      %2167 = vmatpush.msra.mxu0 %v1809
      %2168 = vmatpush.msra.mxu0 %v1801
      %2169 = vmatpush.msra.mxu0 %v1793
      %2170 = vmatpush.msra.mxu0 %v1785
      %2171 = vmatpush.msra.mxu0 %v1777
      %2172 = vmatpush.msra.mxu0 %v1769
      %2173 = vmatpush.msra.mxu0 %v1761
      %2174 = vmatpush.msra.mxu0 %v1753
      %2175 = vmatpush.msra.mxu0 %v1745
      %2176 = vmatpush.msra.mxu0 %v1737
      %2177 = vmatpush.msra.mxu0 %v1729
      %2178 = vmatpush.msra.mxu0 %v1721
      %2179 = vmatpush.msra.mxu0 %v1713
      %2180 = vmatpush.msra.mxu0 %v1705
      %2181 = vmatmul.f32.gmra.mxu0 %v1697
      %v2182 = vpop.f32.mrf.mxu0
      %v2183 = vadd.f32 %v1919, %v2182
      %2184 = vdwg.mxu0
      %2185 = vmatpush.msra.mxu0 0.0
      %2186 = vmatpush.msra.mxu0 0.0
      %2187 = vmatpush.msra.mxu0 0.0
      %2188 = vmatpush.msra.mxu0 0.0
      %2189 = vmatpush.msra.mxu0 0.0
      %2190 = vmatpush.msra.mxu0 %v1913
      %2191 = vmatpush.msra.mxu0 %v1905
      %2192 = vmatpush.msra.mxu0 %v1897
      %2193 = vmatpush.msra.mxu0 %v1889
      %2194 = vmatpush.msra.mxu0 %v1881
      %2195 = vmatpush.msra.mxu0 %v1873
      %2196 = vmatpush.msra.mxu0 %v1865
      %2197 = vmatpush.msra.mxu0 %v1857
      %2198 = vmatpush.msra.mxu0 %v1849
      %2199 = vmatpush.msra.mxu0 %v1841
      %2200 = vmatpush.msra.mxu0 %v1833
      %2201 = vmatmul.f32.gmra.mxu0 %v1923
      %v2202 = vpop.f32.mrf.mxu0
      %v2203 = vadd.f32 %v2183, %v2202
      %2204 = vdwg.mxu0
      %2205 = vmatpush.msra.mxu0 %v1826
      %2206 = vmatpush.msra.mxu0 %v1818
      %2207 = vmatpush.msra.mxu0 %v1810
      %2208 = vmatpush.msra.mxu0 %v1802
      %2209 = vmatpush.msra.mxu0 %v1794
      %2210 = vmatpush.msra.mxu0 %v1786
      %2211 = vmatpush.msra.mxu0 %v1778
      %2212 = vmatpush.msra.mxu0 %v1770
      %2213 = vmatpush.msra.mxu0 %v1762
      %2214 = vmatpush.msra.mxu0 %v1754
      %2215 = vmatpush.msra.mxu0 %v1746
      %2216 = vmatpush.msra.mxu0 %v1738
      %2217 = vmatpush.msra.mxu0 %v1730
      %2218 = vmatpush.msra.mxu0 %v1722
      %2219 = vmatpush.msra.mxu0 %v1714
      %2220 = vmatpush.msra.mxu0 %v1706
      %2221 = vmatmul.f32.gmra.mxu0 %v1697
      %v2222 = vpop.f32.mrf.mxu0
      %v2223 = vadd.f32 %v1919, %v2222
      %2224 = vdwg.mxu0
      %2225 = vmatpush.msra.mxu0 0.0
      %2226 = vmatpush.msra.mxu0 0.0
      %2227 = vmatpush.msra.mxu0 0.0
      %2228 = vmatpush.msra.mxu0 0.0
      %2229 = vmatpush.msra.mxu0 0.0
      %2230 = vmatpush.msra.mxu0 %v1914
      %2231 = vmatpush.msra.mxu0 %v1906
      %2232 = vmatpush.msra.mxu0 %v1898
      %2233 = vmatpush.msra.mxu0 %v1890
      %2234 = vmatpush.msra.mxu0 %v1882
      %2235 = vmatpush.msra.mxu0 %v1874
      %2236 = vmatpush.msra.mxu0 %v1866
      %2237 = vmatpush.msra.mxu0 %v1858
      %2238 = vmatpush.msra.mxu0 %v1850
      %2239 = vmatpush.msra.mxu0 %v1842
      %2240 = vmatpush.msra.mxu0 %v1834
      %2241 = vmatmul.f32.gmra.mxu0 %v1923
      %v2242 = vpop.f32.mrf.mxu0
      %v2243 = vadd.f32 %v2223, %v2242
      %2244 = vdwg.mxu0
      %v2246 = vperm.slane %v819, 0
      %v2247 = vperm.slane %v819, 1
      %v2248 = vperm.slane %v819, 2
      %v2249 = vperm.slane %v819, 3
      %v2250 = vperm.slane %v819, 4
      %v2251 = vperm.slane %v819, 5
      %v2252 = vperm.slane %v819, 6
      %v2253 = vperm.slane %v819, 7
      %v2262 = vmul.f32 %v1963, %v2246
      %v2263 = vmul.f32 %v2003, %v2247
      %v2264 = vmul.f32 %v2043, %v2248
      %v2265 = vmul.f32 %v2083, %v2249
      %v2266 = vmul.f32 %v2123, %v2250
      %v2267 = vmul.f32 %v2163, %v2251
      %v2268 = vmul.f32 %v2203, %v2252
      %v2269 = vmul.f32 %v2243, %v2253
      %2270 = vrot.lane.b32.xlu0 %v2262, 111
      %v2271 = vpop.permute.xlu0 %2270
      %2272 = vrot.lane.b32.xlu0 %v2263, 111
      %v2273 = vpop.permute.xlu0 %2272
      %2274 = vrot.lane.b32.xlu0 %v2264, 111
      %v2275 = vpop.permute.xlu0 %2274
      %2276 = vrot.lane.b32.xlu0 %v2265, 111
      %v2277 = vpop.permute.xlu0 %2276
      %2278 = vrot.lane.b32.xlu0 %v2266, 111
      %v2279 = vpop.permute.xlu0 %2278
      %2280 = vrot.lane.b32.xlu0 %v2267, 111
      %v2281 = vpop.permute.xlu0 %2280
      %2282 = vrot.lane.b32.xlu0 %v2268, 111
      %v2283 = vpop.permute.xlu0 %2282
      %2284 = vrot.lane.b32.xlu0 %v2269, 111
      %v2285 = vpop.permute.xlu0 %2284
      %v2286 = vsel %vm847, %v2283, %v2285
      %v2287 = vsel %vm847, %v2281, %v2283
      %v2288 = vsel %vm847, %v2279, %v2281
      %v2289 = vsel %vm847, %v2277, %v2279
      %v2290 = vsel %vm847, %v2275, %v2277
      %v2291 = vsel %vm847, %v2273, %v2275
      %v2292 = vsel %vm847, %v2271, %v2273
      %v2293 = vsel %vm847, %v2285, %v2271
      %v2294 = vld [vmem:[%s5] sm:$0xff]
      %2296 = vset.pattern.permute.xlu0 0
      %2297 = vperm.xlu0 %2296, %v2294
      %v2298 = vpop.permute.xlu0 %2297
      %v2300 = vmul.f32 %v2293, %v2298
      %v2301 = vmul.f32 %v2292, %v2298
      %v2302 = vmul.f32 %v2291, %v2298
      %v2303 = vmul.f32 %v2290, %v2298
      %v2304 = vmul.f32 %v2289, %v2298
      %v2305 = vmul.f32 %v2288, %v2298
      %v2306 = vmul.f32 %v2287, %v2298
      %v2307 = vmul.f32 %v2286, %v2298
      %2308 = vrot.lane.b32.xlu0 %v2262, 110
      %v2309 = vpop.permute.xlu0 %2308
      %2310 = vrot.lane.b32.xlu0 %v2263, 110
      %v2311 = vpop.permute.xlu0 %2310
      %2312 = vrot.lane.b32.xlu0 %v2264, 110
      %v2313 = vpop.permute.xlu0 %2312
      %2314 = vrot.lane.b32.xlu0 %v2265, 110
      %v2315 = vpop.permute.xlu0 %2314
      %2316 = vrot.lane.b32.xlu0 %v2266, 110
      %v2317 = vpop.permute.xlu0 %2316
      %2318 = vrot.lane.b32.xlu0 %v2267, 110
      %v2319 = vpop.permute.xlu0 %2318
      %2320 = vrot.lane.b32.xlu0 %v2268, 110
      %v2321 = vpop.permute.xlu0 %2320
      %2322 = vrot.lane.b32.xlu0 %v2269, 110
      %v2323 = vpop.permute.xlu0 %2322
      %v2324 = vsel %vm880, %v2321, %v2323
      %v2325 = vsel %vm880, %v2319, %v2321
      %v2326 = vsel %vm880, %v2317, %v2319
      %v2327 = vsel %vm880, %v2315, %v2317
      %v2328 = vsel %vm880, %v2313, %v2315
      %v2329 = vsel %vm880, %v2311, %v2313
      %v2330 = vsel %vm880, %v2309, %v2311
      %v2331 = vsel %vm880, %v2323, %v2309
      %s2332 = scalar_lea.vmem %s5, 8
      %v2333 = vld [vmem:[%s2332] sm:$0xff]
      %2335 = vset.pattern.permute.xlu0 0
      %2336 = vperm.xlu0 %2335, %v2333
      %v2337 = vpop.permute.xlu0 %2336
      %v2339 = vmul.f32 %v2331, %v2337
      %v2340 = vmul.f32 %v2330, %v2337
      %v2341 = vmul.f32 %v2329, %v2337
      %v2342 = vmul.f32 %v2328, %v2337
      %v2343 = vmul.f32 %v2327, %v2337
      %v2344 = vmul.f32 %v2326, %v2337
      %v2345 = vmul.f32 %v2325, %v2337
      %v2346 = vmul.f32 %v2324, %v2337
      %v2347 = vadd.f32 %v2300, %v2339
      %v2348 = vadd.f32 %v2301, %v2340
      %v2349 = vadd.f32 %v2302, %v2341
      %v2350 = vadd.f32 %v2303, %v2342
      %v2351 = vadd.f32 %v2304, %v2343
      %v2352 = vadd.f32 %v2305, %v2344
      %v2353 = vadd.f32 %v2306, %v2345
      %v2354 = vadd.f32 %v2307, %v2346
      %2355 = vrot.lane.b32.xlu0 %v2262, 109
      %v2356 = vpop.permute.xlu0 %2355
      %2357 = vrot.lane.b32.xlu0 %v2263, 109
      %v2358 = vpop.permute.xlu0 %2357
      %2359 = vrot.lane.b32.xlu0 %v2264, 109
      %v2360 = vpop.permute.xlu0 %2359
      %2361 = vrot.lane.b32.xlu0 %v2265, 109
      %v2362 = vpop.permute.xlu0 %2361
      %2363 = vrot.lane.b32.xlu0 %v2266, 109
      %v2364 = vpop.permute.xlu0 %2363
      %2365 = vrot.lane.b32.xlu0 %v2267, 109
      %v2366 = vpop.permute.xlu0 %2365
      %2367 = vrot.lane.b32.xlu0 %v2268, 109
      %v2368 = vpop.permute.xlu0 %2367
      %2369 = vrot.lane.b32.xlu0 %v2269, 109
      %v2370 = vpop.permute.xlu0 %2369
      %v2371 = vsel %vm913, %v2368, %v2370
      %v2372 = vsel %vm913, %v2366, %v2368
      %v2373 = vsel %vm913, %v2364, %v2366
      %v2374 = vsel %vm913, %v2362, %v2364
      %v2375 = vsel %vm913, %v2360, %v2362
      %v2376 = vsel %vm913, %v2358, %v2360
      %v2377 = vsel %vm913, %v2356, %v2358
      %v2378 = vsel %vm913, %v2370, %v2356
      %s2379 = scalar_lea.vmem %s5, 16
      %v2380 = vld [vmem:[%s2379] sm:$0xff]
      %2382 = vset.pattern.permute.xlu0 0
      %2383 = vperm.xlu0 %2382, %v2380
      %v2384 = vpop.permute.xlu0 %2383
      %v2386 = vmul.f32 %v2378, %v2384
      %v2387 = vmul.f32 %v2377, %v2384
      %v2388 = vmul.f32 %v2376, %v2384
      %v2389 = vmul.f32 %v2375, %v2384
      %v2390 = vmul.f32 %v2374, %v2384
      %v2391 = vmul.f32 %v2373, %v2384
      %v2392 = vmul.f32 %v2372, %v2384
      %v2393 = vmul.f32 %v2371, %v2384
      %v2394 = vadd.f32 %v2347, %v2386
      %v2395 = vadd.f32 %v2348, %v2387
      %v2396 = vadd.f32 %v2349, %v2388
      %v2397 = vadd.f32 %v2350, %v2389
      %v2398 = vadd.f32 %v2351, %v2390
      %v2399 = vadd.f32 %v2352, %v2391
      %v2400 = vadd.f32 %v2353, %v2392
      %v2401 = vadd.f32 %v2354, %v2393
      %2402 = vrot.lane.b32.xlu0 %v2262, 101
      %v2403 = vpop.permute.xlu0 %2402
      %2404 = vrot.lane.b32.xlu0 %v2263, 101
      %v2405 = vpop.permute.xlu0 %2404
      %2406 = vrot.lane.b32.xlu0 %v2264, 101
      %v2407 = vpop.permute.xlu0 %2406
      %2408 = vrot.lane.b32.xlu0 %v2265, 101
      %v2409 = vpop.permute.xlu0 %2408
      %2410 = vrot.lane.b32.xlu0 %v2266, 101
      %v2411 = vpop.permute.xlu0 %2410
      %2412 = vrot.lane.b32.xlu0 %v2267, 101
      %v2413 = vpop.permute.xlu0 %2412
      %2414 = vrot.lane.b32.xlu0 %v2268, 101
      %v2415 = vpop.permute.xlu0 %2414
      %2416 = vrot.lane.b32.xlu0 %v2269, 101
      %v2417 = vpop.permute.xlu0 %2416
      %v2418 = vsel %vm946, %v2415, %v2417
      %v2419 = vsel %vm946, %v2413, %v2415
      %v2420 = vsel %vm946, %v2411, %v2413
      %v2421 = vsel %vm946, %v2409, %v2411
      %v2422 = vsel %vm946, %v2407, %v2409
      %v2423 = vsel %vm946, %v2405, %v2407
      %v2424 = vsel %vm946, %v2403, %v2405
      %v2425 = vsel %vm946, %v2417, %v2403
      %s2426 = scalar_lea.vmem %s5, 24
      %v2427 = vld [vmem:[%s2426] sm:$0xff]
      %2429 = vset.pattern.permute.xlu0 0
      %2430 = vperm.xlu0 %2429, %v2427
      %v2431 = vpop.permute.xlu0 %2430
      %v2433 = vmul.f32 %v2425, %v2431
      %v2434 = vmul.f32 %v2424, %v2431
      %v2435 = vmul.f32 %v2423, %v2431
      %v2436 = vmul.f32 %v2422, %v2431
      %v2437 = vmul.f32 %v2421, %v2431
      %v2438 = vmul.f32 %v2420, %v2431
      %v2439 = vmul.f32 %v2419, %v2431
      %v2440 = vmul.f32 %v2418, %v2431
      %v2441 = vadd.f32 %v2394, %v2433
      %v2442 = vadd.f32 %v2395, %v2434
      %v2443 = vadd.f32 %v2396, %v2435
      %v2444 = vadd.f32 %v2397, %v2436
      %v2445 = vadd.f32 %v2398, %v2437
      %v2446 = vadd.f32 %v2399, %v2438
      %v2447 = vadd.f32 %v2400, %v2439
      %v2448 = vadd.f32 %v2401, %v2440
      %2449 = vrot.lane.b32.xlu0 %v2262, 100
      %v2450 = vpop.permute.xlu0 %2449
      %2451 = vrot.lane.b32.xlu0 %v2263, 100
      %v2452 = vpop.permute.xlu0 %2451
      %2453 = vrot.lane.b32.xlu0 %v2264, 100
      %v2454 = vpop.permute.xlu0 %2453
      %2455 = vrot.lane.b32.xlu0 %v2265, 100
      %v2456 = vpop.permute.xlu0 %2455
      %2457 = vrot.lane.b32.xlu0 %v2266, 100
      %v2458 = vpop.permute.xlu0 %2457
      %2459 = vrot.lane.b32.xlu0 %v2267, 100
      %v2460 = vpop.permute.xlu0 %2459
      %2461 = vrot.lane.b32.xlu0 %v2268, 100
      %v2462 = vpop.permute.xlu0 %2461
      %2463 = vrot.lane.b32.xlu0 %v2269, 100
      %v2464 = vpop.permute.xlu0 %2463
      %v2465 = vsel %vm979, %v2462, %v2464
      %v2466 = vsel %vm979, %v2460, %v2462
      %v2467 = vsel %vm979, %v2458, %v2460
      %v2468 = vsel %vm979, %v2456, %v2458
      %v2469 = vsel %vm979, %v2454, %v2456
      %v2470 = vsel %vm979, %v2452, %v2454
      %v2471 = vsel %vm979, %v2450, %v2452
      %v2472 = vsel %vm979, %v2464, %v2450
      %s2473 = scalar_lea.vmem %s5, 32
      %v2474 = vld [vmem:[%s2473] sm:$0xff]
      %2476 = vset.pattern.permute.xlu0 0
      %2477 = vperm.xlu0 %2476, %v2474
      %v2478 = vpop.permute.xlu0 %2477
      %v2480 = vmul.f32 %v2472, %v2478
      %v2481 = vmul.f32 %v2471, %v2478
      %v2482 = vmul.f32 %v2470, %v2478
      %v2483 = vmul.f32 %v2469, %v2478
      %v2484 = vmul.f32 %v2468, %v2478
      %v2485 = vmul.f32 %v2467, %v2478
      %v2486 = vmul.f32 %v2466, %v2478
      %v2487 = vmul.f32 %v2465, %v2478
      %v2488 = vadd.f32 %v2441, %v2480
      %v2489 = vadd.f32 %v2442, %v2481
      %v2490 = vadd.f32 %v2443, %v2482
      %v2491 = vadd.f32 %v2444, %v2483
      %v2492 = vadd.f32 %v2445, %v2484
      %v2493 = vadd.f32 %v2446, %v2485
      %v2494 = vadd.f32 %v2447, %v2486
      %v2495 = vadd.f32 %v2448, %v2487
      %2496 = vrot.lane.b32.xlu0 %v2262, 99
      %v2497 = vpop.permute.xlu0 %2496
      %2498 = vrot.lane.b32.xlu0 %v2263, 99
      %v2499 = vpop.permute.xlu0 %2498
      %2500 = vrot.lane.b32.xlu0 %v2264, 99
      %v2501 = vpop.permute.xlu0 %2500
      %2502 = vrot.lane.b32.xlu0 %v2265, 99
      %v2503 = vpop.permute.xlu0 %2502
      %2504 = vrot.lane.b32.xlu0 %v2266, 99
      %v2505 = vpop.permute.xlu0 %2504
      %2506 = vrot.lane.b32.xlu0 %v2267, 99
      %v2507 = vpop.permute.xlu0 %2506
      %2508 = vrot.lane.b32.xlu0 %v2268, 99
      %v2509 = vpop.permute.xlu0 %2508
      %2510 = vrot.lane.b32.xlu0 %v2269, 99
      %v2511 = vpop.permute.xlu0 %2510
      %v2512 = vsel %vm1012, %v2509, %v2511
      %v2513 = vsel %vm1012, %v2507, %v2509
      %v2514 = vsel %vm1012, %v2505, %v2507
      %v2515 = vsel %vm1012, %v2503, %v2505
      %v2516 = vsel %vm1012, %v2501, %v2503
      %v2517 = vsel %vm1012, %v2499, %v2501
      %v2518 = vsel %vm1012, %v2497, %v2499
      %v2519 = vsel %vm1012, %v2511, %v2497
      %s2520 = scalar_lea.vmem %s5, 40
      %v2521 = vld [vmem:[%s2520] sm:$0xff]
      %2523 = vset.pattern.permute.xlu0 0
      %2524 = vperm.xlu0 %2523, %v2521
      %v2525 = vpop.permute.xlu0 %2524
      %v2527 = vmul.f32 %v2519, %v2525
      %v2528 = vmul.f32 %v2518, %v2525
      %v2529 = vmul.f32 %v2517, %v2525
      %v2530 = vmul.f32 %v2516, %v2525
      %v2531 = vmul.f32 %v2515, %v2525
      %v2532 = vmul.f32 %v2514, %v2525
      %v2533 = vmul.f32 %v2513, %v2525
      %v2534 = vmul.f32 %v2512, %v2525
      %v2535 = vadd.f32 %v2488, %v2527
      %v2536 = vadd.f32 %v2489, %v2528
      %v2537 = vadd.f32 %v2490, %v2529
      %v2538 = vadd.f32 %v2491, %v2530
      %v2539 = vadd.f32 %v2492, %v2531
      %v2540 = vadd.f32 %v2493, %v2532
      %v2541 = vadd.f32 %v2494, %v2533
      %v2542 = vadd.f32 %v2495, %v2534
      %2543 = vrot.lane.b32.xlu0 %v2262, 91
      %v2544 = vpop.permute.xlu0 %2543
      %2545 = vrot.lane.b32.xlu0 %v2263, 91
      %v2546 = vpop.permute.xlu0 %2545
      %2547 = vrot.lane.b32.xlu0 %v2264, 91
      %v2548 = vpop.permute.xlu0 %2547
      %2549 = vrot.lane.b32.xlu0 %v2265, 91
      %v2550 = vpop.permute.xlu0 %2549
      %2551 = vrot.lane.b32.xlu0 %v2266, 91
      %v2552 = vpop.permute.xlu0 %2551
      %2553 = vrot.lane.b32.xlu0 %v2267, 91
      %v2554 = vpop.permute.xlu0 %2553
      %2555 = vrot.lane.b32.xlu0 %v2268, 91
      %v2556 = vpop.permute.xlu0 %2555
      %2557 = vrot.lane.b32.xlu0 %v2269, 91
      %v2558 = vpop.permute.xlu0 %2557
      %v2559 = vsel %vm1045, %v2556, %v2558
      %v2560 = vsel %vm1045, %v2554, %v2556
      %v2561 = vsel %vm1045, %v2552, %v2554
      %v2562 = vsel %vm1045, %v2550, %v2552
      %v2563 = vsel %vm1045, %v2548, %v2550
      %v2564 = vsel %vm1045, %v2546, %v2548
      %v2565 = vsel %vm1045, %v2544, %v2546
      %v2566 = vsel %vm1045, %v2558, %v2544
      %s2567 = scalar_lea.vmem %s5, 48
      %v2568 = vld [vmem:[%s2567] sm:$0xff]
      %2570 = vset.pattern.permute.xlu0 0
      %2571 = vperm.xlu0 %2570, %v2568
      %v2572 = vpop.permute.xlu0 %2571
      %v2574 = vmul.f32 %v2566, %v2572
      %v2575 = vmul.f32 %v2565, %v2572
      %v2576 = vmul.f32 %v2564, %v2572
      %v2577 = vmul.f32 %v2563, %v2572
      %v2578 = vmul.f32 %v2562, %v2572
      %v2579 = vmul.f32 %v2561, %v2572
      %v2580 = vmul.f32 %v2560, %v2572
      %v2581 = vmul.f32 %v2559, %v2572
      %v2582 = vadd.f32 %v2535, %v2574
      %v2583 = vadd.f32 %v2536, %v2575
      %v2584 = vadd.f32 %v2537, %v2576
      %v2585 = vadd.f32 %v2538, %v2577
      %v2586 = vadd.f32 %v2539, %v2578
      %v2587 = vadd.f32 %v2540, %v2579
      %v2588 = vadd.f32 %v2541, %v2580
      %v2589 = vadd.f32 %v2542, %v2581
      %2590 = vrot.lane.b32.xlu0 %v2262, 90
      %v2591 = vpop.permute.xlu0 %2590
      %2592 = vrot.lane.b32.xlu0 %v2263, 90
      %v2593 = vpop.permute.xlu0 %2592
      %2594 = vrot.lane.b32.xlu0 %v2264, 90
      %v2595 = vpop.permute.xlu0 %2594
      %2596 = vrot.lane.b32.xlu0 %v2265, 90
      %v2597 = vpop.permute.xlu0 %2596
      %2598 = vrot.lane.b32.xlu0 %v2266, 90
      %v2599 = vpop.permute.xlu0 %2598
      %2600 = vrot.lane.b32.xlu0 %v2267, 90
      %v2601 = vpop.permute.xlu0 %2600
      %2602 = vrot.lane.b32.xlu0 %v2268, 90
      %v2603 = vpop.permute.xlu0 %2602
      %2604 = vrot.lane.b32.xlu0 %v2269, 90
      %v2605 = vpop.permute.xlu0 %2604
      %v2606 = vsel %vm1078, %v2603, %v2605
      %v2607 = vsel %vm1078, %v2601, %v2603
      %v2608 = vsel %vm1078, %v2599, %v2601
      %v2609 = vsel %vm1078, %v2597, %v2599
      %v2610 = vsel %vm1078, %v2595, %v2597
      %v2611 = vsel %vm1078, %v2593, %v2595
      %v2612 = vsel %vm1078, %v2591, %v2593
      %v2613 = vsel %vm1078, %v2605, %v2591
      %s2614 = scalar_lea.vmem %s5, 56
      %v2615 = vld [vmem:[%s2614] sm:$0xff]
      %2617 = vset.pattern.permute.xlu0 0
      %2618 = vperm.xlu0 %2617, %v2615
      %v2619 = vpop.permute.xlu0 %2618
      %v2621 = vmul.f32 %v2613, %v2619
      %v2622 = vmul.f32 %v2612, %v2619
      %v2623 = vmul.f32 %v2611, %v2619
      %v2624 = vmul.f32 %v2610, %v2619
      %v2625 = vmul.f32 %v2609, %v2619
      %v2626 = vmul.f32 %v2608, %v2619
      %v2627 = vmul.f32 %v2607, %v2619
      %v2628 = vmul.f32 %v2606, %v2619
      %v2629 = vadd.f32 %v2582, %v2621
      %v2630 = vadd.f32 %v2583, %v2622
      %v2631 = vadd.f32 %v2584, %v2623
      %v2632 = vadd.f32 %v2585, %v2624
      %v2633 = vadd.f32 %v2586, %v2625
      %v2634 = vadd.f32 %v2587, %v2626
      %v2635 = vadd.f32 %v2588, %v2627
      %v2636 = vadd.f32 %v2589, %v2628
      %2637 = vrot.lane.b32.xlu0 %v2262, 89
      %v2638 = vpop.permute.xlu0 %2637
      %2639 = vrot.lane.b32.xlu0 %v2263, 89
      %v2640 = vpop.permute.xlu0 %2639
      %2641 = vrot.lane.b32.xlu0 %v2264, 89
      %v2642 = vpop.permute.xlu0 %2641
      %2643 = vrot.lane.b32.xlu0 %v2265, 89
      %v2644 = vpop.permute.xlu0 %2643
      %2645 = vrot.lane.b32.xlu0 %v2266, 89
      %v2646 = vpop.permute.xlu0 %2645
      %2647 = vrot.lane.b32.xlu0 %v2267, 89
      %v2648 = vpop.permute.xlu0 %2647
      %2649 = vrot.lane.b32.xlu0 %v2268, 89
      %v2650 = vpop.permute.xlu0 %2649
      %2651 = vrot.lane.b32.xlu0 %v2269, 89
      %v2652 = vpop.permute.xlu0 %2651
      %v2653 = vsel %vm1111, %v2650, %v2652
      %v2654 = vsel %vm1111, %v2648, %v2650
      %v2655 = vsel %vm1111, %v2646, %v2648
      %v2656 = vsel %vm1111, %v2644, %v2646
      %v2657 = vsel %vm1111, %v2642, %v2644
      %v2658 = vsel %vm1111, %v2640, %v2642
      %v2659 = vsel %vm1111, %v2638, %v2640
      %v2660 = vsel %vm1111, %v2652, %v2638
      %s2661 = scalar_lea.vmem %s5, 64
      %v2662 = vld [vmem:[%s2661] sm:$0xff]
      %2664 = vset.pattern.permute.xlu0 0
      %2665 = vperm.xlu0 %2664, %v2662
      %v2666 = vpop.permute.xlu0 %2665
      %v2668 = vmul.f32 %v2660, %v2666
      %v2669 = vmul.f32 %v2659, %v2666
      %v2670 = vmul.f32 %v2658, %v2666
      %v2671 = vmul.f32 %v2657, %v2666
      %v2672 = vmul.f32 %v2656, %v2666
      %v2673 = vmul.f32 %v2655, %v2666
      %v2674 = vmul.f32 %v2654, %v2666
      %v2675 = vmul.f32 %v2653, %v2666
      %v2676 = vadd.f32 %v2629, %v2668
      %v2677 = vadd.f32 %v2630, %v2669
      %v2678 = vadd.f32 %v2631, %v2670
      %v2679 = vadd.f32 %v2632, %v2671
      %v2680 = vadd.f32 %v2633, %v2672
      %v2681 = vadd.f32 %v2634, %v2673
      %v2682 = vadd.f32 %v2635, %v2674
      %v2683 = vadd.f32 %v2636, %v2675
      %2684 = vrot.lane.b32.xlu0 %v2262, 11
      %v2685 = vpop.permute.xlu0 %2684
      %2686 = vrot.lane.b32.xlu0 %v2263, 11
      %v2687 = vpop.permute.xlu0 %2686
      %2688 = vrot.lane.b32.xlu0 %v2264, 11
      %v2689 = vpop.permute.xlu0 %2688
      %2690 = vrot.lane.b32.xlu0 %v2265, 11
      %v2691 = vpop.permute.xlu0 %2690
      %2692 = vrot.lane.b32.xlu0 %v2266, 11
      %v2693 = vpop.permute.xlu0 %2692
      %2694 = vrot.lane.b32.xlu0 %v2267, 11
      %v2695 = vpop.permute.xlu0 %2694
      %2696 = vrot.lane.b32.xlu0 %v2268, 11
      %v2697 = vpop.permute.xlu0 %2696
      %2698 = vrot.lane.b32.xlu0 %v2269, 11
      %v2699 = vpop.permute.xlu0 %2698
      %v2700 = vsel %vm1144, %v2697, %v2699
      %v2701 = vsel %vm1144, %v2695, %v2697
      %v2702 = vsel %vm1144, %v2693, %v2695
      %v2703 = vsel %vm1144, %v2691, %v2693
      %v2704 = vsel %vm1144, %v2689, %v2691
      %v2705 = vsel %vm1144, %v2687, %v2689
      %v2706 = vsel %vm1144, %v2685, %v2687
      %v2707 = vsel %vm1144, %v2699, %v2685
      %s2708 = scalar_lea.vmem %s5, 72
      %v2709 = vld [vmem:[%s2708] sm:$0xff]
      %2711 = vset.pattern.permute.xlu0 0
      %2712 = vperm.xlu0 %2711, %v2709
      %v2713 = vpop.permute.xlu0 %2712
      %v2715 = vmul.f32 %v2707, %v2713
      %v2716 = vmul.f32 %v2706, %v2713
      %v2717 = vmul.f32 %v2705, %v2713
      %v2718 = vmul.f32 %v2704, %v2713
      %v2719 = vmul.f32 %v2703, %v2713
      %v2720 = vmul.f32 %v2702, %v2713
      %v2721 = vmul.f32 %v2701, %v2713
      %v2722 = vmul.f32 %v2700, %v2713
      %v2723 = vadd.f32 %v2676, %v2715
      %v2724 = vadd.f32 %v2677, %v2716
      %v2725 = vadd.f32 %v2678, %v2717
      %v2726 = vadd.f32 %v2679, %v2718
      %v2727 = vadd.f32 %v2680, %v2719
      %v2728 = vadd.f32 %v2681, %v2720
      %v2729 = vadd.f32 %v2682, %v2721
      %v2730 = vadd.f32 %v2683, %v2722
      %2731 = vrot.lane.b32.xlu0 %v2262, 10
      %v2732 = vpop.permute.xlu0 %2731
      %2733 = vrot.lane.b32.xlu0 %v2263, 10
      %v2734 = vpop.permute.xlu0 %2733
      %2735 = vrot.lane.b32.xlu0 %v2264, 10
      %v2736 = vpop.permute.xlu0 %2735
      %2737 = vrot.lane.b32.xlu0 %v2265, 10
      %v2738 = vpop.permute.xlu0 %2737
      %2739 = vrot.lane.b32.xlu0 %v2266, 10
      %v2740 = vpop.permute.xlu0 %2739
      %2741 = vrot.lane.b32.xlu0 %v2267, 10
      %v2742 = vpop.permute.xlu0 %2741
      %2743 = vrot.lane.b32.xlu0 %v2268, 10
      %v2744 = vpop.permute.xlu0 %2743
      %2745 = vrot.lane.b32.xlu0 %v2269, 10
      %v2746 = vpop.permute.xlu0 %2745
      %v2747 = vsel %vm1177, %v2744, %v2746
      %v2748 = vsel %vm1177, %v2742, %v2744
      %v2749 = vsel %vm1177, %v2740, %v2742
      %v2750 = vsel %vm1177, %v2738, %v2740
      %v2751 = vsel %vm1177, %v2736, %v2738
      %v2752 = vsel %vm1177, %v2734, %v2736
      %v2753 = vsel %vm1177, %v2732, %v2734
      %v2754 = vsel %vm1177, %v2746, %v2732
      %s2755 = scalar_lea.vmem %s5, 80
      %v2756 = vld [vmem:[%s2755] sm:$0xff]
      %2758 = vset.pattern.permute.xlu0 0
      %2759 = vperm.xlu0 %2758, %v2756
      %v2760 = vpop.permute.xlu0 %2759
      %v2762 = vmul.f32 %v2754, %v2760
      %v2763 = vmul.f32 %v2753, %v2760
      %v2764 = vmul.f32 %v2752, %v2760
      %v2765 = vmul.f32 %v2751, %v2760
      %v2766 = vmul.f32 %v2750, %v2760
      %v2767 = vmul.f32 %v2749, %v2760
      %v2768 = vmul.f32 %v2748, %v2760
      %v2769 = vmul.f32 %v2747, %v2760
      %v2770 = vadd.f32 %v2723, %v2762
      %v2771 = vadd.f32 %v2724, %v2763
      %v2772 = vadd.f32 %v2725, %v2764
      %v2773 = vadd.f32 %v2726, %v2765
      %v2774 = vadd.f32 %v2727, %v2766
      %v2775 = vadd.f32 %v2728, %v2767
      %v2776 = vadd.f32 %v2729, %v2768
      %v2777 = vadd.f32 %v2730, %v2769
      %2778 = vrot.lane.b32.xlu0 %v2262, 9
      %v2779 = vpop.permute.xlu0 %2778
      %2780 = vrot.lane.b32.xlu0 %v2263, 9
      %v2781 = vpop.permute.xlu0 %2780
      %2782 = vrot.lane.b32.xlu0 %v2264, 9
      %v2783 = vpop.permute.xlu0 %2782
      %2784 = vrot.lane.b32.xlu0 %v2265, 9
      %v2785 = vpop.permute.xlu0 %2784
      %2786 = vrot.lane.b32.xlu0 %v2266, 9
      %v2787 = vpop.permute.xlu0 %2786
      %2788 = vrot.lane.b32.xlu0 %v2267, 9
      %v2789 = vpop.permute.xlu0 %2788
      %2790 = vrot.lane.b32.xlu0 %v2268, 9
      %v2791 = vpop.permute.xlu0 %2790
      %2792 = vrot.lane.b32.xlu0 %v2269, 9
      %v2793 = vpop.permute.xlu0 %2792
      %v2794 = vsel %vm1210, %v2791, %v2793
      %v2795 = vsel %vm1210, %v2789, %v2791
      %v2796 = vsel %vm1210, %v2787, %v2789
      %v2797 = vsel %vm1210, %v2785, %v2787
      %v2798 = vsel %vm1210, %v2783, %v2785
      %v2799 = vsel %vm1210, %v2781, %v2783
      %v2800 = vsel %vm1210, %v2779, %v2781
      %v2801 = vsel %vm1210, %v2793, %v2779
      %s2802 = scalar_lea.vmem %s5, 88
      %v2803 = vld [vmem:[%s2802] sm:$0xff]
      %2805 = vset.pattern.permute.xlu0 0
      %2806 = vperm.xlu0 %2805, %v2803
      %v2807 = vpop.permute.xlu0 %2806
      %v2809 = vmul.f32 %v2801, %v2807
      %v2810 = vmul.f32 %v2800, %v2807
      %v2811 = vmul.f32 %v2799, %v2807
      %v2812 = vmul.f32 %v2798, %v2807
      %v2813 = vmul.f32 %v2797, %v2807
      %v2814 = vmul.f32 %v2796, %v2807
      %v2815 = vmul.f32 %v2795, %v2807
      %v2816 = vmul.f32 %v2794, %v2807
      %v2817 = vadd.f32 %v2770, %v2809
      %v2818 = vadd.f32 %v2771, %v2810
      %v2819 = vadd.f32 %v2772, %v2811
      %v2820 = vadd.f32 %v2773, %v2812
      %v2821 = vadd.f32 %v2774, %v2813
      %v2822 = vadd.f32 %v2775, %v2814
      %v2823 = vadd.f32 %v2776, %v2815
      %v2824 = vadd.f32 %v2777, %v2816
      %2825 = vrot.lane.b32.xlu0 %v2262, 1
      %v2826 = vpop.permute.xlu0 %2825
      %2827 = vrot.lane.b32.xlu0 %v2263, 1
      %v2828 = vpop.permute.xlu0 %2827
      %2829 = vrot.lane.b32.xlu0 %v2264, 1
      %v2830 = vpop.permute.xlu0 %2829
      %2831 = vrot.lane.b32.xlu0 %v2265, 1
      %v2832 = vpop.permute.xlu0 %2831
      %2833 = vrot.lane.b32.xlu0 %v2266, 1
      %v2834 = vpop.permute.xlu0 %2833
      %2835 = vrot.lane.b32.xlu0 %v2267, 1
      %v2836 = vpop.permute.xlu0 %2835
      %2837 = vrot.lane.b32.xlu0 %v2268, 1
      %v2838 = vpop.permute.xlu0 %2837
      %2839 = vrot.lane.b32.xlu0 %v2269, 1
      %v2840 = vpop.permute.xlu0 %2839
      %v2841 = vsel %vm1243, %v2838, %v2840
      %v2842 = vsel %vm1243, %v2836, %v2838
      %v2843 = vsel %vm1243, %v2834, %v2836
      %v2844 = vsel %vm1243, %v2832, %v2834
      %v2845 = vsel %vm1243, %v2830, %v2832
      %v2846 = vsel %vm1243, %v2828, %v2830
      %v2847 = vsel %vm1243, %v2826, %v2828
      %v2848 = vsel %vm1243, %v2840, %v2826
      %s2849 = scalar_lea.vmem %s5, 96
      %v2850 = vld [vmem:[%s2849] sm:$0xff]
      %2852 = vset.pattern.permute.xlu0 0
      %2853 = vperm.xlu0 %2852, %v2850
      %v2854 = vpop.permute.xlu0 %2853
      %v2856 = vmul.f32 %v2848, %v2854
      %v2857 = vmul.f32 %v2847, %v2854
      %v2858 = vmul.f32 %v2846, %v2854
      %v2859 = vmul.f32 %v2845, %v2854
      %v2860 = vmul.f32 %v2844, %v2854
      %v2861 = vmul.f32 %v2843, %v2854
      %v2862 = vmul.f32 %v2842, %v2854
      %v2863 = vmul.f32 %v2841, %v2854
      %v2864 = vadd.f32 %v2817, %v2856
      %v2865 = vadd.f32 %v2818, %v2857
      %v2866 = vadd.f32 %v2819, %v2858
      %v2867 = vadd.f32 %v2820, %v2859
      %v2868 = vadd.f32 %v2821, %v2860
      %v2869 = vadd.f32 %v2822, %v2861
      %v2870 = vadd.f32 %v2823, %v2862
      %v2871 = vadd.f32 %v2824, %v2863
      %s2872 = scalar_lea.vmem %s5, 104
      %v2873 = vld [vmem:[%s2872] sm:$0xff]
      %2875 = vset.pattern.permute.xlu0 0
      %2876 = vperm.xlu0 %2875, %v2873
      %v2877 = vpop.permute.xlu0 %2876
      %v2879 = vmul.f32 %v2262, %v2877
      %v2880 = vmul.f32 %v2263, %v2877
      %v2881 = vmul.f32 %v2264, %v2877
      %v2882 = vmul.f32 %v2265, %v2877
      %v2883 = vmul.f32 %v2266, %v2877
      %v2884 = vmul.f32 %v2267, %v2877
      %v2885 = vmul.f32 %v2268, %v2877
      %v2886 = vmul.f32 %v2269, %v2877
      %v2887 = vadd.f32 %v2864, %v2879
      %v2888 = vadd.f32 %v2865, %v2880
      %v2889 = vadd.f32 %v2866, %v2881
      %v2890 = vadd.f32 %v2867, %v2882
      %v2891 = vadd.f32 %v2868, %v2883
      %v2892 = vadd.f32 %v2869, %v2884
      %v2893 = vadd.f32 %v2870, %v2885
      %v2894 = vadd.f32 %v2871, %v2886
      %2895 = vrot.lane.b32.xlu0 %v2262, 127
      %v2896 = vpop.permute.xlu0 %2895
      %2897 = vrot.lane.b32.xlu0 %v2263, 127
      %v2898 = vpop.permute.xlu0 %2897
      %2899 = vrot.lane.b32.xlu0 %v2264, 127
      %v2900 = vpop.permute.xlu0 %2899
      %2901 = vrot.lane.b32.xlu0 %v2265, 127
      %v2902 = vpop.permute.xlu0 %2901
      %2903 = vrot.lane.b32.xlu0 %v2266, 127
      %v2904 = vpop.permute.xlu0 %2903
      %2905 = vrot.lane.b32.xlu0 %v2267, 127
      %v2906 = vpop.permute.xlu0 %2905
      %2907 = vrot.lane.b32.xlu0 %v2268, 127
      %v2908 = vpop.permute.xlu0 %2907
      %2909 = vrot.lane.b32.xlu0 %v2269, 127
      %v2910 = vpop.permute.xlu0 %2909
      %v2911 = vsel %vm1284, %v2908, %v2910
      %v2912 = vsel %vm1284, %v2906, %v2908
      %v2913 = vsel %vm1284, %v2904, %v2906
      %v2914 = vsel %vm1284, %v2902, %v2904
      %v2915 = vsel %vm1284, %v2900, %v2902
      %v2916 = vsel %vm1284, %v2898, %v2900
      %v2917 = vsel %vm1284, %v2896, %v2898
      %v2918 = vsel %vm1284, %v2910, %v2896
      %s2919 = scalar_lea.vmem %s5, 112
      %v2920 = vld [vmem:[%s2919] sm:$0xff]
      %2922 = vset.pattern.permute.xlu0 0
      %2923 = vperm.xlu0 %2922, %v2920
      %v2924 = vpop.permute.xlu0 %2923
      %v2926 = vmul.f32 %v2917, %v2924
      %v2927 = vmul.f32 %v2916, %v2924
      %v2928 = vmul.f32 %v2915, %v2924
      %v2929 = vmul.f32 %v2914, %v2924
      %v2930 = vmul.f32 %v2913, %v2924
      %v2931 = vmul.f32 %v2912, %v2924
      %v2932 = vmul.f32 %v2911, %v2924
      %v2933 = vmul.f32 %v2918, %v2924
      %v2934 = vadd.f32 %v2887, %v2926
      %v2935 = vadd.f32 %v2888, %v2927
      %v2936 = vadd.f32 %v2889, %v2928
      %v2937 = vadd.f32 %v2890, %v2929
      %v2938 = vadd.f32 %v2891, %v2930
      %v2939 = vadd.f32 %v2892, %v2931
      %v2940 = vadd.f32 %v2893, %v2932
      %v2941 = vadd.f32 %v2894, %v2933
      %2942 = vrot.lane.b32.xlu0 %v2262, 119
      %v2943 = vpop.permute.xlu0 %2942
      %2944 = vrot.lane.b32.xlu0 %v2263, 119
      %v2945 = vpop.permute.xlu0 %2944
      %2946 = vrot.lane.b32.xlu0 %v2264, 119
      %v2947 = vpop.permute.xlu0 %2946
      %2948 = vrot.lane.b32.xlu0 %v2265, 119
      %v2949 = vpop.permute.xlu0 %2948
      %2950 = vrot.lane.b32.xlu0 %v2266, 119
      %v2951 = vpop.permute.xlu0 %2950
      %2952 = vrot.lane.b32.xlu0 %v2267, 119
      %v2953 = vpop.permute.xlu0 %2952
      %2954 = vrot.lane.b32.xlu0 %v2268, 119
      %v2955 = vpop.permute.xlu0 %2954
      %2956 = vrot.lane.b32.xlu0 %v2269, 119
      %v2957 = vpop.permute.xlu0 %2956
      %v2958 = vsel %vm1317, %v2955, %v2957
      %v2959 = vsel %vm1317, %v2953, %v2955
      %v2960 = vsel %vm1317, %v2951, %v2953
      %v2961 = vsel %vm1317, %v2949, %v2951
      %v2962 = vsel %vm1317, %v2947, %v2949
      %v2963 = vsel %vm1317, %v2945, %v2947
      %v2964 = vsel %vm1317, %v2943, %v2945
      %v2965 = vsel %vm1317, %v2957, %v2943
      %s2966 = scalar_lea.vmem %s5, 120
      %v2967 = vld [vmem:[%s2966] sm:$0xff]
      %2969 = vset.pattern.permute.xlu0 0
      %2970 = vperm.xlu0 %2969, %v2967
      %v2971 = vpop.permute.xlu0 %2970
      %v2973 = vmul.f32 %v2964, %v2971
      %v2974 = vmul.f32 %v2963, %v2971
      %v2975 = vmul.f32 %v2962, %v2971
      %v2976 = vmul.f32 %v2961, %v2971
      %v2977 = vmul.f32 %v2960, %v2971
      %v2978 = vmul.f32 %v2959, %v2971
      %v2979 = vmul.f32 %v2958, %v2971
      %v2980 = vmul.f32 %v2965, %v2971
      %v2981 = vadd.f32 %v2934, %v2973
      %v2982 = vadd.f32 %v2935, %v2974
      %v2983 = vadd.f32 %v2936, %v2975
      %v2984 = vadd.f32 %v2937, %v2976
      %v2985 = vadd.f32 %v2938, %v2977
      %v2986 = vadd.f32 %v2939, %v2978
      %v2987 = vadd.f32 %v2940, %v2979
      %v2988 = vadd.f32 %v2941, %v2980
      %2989 = vrot.lane.b32.xlu0 %v2262, 118
      %v2990 = vpop.permute.xlu0 %2989
      %2991 = vrot.lane.b32.xlu0 %v2263, 118
      %v2992 = vpop.permute.xlu0 %2991
      %2993 = vrot.lane.b32.xlu0 %v2264, 118
      %v2994 = vpop.permute.xlu0 %2993
      %2995 = vrot.lane.b32.xlu0 %v2265, 118
      %v2996 = vpop.permute.xlu0 %2995
      %2997 = vrot.lane.b32.xlu0 %v2266, 118
      %v2998 = vpop.permute.xlu0 %2997
      %2999 = vrot.lane.b32.xlu0 %v2267, 118
      %v3000 = vpop.permute.xlu0 %2999
      %3001 = vrot.lane.b32.xlu0 %v2268, 118
      %v3002 = vpop.permute.xlu0 %3001
      %3003 = vrot.lane.b32.xlu0 %v2269, 118
      %v3004 = vpop.permute.xlu0 %3003
      %v3005 = vsel %vm1350, %v3002, %v3004
      %v3006 = vsel %vm1350, %v3000, %v3002
      %v3007 = vsel %vm1350, %v2998, %v3000
      %v3008 = vsel %vm1350, %v2996, %v2998
      %v3009 = vsel %vm1350, %v2994, %v2996
      %v3010 = vsel %vm1350, %v2992, %v2994
      %v3011 = vsel %vm1350, %v2990, %v2992
      %v3012 = vsel %vm1350, %v3004, %v2990
      %s3013 = scalar_lea.vmem %s5, 128
      %v3014 = vld [vmem:[%s3013] sm:$0xff]
      %3016 = vset.pattern.permute.xlu0 0
      %3017 = vperm.xlu0 %3016, %v3014
      %v3018 = vpop.permute.xlu0 %3017
      %v3020 = vmul.f32 %v3011, %v3018
      %v3021 = vmul.f32 %v3010, %v3018
      %v3022 = vmul.f32 %v3009, %v3018
      %v3023 = vmul.f32 %v3008, %v3018
      %v3024 = vmul.f32 %v3007, %v3018
      %v3025 = vmul.f32 %v3006, %v3018
      %v3026 = vmul.f32 %v3005, %v3018
      %v3027 = vmul.f32 %v3012, %v3018
      %v3028 = vadd.f32 %v2981, %v3020
      %v3029 = vadd.f32 %v2982, %v3021
      %v3030 = vadd.f32 %v2983, %v3022
      %v3031 = vadd.f32 %v2984, %v3023
      %v3032 = vadd.f32 %v2985, %v3024
      %v3033 = vadd.f32 %v2986, %v3025
      %v3034 = vadd.f32 %v2987, %v3026
      %v3035 = vadd.f32 %v2988, %v3027
      %3036 = vrot.lane.b32.xlu0 %v2262, 117
      %v3037 = vpop.permute.xlu0 %3036
      %3038 = vrot.lane.b32.xlu0 %v2263, 117
      %v3039 = vpop.permute.xlu0 %3038
      %3040 = vrot.lane.b32.xlu0 %v2264, 117
      %v3041 = vpop.permute.xlu0 %3040
      %3042 = vrot.lane.b32.xlu0 %v2265, 117
      %v3043 = vpop.permute.xlu0 %3042
      %3044 = vrot.lane.b32.xlu0 %v2266, 117
      %v3045 = vpop.permute.xlu0 %3044
      %3046 = vrot.lane.b32.xlu0 %v2267, 117
      %v3047 = vpop.permute.xlu0 %3046
      %3048 = vrot.lane.b32.xlu0 %v2268, 117
      %v3049 = vpop.permute.xlu0 %3048
      %3050 = vrot.lane.b32.xlu0 %v2269, 117
      %v3051 = vpop.permute.xlu0 %3050
      %v3052 = vsel %vm1383, %v3049, %v3051
      %v3053 = vsel %vm1383, %v3047, %v3049
      %v3054 = vsel %vm1383, %v3045, %v3047
      %v3055 = vsel %vm1383, %v3043, %v3045
      %v3056 = vsel %vm1383, %v3041, %v3043
      %v3057 = vsel %vm1383, %v3039, %v3041
      %v3058 = vsel %vm1383, %v3037, %v3039
      %v3059 = vsel %vm1383, %v3051, %v3037
      %s3060 = scalar_lea.vmem %s5, 136
      %v3061 = vld [vmem:[%s3060] sm:$0xff]
      %3063 = vset.pattern.permute.xlu0 0
      %3064 = vperm.xlu0 %3063, %v3061
      %v3065 = vpop.permute.xlu0 %3064
      %v3067 = vmul.f32 %v3058, %v3065
      %v3068 = vmul.f32 %v3057, %v3065
      %v3069 = vmul.f32 %v3056, %v3065
      %v3070 = vmul.f32 %v3055, %v3065
      %v3071 = vmul.f32 %v3054, %v3065
      %v3072 = vmul.f32 %v3053, %v3065
      %v3073 = vmul.f32 %v3052, %v3065
      %v3074 = vmul.f32 %v3059, %v3065
      %v3075 = vadd.f32 %v3028, %v3067
      %v3076 = vadd.f32 %v3029, %v3068
      %v3077 = vadd.f32 %v3030, %v3069
      %v3078 = vadd.f32 %v3031, %v3070
      %v3079 = vadd.f32 %v3032, %v3071
      %v3080 = vadd.f32 %v3033, %v3072
      %v3081 = vadd.f32 %v3034, %v3073
      %v3082 = vadd.f32 %v3035, %v3074
      %3083 = vrot.lane.b32.xlu0 %v2262, 39
      %v3084 = vpop.permute.xlu0 %3083
      %3085 = vrot.lane.b32.xlu0 %v2263, 39
      %v3086 = vpop.permute.xlu0 %3085
      %3087 = vrot.lane.b32.xlu0 %v2264, 39
      %v3088 = vpop.permute.xlu0 %3087
      %3089 = vrot.lane.b32.xlu0 %v2265, 39
      %v3090 = vpop.permute.xlu0 %3089
      %3091 = vrot.lane.b32.xlu0 %v2266, 39
      %v3092 = vpop.permute.xlu0 %3091
      %3093 = vrot.lane.b32.xlu0 %v2267, 39
      %v3094 = vpop.permute.xlu0 %3093
      %3095 = vrot.lane.b32.xlu0 %v2268, 39
      %v3096 = vpop.permute.xlu0 %3095
      %3097 = vrot.lane.b32.xlu0 %v2269, 39
      %v3098 = vpop.permute.xlu0 %3097
      %v3099 = vsel %vm1416, %v3096, %v3098
      %v3100 = vsel %vm1416, %v3094, %v3096
      %v3101 = vsel %vm1416, %v3092, %v3094
      %v3102 = vsel %vm1416, %v3090, %v3092
      %v3103 = vsel %vm1416, %v3088, %v3090
      %v3104 = vsel %vm1416, %v3086, %v3088
      %v3105 = vsel %vm1416, %v3084, %v3086
      %v3106 = vsel %vm1416, %v3098, %v3084
      %s3107 = scalar_lea.vmem %s5, 144
      %v3108 = vld [vmem:[%s3107] sm:$0xff]
      %3110 = vset.pattern.permute.xlu0 0
      %3111 = vperm.xlu0 %3110, %v3108
      %v3112 = vpop.permute.xlu0 %3111
      %v3114 = vmul.f32 %v3105, %v3112
      %v3115 = vmul.f32 %v3104, %v3112
      %v3116 = vmul.f32 %v3103, %v3112
      %v3117 = vmul.f32 %v3102, %v3112
      %v3118 = vmul.f32 %v3101, %v3112
      %v3119 = vmul.f32 %v3100, %v3112
      %v3120 = vmul.f32 %v3099, %v3112
      %v3121 = vmul.f32 %v3106, %v3112
      %v3122 = vadd.f32 %v3075, %v3114
      %v3123 = vadd.f32 %v3076, %v3115
      %v3124 = vadd.f32 %v3077, %v3116
      %v3125 = vadd.f32 %v3078, %v3117
      %v3126 = vadd.f32 %v3079, %v3118
      %v3127 = vadd.f32 %v3080, %v3119
      %v3128 = vadd.f32 %v3081, %v3120
      %v3129 = vadd.f32 %v3082, %v3121
      %3130 = vrot.lane.b32.xlu0 %v2262, 38
      %v3131 = vpop.permute.xlu0 %3130
      %3132 = vrot.lane.b32.xlu0 %v2263, 38
      %v3133 = vpop.permute.xlu0 %3132
      %3134 = vrot.lane.b32.xlu0 %v2264, 38
      %v3135 = vpop.permute.xlu0 %3134
      %3136 = vrot.lane.b32.xlu0 %v2265, 38
      %v3137 = vpop.permute.xlu0 %3136
      %3138 = vrot.lane.b32.xlu0 %v2266, 38
      %v3139 = vpop.permute.xlu0 %3138
      %3140 = vrot.lane.b32.xlu0 %v2267, 38
      %v3141 = vpop.permute.xlu0 %3140
      %3142 = vrot.lane.b32.xlu0 %v2268, 38
      %v3143 = vpop.permute.xlu0 %3142
      %3144 = vrot.lane.b32.xlu0 %v2269, 38
      %v3145 = vpop.permute.xlu0 %3144
      %v3146 = vsel %vm1449, %v3143, %v3145
      %v3147 = vsel %vm1449, %v3141, %v3143
      %v3148 = vsel %vm1449, %v3139, %v3141
      %v3149 = vsel %vm1449, %v3137, %v3139
      %v3150 = vsel %vm1449, %v3135, %v3137
      %v3151 = vsel %vm1449, %v3133, %v3135
      %v3152 = vsel %vm1449, %v3131, %v3133
      %v3153 = vsel %vm1449, %v3145, %v3131
      %s3154 = scalar_lea.vmem %s5, 152
      %v3155 = vld [vmem:[%s3154] sm:$0xff]
      %3157 = vset.pattern.permute.xlu0 0
      %3158 = vperm.xlu0 %3157, %v3155
      %v3159 = vpop.permute.xlu0 %3158
      %v3161 = vmul.f32 %v3152, %v3159
      %v3162 = vmul.f32 %v3151, %v3159
      %v3163 = vmul.f32 %v3150, %v3159
      %v3164 = vmul.f32 %v3149, %v3159
      %v3165 = vmul.f32 %v3148, %v3159
      %v3166 = vmul.f32 %v3147, %v3159
      %v3167 = vmul.f32 %v3146, %v3159
      %v3168 = vmul.f32 %v3153, %v3159
      %v3169 = vadd.f32 %v3122, %v3161
      %v3170 = vadd.f32 %v3123, %v3162
      %v3171 = vadd.f32 %v3124, %v3163
      %v3172 = vadd.f32 %v3125, %v3164
      %v3173 = vadd.f32 %v3126, %v3165
      %v3174 = vadd.f32 %v3127, %v3166
      %v3175 = vadd.f32 %v3128, %v3167
      %v3176 = vadd.f32 %v3129, %v3168
      %3177 = vrot.lane.b32.xlu0 %v2262, 37
      %v3178 = vpop.permute.xlu0 %3177
      %3179 = vrot.lane.b32.xlu0 %v2263, 37
      %v3180 = vpop.permute.xlu0 %3179
      %3181 = vrot.lane.b32.xlu0 %v2264, 37
      %v3182 = vpop.permute.xlu0 %3181
      %3183 = vrot.lane.b32.xlu0 %v2265, 37
      %v3184 = vpop.permute.xlu0 %3183
      %3185 = vrot.lane.b32.xlu0 %v2266, 37
      %v3186 = vpop.permute.xlu0 %3185
      %3187 = vrot.lane.b32.xlu0 %v2267, 37
      %v3188 = vpop.permute.xlu0 %3187
      %3189 = vrot.lane.b32.xlu0 %v2268, 37
      %v3190 = vpop.permute.xlu0 %3189
      %3191 = vrot.lane.b32.xlu0 %v2269, 37
      %v3192 = vpop.permute.xlu0 %3191
      %v3193 = vsel %vm1482, %v3190, %v3192
      %v3194 = vsel %vm1482, %v3188, %v3190
      %v3195 = vsel %vm1482, %v3186, %v3188
      %v3196 = vsel %vm1482, %v3184, %v3186
      %v3197 = vsel %vm1482, %v3182, %v3184
      %v3198 = vsel %vm1482, %v3180, %v3182
      %v3199 = vsel %vm1482, %v3178, %v3180
      %v3200 = vsel %vm1482, %v3192, %v3178
      %s3201 = scalar_lea.vmem %s5, 160
      %v3202 = vld [vmem:[%s3201] sm:$0xff]
      %3204 = vset.pattern.permute.xlu0 0
      %3205 = vperm.xlu0 %3204, %v3202
      %v3206 = vpop.permute.xlu0 %3205
      %v3208 = vmul.f32 %v3199, %v3206
      %v3209 = vmul.f32 %v3198, %v3206
      %v3210 = vmul.f32 %v3197, %v3206
      %v3211 = vmul.f32 %v3196, %v3206
      %v3212 = vmul.f32 %v3195, %v3206
      %v3213 = vmul.f32 %v3194, %v3206
      %v3214 = vmul.f32 %v3193, %v3206
      %v3215 = vmul.f32 %v3200, %v3206
      %v3216 = vadd.f32 %v3169, %v3208
      %v3217 = vadd.f32 %v3170, %v3209
      %v3218 = vadd.f32 %v3171, %v3210
      %v3219 = vadd.f32 %v3172, %v3211
      %v3220 = vadd.f32 %v3173, %v3212
      %v3221 = vadd.f32 %v3174, %v3213
      %v3222 = vadd.f32 %v3175, %v3214
      %v3223 = vadd.f32 %v3176, %v3215
      %3224 = vrot.lane.b32.xlu0 %v2262, 29
      %v3225 = vpop.permute.xlu0 %3224
      %3226 = vrot.lane.b32.xlu0 %v2263, 29
      %v3227 = vpop.permute.xlu0 %3226
      %3228 = vrot.lane.b32.xlu0 %v2264, 29
      %v3229 = vpop.permute.xlu0 %3228
      %3230 = vrot.lane.b32.xlu0 %v2265, 29
      %v3231 = vpop.permute.xlu0 %3230
      %3232 = vrot.lane.b32.xlu0 %v2266, 29
      %v3233 = vpop.permute.xlu0 %3232
      %3234 = vrot.lane.b32.xlu0 %v2267, 29
      %v3235 = vpop.permute.xlu0 %3234
      %3236 = vrot.lane.b32.xlu0 %v2268, 29
      %v3237 = vpop.permute.xlu0 %3236
      %3238 = vrot.lane.b32.xlu0 %v2269, 29
      %v3239 = vpop.permute.xlu0 %3238
      %v3240 = vsel %vm1515, %v3237, %v3239
      %v3241 = vsel %vm1515, %v3235, %v3237
      %v3242 = vsel %vm1515, %v3233, %v3235
      %v3243 = vsel %vm1515, %v3231, %v3233
      %v3244 = vsel %vm1515, %v3229, %v3231
      %v3245 = vsel %vm1515, %v3227, %v3229
      %v3246 = vsel %vm1515, %v3225, %v3227
      %v3247 = vsel %vm1515, %v3239, %v3225
      %s3248 = scalar_lea.vmem %s5, 168
      %v3249 = vld [vmem:[%s3248] sm:$0xff]
      %3251 = vset.pattern.permute.xlu0 0
      %3252 = vperm.xlu0 %3251, %v3249
      %v3253 = vpop.permute.xlu0 %3252
      %v3255 = vmul.f32 %v3246, %v3253
      %v3256 = vmul.f32 %v3245, %v3253
      %v3257 = vmul.f32 %v3244, %v3253
      %v3258 = vmul.f32 %v3243, %v3253
      %v3259 = vmul.f32 %v3242, %v3253
      %v3260 = vmul.f32 %v3241, %v3253
      %v3261 = vmul.f32 %v3240, %v3253
      %v3262 = vmul.f32 %v3247, %v3253
      %v3263 = vadd.f32 %v3216, %v3255
      %v3264 = vadd.f32 %v3217, %v3256
      %v3265 = vadd.f32 %v3218, %v3257
      %v3266 = vadd.f32 %v3219, %v3258
      %v3267 = vadd.f32 %v3220, %v3259
      %v3268 = vadd.f32 %v3221, %v3260
      %v3269 = vadd.f32 %v3222, %v3261
      %v3270 = vadd.f32 %v3223, %v3262
      %3271 = vrot.lane.b32.xlu0 %v2262, 28
      %v3272 = vpop.permute.xlu0 %3271
      %3273 = vrot.lane.b32.xlu0 %v2263, 28
      %v3274 = vpop.permute.xlu0 %3273
      %3275 = vrot.lane.b32.xlu0 %v2264, 28
      %v3276 = vpop.permute.xlu0 %3275
      %3277 = vrot.lane.b32.xlu0 %v2265, 28
      %v3278 = vpop.permute.xlu0 %3277
      %3279 = vrot.lane.b32.xlu0 %v2266, 28
      %v3280 = vpop.permute.xlu0 %3279
      %3281 = vrot.lane.b32.xlu0 %v2267, 28
      %v3282 = vpop.permute.xlu0 %3281
      %3283 = vrot.lane.b32.xlu0 %v2268, 28
      %v3284 = vpop.permute.xlu0 %3283
      %3285 = vrot.lane.b32.xlu0 %v2269, 28
      %v3286 = vpop.permute.xlu0 %3285
      %v3287 = vsel %vm1548, %v3284, %v3286
      %v3288 = vsel %vm1548, %v3282, %v3284
      %v3289 = vsel %vm1548, %v3280, %v3282
      %v3290 = vsel %vm1548, %v3278, %v3280
      %v3291 = vsel %vm1548, %v3276, %v3278
      %v3292 = vsel %vm1548, %v3274, %v3276
      %v3293 = vsel %vm1548, %v3272, %v3274
      %v3294 = vsel %vm1548, %v3286, %v3272
      %s3295 = scalar_lea.vmem %s5, 176
      %v3296 = vld [vmem:[%s3295] sm:$0xff]
      %3298 = vset.pattern.permute.xlu0 0
      %3299 = vperm.xlu0 %3298, %v3296
      %v3300 = vpop.permute.xlu0 %3299
      %v3302 = vmul.f32 %v3293, %v3300
      %v3303 = vmul.f32 %v3292, %v3300
      %v3304 = vmul.f32 %v3291, %v3300
      %v3305 = vmul.f32 %v3290, %v3300
      %v3306 = vmul.f32 %v3289, %v3300
      %v3307 = vmul.f32 %v3288, %v3300
      %v3308 = vmul.f32 %v3287, %v3300
      %v3309 = vmul.f32 %v3294, %v3300
      %v3310 = vadd.f32 %v3263, %v3302
      %v3311 = vadd.f32 %v3264, %v3303
      %v3312 = vadd.f32 %v3265, %v3304
      %v3313 = vadd.f32 %v3266, %v3305
      %v3314 = vadd.f32 %v3267, %v3306
      %v3315 = vadd.f32 %v3268, %v3307
      %v3316 = vadd.f32 %v3269, %v3308
      %v3317 = vadd.f32 %v3270, %v3309
      %3318 = vrot.lane.b32.xlu0 %v2262, 27
      %v3319 = vpop.permute.xlu0 %3318
      %3320 = vrot.lane.b32.xlu0 %v2263, 27
      %v3321 = vpop.permute.xlu0 %3320
      %3322 = vrot.lane.b32.xlu0 %v2264, 27
      %v3323 = vpop.permute.xlu0 %3322
      %3324 = vrot.lane.b32.xlu0 %v2265, 27
      %v3325 = vpop.permute.xlu0 %3324
      %3326 = vrot.lane.b32.xlu0 %v2266, 27
      %v3327 = vpop.permute.xlu0 %3326
      %3328 = vrot.lane.b32.xlu0 %v2267, 27
      %v3329 = vpop.permute.xlu0 %3328
      %3330 = vrot.lane.b32.xlu0 %v2268, 27
      %v3331 = vpop.permute.xlu0 %3330
      %3332 = vrot.lane.b32.xlu0 %v2269, 27
      %v3333 = vpop.permute.xlu0 %3332
      %v3334 = vsel %vm1581, %v3331, %v3333
      %v3335 = vsel %vm1581, %v3329, %v3331
      %v3336 = vsel %vm1581, %v3327, %v3329
      %v3337 = vsel %vm1581, %v3325, %v3327
      %v3338 = vsel %vm1581, %v3323, %v3325
      %v3339 = vsel %vm1581, %v3321, %v3323
      %v3340 = vsel %vm1581, %v3319, %v3321
      %v3341 = vsel %vm1581, %v3333, %v3319
      %s3342 = scalar_lea.vmem %s5, 184
      %v3343 = vld [vmem:[%s3342] sm:$0xff]
      %3345 = vset.pattern.permute.xlu0 0
      %3346 = vperm.xlu0 %3345, %v3343
      %v3347 = vpop.permute.xlu0 %3346
      %v3349 = vmul.f32 %v3340, %v3347
      %v3350 = vmul.f32 %v3339, %v3347
      %v3351 = vmul.f32 %v3338, %v3347
      %v3352 = vmul.f32 %v3337, %v3347
      %v3353 = vmul.f32 %v3336, %v3347
      %v3354 = vmul.f32 %v3335, %v3347
      %v3355 = vmul.f32 %v3334, %v3347
      %v3356 = vmul.f32 %v3341, %v3347
      %v3357 = vadd.f32 %v3310, %v3349
      %v3358 = vadd.f32 %v3311, %v3350
      %v3359 = vadd.f32 %v3312, %v3351
      %v3360 = vadd.f32 %v3313, %v3352
      %v3361 = vadd.f32 %v3314, %v3353
      %v3362 = vadd.f32 %v3315, %v3354
      %v3363 = vadd.f32 %v3316, %v3355
      %v3364 = vadd.f32 %v3317, %v3356
      %3365 = vrot.lane.b32.xlu0 %v2262, 19
      %v3366 = vpop.permute.xlu0 %3365
      %3367 = vrot.lane.b32.xlu0 %v2263, 19
      %v3368 = vpop.permute.xlu0 %3367
      %3369 = vrot.lane.b32.xlu0 %v2264, 19
      %v3370 = vpop.permute.xlu0 %3369
      %3371 = vrot.lane.b32.xlu0 %v2265, 19
      %v3372 = vpop.permute.xlu0 %3371
      %3373 = vrot.lane.b32.xlu0 %v2266, 19
      %v3374 = vpop.permute.xlu0 %3373
      %3375 = vrot.lane.b32.xlu0 %v2267, 19
      %v3376 = vpop.permute.xlu0 %3375
      %3377 = vrot.lane.b32.xlu0 %v2268, 19
      %v3378 = vpop.permute.xlu0 %3377
      %3379 = vrot.lane.b32.xlu0 %v2269, 19
      %v3380 = vpop.permute.xlu0 %3379
      %v3381 = vsel %vm1614, %v3378, %v3380
      %v3382 = vsel %vm1614, %v3376, %v3378
      %v3383 = vsel %vm1614, %v3374, %v3376
      %v3384 = vsel %vm1614, %v3372, %v3374
      %v3385 = vsel %vm1614, %v3370, %v3372
      %v3386 = vsel %vm1614, %v3368, %v3370
      %v3387 = vsel %vm1614, %v3366, %v3368
      %v3388 = vsel %vm1614, %v3380, %v3366
      %s3389 = scalar_lea.vmem %s5, 192
      %v3390 = vld [vmem:[%s3389] sm:$0xff]
      %3392 = vset.pattern.permute.xlu0 0
      %3393 = vperm.xlu0 %3392, %v3390
      %v3394 = vpop.permute.xlu0 %3393
      %v3396 = vmul.f32 %v3387, %v3394
      %v3397 = vmul.f32 %v3386, %v3394
      %v3398 = vmul.f32 %v3385, %v3394
      %v3399 = vmul.f32 %v3384, %v3394
      %v3400 = vmul.f32 %v3383, %v3394
      %v3401 = vmul.f32 %v3382, %v3394
      %v3402 = vmul.f32 %v3381, %v3394
      %v3403 = vmul.f32 %v3388, %v3394
      %v3404 = vadd.f32 %v3357, %v3396
      %v3405 = vadd.f32 %v3358, %v3397
      %v3406 = vadd.f32 %v3359, %v3398
      %v3407 = vadd.f32 %v3360, %v3399
      %v3408 = vadd.f32 %v3361, %v3400
      %v3409 = vadd.f32 %v3362, %v3401
      %v3410 = vadd.f32 %v3363, %v3402
      %v3411 = vadd.f32 %v3364, %v3403
      %3412 = vrot.lane.b32.xlu0 %v2262, 18
      %v3413 = vpop.permute.xlu0 %3412
      %3414 = vrot.lane.b32.xlu0 %v2263, 18
      %v3415 = vpop.permute.xlu0 %3414
      %3416 = vrot.lane.b32.xlu0 %v2264, 18
      %v3417 = vpop.permute.xlu0 %3416
      %3418 = vrot.lane.b32.xlu0 %v2265, 18
      %v3419 = vpop.permute.xlu0 %3418
      %3420 = vrot.lane.b32.xlu0 %v2266, 18
      %v3421 = vpop.permute.xlu0 %3420
      %3422 = vrot.lane.b32.xlu0 %v2267, 18
      %v3423 = vpop.permute.xlu0 %3422
      %3424 = vrot.lane.b32.xlu0 %v2268, 18
      %v3425 = vpop.permute.xlu0 %3424
      %3426 = vrot.lane.b32.xlu0 %v2269, 18
      %v3427 = vpop.permute.xlu0 %3426
      %v3428 = vsel %vm1647, %v3425, %v3427
      %v3429 = vsel %vm1647, %v3423, %v3425
      %v3430 = vsel %vm1647, %v3421, %v3423
      %v3431 = vsel %vm1647, %v3419, %v3421
      %v3432 = vsel %vm1647, %v3417, %v3419
      %v3433 = vsel %vm1647, %v3415, %v3417
      %v3434 = vsel %vm1647, %v3413, %v3415
      %v3435 = vsel %vm1647, %v3427, %v3413
      %s3436 = scalar_lea.vmem %s5, 200
      %v3437 = vld [vmem:[%s3436] sm:$0xff]
      %3439 = vset.pattern.permute.xlu0 0
      %3440 = vperm.xlu0 %3439, %v3437
      %v3441 = vpop.permute.xlu0 %3440
      %v3443 = vmul.f32 %v3434, %v3441
      %v3444 = vmul.f32 %v3433, %v3441
      %v3445 = vmul.f32 %v3432, %v3441
      %v3446 = vmul.f32 %v3431, %v3441
      %v3447 = vmul.f32 %v3430, %v3441
      %v3448 = vmul.f32 %v3429, %v3441
      %v3449 = vmul.f32 %v3428, %v3441
      %v3450 = vmul.f32 %v3435, %v3441
      %v3451 = vadd.f32 %v3404, %v3443
      %v3452 = vadd.f32 %v3405, %v3444
      %v3453 = vadd.f32 %v3406, %v3445
      %v3454 = vadd.f32 %v3407, %v3446
      %v3455 = vadd.f32 %v3408, %v3447
      %v3456 = vadd.f32 %v3409, %v3448
      %v3457 = vadd.f32 %v3410, %v3449
      %v3458 = vadd.f32 %v3411, %v3450
      %3459 = vrot.lane.b32.xlu0 %v2262, 17
      %v3460 = vpop.permute.xlu0 %3459
      %3461 = vrot.lane.b32.xlu0 %v2263, 17
      %v3462 = vpop.permute.xlu0 %3461
      %3463 = vrot.lane.b32.xlu0 %v2264, 17
      %v3464 = vpop.permute.xlu0 %3463
      %3465 = vrot.lane.b32.xlu0 %v2265, 17
      %v3466 = vpop.permute.xlu0 %3465
      %3467 = vrot.lane.b32.xlu0 %v2266, 17
      %v3468 = vpop.permute.xlu0 %3467
      %3469 = vrot.lane.b32.xlu0 %v2267, 17
      %v3470 = vpop.permute.xlu0 %3469
      %3471 = vrot.lane.b32.xlu0 %v2268, 17
      %v3472 = vpop.permute.xlu0 %3471
      %3473 = vrot.lane.b32.xlu0 %v2269, 17
      %v3474 = vpop.permute.xlu0 %3473
      %v3475 = vsel %vm1680, %v3472, %v3474
      %v3476 = vsel %vm1680, %v3470, %v3472
      %v3477 = vsel %vm1680, %v3468, %v3470
      %v3478 = vsel %vm1680, %v3466, %v3468
      %v3479 = vsel %vm1680, %v3464, %v3466
      %v3480 = vsel %vm1680, %v3462, %v3464
      %v3481 = vsel %vm1680, %v3460, %v3462
      %v3482 = vsel %vm1680, %v3474, %v3460
      %s3483 = scalar_lea.vmem %s5, 208
      %v3484 = vld [vmem:[%s3483] sm:$0xff]
      %3486 = vset.pattern.permute.xlu0 0
      %3487 = vperm.xlu0 %3486, %v3484
      %v3488 = vpop.permute.xlu0 %3487
      %v3490 = vmul.f32 %v3481, %v3488
      %v3491 = vmul.f32 %v3480, %v3488
      %v3492 = vmul.f32 %v3479, %v3488
      %v3493 = vmul.f32 %v3478, %v3488
      %v3494 = vmul.f32 %v3477, %v3488
      %v3495 = vmul.f32 %v3476, %v3488
      %v3496 = vmul.f32 %v3475, %v3488
      %v3497 = vmul.f32 %v3482, %v3488
      %v3498 = vadd.f32 %v3451, %v3490
      %v3499 = vadd.f32 %v3452, %v3491
      %v3500 = vadd.f32 %v3453, %v3492
      %v3501 = vadd.f32 %v3454, %v3493
      %v3502 = vadd.f32 %v3455, %v3494
      %v3503 = vadd.f32 %v3456, %v3495
      %v3504 = vadd.f32 %v3457, %v3496
      %v3505 = vadd.f32 %v3458, %v3497
      %v3506 = vld [vmem:[%s6] sm:$0xff]
      %3508 = vset.pattern.permute.xlu0 0
      %3509 = vperm.xlu0 %3508, %v3506
      %v3510 = vpop.permute.xlu0 %3509
      %v3512 = vadd.f32 %v3498, %v3510
      %v3513 = vadd.f32 %v3499, %v3510
      %v3514 = vadd.f32 %v3500, %v3510
      %v3515 = vadd.f32 %v3501, %v3510
      %v3516 = vadd.f32 %v3502, %v3510
      %v3517 = vadd.f32 %v3503, %v3510
      %v3518 = vadd.f32 %v3504, %v3510
      %v3519 = vadd.f32 %v3505, %v3510
      %v3520 = vmul.f32 %v3512, %v2246
      %v3521 = vmul.f32 %v3513, %v2247
      %v3522 = vmul.f32 %v3514, %v2248
      %v3523 = vmul.f32 %v3515, %v2249
      %v3524 = vmul.f32 %v3516, %v2250
      %v3525 = vmul.f32 %v3517, %v2251
      %v3526 = vmul.f32 %v3518, %v2252
      %v3527 = vmul.f32 %v3519, %v2253
      %v3528 = vadd.f32 %v3520, %v3521
      %v3529 = vadd.f32 %v3528, %v3522
      %v3530 = vadd.f32 %v3529, %v3523
      %v3531 = vadd.f32 %v3530, %v3524
      %v3532 = vadd.f32 %v3531, %v3525
      %v3533 = vadd.f32 %v3532, %v3526
      %v3534 = vadd.f32 %v3533, %v3527
      %3535 = vadd.xlane.f32.xlu0 %v3534
      %v3536 = vpop.xlane.xlu0 %3535
      %v3537 = vmul.f32 %v3536, 0.001953125
      %v3538 = vmul.f32 %v3520, %v3512
      %v3539 = vmul.f32 %v3521, %v3513
      %v3540 = vmul.f32 %v3522, %v3514
      %v3541 = vmul.f32 %v3523, %v3515
      %v3542 = vmul.f32 %v3524, %v3516
      %v3543 = vmul.f32 %v3525, %v3517
      %v3544 = vmul.f32 %v3526, %v3518
      %v3545 = vmul.f32 %v3527, %v3519
      %v3546 = vadd.f32 %v3538, %v3539
      %v3547 = vadd.f32 %v3546, %v3540
      %v3548 = vadd.f32 %v3547, %v3541
      %v3549 = vadd.f32 %v3548, %v3542
      %v3550 = vadd.f32 %v3549, %v3543
      %v3551 = vadd.f32 %v3550, %v3544
      %v3552 = vadd.f32 %v3551, %v3545
      %3553 = vadd.xlane.f32.xlu0 %v3552
      %v3554 = vpop.xlane.xlu0 %3553
      %v3555 = vmul.f32 %v3554, 0.001953125
      %v3556 = vmul.f32 %v3537, %v3537
      %v3557 = vsub.f32 %v3555, %v3556
      %v3558 = vmax.f32 %v3557, 0.0
      %v3559 = vadd.f32 %v3558, 1e-05
      %v3560 = vrsqrt.pop %v3559
      %v3561 = vmul.f32 %v3560, %v3559
      %v3562 = vmul.f32 %v3561, %v3560
      %v3563 = vmul.f32 0.5, %v3562
      %v3564 = vsub.f32 1.5, %v3563
      %v3565 = vmul.f32 %v3560, %v3564
      %vm3566 = vweird.f32 %v3559
      %vm3567 = vweird.f32 %v3560
      %vm3568 = vmor %vm3566, %vm3567
      %v3569 = vsel %vm3568, %v3560, %v3565
      %v3570 = vld [vmem:[%s7] sm:$0xff]
      %v3571 = vmul.f32 %v3569, %v3570
      %v3572 = vld [vmem:[%s8] sm:$0xff]
      %v3573 = vmul.f32 %v3571, %v3537
      %v3574 = vsub.f32 %v3572, %v3573
      %3576 = vset.pattern.permute.xlu0 0
      %3577 = vperm.xlu0 %3576, %v3571
      %v3578 = vpop.permute.xlu0 %3577
      %v3580 = vmul.f32 %v3512, %v3578
      %v3581 = vmul.f32 %v3513, %v3578
      %v3582 = vmul.f32 %v3514, %v3578
      %v3583 = vmul.f32 %v3515, %v3578
      %v3584 = vmul.f32 %v3516, %v3578
      %v3585 = vmul.f32 %v3517, %v3578
      %v3586 = vmul.f32 %v3518, %v3578
      %v3587 = vmul.f32 %v3519, %v3578
      %3589 = vset.pattern.permute.xlu0 0
      %3590 = vperm.xlu0 %3589, %v3574
      %v3591 = vpop.permute.xlu0 %3590
      %v3593 = vadd.f32 %v3580, %v3591
      %v3594 = vadd.f32 %v3581, %v3591
      %v3595 = vadd.f32 %v3582, %v3591
      %v3596 = vadd.f32 %v3583, %v3591
      %v3597 = vadd.f32 %v3584, %v3591
      %v3598 = vadd.f32 %v3585, %v3591
      %v3599 = vadd.f32 %v3586, %v3591
      %v3600 = vadd.f32 %v3587, %v3591
      %v3601 = vld [vmem:[%s9] sm:$0xff]
      %v3602 = vld [vmem:[%s10] sm:$0xff]
      %3604 = vset.pattern.permute.xlu0 0
      %3605 = vperm.xlu0 %3604, %v3602
      %v3606 = vpop.permute.xlu0 %3605
      %vm3608 = vcmask 64512
      %v3610 = vsel %vm3608, %v3601, 0
      %3612 = vmatpush.msra.mxu0 0.0
      %3613 = vmatpush.msra.mxu0 0.0
      %3614 = vmatpush.msra.mxu0 0.0
      %3615 = vmatpush.msra.mxu0 0.0
      %3616 = vmatpush.msra.mxu0 0.0
      %3617 = vmatpush.msra.mxu0 0.0
      %3618 = vmatpush.msra.mxu0 0.0
      %3619 = vmatpush.msra.mxu0 0.0
      %3620 = vmatpush.msra.mxu0 0.0
      %3621 = vmatpush.msra.mxu0 0.0
      %3622 = vmatpush.msra.mxu0 0.0
      %3623 = vmatpush.msra.mxu0 0.0
      %3624 = vmatpush.msra.mxu0 0.0
      %3625 = vmatpush.msra.mxu0 0.0
      %3626 = vmatpush.msra.mxu0 0.0
      %3627 = vmatpush.msra.mxu0 %v3593
      %3628 = vmatmul.f32.gmra.mxu0 %v3610
      %v3629 = vpop.f32.mrf.mxu0
      %v3630 = vadd.f32 %v3606, %v3629
      %3631 = vdwg.mxu0
      %3632 = vmatpush.msra.mxu0 0.0
      %3633 = vmatpush.msra.mxu0 0.0
      %3634 = vmatpush.msra.mxu0 0.0
      %3635 = vmatpush.msra.mxu0 0.0
      %3636 = vmatpush.msra.mxu0 0.0
      %3637 = vmatpush.msra.mxu0 0.0
      %3638 = vmatpush.msra.mxu0 0.0
      %3639 = vmatpush.msra.mxu0 0.0
      %3640 = vmatpush.msra.mxu0 0.0
      %3641 = vmatpush.msra.mxu0 0.0
      %3642 = vmatpush.msra.mxu0 0.0
      %3643 = vmatpush.msra.mxu0 0.0
      %3644 = vmatpush.msra.mxu0 0.0
      %3645 = vmatpush.msra.mxu0 0.0
      %3646 = vmatpush.msra.mxu0 0.0
      %3647 = vmatpush.msra.mxu0 %v3594
      %3648 = vmatmul.f32.gmra.mxu0 %v3610
      %v3649 = vpop.f32.mrf.mxu0
      %v3650 = vadd.f32 %v3606, %v3649
      %3651 = vdwg.mxu0
      %3652 = vmatpush.msra.mxu0 0.0
      %3653 = vmatpush.msra.mxu0 0.0
      %3654 = vmatpush.msra.mxu0 0.0
      %3655 = vmatpush.msra.mxu0 0.0
      %3656 = vmatpush.msra.mxu0 0.0
      %3657 = vmatpush.msra.mxu0 0.0
      %3658 = vmatpush.msra.mxu0 0.0
      %3659 = vmatpush.msra.mxu0 0.0
      %3660 = vmatpush.msra.mxu0 0.0
      %3661 = vmatpush.msra.mxu0 0.0
      %3662 = vmatpush.msra.mxu0 0.0
      %3663 = vmatpush.msra.mxu0 0.0
      %3664 = vmatpush.msra.mxu0 0.0
      %3665 = vmatpush.msra.mxu0 0.0
      %3666 = vmatpush.msra.mxu0 0.0
      %3667 = vmatpush.msra.mxu0 %v3595
      %3668 = vmatmul.f32.gmra.mxu0 %v3610
      %v3669 = vpop.f32.mrf.mxu0
      %v3670 = vadd.f32 %v3606, %v3669
      %3671 = vdwg.mxu0
      %3672 = vmatpush.msra.mxu0 0.0
      %3673 = vmatpush.msra.mxu0 0.0
      %3674 = vmatpush.msra.mxu0 0.0
      %3675 = vmatpush.msra.mxu0 0.0
      %3676 = vmatpush.msra.mxu0 0.0
      %3677 = vmatpush.msra.mxu0 0.0
      %3678 = vmatpush.msra.mxu0 0.0
      %3679 = vmatpush.msra.mxu0 0.0
      %3680 = vmatpush.msra.mxu0 0.0
      %3681 = vmatpush.msra.mxu0 0.0
      %3682 = vmatpush.msra.mxu0 0.0
      %3683 = vmatpush.msra.mxu0 0.0
      %3684 = vmatpush.msra.mxu0 0.0
      %3685 = vmatpush.msra.mxu0 0.0
      %3686 = vmatpush.msra.mxu0 0.0
      %3687 = vmatpush.msra.mxu0 %v3596
      %3688 = vmatmul.f32.gmra.mxu0 %v3610
      %v3689 = vpop.f32.mrf.mxu0
      %v3690 = vadd.f32 %v3606, %v3689
      %3691 = vdwg.mxu0
      %3692 = vmatpush.msra.mxu0 0.0
      %3693 = vmatpush.msra.mxu0 0.0
      %3694 = vmatpush.msra.mxu0 0.0
      %3695 = vmatpush.msra.mxu0 0.0
      %3696 = vmatpush.msra.mxu0 0.0
      %3697 = vmatpush.msra.mxu0 0.0
      %3698 = vmatpush.msra.mxu0 0.0
      %3699 = vmatpush.msra.mxu0 0.0
      %3700 = vmatpush.msra.mxu0 0.0
      %3701 = vmatpush.msra.mxu0 0.0
      %3702 = vmatpush.msra.mxu0 0.0
      %3703 = vmatpush.msra.mxu0 0.0
      %3704 = vmatpush.msra.mxu0 0.0
      %3705 = vmatpush.msra.mxu0 0.0
      %3706 = vmatpush.msra.mxu0 0.0
      %3707 = vmatpush.msra.mxu0 %v3597
      %3708 = vmatmul.f32.gmra.mxu0 %v3610
      %v3709 = vpop.f32.mrf.mxu0
      %v3710 = vadd.f32 %v3606, %v3709
      %3711 = vdwg.mxu0
      %3712 = vmatpush.msra.mxu0 0.0
      %3713 = vmatpush.msra.mxu0 0.0
      %3714 = vmatpush.msra.mxu0 0.0
      %3715 = vmatpush.msra.mxu0 0.0
      %3716 = vmatpush.msra.mxu0 0.0
      %3717 = vmatpush.msra.mxu0 0.0
      %3718 = vmatpush.msra.mxu0 0.0
      %3719 = vmatpush.msra.mxu0 0.0
      %3720 = vmatpush.msra.mxu0 0.0
      %3721 = vmatpush.msra.mxu0 0.0
      %3722 = vmatpush.msra.mxu0 0.0
      %3723 = vmatpush.msra.mxu0 0.0
      %3724 = vmatpush.msra.mxu0 0.0
      %3725 = vmatpush.msra.mxu0 0.0
      %3726 = vmatpush.msra.mxu0 0.0
      %3727 = vmatpush.msra.mxu0 %v3598
      %3728 = vmatmul.f32.gmra.mxu0 %v3610
      %v3729 = vpop.f32.mrf.mxu0
      %v3730 = vadd.f32 %v3606, %v3729
      %3731 = vdwg.mxu0
      %3732 = vmatpush.msra.mxu0 0.0
      %3733 = vmatpush.msra.mxu0 0.0
      %3734 = vmatpush.msra.mxu0 0.0
      %3735 = vmatpush.msra.mxu0 0.0
      %3736 = vmatpush.msra.mxu0 0.0
      %3737 = vmatpush.msra.mxu0 0.0
      %3738 = vmatpush.msra.mxu0 0.0
      %3739 = vmatpush.msra.mxu0 0.0
      %3740 = vmatpush.msra.mxu0 0.0
      %3741 = vmatpush.msra.mxu0 0.0
      %3742 = vmatpush.msra.mxu0 0.0
      %3743 = vmatpush.msra.mxu0 0.0
      %3744 = vmatpush.msra.mxu0 0.0
      %3745 = vmatpush.msra.mxu0 0.0
      %3746 = vmatpush.msra.mxu0 0.0
      %3747 = vmatpush.msra.mxu0 %v3599
      %3748 = vmatmul.f32.gmra.mxu0 %v3610
      %v3749 = vpop.f32.mrf.mxu0
      %v3750 = vadd.f32 %v3606, %v3749
      %3751 = vdwg.mxu0
      %3752 = vmatpush.msra.mxu0 0.0
      %3753 = vmatpush.msra.mxu0 0.0
      %3754 = vmatpush.msra.mxu0 0.0
      %3755 = vmatpush.msra.mxu0 0.0
      %3756 = vmatpush.msra.mxu0 0.0
      %3757 = vmatpush.msra.mxu0 0.0
      %3758 = vmatpush.msra.mxu0 0.0
      %3759 = vmatpush.msra.mxu0 0.0
      %3760 = vmatpush.msra.mxu0 0.0
      %3761 = vmatpush.msra.mxu0 0.0
      %3762 = vmatpush.msra.mxu0 0.0
      %3763 = vmatpush.msra.mxu0 0.0
      %3764 = vmatpush.msra.mxu0 0.0
      %3765 = vmatpush.msra.mxu0 0.0
      %3766 = vmatpush.msra.mxu0 0.0
      %3767 = vmatpush.msra.mxu0 %v3600
      %3768 = vmatmul.f32.gmra.mxu0 %v3610
      %v3769 = vpop.f32.mrf.mxu0
      %v3770 = vadd.f32 %v3606, %v3769
      %3771 = vdwg.mxu0
      %v3772 = vmul.f32 %v3630, 0.5
      %v3773 = vmul.f32 %v3650, 0.5
      %v3774 = vmul.f32 %v3670, 0.5
      %v3775 = vmul.f32 %v3690, 0.5
      %v3776 = vmul.f32 %v3710, 0.5
      %v3777 = vmul.f32 %v3730, 0.5
      %v3778 = vmul.f32 %v3750, 0.5
      %v3779 = vmul.f32 %v3770, 0.5
      %v3780 = vmul.f32 %v3630, 0.70710677
      %v3781 = vmul.f32 %v3650, 0.70710677
      %v3782 = vmul.f32 %v3670, 0.70710677
      %v3783 = vmul.f32 %v3690, 0.70710677
      %v3784 = vmul.f32 %v3710, 0.70710677
      %v3785 = vmul.f32 %v3730, 0.70710677
      %v3786 = vmul.f32 %v3750, 0.70710677
      %v3787 = vmul.f32 %v3770, 0.70710677
      %v3788 = vmul.f32 %v3780, %v3780
      %v3789 = vmin.f32 16.0, %v3788
      %v3790 = vmul.f32 %v3789, 2.1237322e-06
      %v3791 = vadd.f32 %v3790, 0.00028619796
      %v3792 = vmul.f32 %v3789, %v3791
      %v3793 = vadd.f32 %v3792, 0.0036580483
      %v3794 = vmul.f32 %v3789, %v3793
      %v3795 = vadd.f32 %v3794, 0.05243302
      %v3796 = vmul.f32 %v3789, %v3795
      %v3797 = vadd.f32 %v3796, 0.18741608
      %v3798 = vmul.f32 %v3789, %v3797
      %v3799 = vadd.f32 %v3798, 1.1283791
      %v3800 = vmul.f32 %v3780, %v3799
      %v3801 = vmul.f32 %v3789, 3.8918573e-05
      %v3802 = vadd.f32 %v3801, 0.001143296
      %v3803 = vmul.f32 %v3789, %v3802
      %v3804 = vadd.f32 %v3803, 0.014752088
      %v3805 = vmul.f32 %v3789, %v3804
      %v3806 = vadd.f32 %v3805, 0.112945676
      %v3807 = vmul.f32 %v3789, %v3806
      %v3808 = vadd.f32 %v3807, 0.4994258
      %v3809 = vmul.f32 %v3789, %v3808
      %v3810 = vadd.f32 %v3809, 1.0
      %v3811 = vrcp.pop %v3810
      %v3812 = vmul.f32 %v3810, %v3811
      %v3813 = vsub.f32 1.0, %v3812
      %v3814 = vmul.f32 %v3811, %v3813
      %v3815 = vadd.f32 %v3811, %v3814
      %vm3816 = vweird.f32 %v3810
      %vm3817 = vweird.f32 %v3811
      %vm3818 = vmor %vm3816, %vm3817
      %v3819 = vsel %vm3818, %v3811, %v3815
      %v3820 = vand.u32 2147483647, %v3810
      %vm3821 = vcmp.eq.f32.partialorder %v3820, 8.507059e+37
      %v3822 = vand.u32 %v3810, 2147483648
      %v3823 = vor.u32 1.1754944e-38, %v3822
      %v3824 = vsel %vm3821, %v3823, %v3819
      %v3825 = vmul.f32 %v3800, %v3824
      %v3826 = vmin.f32 %v3825, 1.0
      %v3827 = vmax.f32 %v3826, -1.0
      %v3828 = vmul.f32 %v3781, %v3781
      %v3829 = vmin.f32 16.0, %v3828
      %v3830 = vmul.f32 %v3829, 2.1237322e-06
      %v3831 = vadd.f32 %v3830, 0.00028619796
      %v3832 = vmul.f32 %v3829, %v3831
      %v3833 = vadd.f32 %v3832, 0.0036580483
      %v3834 = vmul.f32 %v3829, %v3833
      %v3835 = vadd.f32 %v3834, 0.05243302
      %v3836 = vmul.f32 %v3829, %v3835
      %v3837 = vadd.f32 %v3836, 0.18741608
      %v3838 = vmul.f32 %v3829, %v3837
      %v3839 = vadd.f32 %v3838, 1.1283791
      %v3840 = vmul.f32 %v3781, %v3839
      %v3841 = vmul.f32 %v3829, 3.8918573e-05
      %v3842 = vadd.f32 %v3841, 0.001143296
      %v3843 = vmul.f32 %v3829, %v3842
      %v3844 = vadd.f32 %v3843, 0.014752088
      %v3845 = vmul.f32 %v3829, %v3844
      %v3846 = vadd.f32 %v3845, 0.112945676
      %v3847 = vmul.f32 %v3829, %v3846
      %v3848 = vadd.f32 %v3847, 0.4994258
      %v3849 = vmul.f32 %v3829, %v3848
      %v3850 = vadd.f32 %v3849, 1.0
      %v3851 = vrcp.pop %v3850
      %v3852 = vmul.f32 %v3850, %v3851
      %v3853 = vsub.f32 1.0, %v3852
      %v3854 = vmul.f32 %v3851, %v3853
      %v3855 = vadd.f32 %v3851, %v3854
      %vm3856 = vweird.f32 %v3850
      %vm3857 = vweird.f32 %v3851
      %vm3858 = vmor %vm3856, %vm3857
      %v3859 = vsel %vm3858, %v3851, %v3855
      %v3860 = vand.u32 2147483647, %v3850
      %vm3861 = vcmp.eq.f32.partialorder %v3860, 8.507059e+37
      %v3862 = vand.u32 %v3850, 2147483648
      %v3863 = vor.u32 1.1754944e-38, %v3862
      %v3864 = vsel %vm3861, %v3863, %v3859
      %v3865 = vmul.f32 %v3840, %v3864
      %v3866 = vmin.f32 %v3865, 1.0
      %v3867 = vmax.f32 %v3866, -1.0
      %v3868 = vmul.f32 %v3782, %v3782
      %v3869 = vmin.f32 16.0, %v3868
      %v3870 = vmul.f32 %v3869, 2.1237322e-06
      %v3871 = vadd.f32 %v3870, 0.00028619796
      %v3872 = vmul.f32 %v3869, %v3871
      %v3873 = vadd.f32 %v3872, 0.0036580483
      %v3874 = vmul.f32 %v3869, %v3873
      %v3875 = vadd.f32 %v3874, 0.05243302
      %v3876 = vmul.f32 %v3869, %v3875
      %v3877 = vadd.f32 %v3876, 0.18741608
      %v3878 = vmul.f32 %v3869, %v3877
      %v3879 = vadd.f32 %v3878, 1.1283791
      %v3880 = vmul.f32 %v3782, %v3879
      %v3881 = vmul.f32 %v3869, 3.8918573e-05
      %v3882 = vadd.f32 %v3881, 0.001143296
      %v3883 = vmul.f32 %v3869, %v3882
      %v3884 = vadd.f32 %v3883, 0.014752088
      %v3885 = vmul.f32 %v3869, %v3884
      %v3886 = vadd.f32 %v3885, 0.112945676
      %v3887 = vmul.f32 %v3869, %v3886
      %v3888 = vadd.f32 %v3887, 0.4994258
      %v3889 = vmul.f32 %v3869, %v3888
      %v3890 = vadd.f32 %v3889, 1.0
      %v3891 = vrcp.pop %v3890
      %v3892 = vmul.f32 %v3890, %v3891
      %v3893 = vsub.f32 1.0, %v3892
      %v3894 = vmul.f32 %v3891, %v3893
      %v3895 = vadd.f32 %v3891, %v3894
      %vm3896 = vweird.f32 %v3890
      %vm3897 = vweird.f32 %v3891
      %vm3898 = vmor %vm3896, %vm3897
      %v3899 = vsel %vm3898, %v3891, %v3895
      %v3900 = vand.u32 2147483647, %v3890
      %vm3901 = vcmp.eq.f32.partialorder %v3900, 8.507059e+37
      %v3902 = vand.u32 %v3890, 2147483648
      %v3903 = vor.u32 1.1754944e-38, %v3902
      %v3904 = vsel %vm3901, %v3903, %v3899
      %v3905 = vmul.f32 %v3880, %v3904
      %v3906 = vmin.f32 %v3905, 1.0
      %v3907 = vmax.f32 %v3906, -1.0
      %v3908 = vmul.f32 %v3783, %v3783
      %v3909 = vmin.f32 16.0, %v3908
      %v3910 = vmul.f32 %v3909, 2.1237322e-06
      %v3911 = vadd.f32 %v3910, 0.00028619796
      %v3912 = vmul.f32 %v3909, %v3911
      %v3913 = vadd.f32 %v3912, 0.0036580483
      %v3914 = vmul.f32 %v3909, %v3913
      %v3915 = vadd.f32 %v3914, 0.05243302
      %v3916 = vmul.f32 %v3909, %v3915
      %v3917 = vadd.f32 %v3916, 0.18741608
      %v3918 = vmul.f32 %v3909, %v3917
      %v3919 = vadd.f32 %v3918, 1.1283791
      %v3920 = vmul.f32 %v3783, %v3919
      %v3921 = vmul.f32 %v3909, 3.8918573e-05
      %v3922 = vadd.f32 %v3921, 0.001143296
      %v3923 = vmul.f32 %v3909, %v3922
      %v3924 = vadd.f32 %v3923, 0.014752088
      %v3925 = vmul.f32 %v3909, %v3924
      %v3926 = vadd.f32 %v3925, 0.112945676
      %v3927 = vmul.f32 %v3909, %v3926
      %v3928 = vadd.f32 %v3927, 0.4994258
      %v3929 = vmul.f32 %v3909, %v3928
      %v3930 = vadd.f32 %v3929, 1.0
      %v3931 = vrcp.pop %v3930
      %v3932 = vmul.f32 %v3930, %v3931
      %v3933 = vsub.f32 1.0, %v3932
      %v3934 = vmul.f32 %v3931, %v3933
      %v3935 = vadd.f32 %v3931, %v3934
      %vm3936 = vweird.f32 %v3930
      %vm3937 = vweird.f32 %v3931
      %vm3938 = vmor %vm3936, %vm3937
      %v3939 = vsel %vm3938, %v3931, %v3935
      %v3940 = vand.u32 2147483647, %v3930
      %vm3941 = vcmp.eq.f32.partialorder %v3940, 8.507059e+37
      %v3942 = vand.u32 %v3930, 2147483648
      %v3943 = vor.u32 1.1754944e-38, %v3942
      %v3944 = vsel %vm3941, %v3943, %v3939
      %v3945 = vmul.f32 %v3920, %v3944
      %v3946 = vmin.f32 %v3945, 1.0
      %v3947 = vmax.f32 %v3946, -1.0
      %v3948 = vmul.f32 %v3784, %v3784
      %v3949 = vmin.f32 16.0, %v3948
      %v3950 = vmul.f32 %v3949, 2.1237322e-06
      %v3951 = vadd.f32 %v3950, 0.00028619796
      %v3952 = vmul.f32 %v3949, %v3951
      %v3953 = vadd.f32 %v3952, 0.0036580483
      %v3954 = vmul.f32 %v3949, %v3953
      %v3955 = vadd.f32 %v3954, 0.05243302
      %v3956 = vmul.f32 %v3949, %v3955
      %v3957 = vadd.f32 %v3956, 0.18741608
      %v3958 = vmul.f32 %v3949, %v3957
      %v3959 = vadd.f32 %v3958, 1.1283791
      %v3960 = vmul.f32 %v3784, %v3959
      %v3961 = vmul.f32 %v3949, 3.8918573e-05
      %v3962 = vadd.f32 %v3961, 0.001143296
      %v3963 = vmul.f32 %v3949, %v3962
      %v3964 = vadd.f32 %v3963, 0.014752088
      %v3965 = vmul.f32 %v3949, %v3964
      %v3966 = vadd.f32 %v3965, 0.112945676
      %v3967 = vmul.f32 %v3949, %v3966
      %v3968 = vadd.f32 %v3967, 0.4994258
      %v3969 = vmul.f32 %v3949, %v3968
      %v3970 = vadd.f32 %v3969, 1.0
      %v3971 = vrcp.pop %v3970
      %v3972 = vmul.f32 %v3970, %v3971
      %v3973 = vsub.f32 1.0, %v3972
      %v3974 = vmul.f32 %v3971, %v3973
      %v3975 = vadd.f32 %v3971, %v3974
      %vm3976 = vweird.f32 %v3970
      %vm3977 = vweird.f32 %v3971
      %vm3978 = vmor %vm3976, %vm3977
      %v3979 = vsel %vm3978, %v3971, %v3975
      %v3980 = vand.u32 2147483647, %v3970
      %vm3981 = vcmp.eq.f32.partialorder %v3980, 8.507059e+37
      %v3982 = vand.u32 %v3970, 2147483648
      %v3983 = vor.u32 1.1754944e-38, %v3982
      %v3984 = vsel %vm3981, %v3983, %v3979
      %v3985 = vmul.f32 %v3960, %v3984
      %v3986 = vmin.f32 %v3985, 1.0
      %v3987 = vmax.f32 %v3986, -1.0
      %v3988 = vmul.f32 %v3785, %v3785
      %v3989 = vmin.f32 16.0, %v3988
      %v3990 = vmul.f32 %v3989, 2.1237322e-06
      %v3991 = vadd.f32 %v3990, 0.00028619796
      %v3992 = vmul.f32 %v3989, %v3991
      %v3993 = vadd.f32 %v3992, 0.0036580483
      %v3994 = vmul.f32 %v3989, %v3993
      %v3995 = vadd.f32 %v3994, 0.05243302
      %v3996 = vmul.f32 %v3989, %v3995
      %v3997 = vadd.f32 %v3996, 0.18741608
      %v3998 = vmul.f32 %v3989, %v3997
      %v3999 = vadd.f32 %v3998, 1.1283791
      %v4000 = vmul.f32 %v3785, %v3999
      %v4001 = vmul.f32 %v3989, 3.8918573e-05
      %v4002 = vadd.f32 %v4001, 0.001143296
      %v4003 = vmul.f32 %v3989, %v4002
      %v4004 = vadd.f32 %v4003, 0.014752088
      %v4005 = vmul.f32 %v3989, %v4004
      %v4006 = vadd.f32 %v4005, 0.112945676
      %v4007 = vmul.f32 %v3989, %v4006
      %v4008 = vadd.f32 %v4007, 0.4994258
      %v4009 = vmul.f32 %v3989, %v4008
      %v4010 = vadd.f32 %v4009, 1.0
      %v4011 = vrcp.pop %v4010
      %v4012 = vmul.f32 %v4010, %v4011
      %v4013 = vsub.f32 1.0, %v4012
      %v4014 = vmul.f32 %v4011, %v4013
      %v4015 = vadd.f32 %v4011, %v4014
      %vm4016 = vweird.f32 %v4010
      %vm4017 = vweird.f32 %v4011
      %vm4018 = vmor %vm4016, %vm4017
      %v4019 = vsel %vm4018, %v4011, %v4015
      %v4020 = vand.u32 2147483647, %v4010
      %vm4021 = vcmp.eq.f32.partialorder %v4020, 8.507059e+37
      %v4022 = vand.u32 %v4010, 2147483648
      %v4023 = vor.u32 1.1754944e-38, %v4022
      %v4024 = vsel %vm4021, %v4023, %v4019
      %v4025 = vmul.f32 %v4000, %v4024
      %v4026 = vmin.f32 %v4025, 1.0
      %v4027 = vmax.f32 %v4026, -1.0
      %v4028 = vmul.f32 %v3786, %v3786
      %v4029 = vmin.f32 16.0, %v4028
      %v4030 = vmul.f32 %v4029, 2.1237322e-06
      %v4031 = vadd.f32 %v4030, 0.00028619796
      %v4032 = vmul.f32 %v4029, %v4031
      %v4033 = vadd.f32 %v4032, 0.0036580483
      %v4034 = vmul.f32 %v4029, %v4033
      %v4035 = vadd.f32 %v4034, 0.05243302
      %v4036 = vmul.f32 %v4029, %v4035
      %v4037 = vadd.f32 %v4036, 0.18741608
      %v4038 = vmul.f32 %v4029, %v4037
      %v4039 = vadd.f32 %v4038, 1.1283791
      %v4040 = vmul.f32 %v3786, %v4039
      %v4041 = vmul.f32 %v4029, 3.8918573e-05
      %v4042 = vadd.f32 %v4041, 0.001143296
      %v4043 = vmul.f32 %v4029, %v4042
      %v4044 = vadd.f32 %v4043, 0.014752088
      %v4045 = vmul.f32 %v4029, %v4044
      %v4046 = vadd.f32 %v4045, 0.112945676
      %v4047 = vmul.f32 %v4029, %v4046
      %v4048 = vadd.f32 %v4047, 0.4994258
      %v4049 = vmul.f32 %v4029, %v4048
      %v4050 = vadd.f32 %v4049, 1.0
      %v4051 = vrcp.pop %v4050
      %v4052 = vmul.f32 %v4050, %v4051
      %v4053 = vsub.f32 1.0, %v4052
      %v4054 = vmul.f32 %v4051, %v4053
      %v4055 = vadd.f32 %v4051, %v4054
      %vm4056 = vweird.f32 %v4050
      %vm4057 = vweird.f32 %v4051
      %vm4058 = vmor %vm4056, %vm4057
      %v4059 = vsel %vm4058, %v4051, %v4055
      %v4060 = vand.u32 2147483647, %v4050
      %vm4061 = vcmp.eq.f32.partialorder %v4060, 8.507059e+37
      %v4062 = vand.u32 %v4050, 2147483648
      %v4063 = vor.u32 1.1754944e-38, %v4062
      %v4064 = vsel %vm4061, %v4063, %v4059
      %v4065 = vmul.f32 %v4040, %v4064
      %v4066 = vmin.f32 %v4065, 1.0
      %v4067 = vmax.f32 %v4066, -1.0
      %v4068 = vmul.f32 %v3787, %v3787
      %v4069 = vmin.f32 16.0, %v4068
      %v4070 = vmul.f32 %v4069, 2.1237322e-06
      %v4071 = vadd.f32 %v4070, 0.00028619796
      %v4072 = vmul.f32 %v4069, %v4071
      %v4073 = vadd.f32 %v4072, 0.0036580483
      %v4074 = vmul.f32 %v4069, %v4073
      %v4075 = vadd.f32 %v4074, 0.05243302
      %v4076 = vmul.f32 %v4069, %v4075
      %v4077 = vadd.f32 %v4076, 0.18741608
      %v4078 = vmul.f32 %v4069, %v4077
      %v4079 = vadd.f32 %v4078, 1.1283791
      %v4080 = vmul.f32 %v3787, %v4079
      %v4081 = vmul.f32 %v4069, 3.8918573e-05
      %v4082 = vadd.f32 %v4081, 0.001143296
      %v4083 = vmul.f32 %v4069, %v4082
      %v4084 = vadd.f32 %v4083, 0.014752088
      %v4085 = vmul.f32 %v4069, %v4084
      %v4086 = vadd.f32 %v4085, 0.112945676
      %v4087 = vmul.f32 %v4069, %v4086
      %v4088 = vadd.f32 %v4087, 0.4994258
      %v4089 = vmul.f32 %v4069, %v4088
      %v4090 = vadd.f32 %v4089, 1.0
      %v4091 = vrcp.pop %v4090
      %v4092 = vmul.f32 %v4090, %v4091
      %v4093 = vsub.f32 1.0, %v4092
      %v4094 = vmul.f32 %v4091, %v4093
      %v4095 = vadd.f32 %v4091, %v4094
      %vm4096 = vweird.f32 %v4090
      %vm4097 = vweird.f32 %v4091
      %vm4098 = vmor %vm4096, %vm4097
      %v4099 = vsel %vm4098, %v4091, %v4095
      %v4100 = vand.u32 2147483647, %v4090
      %vm4101 = vcmp.eq.f32.partialorder %v4100, 8.507059e+37
      %v4102 = vand.u32 %v4090, 2147483648
      %v4103 = vor.u32 1.1754944e-38, %v4102
      %v4104 = vsel %vm4101, %v4103, %v4099
      %v4105 = vmul.f32 %v4080, %v4104
      %v4106 = vmin.f32 %v4105, 1.0
      %v4107 = vmax.f32 %v4106, -1.0
      %v4108 = vadd.f32 %v3827, 1.0
      %v4109 = vadd.f32 %v3867, 1.0
      %v4110 = vadd.f32 %v3907, 1.0
      %v4111 = vadd.f32 %v3947, 1.0
      %v4112 = vadd.f32 %v3987, 1.0
      %v4113 = vadd.f32 %v4027, 1.0
      %v4114 = vadd.f32 %v4067, 1.0
      %v4115 = vadd.f32 %v4107, 1.0
      %v4116 = vmul.f32 %v3772, %v4108
      %v4117 = vmul.f32 %v3773, %v4109
      %v4118 = vmul.f32 %v3774, %v4110
      %v4119 = vmul.f32 %v3775, %v4111
      %v4120 = vmul.f32 %v3776, %v4112
      %v4121 = vmul.f32 %v3777, %v4113
      %v4122 = vmul.f32 %v3778, %v4114
      %v4123 = vmul.f32 %v3779, %v4115
      %v4124 = vmul.f32 %v4116, %v2246
      %v4125 = vmul.f32 %v4117, %v2247
      %v4126 = vmul.f32 %v4118, %v2248
      %v4127 = vmul.f32 %v4119, %v2249
      %v4128 = vmul.f32 %v4120, %v2250
      %v4129 = vmul.f32 %v4121, %v2251
      %v4130 = vmul.f32 %v4122, %v2252
      %v4131 = vmul.f32 %v4123, %v2253
      %v4132 = vmul.f32 %v4124, %v4116
      %v4133 = vmul.f32 %v4125, %v4117
      %v4134 = vmul.f32 %v4126, %v4118
      %v4135 = vmul.f32 %v4127, %v4119
      %v4136 = vmul.f32 %v4128, %v4120
      %v4137 = vmul.f32 %v4129, %v4121
      %v4138 = vmul.f32 %v4130, %v4122
      %v4139 = vmul.f32 %v4131, %v4123
      %v4140 = vadd.f32 %v4132, %v4133
      %v4141 = vadd.f32 %v4140, %v4134
      %v4142 = vadd.f32 %v4141, %v4135
      %v4143 = vadd.f32 %v4142, %v4136
      %v4144 = vadd.f32 %v4143, %v4137
      %v4145 = vadd.f32 %v4144, %v4138
      %v4146 = vadd.f32 %v4145, %v4139
      %4147 = vadd.xlane.f32.xlu0 %v4146
      %v4148 = vpop.xlane.xlu0 %4147
      %v4149 = vrsqrt.pop %v4148
      %v4150 = vmul.f32 %v4149, %v4148
      %v4151 = vmul.f32 %v4150, %v4149
      %v4152 = vmul.f32 0.5, %v4151
      %v4153 = vsub.f32 1.5, %v4152
      %v4154 = vmul.f32 %v4149, %v4153
      %v4155 = vmul.f32 %v4148, %v4154
      %vm4156 = vcmp.eq.f32.partialorder %v4148, inf
      %v4157 = vsel %vm4156, %v4148, %v4155
      %vm4158 = vcmp.eq.f32.partialorder %v4148, 0.0
      %v4159 = vand.u32 %v4148, 2147483648
      %v4160 = vsel %vm4158, %v4159, %v4157
      %v4161 = vrot.slane %v4160, 4
      %v4162 = vadd.f32 %v4160, %v4161
      %v4163 = vrot.slane %v4162, 2
      %v4164 = vadd.f32 %v4162, %v4163
      %v4165 = vrot.slane %v4164, 1
      %v4166 = vadd.f32 %v4164, %v4165
      %v4167 = vrcp.pop 8.0
      %v4168 = vmul.f32 8.0, %v4167
      %v4169 = vsub.f32 1.0, %v4168
      %v4170 = vmul.f32 %v4167, %v4169
      %v4171 = vadd.f32 %v4167, %v4170
      %vm4172 = vweird.f32 %v4167
      %v4173 = vsel %vm4172, %v4167, %v4171
      %v4174 = vmul.f32 %v4166, %v4173
      %v4175 = vadd.f32 %v4174, 1e-06
      %v4176 = vld [vmem:[%s11] sm:$0xff]
      %v4177 = vrcp.pop %v4175
      %v4178 = vmul.f32 %v4175, %v4177
      %v4179 = vsub.f32 1.0, %v4178
      %v4180 = vmul.f32 %v4177, %v4179
      %v4181 = vadd.f32 %v4177, %v4180
      %vm4182 = vweird.f32 %v4175
      %vm4183 = vweird.f32 %v4177
      %vm4184 = vmor %vm4182, %vm4183
      %v4185 = vsel %vm4184, %v4177, %v4181
      %v4186 = vand.u32 2147483647, %v4175
      %vm4187 = vcmp.eq.f32.partialorder %v4186, 8.507059e+37
      %v4188 = vand.u32 %v4175, 2147483648
      %v4189 = vor.u32 1.1754944e-38, %v4188
      %v4190 = vsel %vm4187, %v4189, %v4185
      %v4191 = vmul.f32 %v4160, %v4190
      %v4192 = vmul.f32 %v4176, %v4191
      %v4193 = vadd.f32 %v4192, 1.0
      %4195 = vset.pattern.permute.xlu0 0
      %4196 = vperm.xlu0 %4195, %v4193
      %v4197 = vpop.permute.xlu0 %4196
      %v4199 = vmul.f32 %v4116, %v4197
      %v4200 = vmul.f32 %v4117, %v4197
      %v4201 = vmul.f32 %v4118, %v4197
      %v4202 = vmul.f32 %v4119, %v4197
      %v4203 = vmul.f32 %v4120, %v4197
      %v4204 = vmul.f32 %v4121, %v4197
      %v4205 = vmul.f32 %v4122, %v4197
      %v4206 = vmul.f32 %v4123, %v4197
      %v4207 = vld [vmem:[%s12] sm:$0xff]
      %4209 = vset.pattern.permute.xlu0 0
      %4210 = vperm.xlu0 %4209, %v4207
      %v4211 = vpop.permute.xlu0 %4210
      %v4213 = vadd.f32 %v4199, %v4211
      %v4214 = vadd.f32 %v4200, %v4211
      %v4215 = vadd.f32 %v4201, %v4211
      %v4216 = vadd.f32 %v4202, %v4211
      %v4217 = vadd.f32 %v4203, %v4211
      %v4218 = vadd.f32 %v4204, %v4211
      %v4219 = vadd.f32 %v4205, %v4211
      %v4220 = vadd.f32 %v4206, %v4211
      %v4221 = vld [vmem:[%s13] sm:$0xff]
      %v4222 = vld [vmem:[%s14] sm:$0xff]
      %4224 = vset.pattern.permute.xlu0 0
      %4225 = vperm.xlu0 %4224, %v4222
      %v4226 = vpop.permute.xlu0 %4225
      %v4229 = vsel %vm3608, %v4221, 0
      %4231 = vmatpush.msra.mxu0 0.0
      %4232 = vmatpush.msra.mxu0 0.0
      %4233 = vmatpush.msra.mxu0 0.0
      %4234 = vmatpush.msra.mxu0 0.0
      %4235 = vmatpush.msra.mxu0 0.0
      %4236 = vmatpush.msra.mxu0 0.0
      %4237 = vmatpush.msra.mxu0 0.0
      %4238 = vmatpush.msra.mxu0 0.0
      %4239 = vmatpush.msra.mxu0 0.0
      %4240 = vmatpush.msra.mxu0 0.0
      %4241 = vmatpush.msra.mxu0 0.0
      %4242 = vmatpush.msra.mxu0 0.0
      %4243 = vmatpush.msra.mxu0 0.0
      %4244 = vmatpush.msra.mxu0 0.0
      %4245 = vmatpush.msra.mxu0 0.0
      %4246 = vmatpush.msra.mxu0 %v4213
      %4247 = vmatmul.f32.gmra.mxu0 %v4229
      %v4248 = vpop.f32.mrf.mxu0
      %v4249 = vadd.f32 %v4226, %v4248
      %4250 = vdwg.mxu0
      %4251 = vmatpush.msra.mxu0 0.0
      %4252 = vmatpush.msra.mxu0 0.0
      %4253 = vmatpush.msra.mxu0 0.0
      %4254 = vmatpush.msra.mxu0 0.0
      %4255 = vmatpush.msra.mxu0 0.0
      %4256 = vmatpush.msra.mxu0 0.0
      %4257 = vmatpush.msra.mxu0 0.0
      %4258 = vmatpush.msra.mxu0 0.0
      %4259 = vmatpush.msra.mxu0 0.0
      %4260 = vmatpush.msra.mxu0 0.0
      %4261 = vmatpush.msra.mxu0 0.0
      %4262 = vmatpush.msra.mxu0 0.0
      %4263 = vmatpush.msra.mxu0 0.0
      %4264 = vmatpush.msra.mxu0 0.0
      %4265 = vmatpush.msra.mxu0 0.0
      %4266 = vmatpush.msra.mxu0 %v4214
      %4267 = vmatmul.f32.gmra.mxu0 %v4229
      %v4268 = vpop.f32.mrf.mxu0
      %v4269 = vadd.f32 %v4226, %v4268
      %4270 = vdwg.mxu0
      %4271 = vmatpush.msra.mxu0 0.0
      %4272 = vmatpush.msra.mxu0 0.0
      %4273 = vmatpush.msra.mxu0 0.0
      %4274 = vmatpush.msra.mxu0 0.0
      %4275 = vmatpush.msra.mxu0 0.0
      %4276 = vmatpush.msra.mxu0 0.0
      %4277 = vmatpush.msra.mxu0 0.0
      %4278 = vmatpush.msra.mxu0 0.0
      %4279 = vmatpush.msra.mxu0 0.0
      %4280 = vmatpush.msra.mxu0 0.0
      %4281 = vmatpush.msra.mxu0 0.0
      %4282 = vmatpush.msra.mxu0 0.0
      %4283 = vmatpush.msra.mxu0 0.0
      %4284 = vmatpush.msra.mxu0 0.0
      %4285 = vmatpush.msra.mxu0 0.0
      %4286 = vmatpush.msra.mxu0 %v4215
      %4287 = vmatmul.f32.gmra.mxu0 %v4229
      %v4288 = vpop.f32.mrf.mxu0
      %v4289 = vadd.f32 %v4226, %v4288
      %4290 = vdwg.mxu0
      %4291 = vmatpush.msra.mxu0 0.0
      %4292 = vmatpush.msra.mxu0 0.0
      %4293 = vmatpush.msra.mxu0 0.0
      %4294 = vmatpush.msra.mxu0 0.0
      %4295 = vmatpush.msra.mxu0 0.0
      %4296 = vmatpush.msra.mxu0 0.0
      %4297 = vmatpush.msra.mxu0 0.0
      %4298 = vmatpush.msra.mxu0 0.0
      %4299 = vmatpush.msra.mxu0 0.0
      %4300 = vmatpush.msra.mxu0 0.0
      %4301 = vmatpush.msra.mxu0 0.0
      %4302 = vmatpush.msra.mxu0 0.0
      %4303 = vmatpush.msra.mxu0 0.0
      %4304 = vmatpush.msra.mxu0 0.0
      %4305 = vmatpush.msra.mxu0 0.0
      %4306 = vmatpush.msra.mxu0 %v4216
      %4307 = vmatmul.f32.gmra.mxu0 %v4229
      %v4308 = vpop.f32.mrf.mxu0
      %v4309 = vadd.f32 %v4226, %v4308
      %4310 = vdwg.mxu0
      %4311 = vmatpush.msra.mxu0 0.0
      %4312 = vmatpush.msra.mxu0 0.0
      %4313 = vmatpush.msra.mxu0 0.0
      %4314 = vmatpush.msra.mxu0 0.0
      %4315 = vmatpush.msra.mxu0 0.0
      %4316 = vmatpush.msra.mxu0 0.0
      %4317 = vmatpush.msra.mxu0 0.0
      %4318 = vmatpush.msra.mxu0 0.0
      %4319 = vmatpush.msra.mxu0 0.0
      %4320 = vmatpush.msra.mxu0 0.0
      %4321 = vmatpush.msra.mxu0 0.0
      %4322 = vmatpush.msra.mxu0 0.0
      %4323 = vmatpush.msra.mxu0 0.0
      %4324 = vmatpush.msra.mxu0 0.0
      %4325 = vmatpush.msra.mxu0 0.0
      %4326 = vmatpush.msra.mxu0 %v4217
      %4327 = vmatmul.f32.gmra.mxu0 %v4229
      %v4328 = vpop.f32.mrf.mxu0
      %v4329 = vadd.f32 %v4226, %v4328
      %4330 = vdwg.mxu0
      %4331 = vmatpush.msra.mxu0 0.0
      %4332 = vmatpush.msra.mxu0 0.0
      %4333 = vmatpush.msra.mxu0 0.0
      %4334 = vmatpush.msra.mxu0 0.0
      %4335 = vmatpush.msra.mxu0 0.0
      %4336 = vmatpush.msra.mxu0 0.0
      %4337 = vmatpush.msra.mxu0 0.0
      %4338 = vmatpush.msra.mxu0 0.0
      %4339 = vmatpush.msra.mxu0 0.0
      %4340 = vmatpush.msra.mxu0 0.0
      %4341 = vmatpush.msra.mxu0 0.0
      %4342 = vmatpush.msra.mxu0 0.0
      %4343 = vmatpush.msra.mxu0 0.0
      %4344 = vmatpush.msra.mxu0 0.0
      %4345 = vmatpush.msra.mxu0 0.0
      %4346 = vmatpush.msra.mxu0 %v4218
      %4347 = vmatmul.f32.gmra.mxu0 %v4229
      %v4348 = vpop.f32.mrf.mxu0
      %v4349 = vadd.f32 %v4226, %v4348
      %4350 = vdwg.mxu0
      %4351 = vmatpush.msra.mxu0 0.0
      %4352 = vmatpush.msra.mxu0 0.0
      %4353 = vmatpush.msra.mxu0 0.0
      %4354 = vmatpush.msra.mxu0 0.0
      %4355 = vmatpush.msra.mxu0 0.0
      %4356 = vmatpush.msra.mxu0 0.0
      %4357 = vmatpush.msra.mxu0 0.0
      %4358 = vmatpush.msra.mxu0 0.0
      %4359 = vmatpush.msra.mxu0 0.0
      %4360 = vmatpush.msra.mxu0 0.0
      %4361 = vmatpush.msra.mxu0 0.0
      %4362 = vmatpush.msra.mxu0 0.0
      %4363 = vmatpush.msra.mxu0 0.0
      %4364 = vmatpush.msra.mxu0 0.0
      %4365 = vmatpush.msra.mxu0 0.0
      %4366 = vmatpush.msra.mxu0 %v4219
      %4367 = vmatmul.f32.gmra.mxu0 %v4229
      %v4368 = vpop.f32.mrf.mxu0
      %v4369 = vadd.f32 %v4226, %v4368
      %4370 = vdwg.mxu0
      %4371 = vmatpush.msra.mxu0 0.0
      %4372 = vmatpush.msra.mxu0 0.0
      %4373 = vmatpush.msra.mxu0 0.0
      %4374 = vmatpush.msra.mxu0 0.0
      %4375 = vmatpush.msra.mxu0 0.0
      %4376 = vmatpush.msra.mxu0 0.0
      %4377 = vmatpush.msra.mxu0 0.0
      %4378 = vmatpush.msra.mxu0 0.0
      %4379 = vmatpush.msra.mxu0 0.0
      %4380 = vmatpush.msra.mxu0 0.0
      %4381 = vmatpush.msra.mxu0 0.0
      %4382 = vmatpush.msra.mxu0 0.0
      %4383 = vmatpush.msra.mxu0 0.0
      %4384 = vmatpush.msra.mxu0 0.0
      %4385 = vmatpush.msra.mxu0 0.0
      %4386 = vmatpush.msra.mxu0 %v4220
      %4387 = vmatmul.f32.gmra.mxu0 %v4229
      %v4388 = vpop.f32.mrf.mxu0
      %v4389 = vadd.f32 %v4226, %v4388
      %4390 = vdwg.mxu0
      %v4391 = vadd.f32 %v2262, %v4249
      %v4392 = vadd.f32 %v2263, %v4269
      %v4393 = vadd.f32 %v2264, %v4289
      %v4394 = vadd.f32 %v2265, %v4309
      %v4395 = vadd.f32 %v2266, %v4329
      %v4396 = vadd.f32 %v2267, %v4349
      %v4397 = vadd.f32 %v2268, %v4369
      %v4398 = vadd.f32 %v2269, %v4389
      %v4399 = vmul.f32 %v4391, %v2246
      %v4400 = vmul.f32 %v4392, %v2247
      %v4401 = vmul.f32 %v4393, %v2248
      %v4402 = vmul.f32 %v4394, %v2249
      %v4403 = vmul.f32 %v4395, %v2250
      %v4404 = vmul.f32 %v4396, %v2251
      %v4405 = vmul.f32 %v4397, %v2252
      %v4406 = vmul.f32 %v4398, %v2253
      %4407 = vrot.lane.b32.xlu0 %v4399, 111
      %v4408 = vpop.permute.xlu0 %4407
      %4409 = vrot.lane.b32.xlu0 %v4400, 111
      %v4410 = vpop.permute.xlu0 %4409
      %4411 = vrot.lane.b32.xlu0 %v4401, 111
      %v4412 = vpop.permute.xlu0 %4411
      %4413 = vrot.lane.b32.xlu0 %v4402, 111
      %v4414 = vpop.permute.xlu0 %4413
      %4415 = vrot.lane.b32.xlu0 %v4403, 111
      %v4416 = vpop.permute.xlu0 %4415
      %4417 = vrot.lane.b32.xlu0 %v4404, 111
      %v4418 = vpop.permute.xlu0 %4417
      %4419 = vrot.lane.b32.xlu0 %v4405, 111
      %v4420 = vpop.permute.xlu0 %4419
      %4421 = vrot.lane.b32.xlu0 %v4406, 111
      %v4422 = vpop.permute.xlu0 %4421
      %v4423 = vsel %vm847, %v4420, %v4422
      %v4424 = vsel %vm847, %v4418, %v4420
      %v4425 = vsel %vm847, %v4416, %v4418
      %v4426 = vsel %vm847, %v4414, %v4416
      %v4427 = vsel %vm847, %v4412, %v4414
      %v4428 = vsel %vm847, %v4410, %v4412
      %v4429 = vsel %vm847, %v4408, %v4410
      %v4430 = vsel %vm847, %v4422, %v4408
      %v4431 = vld [vmem:[%s15] sm:$0xff]
      %4433 = vset.pattern.permute.xlu0 0
      %4434 = vperm.xlu0 %4433, %v4431
      %v4435 = vpop.permute.xlu0 %4434
      %v4437 = vmul.f32 %v4430, %v4435
      %v4438 = vmul.f32 %v4429, %v4435
      %v4439 = vmul.f32 %v4428, %v4435
      %v4440 = vmul.f32 %v4427, %v4435
      %v4441 = vmul.f32 %v4426, %v4435
      %v4442 = vmul.f32 %v4425, %v4435
      %v4443 = vmul.f32 %v4424, %v4435
      %v4444 = vmul.f32 %v4423, %v4435
      %4445 = vrot.lane.b32.xlu0 %v4399, 110
      %v4446 = vpop.permute.xlu0 %4445
      %4447 = vrot.lane.b32.xlu0 %v4400, 110
      %v4448 = vpop.permute.xlu0 %4447
      %4449 = vrot.lane.b32.xlu0 %v4401, 110
      %v4450 = vpop.permute.xlu0 %4449
      %4451 = vrot.lane.b32.xlu0 %v4402, 110
      %v4452 = vpop.permute.xlu0 %4451
      %4453 = vrot.lane.b32.xlu0 %v4403, 110
      %v4454 = vpop.permute.xlu0 %4453
      %4455 = vrot.lane.b32.xlu0 %v4404, 110
      %v4456 = vpop.permute.xlu0 %4455
      %4457 = vrot.lane.b32.xlu0 %v4405, 110
      %v4458 = vpop.permute.xlu0 %4457
      %4459 = vrot.lane.b32.xlu0 %v4406, 110
      %v4460 = vpop.permute.xlu0 %4459
      %v4461 = vsel %vm880, %v4458, %v4460
      %v4462 = vsel %vm880, %v4456, %v4458
      %v4463 = vsel %vm880, %v4454, %v4456
      %v4464 = vsel %vm880, %v4452, %v4454
      %v4465 = vsel %vm880, %v4450, %v4452
      %v4466 = vsel %vm880, %v4448, %v4450
      %v4467 = vsel %vm880, %v4446, %v4448
      %v4468 = vsel %vm880, %v4460, %v4446
      %s4469 = scalar_lea.vmem %s15, 8
      %v4470 = vld [vmem:[%s4469] sm:$0xff]
      %4472 = vset.pattern.permute.xlu0 0
      %4473 = vperm.xlu0 %4472, %v4470
      %v4474 = vpop.permute.xlu0 %4473
      %v4476 = vmul.f32 %v4468, %v4474
      %v4477 = vmul.f32 %v4467, %v4474
      %v4478 = vmul.f32 %v4466, %v4474
      %v4479 = vmul.f32 %v4465, %v4474
      %v4480 = vmul.f32 %v4464, %v4474
      %v4481 = vmul.f32 %v4463, %v4474
      %v4482 = vmul.f32 %v4462, %v4474
      %v4483 = vmul.f32 %v4461, %v4474
      %v4484 = vadd.f32 %v4437, %v4476
      %v4485 = vadd.f32 %v4438, %v4477
      %v4486 = vadd.f32 %v4439, %v4478
      %v4487 = vadd.f32 %v4440, %v4479
      %v4488 = vadd.f32 %v4441, %v4480
      %v4489 = vadd.f32 %v4442, %v4481
      %v4490 = vadd.f32 %v4443, %v4482
      %v4491 = vadd.f32 %v4444, %v4483
      %4492 = vrot.lane.b32.xlu0 %v4399, 109
      %v4493 = vpop.permute.xlu0 %4492
      %4494 = vrot.lane.b32.xlu0 %v4400, 109
      %v4495 = vpop.permute.xlu0 %4494
      %4496 = vrot.lane.b32.xlu0 %v4401, 109
      %v4497 = vpop.permute.xlu0 %4496
      %4498 = vrot.lane.b32.xlu0 %v4402, 109
      %v4499 = vpop.permute.xlu0 %4498
      %4500 = vrot.lane.b32.xlu0 %v4403, 109
      %v4501 = vpop.permute.xlu0 %4500
      %4502 = vrot.lane.b32.xlu0 %v4404, 109
      %v4503 = vpop.permute.xlu0 %4502
      %4504 = vrot.lane.b32.xlu0 %v4405, 109
      %v4505 = vpop.permute.xlu0 %4504
      %4506 = vrot.lane.b32.xlu0 %v4406, 109
      %v4507 = vpop.permute.xlu0 %4506
      %v4508 = vsel %vm913, %v4505, %v4507
      %v4509 = vsel %vm913, %v4503, %v4505
      %v4510 = vsel %vm913, %v4501, %v4503
      %v4511 = vsel %vm913, %v4499, %v4501
      %v4512 = vsel %vm913, %v4497, %v4499
      %v4513 = vsel %vm913, %v4495, %v4497
      %v4514 = vsel %vm913, %v4493, %v4495
      %v4515 = vsel %vm913, %v4507, %v4493
      %s4516 = scalar_lea.vmem %s15, 16
      %v4517 = vld [vmem:[%s4516] sm:$0xff]
      %4519 = vset.pattern.permute.xlu0 0
      %4520 = vperm.xlu0 %4519, %v4517
      %v4521 = vpop.permute.xlu0 %4520
      %v4523 = vmul.f32 %v4515, %v4521
      %v4524 = vmul.f32 %v4514, %v4521
      %v4525 = vmul.f32 %v4513, %v4521
      %v4526 = vmul.f32 %v4512, %v4521
      %v4527 = vmul.f32 %v4511, %v4521
      %v4528 = vmul.f32 %v4510, %v4521
      %v4529 = vmul.f32 %v4509, %v4521
      %v4530 = vmul.f32 %v4508, %v4521
      %v4531 = vadd.f32 %v4484, %v4523
      %v4532 = vadd.f32 %v4485, %v4524
      %v4533 = vadd.f32 %v4486, %v4525
      %v4534 = vadd.f32 %v4487, %v4526
      %v4535 = vadd.f32 %v4488, %v4527
      %v4536 = vadd.f32 %v4489, %v4528
      %v4537 = vadd.f32 %v4490, %v4529
      %v4538 = vadd.f32 %v4491, %v4530
      %4539 = vrot.lane.b32.xlu0 %v4399, 101
      %v4540 = vpop.permute.xlu0 %4539
      %4541 = vrot.lane.b32.xlu0 %v4400, 101
      %v4542 = vpop.permute.xlu0 %4541
      %4543 = vrot.lane.b32.xlu0 %v4401, 101
      %v4544 = vpop.permute.xlu0 %4543
      %4545 = vrot.lane.b32.xlu0 %v4402, 101
      %v4546 = vpop.permute.xlu0 %4545
      %4547 = vrot.lane.b32.xlu0 %v4403, 101
      %v4548 = vpop.permute.xlu0 %4547
      %4549 = vrot.lane.b32.xlu0 %v4404, 101
      %v4550 = vpop.permute.xlu0 %4549
      %4551 = vrot.lane.b32.xlu0 %v4405, 101
      %v4552 = vpop.permute.xlu0 %4551
      %4553 = vrot.lane.b32.xlu0 %v4406, 101
      %v4554 = vpop.permute.xlu0 %4553
      %v4555 = vsel %vm946, %v4552, %v4554
      %v4556 = vsel %vm946, %v4550, %v4552
      %v4557 = vsel %vm946, %v4548, %v4550
      %v4558 = vsel %vm946, %v4546, %v4548
      %v4559 = vsel %vm946, %v4544, %v4546
      %v4560 = vsel %vm946, %v4542, %v4544
      %v4561 = vsel %vm946, %v4540, %v4542
      %v4562 = vsel %vm946, %v4554, %v4540
      %s4563 = scalar_lea.vmem %s15, 24
      %v4564 = vld [vmem:[%s4563] sm:$0xff]
      %4566 = vset.pattern.permute.xlu0 0
      %4567 = vperm.xlu0 %4566, %v4564
      %v4568 = vpop.permute.xlu0 %4567
      %v4570 = vmul.f32 %v4562, %v4568
      %v4571 = vmul.f32 %v4561, %v4568
      %v4572 = vmul.f32 %v4560, %v4568
      %v4573 = vmul.f32 %v4559, %v4568
      %v4574 = vmul.f32 %v4558, %v4568
      %v4575 = vmul.f32 %v4557, %v4568
      %v4576 = vmul.f32 %v4556, %v4568
      %v4577 = vmul.f32 %v4555, %v4568
      %v4578 = vadd.f32 %v4531, %v4570
      %v4579 = vadd.f32 %v4532, %v4571
      %v4580 = vadd.f32 %v4533, %v4572
      %v4581 = vadd.f32 %v4534, %v4573
      %v4582 = vadd.f32 %v4535, %v4574
      %v4583 = vadd.f32 %v4536, %v4575
      %v4584 = vadd.f32 %v4537, %v4576
      %v4585 = vadd.f32 %v4538, %v4577
      %4586 = vrot.lane.b32.xlu0 %v4399, 100
      %v4587 = vpop.permute.xlu0 %4586
      %4588 = vrot.lane.b32.xlu0 %v4400, 100
      %v4589 = vpop.permute.xlu0 %4588
      %4590 = vrot.lane.b32.xlu0 %v4401, 100
      %v4591 = vpop.permute.xlu0 %4590
      %4592 = vrot.lane.b32.xlu0 %v4402, 100
      %v4593 = vpop.permute.xlu0 %4592
      %4594 = vrot.lane.b32.xlu0 %v4403, 100
      %v4595 = vpop.permute.xlu0 %4594
      %4596 = vrot.lane.b32.xlu0 %v4404, 100
      %v4597 = vpop.permute.xlu0 %4596
      %4598 = vrot.lane.b32.xlu0 %v4405, 100
      %v4599 = vpop.permute.xlu0 %4598
      %4600 = vrot.lane.b32.xlu0 %v4406, 100
      %v4601 = vpop.permute.xlu0 %4600
      %v4602 = vsel %vm979, %v4599, %v4601
      %v4603 = vsel %vm979, %v4597, %v4599
      %v4604 = vsel %vm979, %v4595, %v4597
      %v4605 = vsel %vm979, %v4593, %v4595
      %v4606 = vsel %vm979, %v4591, %v4593
      %v4607 = vsel %vm979, %v4589, %v4591
      %v4608 = vsel %vm979, %v4587, %v4589
      %v4609 = vsel %vm979, %v4601, %v4587
      %s4610 = scalar_lea.vmem %s15, 32
      %v4611 = vld [vmem:[%s4610] sm:$0xff]
      %4613 = vset.pattern.permute.xlu0 0
      %4614 = vperm.xlu0 %4613, %v4611
      %v4615 = vpop.permute.xlu0 %4614
      %v4617 = vmul.f32 %v4609, %v4615
      %v4618 = vmul.f32 %v4608, %v4615
      %v4619 = vmul.f32 %v4607, %v4615
      %v4620 = vmul.f32 %v4606, %v4615
      %v4621 = vmul.f32 %v4605, %v4615
      %v4622 = vmul.f32 %v4604, %v4615
      %v4623 = vmul.f32 %v4603, %v4615
      %v4624 = vmul.f32 %v4602, %v4615
      %v4625 = vadd.f32 %v4578, %v4617
      %v4626 = vadd.f32 %v4579, %v4618
      %v4627 = vadd.f32 %v4580, %v4619
      %v4628 = vadd.f32 %v4581, %v4620
      %v4629 = vadd.f32 %v4582, %v4621
      %v4630 = vadd.f32 %v4583, %v4622
      %v4631 = vadd.f32 %v4584, %v4623
      %v4632 = vadd.f32 %v4585, %v4624
      %4633 = vrot.lane.b32.xlu0 %v4399, 99
      %v4634 = vpop.permute.xlu0 %4633
      %4635 = vrot.lane.b32.xlu0 %v4400, 99
      %v4636 = vpop.permute.xlu0 %4635
      %4637 = vrot.lane.b32.xlu0 %v4401, 99
      %v4638 = vpop.permute.xlu0 %4637
      %4639 = vrot.lane.b32.xlu0 %v4402, 99
      %v4640 = vpop.permute.xlu0 %4639
      %4641 = vrot.lane.b32.xlu0 %v4403, 99
      %v4642 = vpop.permute.xlu0 %4641
      %4643 = vrot.lane.b32.xlu0 %v4404, 99
      %v4644 = vpop.permute.xlu0 %4643
      %4645 = vrot.lane.b32.xlu0 %v4405, 99
      %v4646 = vpop.permute.xlu0 %4645
      %4647 = vrot.lane.b32.xlu0 %v4406, 99
      %v4648 = vpop.permute.xlu0 %4647
      %v4649 = vsel %vm1012, %v4646, %v4648
      %v4650 = vsel %vm1012, %v4644, %v4646
      %v4651 = vsel %vm1012, %v4642, %v4644
      %v4652 = vsel %vm1012, %v4640, %v4642
      %v4653 = vsel %vm1012, %v4638, %v4640
      %v4654 = vsel %vm1012, %v4636, %v4638
      %v4655 = vsel %vm1012, %v4634, %v4636
      %v4656 = vsel %vm1012, %v4648, %v4634
      %s4657 = scalar_lea.vmem %s15, 40
      %v4658 = vld [vmem:[%s4657] sm:$0xff]
      %4660 = vset.pattern.permute.xlu0 0
      %4661 = vperm.xlu0 %4660, %v4658
      %v4662 = vpop.permute.xlu0 %4661
      %v4664 = vmul.f32 %v4656, %v4662
      %v4665 = vmul.f32 %v4655, %v4662
      %v4666 = vmul.f32 %v4654, %v4662
      %v4667 = vmul.f32 %v4653, %v4662
      %v4668 = vmul.f32 %v4652, %v4662
      %v4669 = vmul.f32 %v4651, %v4662
      %v4670 = vmul.f32 %v4650, %v4662
      %v4671 = vmul.f32 %v4649, %v4662
      %v4672 = vadd.f32 %v4625, %v4664
      %v4673 = vadd.f32 %v4626, %v4665
      %v4674 = vadd.f32 %v4627, %v4666
      %v4675 = vadd.f32 %v4628, %v4667
      %v4676 = vadd.f32 %v4629, %v4668
      %v4677 = vadd.f32 %v4630, %v4669
      %v4678 = vadd.f32 %v4631, %v4670
      %v4679 = vadd.f32 %v4632, %v4671
      %4680 = vrot.lane.b32.xlu0 %v4399, 91
      %v4681 = vpop.permute.xlu0 %4680
      %4682 = vrot.lane.b32.xlu0 %v4400, 91
      %v4683 = vpop.permute.xlu0 %4682
      %4684 = vrot.lane.b32.xlu0 %v4401, 91
      %v4685 = vpop.permute.xlu0 %4684
      %4686 = vrot.lane.b32.xlu0 %v4402, 91
      %v4687 = vpop.permute.xlu0 %4686
      %4688 = vrot.lane.b32.xlu0 %v4403, 91
      %v4689 = vpop.permute.xlu0 %4688
      %4690 = vrot.lane.b32.xlu0 %v4404, 91
      %v4691 = vpop.permute.xlu0 %4690
      %4692 = vrot.lane.b32.xlu0 %v4405, 91
      %v4693 = vpop.permute.xlu0 %4692
      %4694 = vrot.lane.b32.xlu0 %v4406, 91
      %v4695 = vpop.permute.xlu0 %4694
      %v4696 = vsel %vm1045, %v4693, %v4695
      %v4697 = vsel %vm1045, %v4691, %v4693
      %v4698 = vsel %vm1045, %v4689, %v4691
      %v4699 = vsel %vm1045, %v4687, %v4689
      %v4700 = vsel %vm1045, %v4685, %v4687
      %v4701 = vsel %vm1045, %v4683, %v4685
      %v4702 = vsel %vm1045, %v4681, %v4683
      %v4703 = vsel %vm1045, %v4695, %v4681
      %s4704 = scalar_lea.vmem %s15, 48
      %v4705 = vld [vmem:[%s4704] sm:$0xff]
      %4707 = vset.pattern.permute.xlu0 0
      %4708 = vperm.xlu0 %4707, %v4705
      %v4709 = vpop.permute.xlu0 %4708
      %v4711 = vmul.f32 %v4703, %v4709
      %v4712 = vmul.f32 %v4702, %v4709
      %v4713 = vmul.f32 %v4701, %v4709
      %v4714 = vmul.f32 %v4700, %v4709
      %v4715 = vmul.f32 %v4699, %v4709
      %v4716 = vmul.f32 %v4698, %v4709
      %v4717 = vmul.f32 %v4697, %v4709
      %v4718 = vmul.f32 %v4696, %v4709
      %v4719 = vadd.f32 %v4672, %v4711
      %v4720 = vadd.f32 %v4673, %v4712
      %v4721 = vadd.f32 %v4674, %v4713
      %v4722 = vadd.f32 %v4675, %v4714
      %v4723 = vadd.f32 %v4676, %v4715
      %v4724 = vadd.f32 %v4677, %v4716
      %v4725 = vadd.f32 %v4678, %v4717
      %v4726 = vadd.f32 %v4679, %v4718
      %4727 = vrot.lane.b32.xlu0 %v4399, 90
      %v4728 = vpop.permute.xlu0 %4727
      %4729 = vrot.lane.b32.xlu0 %v4400, 90
      %v4730 = vpop.permute.xlu0 %4729
      %4731 = vrot.lane.b32.xlu0 %v4401, 90
      %v4732 = vpop.permute.xlu0 %4731
      %4733 = vrot.lane.b32.xlu0 %v4402, 90
      %v4734 = vpop.permute.xlu0 %4733
      %4735 = vrot.lane.b32.xlu0 %v4403, 90
      %v4736 = vpop.permute.xlu0 %4735
      %4737 = vrot.lane.b32.xlu0 %v4404, 90
      %v4738 = vpop.permute.xlu0 %4737
      %4739 = vrot.lane.b32.xlu0 %v4405, 90
      %v4740 = vpop.permute.xlu0 %4739
      %4741 = vrot.lane.b32.xlu0 %v4406, 90
      %v4742 = vpop.permute.xlu0 %4741
      %v4743 = vsel %vm1078, %v4740, %v4742
      %v4744 = vsel %vm1078, %v4738, %v4740
      %v4745 = vsel %vm1078, %v4736, %v4738
      %v4746 = vsel %vm1078, %v4734, %v4736
      %v4747 = vsel %vm1078, %v4732, %v4734
      %v4748 = vsel %vm1078, %v4730, %v4732
      %v4749 = vsel %vm1078, %v4728, %v4730
      %v4750 = vsel %vm1078, %v4742, %v4728
      %s4751 = scalar_lea.vmem %s15, 56
      %v4752 = vld [vmem:[%s4751] sm:$0xff]
      %4754 = vset.pattern.permute.xlu0 0
      %4755 = vperm.xlu0 %4754, %v4752
      %v4756 = vpop.permute.xlu0 %4755
      %v4758 = vmul.f32 %v4750, %v4756
      %v4759 = vmul.f32 %v4749, %v4756
      %v4760 = vmul.f32 %v4748, %v4756
      %v4761 = vmul.f32 %v4747, %v4756
      %v4762 = vmul.f32 %v4746, %v4756
      %v4763 = vmul.f32 %v4745, %v4756
      %v4764 = vmul.f32 %v4744, %v4756
      %v4765 = vmul.f32 %v4743, %v4756
      %v4766 = vadd.f32 %v4719, %v4758
      %v4767 = vadd.f32 %v4720, %v4759
      %v4768 = vadd.f32 %v4721, %v4760
      %v4769 = vadd.f32 %v4722, %v4761
      %v4770 = vadd.f32 %v4723, %v4762
      %v4771 = vadd.f32 %v4724, %v4763
      %v4772 = vadd.f32 %v4725, %v4764
      %v4773 = vadd.f32 %v4726, %v4765
      %4774 = vrot.lane.b32.xlu0 %v4399, 89
      %v4775 = vpop.permute.xlu0 %4774
      %4776 = vrot.lane.b32.xlu0 %v4400, 89
      %v4777 = vpop.permute.xlu0 %4776
      %4778 = vrot.lane.b32.xlu0 %v4401, 89
      %v4779 = vpop.permute.xlu0 %4778
      %4780 = vrot.lane.b32.xlu0 %v4402, 89
      %v4781 = vpop.permute.xlu0 %4780
      %4782 = vrot.lane.b32.xlu0 %v4403, 89
      %v4783 = vpop.permute.xlu0 %4782
      %4784 = vrot.lane.b32.xlu0 %v4404, 89
      %v4785 = vpop.permute.xlu0 %4784
      %4786 = vrot.lane.b32.xlu0 %v4405, 89
      %v4787 = vpop.permute.xlu0 %4786
      %4788 = vrot.lane.b32.xlu0 %v4406, 89
      %v4789 = vpop.permute.xlu0 %4788
      %v4790 = vsel %vm1111, %v4787, %v4789
      %v4791 = vsel %vm1111, %v4785, %v4787
      %v4792 = vsel %vm1111, %v4783, %v4785
      %v4793 = vsel %vm1111, %v4781, %v4783
      %v4794 = vsel %vm1111, %v4779, %v4781
      %v4795 = vsel %vm1111, %v4777, %v4779
      %v4796 = vsel %vm1111, %v4775, %v4777
      %v4797 = vsel %vm1111, %v4789, %v4775
      %s4798 = scalar_lea.vmem %s15, 64
      %v4799 = vld [vmem:[%s4798] sm:$0xff]
      %4801 = vset.pattern.permute.xlu0 0
      %4802 = vperm.xlu0 %4801, %v4799
      %v4803 = vpop.permute.xlu0 %4802
      %v4805 = vmul.f32 %v4797, %v4803
      %v4806 = vmul.f32 %v4796, %v4803
      %v4807 = vmul.f32 %v4795, %v4803
      %v4808 = vmul.f32 %v4794, %v4803
      %v4809 = vmul.f32 %v4793, %v4803
      %v4810 = vmul.f32 %v4792, %v4803
      %v4811 = vmul.f32 %v4791, %v4803
      %v4812 = vmul.f32 %v4790, %v4803
      %v4813 = vadd.f32 %v4766, %v4805
      %v4814 = vadd.f32 %v4767, %v4806
      %v4815 = vadd.f32 %v4768, %v4807
      %v4816 = vadd.f32 %v4769, %v4808
      %v4817 = vadd.f32 %v4770, %v4809
      %v4818 = vadd.f32 %v4771, %v4810
      %v4819 = vadd.f32 %v4772, %v4811
      %v4820 = vadd.f32 %v4773, %v4812
      %4821 = vrot.lane.b32.xlu0 %v4399, 11
      %v4822 = vpop.permute.xlu0 %4821
      %4823 = vrot.lane.b32.xlu0 %v4400, 11
      %v4824 = vpop.permute.xlu0 %4823
      %4825 = vrot.lane.b32.xlu0 %v4401, 11
      %v4826 = vpop.permute.xlu0 %4825
      %4827 = vrot.lane.b32.xlu0 %v4402, 11
      %v4828 = vpop.permute.xlu0 %4827
      %4829 = vrot.lane.b32.xlu0 %v4403, 11
      %v4830 = vpop.permute.xlu0 %4829
      %4831 = vrot.lane.b32.xlu0 %v4404, 11
      %v4832 = vpop.permute.xlu0 %4831
      %4833 = vrot.lane.b32.xlu0 %v4405, 11
      %v4834 = vpop.permute.xlu0 %4833
      %4835 = vrot.lane.b32.xlu0 %v4406, 11
      %v4836 = vpop.permute.xlu0 %4835
      %v4837 = vsel %vm1144, %v4834, %v4836
      %v4838 = vsel %vm1144, %v4832, %v4834
      %v4839 = vsel %vm1144, %v4830, %v4832
      %v4840 = vsel %vm1144, %v4828, %v4830
      %v4841 = vsel %vm1144, %v4826, %v4828
      %v4842 = vsel %vm1144, %v4824, %v4826
      %v4843 = vsel %vm1144, %v4822, %v4824
      %v4844 = vsel %vm1144, %v4836, %v4822
      %s4845 = scalar_lea.vmem %s15, 72
      %v4846 = vld [vmem:[%s4845] sm:$0xff]
      %4848 = vset.pattern.permute.xlu0 0
      %4849 = vperm.xlu0 %4848, %v4846
      %v4850 = vpop.permute.xlu0 %4849
      %v4852 = vmul.f32 %v4844, %v4850
      %v4853 = vmul.f32 %v4843, %v4850
      %v4854 = vmul.f32 %v4842, %v4850
      %v4855 = vmul.f32 %v4841, %v4850
      %v4856 = vmul.f32 %v4840, %v4850
      %v4857 = vmul.f32 %v4839, %v4850
      %v4858 = vmul.f32 %v4838, %v4850
      %v4859 = vmul.f32 %v4837, %v4850
      %v4860 = vadd.f32 %v4813, %v4852
      %v4861 = vadd.f32 %v4814, %v4853
      %v4862 = vadd.f32 %v4815, %v4854
      %v4863 = vadd.f32 %v4816, %v4855
      %v4864 = vadd.f32 %v4817, %v4856
      %v4865 = vadd.f32 %v4818, %v4857
      %v4866 = vadd.f32 %v4819, %v4858
      %v4867 = vadd.f32 %v4820, %v4859
      %4868 = vrot.lane.b32.xlu0 %v4399, 10
      %v4869 = vpop.permute.xlu0 %4868
      %4870 = vrot.lane.b32.xlu0 %v4400, 10
      %v4871 = vpop.permute.xlu0 %4870
      %4872 = vrot.lane.b32.xlu0 %v4401, 10
      %v4873 = vpop.permute.xlu0 %4872
      %4874 = vrot.lane.b32.xlu0 %v4402, 10
      %v4875 = vpop.permute.xlu0 %4874
      %4876 = vrot.lane.b32.xlu0 %v4403, 10
      %v4877 = vpop.permute.xlu0 %4876
      %4878 = vrot.lane.b32.xlu0 %v4404, 10
      %v4879 = vpop.permute.xlu0 %4878
      %4880 = vrot.lane.b32.xlu0 %v4405, 10
      %v4881 = vpop.permute.xlu0 %4880
      %4882 = vrot.lane.b32.xlu0 %v4406, 10
      %v4883 = vpop.permute.xlu0 %4882
      %v4884 = vsel %vm1177, %v4881, %v4883
      %v4885 = vsel %vm1177, %v4879, %v4881
      %v4886 = vsel %vm1177, %v4877, %v4879
      %v4887 = vsel %vm1177, %v4875, %v4877
      %v4888 = vsel %vm1177, %v4873, %v4875
      %v4889 = vsel %vm1177, %v4871, %v4873
      %v4890 = vsel %vm1177, %v4869, %v4871
      %v4891 = vsel %vm1177, %v4883, %v4869
      %s4892 = scalar_lea.vmem %s15, 80
      %v4893 = vld [vmem:[%s4892] sm:$0xff]
      %4895 = vset.pattern.permute.xlu0 0
      %4896 = vperm.xlu0 %4895, %v4893
      %v4897 = vpop.permute.xlu0 %4896
      %v4899 = vmul.f32 %v4891, %v4897
      %v4900 = vmul.f32 %v4890, %v4897
      %v4901 = vmul.f32 %v4889, %v4897
      %v4902 = vmul.f32 %v4888, %v4897
      %v4903 = vmul.f32 %v4887, %v4897
      %v4904 = vmul.f32 %v4886, %v4897
      %v4905 = vmul.f32 %v4885, %v4897
      %v4906 = vmul.f32 %v4884, %v4897
      %v4907 = vadd.f32 %v4860, %v4899
      %v4908 = vadd.f32 %v4861, %v4900
      %v4909 = vadd.f32 %v4862, %v4901
      %v4910 = vadd.f32 %v4863, %v4902
      %v4911 = vadd.f32 %v4864, %v4903
      %v4912 = vadd.f32 %v4865, %v4904
      %v4913 = vadd.f32 %v4866, %v4905
      %v4914 = vadd.f32 %v4867, %v4906
      %4915 = vrot.lane.b32.xlu0 %v4399, 9
      %v4916 = vpop.permute.xlu0 %4915
      %4917 = vrot.lane.b32.xlu0 %v4400, 9
      %v4918 = vpop.permute.xlu0 %4917
      %4919 = vrot.lane.b32.xlu0 %v4401, 9
      %v4920 = vpop.permute.xlu0 %4919
      %4921 = vrot.lane.b32.xlu0 %v4402, 9
      %v4922 = vpop.permute.xlu0 %4921
      %4923 = vrot.lane.b32.xlu0 %v4403, 9
      %v4924 = vpop.permute.xlu0 %4923
      %4925 = vrot.lane.b32.xlu0 %v4404, 9
      %v4926 = vpop.permute.xlu0 %4925
      %4927 = vrot.lane.b32.xlu0 %v4405, 9
      %v4928 = vpop.permute.xlu0 %4927
      %4929 = vrot.lane.b32.xlu0 %v4406, 9
      %v4930 = vpop.permute.xlu0 %4929
      %v4931 = vsel %vm1210, %v4928, %v4930
      %v4932 = vsel %vm1210, %v4926, %v4928
      %v4933 = vsel %vm1210, %v4924, %v4926
      %v4934 = vsel %vm1210, %v4922, %v4924
      %v4935 = vsel %vm1210, %v4920, %v4922
      %v4936 = vsel %vm1210, %v4918, %v4920
      %v4937 = vsel %vm1210, %v4916, %v4918
      %v4938 = vsel %vm1210, %v4930, %v4916
      %s4939 = scalar_lea.vmem %s15, 88
      %v4940 = vld [vmem:[%s4939] sm:$0xff]
      %4942 = vset.pattern.permute.xlu0 0
      %4943 = vperm.xlu0 %4942, %v4940
      %v4944 = vpop.permute.xlu0 %4943
      %v4946 = vmul.f32 %v4938, %v4944
      %v4947 = vmul.f32 %v4937, %v4944
      %v4948 = vmul.f32 %v4936, %v4944
      %v4949 = vmul.f32 %v4935, %v4944
      %v4950 = vmul.f32 %v4934, %v4944
      %v4951 = vmul.f32 %v4933, %v4944
      %v4952 = vmul.f32 %v4932, %v4944
      %v4953 = vmul.f32 %v4931, %v4944
      %v4954 = vadd.f32 %v4907, %v4946
      %v4955 = vadd.f32 %v4908, %v4947
      %v4956 = vadd.f32 %v4909, %v4948
      %v4957 = vadd.f32 %v4910, %v4949
      %v4958 = vadd.f32 %v4911, %v4950
      %v4959 = vadd.f32 %v4912, %v4951
      %v4960 = vadd.f32 %v4913, %v4952
      %v4961 = vadd.f32 %v4914, %v4953
      %4962 = vrot.lane.b32.xlu0 %v4399, 1
      %v4963 = vpop.permute.xlu0 %4962
      %4964 = vrot.lane.b32.xlu0 %v4400, 1
      %v4965 = vpop.permute.xlu0 %4964
      %4966 = vrot.lane.b32.xlu0 %v4401, 1
      %v4967 = vpop.permute.xlu0 %4966
      %4968 = vrot.lane.b32.xlu0 %v4402, 1
      %v4969 = vpop.permute.xlu0 %4968
      %4970 = vrot.lane.b32.xlu0 %v4403, 1
      %v4971 = vpop.permute.xlu0 %4970
      %4972 = vrot.lane.b32.xlu0 %v4404, 1
      %v4973 = vpop.permute.xlu0 %4972
      %4974 = vrot.lane.b32.xlu0 %v4405, 1
      %v4975 = vpop.permute.xlu0 %4974
      %4976 = vrot.lane.b32.xlu0 %v4406, 1
      %v4977 = vpop.permute.xlu0 %4976
      %v4978 = vsel %vm1243, %v4975, %v4977
      %v4979 = vsel %vm1243, %v4973, %v4975
      %v4980 = vsel %vm1243, %v4971, %v4973
      %v4981 = vsel %vm1243, %v4969, %v4971
      %v4982 = vsel %vm1243, %v4967, %v4969
      %v4983 = vsel %vm1243, %v4965, %v4967
      %v4984 = vsel %vm1243, %v4963, %v4965
      %v4985 = vsel %vm1243, %v4977, %v4963
      %s4986 = scalar_lea.vmem %s15, 96
      %v4987 = vld [vmem:[%s4986] sm:$0xff]
      %4989 = vset.pattern.permute.xlu0 0
      %4990 = vperm.xlu0 %4989, %v4987
      %v4991 = vpop.permute.xlu0 %4990
      %v4993 = vmul.f32 %v4985, %v4991
      %v4994 = vmul.f32 %v4984, %v4991
      %v4995 = vmul.f32 %v4983, %v4991
      %v4996 = vmul.f32 %v4982, %v4991
      %v4997 = vmul.f32 %v4981, %v4991
      %v4998 = vmul.f32 %v4980, %v4991
      %v4999 = vmul.f32 %v4979, %v4991
      %v5000 = vmul.f32 %v4978, %v4991
      %v5001 = vadd.f32 %v4954, %v4993
      %v5002 = vadd.f32 %v4955, %v4994
      %v5003 = vadd.f32 %v4956, %v4995
      %v5004 = vadd.f32 %v4957, %v4996
      %v5005 = vadd.f32 %v4958, %v4997
      %v5006 = vadd.f32 %v4959, %v4998
      %v5007 = vadd.f32 %v4960, %v4999
      %v5008 = vadd.f32 %v4961, %v5000
      %s5009 = scalar_lea.vmem %s15, 104
      %v5010 = vld [vmem:[%s5009] sm:$0xff]
      %5012 = vset.pattern.permute.xlu0 0
      %5013 = vperm.xlu0 %5012, %v5010
      %v5014 = vpop.permute.xlu0 %5013
      %v5016 = vmul.f32 %v4399, %v5014
      %v5017 = vmul.f32 %v4400, %v5014
      %v5018 = vmul.f32 %v4401, %v5014
      %v5019 = vmul.f32 %v4402, %v5014
      %v5020 = vmul.f32 %v4403, %v5014
      %v5021 = vmul.f32 %v4404, %v5014
      %v5022 = vmul.f32 %v4405, %v5014
      %v5023 = vmul.f32 %v4406, %v5014
      %v5024 = vadd.f32 %v5001, %v5016
      %v5025 = vadd.f32 %v5002, %v5017
      %v5026 = vadd.f32 %v5003, %v5018
      %v5027 = vadd.f32 %v5004, %v5019
      %v5028 = vadd.f32 %v5005, %v5020
      %v5029 = vadd.f32 %v5006, %v5021
      %v5030 = vadd.f32 %v5007, %v5022
      %v5031 = vadd.f32 %v5008, %v5023
      %5032 = vrot.lane.b32.xlu0 %v4399, 127
      %v5033 = vpop.permute.xlu0 %5032
      %5034 = vrot.lane.b32.xlu0 %v4400, 127
      %v5035 = vpop.permute.xlu0 %5034
      %5036 = vrot.lane.b32.xlu0 %v4401, 127
      %v5037 = vpop.permute.xlu0 %5036
      %5038 = vrot.lane.b32.xlu0 %v4402, 127
      %v5039 = vpop.permute.xlu0 %5038
      %5040 = vrot.lane.b32.xlu0 %v4403, 127
      %v5041 = vpop.permute.xlu0 %5040
      %5042 = vrot.lane.b32.xlu0 %v4404, 127
      %v5043 = vpop.permute.xlu0 %5042
      %5044 = vrot.lane.b32.xlu0 %v4405, 127
      %v5045 = vpop.permute.xlu0 %5044
      %5046 = vrot.lane.b32.xlu0 %v4406, 127
      %v5047 = vpop.permute.xlu0 %5046
      %v5048 = vsel %vm1284, %v5045, %v5047
      %v5049 = vsel %vm1284, %v5043, %v5045
      %v5050 = vsel %vm1284, %v5041, %v5043
      %v5051 = vsel %vm1284, %v5039, %v5041
      %v5052 = vsel %vm1284, %v5037, %v5039
      %v5053 = vsel %vm1284, %v5035, %v5037
      %v5054 = vsel %vm1284, %v5033, %v5035
      %v5055 = vsel %vm1284, %v5047, %v5033
      %s5056 = scalar_lea.vmem %s15, 112
      %v5057 = vld [vmem:[%s5056] sm:$0xff]
      %5059 = vset.pattern.permute.xlu0 0
      %5060 = vperm.xlu0 %5059, %v5057
      %v5061 = vpop.permute.xlu0 %5060
      %v5063 = vmul.f32 %v5054, %v5061
      %v5064 = vmul.f32 %v5053, %v5061
      %v5065 = vmul.f32 %v5052, %v5061
      %v5066 = vmul.f32 %v5051, %v5061
      %v5067 = vmul.f32 %v5050, %v5061
      %v5068 = vmul.f32 %v5049, %v5061
      %v5069 = vmul.f32 %v5048, %v5061
      %v5070 = vmul.f32 %v5055, %v5061
      %v5071 = vadd.f32 %v5024, %v5063
      %v5072 = vadd.f32 %v5025, %v5064
      %v5073 = vadd.f32 %v5026, %v5065
      %v5074 = vadd.f32 %v5027, %v5066
      %v5075 = vadd.f32 %v5028, %v5067
      %v5076 = vadd.f32 %v5029, %v5068
      %v5077 = vadd.f32 %v5030, %v5069
      %v5078 = vadd.f32 %v5031, %v5070
      %5079 = vrot.lane.b32.xlu0 %v4399, 119
      %v5080 = vpop.permute.xlu0 %5079
      %5081 = vrot.lane.b32.xlu0 %v4400, 119
      %v5082 = vpop.permute.xlu0 %5081
      %5083 = vrot.lane.b32.xlu0 %v4401, 119
      %v5084 = vpop.permute.xlu0 %5083
      %5085 = vrot.lane.b32.xlu0 %v4402, 119
      %v5086 = vpop.permute.xlu0 %5085
      %5087 = vrot.lane.b32.xlu0 %v4403, 119
      %v5088 = vpop.permute.xlu0 %5087
      %5089 = vrot.lane.b32.xlu0 %v4404, 119
      %v5090 = vpop.permute.xlu0 %5089
      %5091 = vrot.lane.b32.xlu0 %v4405, 119
      %v5092 = vpop.permute.xlu0 %5091
      %5093 = vrot.lane.b32.xlu0 %v4406, 119
      %v5094 = vpop.permute.xlu0 %5093
      %v5095 = vsel %vm1317, %v5092, %v5094
      %v5096 = vsel %vm1317, %v5090, %v5092
      %v5097 = vsel %vm1317, %v5088, %v5090
      %v5098 = vsel %vm1317, %v5086, %v5088
      %v5099 = vsel %vm1317, %v5084, %v5086
      %v5100 = vsel %vm1317, %v5082, %v5084
      %v5101 = vsel %vm1317, %v5080, %v5082
      %v5102 = vsel %vm1317, %v5094, %v5080
      %s5103 = scalar_lea.vmem %s15, 120
      %v5104 = vld [vmem:[%s5103] sm:$0xff]
      %5106 = vset.pattern.permute.xlu0 0
      %5107 = vperm.xlu0 %5106, %v5104
      %v5108 = vpop.permute.xlu0 %5107
      %v5110 = vmul.f32 %v5101, %v5108
      %v5111 = vmul.f32 %v5100, %v5108
      %v5112 = vmul.f32 %v5099, %v5108
      %v5113 = vmul.f32 %v5098, %v5108
      %v5114 = vmul.f32 %v5097, %v5108
      %v5115 = vmul.f32 %v5096, %v5108
      %v5116 = vmul.f32 %v5095, %v5108
      %v5117 = vmul.f32 %v5102, %v5108
      %v5118 = vadd.f32 %v5071, %v5110
      %v5119 = vadd.f32 %v5072, %v5111
      %v5120 = vadd.f32 %v5073, %v5112
      %v5121 = vadd.f32 %v5074, %v5113
      %v5122 = vadd.f32 %v5075, %v5114
      %v5123 = vadd.f32 %v5076, %v5115
      %v5124 = vadd.f32 %v5077, %v5116
      %v5125 = vadd.f32 %v5078, %v5117
      %5126 = vrot.lane.b32.xlu0 %v4399, 118
      %v5127 = vpop.permute.xlu0 %5126
      %5128 = vrot.lane.b32.xlu0 %v4400, 118
      %v5129 = vpop.permute.xlu0 %5128
      %5130 = vrot.lane.b32.xlu0 %v4401, 118
      %v5131 = vpop.permute.xlu0 %5130
      %5132 = vrot.lane.b32.xlu0 %v4402, 118
      %v5133 = vpop.permute.xlu0 %5132
      %5134 = vrot.lane.b32.xlu0 %v4403, 118
      %v5135 = vpop.permute.xlu0 %5134
      %5136 = vrot.lane.b32.xlu0 %v4404, 118
      %v5137 = vpop.permute.xlu0 %5136
      %5138 = vrot.lane.b32.xlu0 %v4405, 118
      %v5139 = vpop.permute.xlu0 %5138
      %5140 = vrot.lane.b32.xlu0 %v4406, 118
      %v5141 = vpop.permute.xlu0 %5140
      %v5142 = vsel %vm1350, %v5139, %v5141
      %v5143 = vsel %vm1350, %v5137, %v5139
      %v5144 = vsel %vm1350, %v5135, %v5137
      %v5145 = vsel %vm1350, %v5133, %v5135
      %v5146 = vsel %vm1350, %v5131, %v5133
      %v5147 = vsel %vm1350, %v5129, %v5131
      %v5148 = vsel %vm1350, %v5127, %v5129
      %v5149 = vsel %vm1350, %v5141, %v5127
      %s5150 = scalar_lea.vmem %s15, 128
      %v5151 = vld [vmem:[%s5150] sm:$0xff]
      %5153 = vset.pattern.permute.xlu0 0
      %5154 = vperm.xlu0 %5153, %v5151
      %v5155 = vpop.permute.xlu0 %5154
      %v5157 = vmul.f32 %v5148, %v5155
      %v5158 = vmul.f32 %v5147, %v5155
      %v5159 = vmul.f32 %v5146, %v5155
      %v5160 = vmul.f32 %v5145, %v5155
      %v5161 = vmul.f32 %v5144, %v5155
      %v5162 = vmul.f32 %v5143, %v5155
      %v5163 = vmul.f32 %v5142, %v5155
      %v5164 = vmul.f32 %v5149, %v5155
      %v5165 = vadd.f32 %v5118, %v5157
      %v5166 = vadd.f32 %v5119, %v5158
      %v5167 = vadd.f32 %v5120, %v5159
      %v5168 = vadd.f32 %v5121, %v5160
      %v5169 = vadd.f32 %v5122, %v5161
      %v5170 = vadd.f32 %v5123, %v5162
      %v5171 = vadd.f32 %v5124, %v5163
      %v5172 = vadd.f32 %v5125, %v5164
      %5173 = vrot.lane.b32.xlu0 %v4399, 117
      %v5174 = vpop.permute.xlu0 %5173
      %5175 = vrot.lane.b32.xlu0 %v4400, 117
      %v5176 = vpop.permute.xlu0 %5175
      %5177 = vrot.lane.b32.xlu0 %v4401, 117
      %v5178 = vpop.permute.xlu0 %5177
      %5179 = vrot.lane.b32.xlu0 %v4402, 117
      %v5180 = vpop.permute.xlu0 %5179
      %5181 = vrot.lane.b32.xlu0 %v4403, 117
      %v5182 = vpop.permute.xlu0 %5181
      %5183 = vrot.lane.b32.xlu0 %v4404, 117
      %v5184 = vpop.permute.xlu0 %5183
      %5185 = vrot.lane.b32.xlu0 %v4405, 117
      %v5186 = vpop.permute.xlu0 %5185
      %5187 = vrot.lane.b32.xlu0 %v4406, 117
      %v5188 = vpop.permute.xlu0 %5187
      %v5189 = vsel %vm1383, %v5186, %v5188
      %v5190 = vsel %vm1383, %v5184, %v5186
      %v5191 = vsel %vm1383, %v5182, %v5184
      %v5192 = vsel %vm1383, %v5180, %v5182
      %v5193 = vsel %vm1383, %v5178, %v5180
      %v5194 = vsel %vm1383, %v5176, %v5178
      %v5195 = vsel %vm1383, %v5174, %v5176
      %v5196 = vsel %vm1383, %v5188, %v5174
      %s5197 = scalar_lea.vmem %s15, 136
      %v5198 = vld [vmem:[%s5197] sm:$0xff]
      %5200 = vset.pattern.permute.xlu0 0
      %5201 = vperm.xlu0 %5200, %v5198
      %v5202 = vpop.permute.xlu0 %5201
      %v5204 = vmul.f32 %v5195, %v5202
      %v5205 = vmul.f32 %v5194, %v5202
      %v5206 = vmul.f32 %v5193, %v5202
      %v5207 = vmul.f32 %v5192, %v5202
      %v5208 = vmul.f32 %v5191, %v5202
      %v5209 = vmul.f32 %v5190, %v5202
      %v5210 = vmul.f32 %v5189, %v5202
      %v5211 = vmul.f32 %v5196, %v5202
      %v5212 = vadd.f32 %v5165, %v5204
      %v5213 = vadd.f32 %v5166, %v5205
      %v5214 = vadd.f32 %v5167, %v5206
      %v5215 = vadd.f32 %v5168, %v5207
      %v5216 = vadd.f32 %v5169, %v5208
      %v5217 = vadd.f32 %v5170, %v5209
      %v5218 = vadd.f32 %v5171, %v5210
      %v5219 = vadd.f32 %v5172, %v5211
      %5220 = vrot.lane.b32.xlu0 %v4399, 39
      %v5221 = vpop.permute.xlu0 %5220
      %5222 = vrot.lane.b32.xlu0 %v4400, 39
      %v5223 = vpop.permute.xlu0 %5222
      %5224 = vrot.lane.b32.xlu0 %v4401, 39
      %v5225 = vpop.permute.xlu0 %5224
      %5226 = vrot.lane.b32.xlu0 %v4402, 39
      %v5227 = vpop.permute.xlu0 %5226
      %5228 = vrot.lane.b32.xlu0 %v4403, 39
      %v5229 = vpop.permute.xlu0 %5228
      %5230 = vrot.lane.b32.xlu0 %v4404, 39
      %v5231 = vpop.permute.xlu0 %5230
      %5232 = vrot.lane.b32.xlu0 %v4405, 39
      %v5233 = vpop.permute.xlu0 %5232
      %5234 = vrot.lane.b32.xlu0 %v4406, 39
      %v5235 = vpop.permute.xlu0 %5234
      %v5236 = vsel %vm1416, %v5233, %v5235
      %v5237 = vsel %vm1416, %v5231, %v5233
      %v5238 = vsel %vm1416, %v5229, %v5231
      %v5239 = vsel %vm1416, %v5227, %v5229
      %v5240 = vsel %vm1416, %v5225, %v5227
      %v5241 = vsel %vm1416, %v5223, %v5225
      %v5242 = vsel %vm1416, %v5221, %v5223
      %v5243 = vsel %vm1416, %v5235, %v5221
      %s5244 = scalar_lea.vmem %s15, 144
      %v5245 = vld [vmem:[%s5244] sm:$0xff]
      %5247 = vset.pattern.permute.xlu0 0
      %5248 = vperm.xlu0 %5247, %v5245
      %v5249 = vpop.permute.xlu0 %5248
      %v5251 = vmul.f32 %v5242, %v5249
      %v5252 = vmul.f32 %v5241, %v5249
      %v5253 = vmul.f32 %v5240, %v5249
      %v5254 = vmul.f32 %v5239, %v5249
      %v5255 = vmul.f32 %v5238, %v5249
      %v5256 = vmul.f32 %v5237, %v5249
      %v5257 = vmul.f32 %v5236, %v5249
      %v5258 = vmul.f32 %v5243, %v5249
      %v5259 = vadd.f32 %v5212, %v5251
      %v5260 = vadd.f32 %v5213, %v5252
      %v5261 = vadd.f32 %v5214, %v5253
      %v5262 = vadd.f32 %v5215, %v5254
      %v5263 = vadd.f32 %v5216, %v5255
      %v5264 = vadd.f32 %v5217, %v5256
      %v5265 = vadd.f32 %v5218, %v5257
      %v5266 = vadd.f32 %v5219, %v5258
      %5267 = vrot.lane.b32.xlu0 %v4399, 38
      %v5268 = vpop.permute.xlu0 %5267
      %5269 = vrot.lane.b32.xlu0 %v4400, 38
      %v5270 = vpop.permute.xlu0 %5269
      %5271 = vrot.lane.b32.xlu0 %v4401, 38
      %v5272 = vpop.permute.xlu0 %5271
      %5273 = vrot.lane.b32.xlu0 %v4402, 38
      %v5274 = vpop.permute.xlu0 %5273
      %5275 = vrot.lane.b32.xlu0 %v4403, 38
      %v5276 = vpop.permute.xlu0 %5275
      %5277 = vrot.lane.b32.xlu0 %v4404, 38
      %v5278 = vpop.permute.xlu0 %5277
      %5279 = vrot.lane.b32.xlu0 %v4405, 38
      %v5280 = vpop.permute.xlu0 %5279
      %5281 = vrot.lane.b32.xlu0 %v4406, 38
      %v5282 = vpop.permute.xlu0 %5281
      %v5283 = vsel %vm1449, %v5280, %v5282
      %v5284 = vsel %vm1449, %v5278, %v5280
      %v5285 = vsel %vm1449, %v5276, %v5278
      %v5286 = vsel %vm1449, %v5274, %v5276
      %v5287 = vsel %vm1449, %v5272, %v5274
      %v5288 = vsel %vm1449, %v5270, %v5272
      %v5289 = vsel %vm1449, %v5268, %v5270
      %v5290 = vsel %vm1449, %v5282, %v5268
      %s5291 = scalar_lea.vmem %s15, 152
      %v5292 = vld [vmem:[%s5291] sm:$0xff]
      %5294 = vset.pattern.permute.xlu0 0
      %5295 = vperm.xlu0 %5294, %v5292
      %v5296 = vpop.permute.xlu0 %5295
      %v5298 = vmul.f32 %v5289, %v5296
      %v5299 = vmul.f32 %v5288, %v5296
      %v5300 = vmul.f32 %v5287, %v5296
      %v5301 = vmul.f32 %v5286, %v5296
      %v5302 = vmul.f32 %v5285, %v5296
      %v5303 = vmul.f32 %v5284, %v5296
      %v5304 = vmul.f32 %v5283, %v5296
      %v5305 = vmul.f32 %v5290, %v5296
      %v5306 = vadd.f32 %v5259, %v5298
      %v5307 = vadd.f32 %v5260, %v5299
      %v5308 = vadd.f32 %v5261, %v5300
      %v5309 = vadd.f32 %v5262, %v5301
      %v5310 = vadd.f32 %v5263, %v5302
      %v5311 = vadd.f32 %v5264, %v5303
      %v5312 = vadd.f32 %v5265, %v5304
      %v5313 = vadd.f32 %v5266, %v5305
      %5314 = vrot.lane.b32.xlu0 %v4399, 37
      %v5315 = vpop.permute.xlu0 %5314
      %5316 = vrot.lane.b32.xlu0 %v4400, 37
      %v5317 = vpop.permute.xlu0 %5316
      %5318 = vrot.lane.b32.xlu0 %v4401, 37
      %v5319 = vpop.permute.xlu0 %5318
      %5320 = vrot.lane.b32.xlu0 %v4402, 37
      %v5321 = vpop.permute.xlu0 %5320
      %5322 = vrot.lane.b32.xlu0 %v4403, 37
      %v5323 = vpop.permute.xlu0 %5322
      %5324 = vrot.lane.b32.xlu0 %v4404, 37
      %v5325 = vpop.permute.xlu0 %5324
      %5326 = vrot.lane.b32.xlu0 %v4405, 37
      %v5327 = vpop.permute.xlu0 %5326
      %5328 = vrot.lane.b32.xlu0 %v4406, 37
      %v5329 = vpop.permute.xlu0 %5328
      %v5330 = vsel %vm1482, %v5327, %v5329
      %v5331 = vsel %vm1482, %v5325, %v5327
      %v5332 = vsel %vm1482, %v5323, %v5325
      %v5333 = vsel %vm1482, %v5321, %v5323
      %v5334 = vsel %vm1482, %v5319, %v5321
      %v5335 = vsel %vm1482, %v5317, %v5319
      %v5336 = vsel %vm1482, %v5315, %v5317
      %v5337 = vsel %vm1482, %v5329, %v5315
      %s5338 = scalar_lea.vmem %s15, 160
      %v5339 = vld [vmem:[%s5338] sm:$0xff]
      %5341 = vset.pattern.permute.xlu0 0
      %5342 = vperm.xlu0 %5341, %v5339
      %v5343 = vpop.permute.xlu0 %5342
      %v5345 = vmul.f32 %v5336, %v5343
      %v5346 = vmul.f32 %v5335, %v5343
      %v5347 = vmul.f32 %v5334, %v5343
      %v5348 = vmul.f32 %v5333, %v5343
      %v5349 = vmul.f32 %v5332, %v5343
      %v5350 = vmul.f32 %v5331, %v5343
      %v5351 = vmul.f32 %v5330, %v5343
      %v5352 = vmul.f32 %v5337, %v5343
      %v5353 = vadd.f32 %v5306, %v5345
      %v5354 = vadd.f32 %v5307, %v5346
      %v5355 = vadd.f32 %v5308, %v5347
      %v5356 = vadd.f32 %v5309, %v5348
      %v5357 = vadd.f32 %v5310, %v5349
      %v5358 = vadd.f32 %v5311, %v5350
      %v5359 = vadd.f32 %v5312, %v5351
      %v5360 = vadd.f32 %v5313, %v5352
      %5361 = vrot.lane.b32.xlu0 %v4399, 29
      %v5362 = vpop.permute.xlu0 %5361
      %5363 = vrot.lane.b32.xlu0 %v4400, 29
      %v5364 = vpop.permute.xlu0 %5363
      %5365 = vrot.lane.b32.xlu0 %v4401, 29
      %v5366 = vpop.permute.xlu0 %5365
      %5367 = vrot.lane.b32.xlu0 %v4402, 29
      %v5368 = vpop.permute.xlu0 %5367
      %5369 = vrot.lane.b32.xlu0 %v4403, 29
      %v5370 = vpop.permute.xlu0 %5369
      %5371 = vrot.lane.b32.xlu0 %v4404, 29
      %v5372 = vpop.permute.xlu0 %5371
      %5373 = vrot.lane.b32.xlu0 %v4405, 29
      %v5374 = vpop.permute.xlu0 %5373
      %5375 = vrot.lane.b32.xlu0 %v4406, 29
      %v5376 = vpop.permute.xlu0 %5375
      %v5377 = vsel %vm1515, %v5374, %v5376
      %v5378 = vsel %vm1515, %v5372, %v5374
      %v5379 = vsel %vm1515, %v5370, %v5372
      %v5380 = vsel %vm1515, %v5368, %v5370
      %v5381 = vsel %vm1515, %v5366, %v5368
      %v5382 = vsel %vm1515, %v5364, %v5366
      %v5383 = vsel %vm1515, %v5362, %v5364
      %v5384 = vsel %vm1515, %v5376, %v5362
      %s5385 = scalar_lea.vmem %s15, 168
      %v5386 = vld [vmem:[%s5385] sm:$0xff]
      %5388 = vset.pattern.permute.xlu0 0
      %5389 = vperm.xlu0 %5388, %v5386
      %v5390 = vpop.permute.xlu0 %5389
      %v5392 = vmul.f32 %v5383, %v5390
      %v5393 = vmul.f32 %v5382, %v5390
      %v5394 = vmul.f32 %v5381, %v5390
      %v5395 = vmul.f32 %v5380, %v5390
      %v5396 = vmul.f32 %v5379, %v5390
      %v5397 = vmul.f32 %v5378, %v5390
      %v5398 = vmul.f32 %v5377, %v5390
      %v5399 = vmul.f32 %v5384, %v5390
      %v5400 = vadd.f32 %v5353, %v5392
      %v5401 = vadd.f32 %v5354, %v5393
      %v5402 = vadd.f32 %v5355, %v5394
      %v5403 = vadd.f32 %v5356, %v5395
      %v5404 = vadd.f32 %v5357, %v5396
      %v5405 = vadd.f32 %v5358, %v5397
      %v5406 = vadd.f32 %v5359, %v5398
      %v5407 = vadd.f32 %v5360, %v5399
      %5408 = vrot.lane.b32.xlu0 %v4399, 28
      %v5409 = vpop.permute.xlu0 %5408
      %5410 = vrot.lane.b32.xlu0 %v4400, 28
      %v5411 = vpop.permute.xlu0 %5410
      %5412 = vrot.lane.b32.xlu0 %v4401, 28
      %v5413 = vpop.permute.xlu0 %5412
      %5414 = vrot.lane.b32.xlu0 %v4402, 28
      %v5415 = vpop.permute.xlu0 %5414
      %5416 = vrot.lane.b32.xlu0 %v4403, 28
      %v5417 = vpop.permute.xlu0 %5416
      %5418 = vrot.lane.b32.xlu0 %v4404, 28
      %v5419 = vpop.permute.xlu0 %5418
      %5420 = vrot.lane.b32.xlu0 %v4405, 28
      %v5421 = vpop.permute.xlu0 %5420
      %5422 = vrot.lane.b32.xlu0 %v4406, 28
      %v5423 = vpop.permute.xlu0 %5422
      %v5424 = vsel %vm1548, %v5421, %v5423
      %v5425 = vsel %vm1548, %v5419, %v5421
      %v5426 = vsel %vm1548, %v5417, %v5419
      %v5427 = vsel %vm1548, %v5415, %v5417
      %v5428 = vsel %vm1548, %v5413, %v5415
      %v5429 = vsel %vm1548, %v5411, %v5413
      %v5430 = vsel %vm1548, %v5409, %v5411
      %v5431 = vsel %vm1548, %v5423, %v5409
      %s5432 = scalar_lea.vmem %s15, 176
      %v5433 = vld [vmem:[%s5432] sm:$0xff]
      %5435 = vset.pattern.permute.xlu0 0
      %5436 = vperm.xlu0 %5435, %v5433
      %v5437 = vpop.permute.xlu0 %5436
      %v5439 = vmul.f32 %v5430, %v5437
      %v5440 = vmul.f32 %v5429, %v5437
      %v5441 = vmul.f32 %v5428, %v5437
      %v5442 = vmul.f32 %v5427, %v5437
      %v5443 = vmul.f32 %v5426, %v5437
      %v5444 = vmul.f32 %v5425, %v5437
      %v5445 = vmul.f32 %v5424, %v5437
      %v5446 = vmul.f32 %v5431, %v5437
      %v5447 = vadd.f32 %v5400, %v5439
      %v5448 = vadd.f32 %v5401, %v5440
      %v5449 = vadd.f32 %v5402, %v5441
      %v5450 = vadd.f32 %v5403, %v5442
      %v5451 = vadd.f32 %v5404, %v5443
      %v5452 = vadd.f32 %v5405, %v5444
      %v5453 = vadd.f32 %v5406, %v5445
      %v5454 = vadd.f32 %v5407, %v5446
      %5455 = vrot.lane.b32.xlu0 %v4399, 27
      %v5456 = vpop.permute.xlu0 %5455
      %5457 = vrot.lane.b32.xlu0 %v4400, 27
      %v5458 = vpop.permute.xlu0 %5457
      %5459 = vrot.lane.b32.xlu0 %v4401, 27
      %v5460 = vpop.permute.xlu0 %5459
      %5461 = vrot.lane.b32.xlu0 %v4402, 27
      %v5462 = vpop.permute.xlu0 %5461
      %5463 = vrot.lane.b32.xlu0 %v4403, 27
      %v5464 = vpop.permute.xlu0 %5463
      %5465 = vrot.lane.b32.xlu0 %v4404, 27
      %v5466 = vpop.permute.xlu0 %5465
      %5467 = vrot.lane.b32.xlu0 %v4405, 27
      %v5468 = vpop.permute.xlu0 %5467
      %5469 = vrot.lane.b32.xlu0 %v4406, 27
      %v5470 = vpop.permute.xlu0 %5469
      %v5471 = vsel %vm1581, %v5468, %v5470
      %v5472 = vsel %vm1581, %v5466, %v5468
      %v5473 = vsel %vm1581, %v5464, %v5466
      %v5474 = vsel %vm1581, %v5462, %v5464
      %v5475 = vsel %vm1581, %v5460, %v5462
      %v5476 = vsel %vm1581, %v5458, %v5460
      %v5477 = vsel %vm1581, %v5456, %v5458
      %v5478 = vsel %vm1581, %v5470, %v5456
      %s5479 = scalar_lea.vmem %s15, 184
      %v5480 = vld [vmem:[%s5479] sm:$0xff]
      %5482 = vset.pattern.permute.xlu0 0
      %5483 = vperm.xlu0 %5482, %v5480
      %v5484 = vpop.permute.xlu0 %5483
      %v5486 = vmul.f32 %v5477, %v5484
      %v5487 = vmul.f32 %v5476, %v5484
      %v5488 = vmul.f32 %v5475, %v5484
      %v5489 = vmul.f32 %v5474, %v5484
      %v5490 = vmul.f32 %v5473, %v5484
      %v5491 = vmul.f32 %v5472, %v5484
      %v5492 = vmul.f32 %v5471, %v5484
      %v5493 = vmul.f32 %v5478, %v5484
      %v5494 = vadd.f32 %v5447, %v5486
      %v5495 = vadd.f32 %v5448, %v5487
      %v5496 = vadd.f32 %v5449, %v5488
      %v5497 = vadd.f32 %v5450, %v5489
      %v5498 = vadd.f32 %v5451, %v5490
      %v5499 = vadd.f32 %v5452, %v5491
      %v5500 = vadd.f32 %v5453, %v5492
      %v5501 = vadd.f32 %v5454, %v5493
      %5502 = vrot.lane.b32.xlu0 %v4399, 19
      %v5503 = vpop.permute.xlu0 %5502
      %5504 = vrot.lane.b32.xlu0 %v4400, 19
      %v5505 = vpop.permute.xlu0 %5504
      %5506 = vrot.lane.b32.xlu0 %v4401, 19
      %v5507 = vpop.permute.xlu0 %5506
      %5508 = vrot.lane.b32.xlu0 %v4402, 19
      %v5509 = vpop.permute.xlu0 %5508
      %5510 = vrot.lane.b32.xlu0 %v4403, 19
      %v5511 = vpop.permute.xlu0 %5510
      %5512 = vrot.lane.b32.xlu0 %v4404, 19
      %v5513 = vpop.permute.xlu0 %5512
      %5514 = vrot.lane.b32.xlu0 %v4405, 19
      %v5515 = vpop.permute.xlu0 %5514
      %5516 = vrot.lane.b32.xlu0 %v4406, 19
      %v5517 = vpop.permute.xlu0 %5516
      %v5518 = vsel %vm1614, %v5515, %v5517
      %v5519 = vsel %vm1614, %v5513, %v5515
      %v5520 = vsel %vm1614, %v5511, %v5513
      %v5521 = vsel %vm1614, %v5509, %v5511
      %v5522 = vsel %vm1614, %v5507, %v5509
      %v5523 = vsel %vm1614, %v5505, %v5507
      %v5524 = vsel %vm1614, %v5503, %v5505
      %v5525 = vsel %vm1614, %v5517, %v5503
      %s5526 = scalar_lea.vmem %s15, 192
      %v5527 = vld [vmem:[%s5526] sm:$0xff]
      %5529 = vset.pattern.permute.xlu0 0
      %5530 = vperm.xlu0 %5529, %v5527
      %v5531 = vpop.permute.xlu0 %5530
      %v5533 = vmul.f32 %v5524, %v5531
      %v5534 = vmul.f32 %v5523, %v5531
      %v5535 = vmul.f32 %v5522, %v5531
      %v5536 = vmul.f32 %v5521, %v5531
      %v5537 = vmul.f32 %v5520, %v5531
      %v5538 = vmul.f32 %v5519, %v5531
      %v5539 = vmul.f32 %v5518, %v5531
      %v5540 = vmul.f32 %v5525, %v5531
      %v5541 = vadd.f32 %v5494, %v5533
      %v5542 = vadd.f32 %v5495, %v5534
      %v5543 = vadd.f32 %v5496, %v5535
      %v5544 = vadd.f32 %v5497, %v5536
      %v5545 = vadd.f32 %v5498, %v5537
      %v5546 = vadd.f32 %v5499, %v5538
      %v5547 = vadd.f32 %v5500, %v5539
      %v5548 = vadd.f32 %v5501, %v5540
      %5549 = vrot.lane.b32.xlu0 %v4399, 18
      %v5550 = vpop.permute.xlu0 %5549
      %5551 = vrot.lane.b32.xlu0 %v4400, 18
      %v5552 = vpop.permute.xlu0 %5551
      %5553 = vrot.lane.b32.xlu0 %v4401, 18
      %v5554 = vpop.permute.xlu0 %5553
      %5555 = vrot.lane.b32.xlu0 %v4402, 18
      %v5556 = vpop.permute.xlu0 %5555
      %5557 = vrot.lane.b32.xlu0 %v4403, 18
      %v5558 = vpop.permute.xlu0 %5557
      %5559 = vrot.lane.b32.xlu0 %v4404, 18
      %v5560 = vpop.permute.xlu0 %5559
      %5561 = vrot.lane.b32.xlu0 %v4405, 18
      %v5562 = vpop.permute.xlu0 %5561
      %5563 = vrot.lane.b32.xlu0 %v4406, 18
      %v5564 = vpop.permute.xlu0 %5563
      %v5565 = vsel %vm1647, %v5562, %v5564
      %v5566 = vsel %vm1647, %v5560, %v5562
      %v5567 = vsel %vm1647, %v5558, %v5560
      %v5568 = vsel %vm1647, %v5556, %v5558
      %v5569 = vsel %vm1647, %v5554, %v5556
      %v5570 = vsel %vm1647, %v5552, %v5554
      %v5571 = vsel %vm1647, %v5550, %v5552
      %v5572 = vsel %vm1647, %v5564, %v5550
      %s5573 = scalar_lea.vmem %s15, 200
      %v5574 = vld [vmem:[%s5573] sm:$0xff]
      %5576 = vset.pattern.permute.xlu0 0
      %5577 = vperm.xlu0 %5576, %v5574
      %v5578 = vpop.permute.xlu0 %5577
      %v5580 = vmul.f32 %v5571, %v5578
      %v5581 = vmul.f32 %v5570, %v5578
      %v5582 = vmul.f32 %v5569, %v5578
      %v5583 = vmul.f32 %v5568, %v5578
      %v5584 = vmul.f32 %v5567, %v5578
      %v5585 = vmul.f32 %v5566, %v5578
      %v5586 = vmul.f32 %v5565, %v5578
      %v5587 = vmul.f32 %v5572, %v5578
      %v5588 = vadd.f32 %v5541, %v5580
      %v5589 = vadd.f32 %v5542, %v5581
      %v5590 = vadd.f32 %v5543, %v5582
      %v5591 = vadd.f32 %v5544, %v5583
      %v5592 = vadd.f32 %v5545, %v5584
      %v5593 = vadd.f32 %v5546, %v5585
      %v5594 = vadd.f32 %v5547, %v5586
      %v5595 = vadd.f32 %v5548, %v5587
      %5596 = vrot.lane.b32.xlu0 %v4399, 17
      %v5597 = vpop.permute.xlu0 %5596
      %5598 = vrot.lane.b32.xlu0 %v4400, 17
      %v5599 = vpop.permute.xlu0 %5598
      %5600 = vrot.lane.b32.xlu0 %v4401, 17
      %v5601 = vpop.permute.xlu0 %5600
      %5602 = vrot.lane.b32.xlu0 %v4402, 17
      %v5603 = vpop.permute.xlu0 %5602
      %5604 = vrot.lane.b32.xlu0 %v4403, 17
      %v5605 = vpop.permute.xlu0 %5604
      %5606 = vrot.lane.b32.xlu0 %v4404, 17
      %v5607 = vpop.permute.xlu0 %5606
      %5608 = vrot.lane.b32.xlu0 %v4405, 17
      %v5609 = vpop.permute.xlu0 %5608
      %5610 = vrot.lane.b32.xlu0 %v4406, 17
      %v5611 = vpop.permute.xlu0 %5610
      %v5612 = vsel %vm1680, %v5609, %v5611
      %v5613 = vsel %vm1680, %v5607, %v5609
      %v5614 = vsel %vm1680, %v5605, %v5607
      %v5615 = vsel %vm1680, %v5603, %v5605
      %v5616 = vsel %vm1680, %v5601, %v5603
      %v5617 = vsel %vm1680, %v5599, %v5601
      %v5618 = vsel %vm1680, %v5597, %v5599
      %v5619 = vsel %vm1680, %v5611, %v5597
      %s5620 = scalar_lea.vmem %s15, 208
      %v5621 = vld [vmem:[%s5620] sm:$0xff]
      %5623 = vset.pattern.permute.xlu0 0
      %5624 = vperm.xlu0 %5623, %v5621
      %v5625 = vpop.permute.xlu0 %5624
      %v5627 = vmul.f32 %v5618, %v5625
      %v5628 = vmul.f32 %v5617, %v5625
      %v5629 = vmul.f32 %v5616, %v5625
      %v5630 = vmul.f32 %v5615, %v5625
      %v5631 = vmul.f32 %v5614, %v5625
      %v5632 = vmul.f32 %v5613, %v5625
      %v5633 = vmul.f32 %v5612, %v5625
      %v5634 = vmul.f32 %v5619, %v5625
      %v5635 = vadd.f32 %v5588, %v5627
      %v5636 = vadd.f32 %v5589, %v5628
      %v5637 = vadd.f32 %v5590, %v5629
      %v5638 = vadd.f32 %v5591, %v5630
      %v5639 = vadd.f32 %v5592, %v5631
      %v5640 = vadd.f32 %v5593, %v5632
      %v5641 = vadd.f32 %v5594, %v5633
      %v5642 = vadd.f32 %v5595, %v5634
      %v5643 = vld [vmem:[%s16] sm:$0xff]
      %5645 = vset.pattern.permute.xlu0 0
      %5646 = vperm.xlu0 %5645, %v5643
      %v5647 = vpop.permute.xlu0 %5646
      %v5649 = vadd.f32 %v5635, %v5647
      %v5650 = vadd.f32 %v5636, %v5647
      %v5651 = vadd.f32 %v5637, %v5647
      %v5652 = vadd.f32 %v5638, %v5647
      %v5653 = vadd.f32 %v5639, %v5647
      %v5654 = vadd.f32 %v5640, %v5647
      %v5655 = vadd.f32 %v5641, %v5647
      %v5656 = vadd.f32 %v5642, %v5647
      %v5658 = vperm.slane %v820, 0
      %v5659 = vperm.slane %v820, 1
      %v5660 = vperm.slane %v820, 2
      %v5661 = vperm.slane %v820, 3
      %v5662 = vperm.slane %v820, 4
      %v5663 = vperm.slane %v820, 5
      %v5664 = vperm.slane %v820, 6
      %v5665 = vperm.slane %v820, 7
      %v5674 = vmul.f32 %v5649, %v5658
      %v5675 = vmul.f32 %v5650, %v5659
      %v5676 = vmul.f32 %v5651, %v5660
      %v5677 = vmul.f32 %v5652, %v5661
      %v5678 = vmul.f32 %v5653, %v5662
      %v5679 = vmul.f32 %v5654, %v5663
      %v5680 = vmul.f32 %v5655, %v5664
      %v5681 = vmul.f32 %v5656, %v5665
      %v5682 = vadd.f32 %v5674, %v5675
      %v5683 = vadd.f32 %v5682, %v5676
      %v5684 = vadd.f32 %v5683, %v5677
      %v5685 = vadd.f32 %v5684, %v5678
      %v5686 = vadd.f32 %v5685, %v5679
      %v5687 = vadd.f32 %v5686, %v5680
      %v5688 = vadd.f32 %v5687, %v5681
      %5689 = vadd.xlane.f32.xlu0 %v5688
      %v5690 = vpop.xlane.xlu0 %5689
      %v5691 = vmul.f32 %v5690, 0.015625
      %v5692 = vmul.f32 %v5674, %v5649
      %v5693 = vmul.f32 %v5675, %v5650
      %v5694 = vmul.f32 %v5676, %v5651
      %v5695 = vmul.f32 %v5677, %v5652
      %v5696 = vmul.f32 %v5678, %v5653
      %v5697 = vmul.f32 %v5679, %v5654
      %v5698 = vmul.f32 %v5680, %v5655
      %v5699 = vmul.f32 %v5681, %v5656
      %v5700 = vadd.f32 %v5692, %v5693
      %v5701 = vadd.f32 %v5700, %v5694
      %v5702 = vadd.f32 %v5701, %v5695
      %v5703 = vadd.f32 %v5702, %v5696
      %v5704 = vadd.f32 %v5703, %v5697
      %v5705 = vadd.f32 %v5704, %v5698
      %v5706 = vadd.f32 %v5705, %v5699
      %5707 = vadd.xlane.f32.xlu0 %v5706
      %v5708 = vpop.xlane.xlu0 %5707
      %v5709 = vmul.f32 %v5708, 0.015625
      %v5710 = vmul.f32 %v5691, %v5691
      %v5711 = vsub.f32 %v5709, %v5710
      %v5712 = vmax.f32 %v5711, 0.0
      %v5713 = vadd.f32 %v5712, 1e-05
      %v5714 = vrsqrt.pop %v5713
      %v5715 = vmul.f32 %v5714, %v5713
      %v5716 = vmul.f32 %v5715, %v5714
      %v5717 = vmul.f32 0.5, %v5716
      %v5718 = vsub.f32 1.5, %v5717
      %v5719 = vmul.f32 %v5714, %v5718
      %vm5720 = vweird.f32 %v5713
      %vm5721 = vweird.f32 %v5714
      %vm5722 = vmor %vm5720, %vm5721
      %v5723 = vsel %vm5722, %v5714, %v5719
      %v5724 = vld [vmem:[%s17] sm:$0xff]
      %v5725 = vmul.f32 %v5723, %v5724
      %v5726 = vld [vmem:[%s18] sm:$0xff]
      %v5727 = vmul.f32 %v5725, %v5691
      %v5728 = vsub.f32 %v5726, %v5727
      %5730 = vset.pattern.permute.xlu0 0
      %5731 = vperm.xlu0 %5730, %v5725
      %v5732 = vpop.permute.xlu0 %5731
      %v5734 = vmul.f32 %v5649, %v5732
      %v5735 = vmul.f32 %v5650, %v5732
      %v5736 = vmul.f32 %v5651, %v5732
      %v5737 = vmul.f32 %v5652, %v5732
      %v5738 = vmul.f32 %v5653, %v5732
      %v5739 = vmul.f32 %v5654, %v5732
      %v5740 = vmul.f32 %v5655, %v5732
      %v5741 = vmul.f32 %v5656, %v5732
      %5743 = vset.pattern.permute.xlu0 0
      %5744 = vperm.xlu0 %5743, %v5728
      %v5745 = vpop.permute.xlu0 %5744
      %v5747 = vadd.f32 %v5734, %v5745
      %v5748 = vadd.f32 %v5735, %v5745
      %v5749 = vadd.f32 %v5736, %v5745
      %v5750 = vadd.f32 %v5737, %v5745
      %v5751 = vadd.f32 %v5738, %v5745
      %v5752 = vadd.f32 %v5739, %v5745
      %v5753 = vadd.f32 %v5740, %v5745
      %v5754 = vadd.f32 %v5741, %v5745
      %v5755 = vld [vmem:[%s19] sm:$0xff]
      %v5756 = vld [vmem:[%s19 + $0x8] sm:$0xff]
      %v5757 = vld [vmem:[%s20] sm:$0xff]
      %v5758 = vld [vmem:[%s20 + $0x8] sm:$0xff]
      %5760 = vset.pattern.permute.xlu0 0
      %5761 = vperm.xlu0 %5760, %v5757
      %v5762 = vpop.permute.xlu0 %5761
      %5765 = vset.pattern.permute.xlu0 0
      %5766 = vperm.xlu0 %5765, %v5758
      %v5767 = vpop.permute.xlu0 %5766
      %v5770 = vsel %vm3608, %v5755, 0
      %v5773 = vsel %vm3608, %v5756, 0
      %5775 = vmatpush.msra.mxu0 0.0
      %5776 = vmatpush.msra.mxu0 0.0
      %5777 = vmatpush.msra.mxu0 0.0
      %5778 = vmatpush.msra.mxu0 0.0
      %5779 = vmatpush.msra.mxu0 0.0
      %5780 = vmatpush.msra.mxu0 0.0
      %5781 = vmatpush.msra.mxu0 0.0
      %5782 = vmatpush.msra.mxu0 0.0
      %5783 = vmatpush.msra.mxu0 0.0
      %5784 = vmatpush.msra.mxu0 0.0
      %5785 = vmatpush.msra.mxu0 0.0
      %5786 = vmatpush.msra.mxu0 0.0
      %5787 = vmatpush.msra.mxu0 0.0
      %5788 = vmatpush.msra.mxu0 0.0
      %5789 = vmatpush.msra.mxu0 0.0
      %5790 = vmatpush.msra.mxu0 %v5747
      %5791 = vmatmul.f32.gmra.mxu0 %v5770
      %v5792 = vpop.f32.mrf.mxu0
      %v5793 = vadd.f32 %v5762, %v5792
      %5794 = vmatmul.f32.gmra.mxu0 %v5773
      %v5795 = vpop.f32.mrf.mxu0
      %v5796 = vadd.f32 %v5767, %v5795
      %5797 = vdwg.mxu0
      %5798 = vmatpush.msra.mxu0 0.0
      %5799 = vmatpush.msra.mxu0 0.0
      %5800 = vmatpush.msra.mxu0 0.0
      %5801 = vmatpush.msra.mxu0 0.0
      %5802 = vmatpush.msra.mxu0 0.0
      %5803 = vmatpush.msra.mxu0 0.0
      %5804 = vmatpush.msra.mxu0 0.0
      %5805 = vmatpush.msra.mxu0 0.0
      %5806 = vmatpush.msra.mxu0 0.0
      %5807 = vmatpush.msra.mxu0 0.0
      %5808 = vmatpush.msra.mxu0 0.0
      %5809 = vmatpush.msra.mxu0 0.0
      %5810 = vmatpush.msra.mxu0 0.0
      %5811 = vmatpush.msra.mxu0 0.0
      %5812 = vmatpush.msra.mxu0 0.0
      %5813 = vmatpush.msra.mxu0 %v5748
      %5814 = vmatmul.f32.gmra.mxu0 %v5770
      %v5815 = vpop.f32.mrf.mxu0
      %v5816 = vadd.f32 %v5762, %v5815
      %5817 = vmatmul.f32.gmra.mxu0 %v5773
      %v5818 = vpop.f32.mrf.mxu0
      %v5819 = vadd.f32 %v5767, %v5818
      %5820 = vdwg.mxu0
      %5821 = vmatpush.msra.mxu0 0.0
      %5822 = vmatpush.msra.mxu0 0.0
      %5823 = vmatpush.msra.mxu0 0.0
      %5824 = vmatpush.msra.mxu0 0.0
      %5825 = vmatpush.msra.mxu0 0.0
      %5826 = vmatpush.msra.mxu0 0.0
      %5827 = vmatpush.msra.mxu0 0.0
      %5828 = vmatpush.msra.mxu0 0.0
      %5829 = vmatpush.msra.mxu0 0.0
      %5830 = vmatpush.msra.mxu0 0.0
      %5831 = vmatpush.msra.mxu0 0.0
      %5832 = vmatpush.msra.mxu0 0.0
      %5833 = vmatpush.msra.mxu0 0.0
      %5834 = vmatpush.msra.mxu0 0.0
      %5835 = vmatpush.msra.mxu0 0.0
      %5836 = vmatpush.msra.mxu0 %v5749
      %5837 = vmatmul.f32.gmra.mxu0 %v5770
      %v5838 = vpop.f32.mrf.mxu0
      %v5839 = vadd.f32 %v5762, %v5838
      %5840 = vmatmul.f32.gmra.mxu0 %v5773
      %v5841 = vpop.f32.mrf.mxu0
      %v5842 = vadd.f32 %v5767, %v5841
      %5843 = vdwg.mxu0
      %5844 = vmatpush.msra.mxu0 0.0
      %5845 = vmatpush.msra.mxu0 0.0
      %5846 = vmatpush.msra.mxu0 0.0
      %5847 = vmatpush.msra.mxu0 0.0
      %5848 = vmatpush.msra.mxu0 0.0
      %5849 = vmatpush.msra.mxu0 0.0
      %5850 = vmatpush.msra.mxu0 0.0
      %5851 = vmatpush.msra.mxu0 0.0
      %5852 = vmatpush.msra.mxu0 0.0
      %5853 = vmatpush.msra.mxu0 0.0
      %5854 = vmatpush.msra.mxu0 0.0
      %5855 = vmatpush.msra.mxu0 0.0
      %5856 = vmatpush.msra.mxu0 0.0
      %5857 = vmatpush.msra.mxu0 0.0
      %5858 = vmatpush.msra.mxu0 0.0
      %5859 = vmatpush.msra.mxu0 %v5750
      %5860 = vmatmul.f32.gmra.mxu0 %v5770
      %v5861 = vpop.f32.mrf.mxu0
      %v5862 = vadd.f32 %v5762, %v5861
      %5863 = vmatmul.f32.gmra.mxu0 %v5773
      %v5864 = vpop.f32.mrf.mxu0
      %v5865 = vadd.f32 %v5767, %v5864
      %5866 = vdwg.mxu0
      %5867 = vmatpush.msra.mxu0 0.0
      %5868 = vmatpush.msra.mxu0 0.0
      %5869 = vmatpush.msra.mxu0 0.0
      %5870 = vmatpush.msra.mxu0 0.0
      %5871 = vmatpush.msra.mxu0 0.0
      %5872 = vmatpush.msra.mxu0 0.0
      %5873 = vmatpush.msra.mxu0 0.0
      %5874 = vmatpush.msra.mxu0 0.0
      %5875 = vmatpush.msra.mxu0 0.0
      %5876 = vmatpush.msra.mxu0 0.0
      %5877 = vmatpush.msra.mxu0 0.0
      %5878 = vmatpush.msra.mxu0 0.0
      %5879 = vmatpush.msra.mxu0 0.0
      %5880 = vmatpush.msra.mxu0 0.0
      %5881 = vmatpush.msra.mxu0 0.0
      %5882 = vmatpush.msra.mxu0 %v5751
      %5883 = vmatmul.f32.gmra.mxu0 %v5770
      %v5884 = vpop.f32.mrf.mxu0
      %v5885 = vadd.f32 %v5762, %v5884
      %5886 = vmatmul.f32.gmra.mxu0 %v5773
      %v5887 = vpop.f32.mrf.mxu0
      %v5888 = vadd.f32 %v5767, %v5887
      %5889 = vdwg.mxu0
      %5890 = vmatpush.msra.mxu0 0.0
      %5891 = vmatpush.msra.mxu0 0.0
      %5892 = vmatpush.msra.mxu0 0.0
      %5893 = vmatpush.msra.mxu0 0.0
      %5894 = vmatpush.msra.mxu0 0.0
      %5895 = vmatpush.msra.mxu0 0.0
      %5896 = vmatpush.msra.mxu0 0.0
      %5897 = vmatpush.msra.mxu0 0.0
      %5898 = vmatpush.msra.mxu0 0.0
      %5899 = vmatpush.msra.mxu0 0.0
      %5900 = vmatpush.msra.mxu0 0.0
      %5901 = vmatpush.msra.mxu0 0.0
      %5902 = vmatpush.msra.mxu0 0.0
      %5903 = vmatpush.msra.mxu0 0.0
      %5904 = vmatpush.msra.mxu0 0.0
      %5905 = vmatpush.msra.mxu0 %v5752
      %5906 = vmatmul.f32.gmra.mxu0 %v5770
      %v5907 = vpop.f32.mrf.mxu0
      %v5908 = vadd.f32 %v5762, %v5907
      %5909 = vmatmul.f32.gmra.mxu0 %v5773
      %v5910 = vpop.f32.mrf.mxu0
      %v5911 = vadd.f32 %v5767, %v5910
      %5912 = vdwg.mxu0
      %5913 = vmatpush.msra.mxu0 0.0
      %5914 = vmatpush.msra.mxu0 0.0
      %5915 = vmatpush.msra.mxu0 0.0
      %5916 = vmatpush.msra.mxu0 0.0
      %5917 = vmatpush.msra.mxu0 0.0
      %5918 = vmatpush.msra.mxu0 0.0
      %5919 = vmatpush.msra.mxu0 0.0
      %5920 = vmatpush.msra.mxu0 0.0
      %5921 = vmatpush.msra.mxu0 0.0
      %5922 = vmatpush.msra.mxu0 0.0
      %5923 = vmatpush.msra.mxu0 0.0
      %5924 = vmatpush.msra.mxu0 0.0
      %5925 = vmatpush.msra.mxu0 0.0
      %5926 = vmatpush.msra.mxu0 0.0
      %5927 = vmatpush.msra.mxu0 0.0
      %5928 = vmatpush.msra.mxu0 %v5753
      %5929 = vmatmul.f32.gmra.mxu0 %v5770
      %v5930 = vpop.f32.mrf.mxu0
      %v5931 = vadd.f32 %v5762, %v5930
      %5932 = vmatmul.f32.gmra.mxu0 %v5773
      %v5933 = vpop.f32.mrf.mxu0
      %v5934 = vadd.f32 %v5767, %v5933
      %5935 = vdwg.mxu0
      %5936 = vmatpush.msra.mxu0 0.0
      %5937 = vmatpush.msra.mxu0 0.0
      %5938 = vmatpush.msra.mxu0 0.0
      %5939 = vmatpush.msra.mxu0 0.0
      %5940 = vmatpush.msra.mxu0 0.0
      %5941 = vmatpush.msra.mxu0 0.0
      %5942 = vmatpush.msra.mxu0 0.0
      %5943 = vmatpush.msra.mxu0 0.0
      %5944 = vmatpush.msra.mxu0 0.0
      %5945 = vmatpush.msra.mxu0 0.0
      %5946 = vmatpush.msra.mxu0 0.0
      %5947 = vmatpush.msra.mxu0 0.0
      %5948 = vmatpush.msra.mxu0 0.0
      %5949 = vmatpush.msra.mxu0 0.0
      %5950 = vmatpush.msra.mxu0 0.0
      %5951 = vmatpush.msra.mxu0 %v5754
      %5952 = vmatmul.f32.gmra.mxu0 %v5770
      %v5953 = vpop.f32.mrf.mxu0
      %v5954 = vadd.f32 %v5762, %v5953
      %5955 = vmatmul.f32.gmra.mxu0 %v5773
      %v5956 = vpop.f32.mrf.mxu0
      %v5957 = vadd.f32 %v5767, %v5956
      %5958 = vdwg.mxu0
      %v5959 = vmul.f32 %v5793, 0.5
      %v5960 = vmul.f32 %v5816, 0.5
      %v5961 = vmul.f32 %v5839, 0.5
      %v5962 = vmul.f32 %v5862, 0.5
      %v5963 = vmul.f32 %v5885, 0.5
      %v5964 = vmul.f32 %v5908, 0.5
      %v5965 = vmul.f32 %v5931, 0.5
      %v5966 = vmul.f32 %v5954, 0.5
      %v5967 = vmul.f32 %v5796, 0.5
      %v5968 = vmul.f32 %v5819, 0.5
      %v5969 = vmul.f32 %v5842, 0.5
      %v5970 = vmul.f32 %v5865, 0.5
      %v5971 = vmul.f32 %v5888, 0.5
      %v5972 = vmul.f32 %v5911, 0.5
      %v5973 = vmul.f32 %v5934, 0.5
      %v5974 = vmul.f32 %v5957, 0.5
      %v5975 = vmul.f32 %v5793, 0.70710677
      %v5976 = vmul.f32 %v5816, 0.70710677
      %v5977 = vmul.f32 %v5839, 0.70710677
      %v5978 = vmul.f32 %v5862, 0.70710677
      %v5979 = vmul.f32 %v5885, 0.70710677
      %v5980 = vmul.f32 %v5908, 0.70710677
      %v5981 = vmul.f32 %v5931, 0.70710677
      %v5982 = vmul.f32 %v5954, 0.70710677
      %v5983 = vmul.f32 %v5796, 0.70710677
      %v5984 = vmul.f32 %v5819, 0.70710677
      %v5985 = vmul.f32 %v5842, 0.70710677
      %v5986 = vmul.f32 %v5865, 0.70710677
      %v5987 = vmul.f32 %v5888, 0.70710677
      %v5988 = vmul.f32 %v5911, 0.70710677
      %v5989 = vmul.f32 %v5934, 0.70710677
      %v5990 = vmul.f32 %v5957, 0.70710677
      %v5991 = vmul.f32 %v5975, %v5975
      %v5992 = vmin.f32 16.0, %v5991
      %v5993 = vmul.f32 %v5992, 2.1237322e-06
      %v5994 = vadd.f32 %v5993, 0.00028619796
      %v5995 = vmul.f32 %v5992, %v5994
      %v5996 = vadd.f32 %v5995, 0.0036580483
      %v5997 = vmul.f32 %v5992, %v5996
      %v5998 = vadd.f32 %v5997, 0.05243302
      %v5999 = vmul.f32 %v5992, %v5998
      %v6000 = vadd.f32 %v5999, 0.18741608
      %v6001 = vmul.f32 %v5992, %v6000
      %v6002 = vadd.f32 %v6001, 1.1283791
      %v6003 = vmul.f32 %v5975, %v6002
      %v6004 = vmul.f32 %v5992, 3.8918573e-05
      %v6005 = vadd.f32 %v6004, 0.001143296
      %v6006 = vmul.f32 %v5992, %v6005
      %v6007 = vadd.f32 %v6006, 0.014752088
      %v6008 = vmul.f32 %v5992, %v6007
      %v6009 = vadd.f32 %v6008, 0.112945676
      %v6010 = vmul.f32 %v5992, %v6009
      %v6011 = vadd.f32 %v6010, 0.4994258
      %v6012 = vmul.f32 %v5992, %v6011
      %v6013 = vadd.f32 %v6012, 1.0
      %v6014 = vrcp.pop %v6013
      %v6015 = vmul.f32 %v6013, %v6014
      %v6016 = vsub.f32 1.0, %v6015
      %v6017 = vmul.f32 %v6014, %v6016
      %v6018 = vadd.f32 %v6014, %v6017
      %vm6019 = vweird.f32 %v6013
      %vm6020 = vweird.f32 %v6014
      %vm6021 = vmor %vm6019, %vm6020
      %v6022 = vsel %vm6021, %v6014, %v6018
      %v6023 = vand.u32 2147483647, %v6013
      %vm6024 = vcmp.eq.f32.partialorder %v6023, 8.507059e+37
      %v6025 = vand.u32 %v6013, 2147483648
      %v6026 = vor.u32 1.1754944e-38, %v6025
      %v6027 = vsel %vm6024, %v6026, %v6022
      %v6028 = vmul.f32 %v6003, %v6027
      %v6029 = vmin.f32 %v6028, 1.0
      %v6030 = vmax.f32 %v6029, -1.0
      %v6031 = vmul.f32 %v5976, %v5976
      %v6032 = vmin.f32 16.0, %v6031
      %v6033 = vmul.f32 %v6032, 2.1237322e-06
      %v6034 = vadd.f32 %v6033, 0.00028619796
      %v6035 = vmul.f32 %v6032, %v6034
      %v6036 = vadd.f32 %v6035, 0.0036580483
      %v6037 = vmul.f32 %v6032, %v6036
      %v6038 = vadd.f32 %v6037, 0.05243302
      %v6039 = vmul.f32 %v6032, %v6038
      %v6040 = vadd.f32 %v6039, 0.18741608
      %v6041 = vmul.f32 %v6032, %v6040
      %v6042 = vadd.f32 %v6041, 1.1283791
      %v6043 = vmul.f32 %v5976, %v6042
      %v6044 = vmul.f32 %v6032, 3.8918573e-05
      %v6045 = vadd.f32 %v6044, 0.001143296
      %v6046 = vmul.f32 %v6032, %v6045
      %v6047 = vadd.f32 %v6046, 0.014752088
      %v6048 = vmul.f32 %v6032, %v6047
      %v6049 = vadd.f32 %v6048, 0.112945676
      %v6050 = vmul.f32 %v6032, %v6049
      %v6051 = vadd.f32 %v6050, 0.4994258
      %v6052 = vmul.f32 %v6032, %v6051
      %v6053 = vadd.f32 %v6052, 1.0
      %v6054 = vrcp.pop %v6053
      %v6055 = vmul.f32 %v6053, %v6054
      %v6056 = vsub.f32 1.0, %v6055
      %v6057 = vmul.f32 %v6054, %v6056
      %v6058 = vadd.f32 %v6054, %v6057
      %vm6059 = vweird.f32 %v6053
      %vm6060 = vweird.f32 %v6054
      %vm6061 = vmor %vm6059, %vm6060
      %v6062 = vsel %vm6061, %v6054, %v6058
      %v6063 = vand.u32 2147483647, %v6053
      %vm6064 = vcmp.eq.f32.partialorder %v6063, 8.507059e+37
      %v6065 = vand.u32 %v6053, 2147483648
      %v6066 = vor.u32 1.1754944e-38, %v6065
      %v6067 = vsel %vm6064, %v6066, %v6062
      %v6068 = vmul.f32 %v6043, %v6067
      %v6069 = vmin.f32 %v6068, 1.0
      %v6070 = vmax.f32 %v6069, -1.0
      %v6071 = vmul.f32 %v5977, %v5977
      %v6072 = vmin.f32 16.0, %v6071
      %v6073 = vmul.f32 %v6072, 2.1237322e-06
      %v6074 = vadd.f32 %v6073, 0.00028619796
      %v6075 = vmul.f32 %v6072, %v6074
      %v6076 = vadd.f32 %v6075, 0.0036580483
      %v6077 = vmul.f32 %v6072, %v6076
      %v6078 = vadd.f32 %v6077, 0.05243302
      %v6079 = vmul.f32 %v6072, %v6078
      %v6080 = vadd.f32 %v6079, 0.18741608
      %v6081 = vmul.f32 %v6072, %v6080
      %v6082 = vadd.f32 %v6081, 1.1283791
      %v6083 = vmul.f32 %v5977, %v6082
      %v6084 = vmul.f32 %v6072, 3.8918573e-05
      %v6085 = vadd.f32 %v6084, 0.001143296
      %v6086 = vmul.f32 %v6072, %v6085
      %v6087 = vadd.f32 %v6086, 0.014752088
      %v6088 = vmul.f32 %v6072, %v6087
      %v6089 = vadd.f32 %v6088, 0.112945676
      %v6090 = vmul.f32 %v6072, %v6089
      %v6091 = vadd.f32 %v6090, 0.4994258
      %v6092 = vmul.f32 %v6072, %v6091
      %v6093 = vadd.f32 %v6092, 1.0
      %v6094 = vrcp.pop %v6093
      %v6095 = vmul.f32 %v6093, %v6094
      %v6096 = vsub.f32 1.0, %v6095
      %v6097 = vmul.f32 %v6094, %v6096
      %v6098 = vadd.f32 %v6094, %v6097
      %vm6099 = vweird.f32 %v6093
      %vm6100 = vweird.f32 %v6094
      %vm6101 = vmor %vm6099, %vm6100
      %v6102 = vsel %vm6101, %v6094, %v6098
      %v6103 = vand.u32 2147483647, %v6093
      %vm6104 = vcmp.eq.f32.partialorder %v6103, 8.507059e+37
      %v6105 = vand.u32 %v6093, 2147483648
      %v6106 = vor.u32 1.1754944e-38, %v6105
      %v6107 = vsel %vm6104, %v6106, %v6102
      %v6108 = vmul.f32 %v6083, %v6107
      %v6109 = vmin.f32 %v6108, 1.0
      %v6110 = vmax.f32 %v6109, -1.0
      %v6111 = vmul.f32 %v5978, %v5978
      %v6112 = vmin.f32 16.0, %v6111
      %v6113 = vmul.f32 %v6112, 2.1237322e-06
      %v6114 = vadd.f32 %v6113, 0.00028619796
      %v6115 = vmul.f32 %v6112, %v6114
      %v6116 = vadd.f32 %v6115, 0.0036580483
      %v6117 = vmul.f32 %v6112, %v6116
      %v6118 = vadd.f32 %v6117, 0.05243302
      %v6119 = vmul.f32 %v6112, %v6118
      %v6120 = vadd.f32 %v6119, 0.18741608
      %v6121 = vmul.f32 %v6112, %v6120
      %v6122 = vadd.f32 %v6121, 1.1283791
      %v6123 = vmul.f32 %v5978, %v6122
      %v6124 = vmul.f32 %v6112, 3.8918573e-05
      %v6125 = vadd.f32 %v6124, 0.001143296
      %v6126 = vmul.f32 %v6112, %v6125
      %v6127 = vadd.f32 %v6126, 0.014752088
      %v6128 = vmul.f32 %v6112, %v6127
      %v6129 = vadd.f32 %v6128, 0.112945676
      %v6130 = vmul.f32 %v6112, %v6129
      %v6131 = vadd.f32 %v6130, 0.4994258
      %v6132 = vmul.f32 %v6112, %v6131
      %v6133 = vadd.f32 %v6132, 1.0
      %v6134 = vrcp.pop %v6133
      %v6135 = vmul.f32 %v6133, %v6134
      %v6136 = vsub.f32 1.0, %v6135
      %v6137 = vmul.f32 %v6134, %v6136
      %v6138 = vadd.f32 %v6134, %v6137
      %vm6139 = vweird.f32 %v6133
      %vm6140 = vweird.f32 %v6134
      %vm6141 = vmor %vm6139, %vm6140
      %v6142 = vsel %vm6141, %v6134, %v6138
      %v6143 = vand.u32 2147483647, %v6133
      %vm6144 = vcmp.eq.f32.partialorder %v6143, 8.507059e+37
      %v6145 = vand.u32 %v6133, 2147483648
      %v6146 = vor.u32 1.1754944e-38, %v6145
      %v6147 = vsel %vm6144, %v6146, %v6142
      %v6148 = vmul.f32 %v6123, %v6147
      %v6149 = vmin.f32 %v6148, 1.0
      %v6150 = vmax.f32 %v6149, -1.0
      %v6151 = vmul.f32 %v5979, %v5979
      %v6152 = vmin.f32 16.0, %v6151
      %v6153 = vmul.f32 %v6152, 2.1237322e-06
      %v6154 = vadd.f32 %v6153, 0.00028619796
      %v6155 = vmul.f32 %v6152, %v6154
      %v6156 = vadd.f32 %v6155, 0.0036580483
      %v6157 = vmul.f32 %v6152, %v6156
      %v6158 = vadd.f32 %v6157, 0.05243302
      %v6159 = vmul.f32 %v6152, %v6158
      %v6160 = vadd.f32 %v6159, 0.18741608
      %v6161 = vmul.f32 %v6152, %v6160
      %v6162 = vadd.f32 %v6161, 1.1283791
      %v6163 = vmul.f32 %v5979, %v6162
      %v6164 = vmul.f32 %v6152, 3.8918573e-05
      %v6165 = vadd.f32 %v6164, 0.001143296
      %v6166 = vmul.f32 %v6152, %v6165
      %v6167 = vadd.f32 %v6166, 0.014752088
      %v6168 = vmul.f32 %v6152, %v6167
      %v6169 = vadd.f32 %v6168, 0.112945676
      %v6170 = vmul.f32 %v6152, %v6169
      %v6171 = vadd.f32 %v6170, 0.4994258
      %v6172 = vmul.f32 %v6152, %v6171
      %v6173 = vadd.f32 %v6172, 1.0
      %v6174 = vrcp.pop %v6173
      %v6175 = vmul.f32 %v6173, %v6174
      %v6176 = vsub.f32 1.0, %v6175
      %v6177 = vmul.f32 %v6174, %v6176
      %v6178 = vadd.f32 %v6174, %v6177
      %vm6179 = vweird.f32 %v6173
      %vm6180 = vweird.f32 %v6174
      %vm6181 = vmor %vm6179, %vm6180
      %v6182 = vsel %vm6181, %v6174, %v6178
      %v6183 = vand.u32 2147483647, %v6173
      %vm6184 = vcmp.eq.f32.partialorder %v6183, 8.507059e+37
      %v6185 = vand.u32 %v6173, 2147483648
      %v6186 = vor.u32 1.1754944e-38, %v6185
      %v6187 = vsel %vm6184, %v6186, %v6182
      %v6188 = vmul.f32 %v6163, %v6187
      %v6189 = vmin.f32 %v6188, 1.0
      %v6190 = vmax.f32 %v6189, -1.0
      %v6191 = vmul.f32 %v5980, %v5980
      %v6192 = vmin.f32 16.0, %v6191
      %v6193 = vmul.f32 %v6192, 2.1237322e-06
      %v6194 = vadd.f32 %v6193, 0.00028619796
      %v6195 = vmul.f32 %v6192, %v6194
      %v6196 = vadd.f32 %v6195, 0.0036580483
      %v6197 = vmul.f32 %v6192, %v6196
      %v6198 = vadd.f32 %v6197, 0.05243302
      %v6199 = vmul.f32 %v6192, %v6198
      %v6200 = vadd.f32 %v6199, 0.18741608
      %v6201 = vmul.f32 %v6192, %v6200
      %v6202 = vadd.f32 %v6201, 1.1283791
      %v6203 = vmul.f32 %v5980, %v6202
      %v6204 = vmul.f32 %v6192, 3.8918573e-05
      %v6205 = vadd.f32 %v6204, 0.001143296
      %v6206 = vmul.f32 %v6192, %v6205
      %v6207 = vadd.f32 %v6206, 0.014752088
      %v6208 = vmul.f32 %v6192, %v6207
      %v6209 = vadd.f32 %v6208, 0.112945676
      %v6210 = vmul.f32 %v6192, %v6209
      %v6211 = vadd.f32 %v6210, 0.4994258
      %v6212 = vmul.f32 %v6192, %v6211
      %v6213 = vadd.f32 %v6212, 1.0
      %v6214 = vrcp.pop %v6213
      %v6215 = vmul.f32 %v6213, %v6214
      %v6216 = vsub.f32 1.0, %v6215
      %v6217 = vmul.f32 %v6214, %v6216
      %v6218 = vadd.f32 %v6214, %v6217
      %vm6219 = vweird.f32 %v6213
      %vm6220 = vweird.f32 %v6214
      %vm6221 = vmor %vm6219, %vm6220
      %v6222 = vsel %vm6221, %v6214, %v6218
      %v6223 = vand.u32 2147483647, %v6213
      %vm6224 = vcmp.eq.f32.partialorder %v6223, 8.507059e+37
      %v6225 = vand.u32 %v6213, 2147483648
      %v6226 = vor.u32 1.1754944e-38, %v6225
      %v6227 = vsel %vm6224, %v6226, %v6222
      %v6228 = vmul.f32 %v6203, %v6227
      %v6229 = vmin.f32 %v6228, 1.0
      %v6230 = vmax.f32 %v6229, -1.0
      %v6231 = vmul.f32 %v5981, %v5981
      %v6232 = vmin.f32 16.0, %v6231
      %v6233 = vmul.f32 %v6232, 2.1237322e-06
      %v6234 = vadd.f32 %v6233, 0.00028619796
      %v6235 = vmul.f32 %v6232, %v6234
      %v6236 = vadd.f32 %v6235, 0.0036580483
      %v6237 = vmul.f32 %v6232, %v6236
      %v6238 = vadd.f32 %v6237, 0.05243302
      %v6239 = vmul.f32 %v6232, %v6238
      %v6240 = vadd.f32 %v6239, 0.18741608
      %v6241 = vmul.f32 %v6232, %v6240
      %v6242 = vadd.f32 %v6241, 1.1283791
      %v6243 = vmul.f32 %v5981, %v6242
      %v6244 = vmul.f32 %v6232, 3.8918573e-05
      %v6245 = vadd.f32 %v6244, 0.001143296
      %v6246 = vmul.f32 %v6232, %v6245
      %v6247 = vadd.f32 %v6246, 0.014752088
      %v6248 = vmul.f32 %v6232, %v6247
      %v6249 = vadd.f32 %v6248, 0.112945676
      %v6250 = vmul.f32 %v6232, %v6249
      %v6251 = vadd.f32 %v6250, 0.4994258
      %v6252 = vmul.f32 %v6232, %v6251
      %v6253 = vadd.f32 %v6252, 1.0
      %v6254 = vrcp.pop %v6253
      %v6255 = vmul.f32 %v6253, %v6254
      %v6256 = vsub.f32 1.0, %v6255
      %v6257 = vmul.f32 %v6254, %v6256
      %v6258 = vadd.f32 %v6254, %v6257
      %vm6259 = vweird.f32 %v6253
      %vm6260 = vweird.f32 %v6254
      %vm6261 = vmor %vm6259, %vm6260
      %v6262 = vsel %vm6261, %v6254, %v6258
      %v6263 = vand.u32 2147483647, %v6253
      %vm6264 = vcmp.eq.f32.partialorder %v6263, 8.507059e+37
      %v6265 = vand.u32 %v6253, 2147483648
      %v6266 = vor.u32 1.1754944e-38, %v6265
      %v6267 = vsel %vm6264, %v6266, %v6262
      %v6268 = vmul.f32 %v6243, %v6267
      %v6269 = vmin.f32 %v6268, 1.0
      %v6270 = vmax.f32 %v6269, -1.0
      %v6271 = vmul.f32 %v5982, %v5982
      %v6272 = vmin.f32 16.0, %v6271
      %v6273 = vmul.f32 %v6272, 2.1237322e-06
      %v6274 = vadd.f32 %v6273, 0.00028619796
      %v6275 = vmul.f32 %v6272, %v6274
      %v6276 = vadd.f32 %v6275, 0.0036580483
      %v6277 = vmul.f32 %v6272, %v6276
      %v6278 = vadd.f32 %v6277, 0.05243302
      %v6279 = vmul.f32 %v6272, %v6278
      %v6280 = vadd.f32 %v6279, 0.18741608
      %v6281 = vmul.f32 %v6272, %v6280
      %v6282 = vadd.f32 %v6281, 1.1283791
      %v6283 = vmul.f32 %v5982, %v6282
      %v6284 = vmul.f32 %v6272, 3.8918573e-05
      %v6285 = vadd.f32 %v6284, 0.001143296
      %v6286 = vmul.f32 %v6272, %v6285
      %v6287 = vadd.f32 %v6286, 0.014752088
      %v6288 = vmul.f32 %v6272, %v6287
      %v6289 = vadd.f32 %v6288, 0.112945676
      %v6290 = vmul.f32 %v6272, %v6289
      %v6291 = vadd.f32 %v6290, 0.4994258
      %v6292 = vmul.f32 %v6272, %v6291
      %v6293 = vadd.f32 %v6292, 1.0
      %v6294 = vrcp.pop %v6293
      %v6295 = vmul.f32 %v6293, %v6294
      %v6296 = vsub.f32 1.0, %v6295
      %v6297 = vmul.f32 %v6294, %v6296
      %v6298 = vadd.f32 %v6294, %v6297
      %vm6299 = vweird.f32 %v6293
      %vm6300 = vweird.f32 %v6294
      %vm6301 = vmor %vm6299, %vm6300
      %v6302 = vsel %vm6301, %v6294, %v6298
      %v6303 = vand.u32 2147483647, %v6293
      %vm6304 = vcmp.eq.f32.partialorder %v6303, 8.507059e+37
      %v6305 = vand.u32 %v6293, 2147483648
      %v6306 = vor.u32 1.1754944e-38, %v6305
      %v6307 = vsel %vm6304, %v6306, %v6302
      %v6308 = vmul.f32 %v6283, %v6307
      %v6309 = vmin.f32 %v6308, 1.0
      %v6310 = vmax.f32 %v6309, -1.0
      %v6311 = vmul.f32 %v5983, %v5983
      %v6312 = vmin.f32 16.0, %v6311
      %v6313 = vmul.f32 %v6312, 2.1237322e-06
      %v6314 = vadd.f32 %v6313, 0.00028619796
      %v6315 = vmul.f32 %v6312, %v6314
      %v6316 = vadd.f32 %v6315, 0.0036580483
      %v6317 = vmul.f32 %v6312, %v6316
      %v6318 = vadd.f32 %v6317, 0.05243302
      %v6319 = vmul.f32 %v6312, %v6318
      %v6320 = vadd.f32 %v6319, 0.18741608
      %v6321 = vmul.f32 %v6312, %v6320
      %v6322 = vadd.f32 %v6321, 1.1283791
      %v6323 = vmul.f32 %v5983, %v6322
      %v6324 = vmul.f32 %v6312, 3.8918573e-05
      %v6325 = vadd.f32 %v6324, 0.001143296
      %v6326 = vmul.f32 %v6312, %v6325
      %v6327 = vadd.f32 %v6326, 0.014752088
      %v6328 = vmul.f32 %v6312, %v6327
      %v6329 = vadd.f32 %v6328, 0.112945676
      %v6330 = vmul.f32 %v6312, %v6329
      %v6331 = vadd.f32 %v6330, 0.4994258
      %v6332 = vmul.f32 %v6312, %v6331
      %v6333 = vadd.f32 %v6332, 1.0
      %v6334 = vrcp.pop %v6333
      %v6335 = vmul.f32 %v6333, %v6334
      %v6336 = vsub.f32 1.0, %v6335
      %v6337 = vmul.f32 %v6334, %v6336
      %v6338 = vadd.f32 %v6334, %v6337
      %vm6339 = vweird.f32 %v6333
      %vm6340 = vweird.f32 %v6334
      %vm6341 = vmor %vm6339, %vm6340
      %v6342 = vsel %vm6341, %v6334, %v6338
      %v6343 = vand.u32 2147483647, %v6333
      %vm6344 = vcmp.eq.f32.partialorder %v6343, 8.507059e+37
      %v6345 = vand.u32 %v6333, 2147483648
      %v6346 = vor.u32 1.1754944e-38, %v6345
      %v6347 = vsel %vm6344, %v6346, %v6342
      %v6348 = vmul.f32 %v6323, %v6347
      %v6349 = vmin.f32 %v6348, 1.0
      %v6350 = vmax.f32 %v6349, -1.0
      %v6351 = vmul.f32 %v5984, %v5984
      %v6352 = vmin.f32 16.0, %v6351
      %v6353 = vmul.f32 %v6352, 2.1237322e-06
      %v6354 = vadd.f32 %v6353, 0.00028619796
      %v6355 = vmul.f32 %v6352, %v6354
      %v6356 = vadd.f32 %v6355, 0.0036580483
      %v6357 = vmul.f32 %v6352, %v6356
      %v6358 = vadd.f32 %v6357, 0.05243302
      %v6359 = vmul.f32 %v6352, %v6358
      %v6360 = vadd.f32 %v6359, 0.18741608
      %v6361 = vmul.f32 %v6352, %v6360
      %v6362 = vadd.f32 %v6361, 1.1283791
      %v6363 = vmul.f32 %v5984, %v6362
      %v6364 = vmul.f32 %v6352, 3.8918573e-05
      %v6365 = vadd.f32 %v6364, 0.001143296
      %v6366 = vmul.f32 %v6352, %v6365
      %v6367 = vadd.f32 %v6366, 0.014752088
      %v6368 = vmul.f32 %v6352, %v6367
      %v6369 = vadd.f32 %v6368, 0.112945676
      %v6370 = vmul.f32 %v6352, %v6369
      %v6371 = vadd.f32 %v6370, 0.4994258
      %v6372 = vmul.f32 %v6352, %v6371
      %v6373 = vadd.f32 %v6372, 1.0
      %v6374 = vrcp.pop %v6373
      %v6375 = vmul.f32 %v6373, %v6374
      %v6376 = vsub.f32 1.0, %v6375
      %v6377 = vmul.f32 %v6374, %v6376
      %v6378 = vadd.f32 %v6374, %v6377
      %vm6379 = vweird.f32 %v6373
      %vm6380 = vweird.f32 %v6374
      %vm6381 = vmor %vm6379, %vm6380
      %v6382 = vsel %vm6381, %v6374, %v6378
      %v6383 = vand.u32 2147483647, %v6373
      %vm6384 = vcmp.eq.f32.partialorder %v6383, 8.507059e+37
      %v6385 = vand.u32 %v6373, 2147483648
      %v6386 = vor.u32 1.1754944e-38, %v6385
      %v6387 = vsel %vm6384, %v6386, %v6382
      %v6388 = vmul.f32 %v6363, %v6387
      %v6389 = vmin.f32 %v6388, 1.0
      %v6390 = vmax.f32 %v6389, -1.0
      %v6391 = vmul.f32 %v5985, %v5985
      %v6392 = vmin.f32 16.0, %v6391
      %v6393 = vmul.f32 %v6392, 2.1237322e-06
      %v6394 = vadd.f32 %v6393, 0.00028619796
      %v6395 = vmul.f32 %v6392, %v6394
      %v6396 = vadd.f32 %v6395, 0.0036580483
      %v6397 = vmul.f32 %v6392, %v6396
      %v6398 = vadd.f32 %v6397, 0.05243302
      %v6399 = vmul.f32 %v6392, %v6398
      %v6400 = vadd.f32 %v6399, 0.18741608
      %v6401 = vmul.f32 %v6392, %v6400
      %v6402 = vadd.f32 %v6401, 1.1283791
      %v6403 = vmul.f32 %v5985, %v6402
      %v6404 = vmul.f32 %v6392, 3.8918573e-05
      %v6405 = vadd.f32 %v6404, 0.001143296
      %v6406 = vmul.f32 %v6392, %v6405
      %v6407 = vadd.f32 %v6406, 0.014752088
      %v6408 = vmul.f32 %v6392, %v6407
      %v6409 = vadd.f32 %v6408, 0.112945676
      %v6410 = vmul.f32 %v6392, %v6409
      %v6411 = vadd.f32 %v6410, 0.4994258
      %v6412 = vmul.f32 %v6392, %v6411
      %v6413 = vadd.f32 %v6412, 1.0
      %v6414 = vrcp.pop %v6413
      %v6415 = vmul.f32 %v6413, %v6414
      %v6416 = vsub.f32 1.0, %v6415
      %v6417 = vmul.f32 %v6414, %v6416
      %v6418 = vadd.f32 %v6414, %v6417
      %vm6419 = vweird.f32 %v6413
      %vm6420 = vweird.f32 %v6414
      %vm6421 = vmor %vm6419, %vm6420
      %v6422 = vsel %vm6421, %v6414, %v6418
      %v6423 = vand.u32 2147483647, %v6413
      %vm6424 = vcmp.eq.f32.partialorder %v6423, 8.507059e+37
      %v6425 = vand.u32 %v6413, 2147483648
      %v6426 = vor.u32 1.1754944e-38, %v6425
      %v6427 = vsel %vm6424, %v6426, %v6422
      %v6428 = vmul.f32 %v6403, %v6427
      %v6429 = vmin.f32 %v6428, 1.0
      %v6430 = vmax.f32 %v6429, -1.0
      %v6431 = vmul.f32 %v5986, %v5986
      %v6432 = vmin.f32 16.0, %v6431
      %v6433 = vmul.f32 %v6432, 2.1237322e-06
      %v6434 = vadd.f32 %v6433, 0.00028619796
      %v6435 = vmul.f32 %v6432, %v6434
      %v6436 = vadd.f32 %v6435, 0.0036580483
      %v6437 = vmul.f32 %v6432, %v6436
      %v6438 = vadd.f32 %v6437, 0.05243302
      %v6439 = vmul.f32 %v6432, %v6438
      %v6440 = vadd.f32 %v6439, 0.18741608
      %v6441 = vmul.f32 %v6432, %v6440
      %v6442 = vadd.f32 %v6441, 1.1283791
      %v6443 = vmul.f32 %v5986, %v6442
      %v6444 = vmul.f32 %v6432, 3.8918573e-05
      %v6445 = vadd.f32 %v6444, 0.001143296
      %v6446 = vmul.f32 %v6432, %v6445
      %v6447 = vadd.f32 %v6446, 0.014752088
      %v6448 = vmul.f32 %v6432, %v6447
      %v6449 = vadd.f32 %v6448, 0.112945676
      %v6450 = vmul.f32 %v6432, %v6449
      %v6451 = vadd.f32 %v6450, 0.4994258
      %v6452 = vmul.f32 %v6432, %v6451
      %v6453 = vadd.f32 %v6452, 1.0
      %v6454 = vrcp.pop %v6453
      %v6455 = vmul.f32 %v6453, %v6454
      %v6456 = vsub.f32 1.0, %v6455
      %v6457 = vmul.f32 %v6454, %v6456
      %v6458 = vadd.f32 %v6454, %v6457
      %vm6459 = vweird.f32 %v6453
      %vm6460 = vweird.f32 %v6454
      %vm6461 = vmor %vm6459, %vm6460
      %v6462 = vsel %vm6461, %v6454, %v6458
      %v6463 = vand.u32 2147483647, %v6453
      %vm6464 = vcmp.eq.f32.partialorder %v6463, 8.507059e+37
      %v6465 = vand.u32 %v6453, 2147483648
      %v6466 = vor.u32 1.1754944e-38, %v6465
      %v6467 = vsel %vm6464, %v6466, %v6462
      %v6468 = vmul.f32 %v6443, %v6467
      %v6469 = vmin.f32 %v6468, 1.0
      %v6470 = vmax.f32 %v6469, -1.0
      %v6471 = vmul.f32 %v5987, %v5987
      %v6472 = vmin.f32 16.0, %v6471
      %v6473 = vmul.f32 %v6472, 2.1237322e-06
      %v6474 = vadd.f32 %v6473, 0.00028619796
      %v6475 = vmul.f32 %v6472, %v6474
      %v6476 = vadd.f32 %v6475, 0.0036580483
      %v6477 = vmul.f32 %v6472, %v6476
      %v6478 = vadd.f32 %v6477, 0.05243302
      %v6479 = vmul.f32 %v6472, %v6478
      %v6480 = vadd.f32 %v6479, 0.18741608
      %v6481 = vmul.f32 %v6472, %v6480
      %v6482 = vadd.f32 %v6481, 1.1283791
      %v6483 = vmul.f32 %v5987, %v6482
      %v6484 = vmul.f32 %v6472, 3.8918573e-05
      %v6485 = vadd.f32 %v6484, 0.001143296
      %v6486 = vmul.f32 %v6472, %v6485
      %v6487 = vadd.f32 %v6486, 0.014752088
      %v6488 = vmul.f32 %v6472, %v6487
      %v6489 = vadd.f32 %v6488, 0.112945676
      %v6490 = vmul.f32 %v6472, %v6489
      %v6491 = vadd.f32 %v6490, 0.4994258
      %v6492 = vmul.f32 %v6472, %v6491
      %v6493 = vadd.f32 %v6492, 1.0
      %v6494 = vrcp.pop %v6493
      %v6495 = vmul.f32 %v6493, %v6494
      %v6496 = vsub.f32 1.0, %v6495
      %v6497 = vmul.f32 %v6494, %v6496
      %v6498 = vadd.f32 %v6494, %v6497
      %vm6499 = vweird.f32 %v6493
      %vm6500 = vweird.f32 %v6494
      %vm6501 = vmor %vm6499, %vm6500
      %v6502 = vsel %vm6501, %v6494, %v6498
      %v6503 = vand.u32 2147483647, %v6493
      %vm6504 = vcmp.eq.f32.partialorder %v6503, 8.507059e+37
      %v6505 = vand.u32 %v6493, 2147483648
      %v6506 = vor.u32 1.1754944e-38, %v6505
      %v6507 = vsel %vm6504, %v6506, %v6502
      %v6508 = vmul.f32 %v6483, %v6507
      %v6509 = vmin.f32 %v6508, 1.0
      %v6510 = vmax.f32 %v6509, -1.0
      %v6511 = vmul.f32 %v5988, %v5988
      %v6512 = vmin.f32 16.0, %v6511
      %v6513 = vmul.f32 %v6512, 2.1237322e-06
      %v6514 = vadd.f32 %v6513, 0.00028619796
      %v6515 = vmul.f32 %v6512, %v6514
      %v6516 = vadd.f32 %v6515, 0.0036580483
      %v6517 = vmul.f32 %v6512, %v6516
      %v6518 = vadd.f32 %v6517, 0.05243302
      %v6519 = vmul.f32 %v6512, %v6518
      %v6520 = vadd.f32 %v6519, 0.18741608
      %v6521 = vmul.f32 %v6512, %v6520
      %v6522 = vadd.f32 %v6521, 1.1283791
      %v6523 = vmul.f32 %v5988, %v6522
      %v6524 = vmul.f32 %v6512, 3.8918573e-05
      %v6525 = vadd.f32 %v6524, 0.001143296
      %v6526 = vmul.f32 %v6512, %v6525
      %v6527 = vadd.f32 %v6526, 0.014752088
      %v6528 = vmul.f32 %v6512, %v6527
      %v6529 = vadd.f32 %v6528, 0.112945676
      %v6530 = vmul.f32 %v6512, %v6529
      %v6531 = vadd.f32 %v6530, 0.4994258
      %v6532 = vmul.f32 %v6512, %v6531
      %v6533 = vadd.f32 %v6532, 1.0
      %v6534 = vrcp.pop %v6533
      %v6535 = vmul.f32 %v6533, %v6534
      %v6536 = vsub.f32 1.0, %v6535
      %v6537 = vmul.f32 %v6534, %v6536
      %v6538 = vadd.f32 %v6534, %v6537
      %vm6539 = vweird.f32 %v6533
      %vm6540 = vweird.f32 %v6534
      %vm6541 = vmor %vm6539, %vm6540
      %v6542 = vsel %vm6541, %v6534, %v6538
      %v6543 = vand.u32 2147483647, %v6533
      %vm6544 = vcmp.eq.f32.partialorder %v6543, 8.507059e+37
      %v6545 = vand.u32 %v6533, 2147483648
      %v6546 = vor.u32 1.1754944e-38, %v6545
      %v6547 = vsel %vm6544, %v6546, %v6542
      %v6548 = vmul.f32 %v6523, %v6547
      %v6549 = vmin.f32 %v6548, 1.0
      %v6550 = vmax.f32 %v6549, -1.0
      %v6551 = vmul.f32 %v5989, %v5989
      %v6552 = vmin.f32 16.0, %v6551
      %v6553 = vmul.f32 %v6552, 2.1237322e-06
      %v6554 = vadd.f32 %v6553, 0.00028619796
      %v6555 = vmul.f32 %v6552, %v6554
      %v6556 = vadd.f32 %v6555, 0.0036580483
      %v6557 = vmul.f32 %v6552, %v6556
      %v6558 = vadd.f32 %v6557, 0.05243302
      %v6559 = vmul.f32 %v6552, %v6558
      %v6560 = vadd.f32 %v6559, 0.18741608
      %v6561 = vmul.f32 %v6552, %v6560
      %v6562 = vadd.f32 %v6561, 1.1283791
      %v6563 = vmul.f32 %v5989, %v6562
      %v6564 = vmul.f32 %v6552, 3.8918573e-05
      %v6565 = vadd.f32 %v6564, 0.001143296
      %v6566 = vmul.f32 %v6552, %v6565
      %v6567 = vadd.f32 %v6566, 0.014752088
      %v6568 = vmul.f32 %v6552, %v6567
      %v6569 = vadd.f32 %v6568, 0.112945676
      %v6570 = vmul.f32 %v6552, %v6569
      %v6571 = vadd.f32 %v6570, 0.4994258
      %v6572 = vmul.f32 %v6552, %v6571
      %v6573 = vadd.f32 %v6572, 1.0
      %v6574 = vrcp.pop %v6573
      %v6575 = vmul.f32 %v6573, %v6574
      %v6576 = vsub.f32 1.0, %v6575
      %v6577 = vmul.f32 %v6574, %v6576
      %v6578 = vadd.f32 %v6574, %v6577
      %vm6579 = vweird.f32 %v6573
      %vm6580 = vweird.f32 %v6574
      %vm6581 = vmor %vm6579, %vm6580
      %v6582 = vsel %vm6581, %v6574, %v6578
      %v6583 = vand.u32 2147483647, %v6573
      %vm6584 = vcmp.eq.f32.partialorder %v6583, 8.507059e+37
      %v6585 = vand.u32 %v6573, 2147483648
      %v6586 = vor.u32 1.1754944e-38, %v6585
      %v6587 = vsel %vm6584, %v6586, %v6582
      %v6588 = vmul.f32 %v6563, %v6587
      %v6589 = vmin.f32 %v6588, 1.0
      %v6590 = vmax.f32 %v6589, -1.0
      %v6591 = vmul.f32 %v5990, %v5990
      %v6592 = vmin.f32 16.0, %v6591
      %v6593 = vmul.f32 %v6592, 2.1237322e-06
      %v6594 = vadd.f32 %v6593, 0.00028619796
      %v6595 = vmul.f32 %v6592, %v6594
      %v6596 = vadd.f32 %v6595, 0.0036580483
      %v6597 = vmul.f32 %v6592, %v6596
      %v6598 = vadd.f32 %v6597, 0.05243302
      %v6599 = vmul.f32 %v6592, %v6598
      %v6600 = vadd.f32 %v6599, 0.18741608
      %v6601 = vmul.f32 %v6592, %v6600
      %v6602 = vadd.f32 %v6601, 1.1283791
      %v6603 = vmul.f32 %v5990, %v6602
      %v6604 = vmul.f32 %v6592, 3.8918573e-05
      %v6605 = vadd.f32 %v6604, 0.001143296
      %v6606 = vmul.f32 %v6592, %v6605
      %v6607 = vadd.f32 %v6606, 0.014752088
      %v6608 = vmul.f32 %v6592, %v6607
      %v6609 = vadd.f32 %v6608, 0.112945676
      %v6610 = vmul.f32 %v6592, %v6609
      %v6611 = vadd.f32 %v6610, 0.4994258
      %v6612 = vmul.f32 %v6592, %v6611
      %v6613 = vadd.f32 %v6612, 1.0
      %v6614 = vrcp.pop %v6613
      %v6615 = vmul.f32 %v6613, %v6614
      %v6616 = vsub.f32 1.0, %v6615
      %v6617 = vmul.f32 %v6614, %v6616
      %v6618 = vadd.f32 %v6614, %v6617
      %vm6619 = vweird.f32 %v6613
      %vm6620 = vweird.f32 %v6614
      %vm6621 = vmor %vm6619, %vm6620
      %v6622 = vsel %vm6621, %v6614, %v6618
      %v6623 = vand.u32 2147483647, %v6613
      %vm6624 = vcmp.eq.f32.partialorder %v6623, 8.507059e+37
      %v6625 = vand.u32 %v6613, 2147483648
      %v6626 = vor.u32 1.1754944e-38, %v6625
      %v6627 = vsel %vm6624, %v6626, %v6622
      %v6628 = vmul.f32 %v6603, %v6627
      %v6629 = vmin.f32 %v6628, 1.0
      %v6630 = vmax.f32 %v6629, -1.0
      %v6631 = vadd.f32 %v6030, 1.0
      %v6632 = vadd.f32 %v6070, 1.0
      %v6633 = vadd.f32 %v6110, 1.0
      %v6634 = vadd.f32 %v6150, 1.0
      %v6635 = vadd.f32 %v6190, 1.0
      %v6636 = vadd.f32 %v6230, 1.0
      %v6637 = vadd.f32 %v6270, 1.0
      %v6638 = vadd.f32 %v6310, 1.0
      %v6639 = vadd.f32 %v6350, 1.0
      %v6640 = vadd.f32 %v6390, 1.0
      %v6641 = vadd.f32 %v6430, 1.0
      %v6642 = vadd.f32 %v6470, 1.0
      %v6643 = vadd.f32 %v6510, 1.0
      %v6644 = vadd.f32 %v6550, 1.0
      %v6645 = vadd.f32 %v6590, 1.0
      %v6646 = vadd.f32 %v6630, 1.0
      %v6647 = vmul.f32 %v5959, %v6631
      %v6648 = vmul.f32 %v5960, %v6632
      %v6649 = vmul.f32 %v5961, %v6633
      %v6650 = vmul.f32 %v5962, %v6634
      %v6651 = vmul.f32 %v5963, %v6635
      %v6652 = vmul.f32 %v5964, %v6636
      %v6653 = vmul.f32 %v5965, %v6637
      %v6654 = vmul.f32 %v5966, %v6638
      %v6655 = vmul.f32 %v5967, %v6639
      %v6656 = vmul.f32 %v5968, %v6640
      %v6657 = vmul.f32 %v5969, %v6641
      %v6658 = vmul.f32 %v5970, %v6642
      %v6659 = vmul.f32 %v5971, %v6643
      %v6660 = vmul.f32 %v5972, %v6644
      %v6661 = vmul.f32 %v5973, %v6645
      %v6662 = vmul.f32 %v5974, %v6646
      %v6663 = vmul.f32 %v6647, %v5658
      %v6664 = vmul.f32 %v6648, %v5659
      %v6665 = vmul.f32 %v6649, %v5660
      %v6666 = vmul.f32 %v6650, %v5661
      %v6667 = vmul.f32 %v6651, %v5662
      %v6668 = vmul.f32 %v6652, %v5663
      %v6669 = vmul.f32 %v6653, %v5664
      %v6670 = vmul.f32 %v6654, %v5665
      %v6671 = vmul.f32 %v6655, %v5658
      %v6672 = vmul.f32 %v6656, %v5659
      %v6673 = vmul.f32 %v6657, %v5660
      %v6674 = vmul.f32 %v6658, %v5661
      %v6675 = vmul.f32 %v6659, %v5662
      %v6676 = vmul.f32 %v6660, %v5663
      %v6677 = vmul.f32 %v6661, %v5664
      %v6678 = vmul.f32 %v6662, %v5665
      %v6679 = vmul.f32 %v6663, %v6647
      %v6680 = vmul.f32 %v6664, %v6648
      %v6681 = vmul.f32 %v6665, %v6649
      %v6682 = vmul.f32 %v6666, %v6650
      %v6683 = vmul.f32 %v6667, %v6651
      %v6684 = vmul.f32 %v6668, %v6652
      %v6685 = vmul.f32 %v6669, %v6653
      %v6686 = vmul.f32 %v6670, %v6654
      %v6687 = vmul.f32 %v6671, %v6655
      %v6688 = vmul.f32 %v6672, %v6656
      %v6689 = vmul.f32 %v6673, %v6657
      %v6690 = vmul.f32 %v6674, %v6658
      %v6691 = vmul.f32 %v6675, %v6659
      %v6692 = vmul.f32 %v6676, %v6660
      %v6693 = vmul.f32 %v6677, %v6661
      %v6694 = vmul.f32 %v6678, %v6662
      %v6695 = vadd.f32 %v6679, %v6680
      %v6696 = vadd.f32 %v6695, %v6681
      %v6697 = vadd.f32 %v6696, %v6682
      %v6698 = vadd.f32 %v6697, %v6683
      %v6699 = vadd.f32 %v6698, %v6684
      %v6700 = vadd.f32 %v6699, %v6685
      %v6701 = vadd.f32 %v6700, %v6686
      %6702 = vadd.xlane.f32.xlu0 %v6701
      %v6703 = vpop.xlane.xlu0 %6702
      %v6704 = vadd.f32 %v6687, %v6688
      %v6705 = vadd.f32 %v6704, %v6689
      %v6706 = vadd.f32 %v6705, %v6690
      %v6707 = vadd.f32 %v6706, %v6691
      %v6708 = vadd.f32 %v6707, %v6692
      %v6709 = vadd.f32 %v6708, %v6693
      %v6710 = vadd.f32 %v6709, %v6694
      %6711 = vadd.xlane.f32.xlu0 %v6710
      %v6712 = vpop.xlane.xlu0 %6711
      %v6713 = vrsqrt.pop %v6703
      %v6714 = vmul.f32 %v6713, %v6703
      %v6715 = vmul.f32 %v6714, %v6713
      %v6716 = vmul.f32 0.5, %v6715
      %v6717 = vsub.f32 1.5, %v6716
      %v6718 = vmul.f32 %v6713, %v6717
      %v6719 = vmul.f32 %v6703, %v6718
      %vm6720 = vcmp.eq.f32.partialorder %v6703, inf
      %v6721 = vsel %vm6720, %v6703, %v6719
      %vm6722 = vcmp.eq.f32.partialorder %v6703, 0.0
      %v6723 = vand.u32 %v6703, 2147483648
      %v6724 = vsel %vm6722, %v6723, %v6721
      %v6725 = vrsqrt.pop %v6712
      %v6726 = vmul.f32 %v6725, %v6712
      %v6727 = vmul.f32 %v6726, %v6725
      %v6728 = vmul.f32 0.5, %v6727
      %v6729 = vsub.f32 1.5, %v6728
      %v6730 = vmul.f32 %v6725, %v6729
      %v6731 = vmul.f32 %v6712, %v6730
      %vm6732 = vcmp.eq.f32.partialorder %v6712, inf
      %v6733 = vsel %vm6732, %v6712, %v6731
      %vm6734 = vcmp.eq.f32.partialorder %v6712, 0.0
      %v6735 = vand.u32 %v6712, 2147483648
      %v6736 = vsel %vm6734, %v6735, %v6733
      %v6737 = vadd.f32 %v6724, %v6736
      %v6738 = vrot.slane %v6737, 4
      %v6739 = vadd.f32 %v6737, %v6738
      %v6740 = vrot.slane %v6739, 2
      %v6741 = vadd.f32 %v6739, %v6740
      %v6742 = vrot.slane %v6741, 1
      %v6743 = vadd.f32 %v6741, %v6742
      %v6744 = vrcp.pop 16.0
      %v6745 = vmul.f32 16.0, %v6744
      %v6746 = vsub.f32 1.0, %v6745
      %v6747 = vmul.f32 %v6744, %v6746
      %v6748 = vadd.f32 %v6744, %v6747
      %vm6749 = vweird.f32 %v6744
      %v6750 = vsel %vm6749, %v6744, %v6748
      %v6751 = vmul.f32 %v6743, %v6750
      %v6752 = vadd.f32 %v6751, 1e-06
      %v6753 = vld [vmem:[%s21] sm:$0xff]
      %v6754 = vld [vmem:[%s21 + $0x8] sm:$0xff]
      %v6755 = vrcp.pop %v6752
      %v6756 = vmul.f32 %v6752, %v6755
      %v6757 = vsub.f32 1.0, %v6756
      %v6758 = vmul.f32 %v6755, %v6757
      %v6759 = vadd.f32 %v6755, %v6758
      %vm6760 = vweird.f32 %v6752
      %vm6761 = vweird.f32 %v6755
      %vm6762 = vmor %vm6760, %vm6761
      %v6763 = vsel %vm6762, %v6755, %v6759
      %v6764 = vand.u32 2147483647, %v6752
      %vm6765 = vcmp.eq.f32.partialorder %v6764, 8.507059e+37
      %v6766 = vand.u32 %v6752, 2147483648
      %v6767 = vor.u32 1.1754944e-38, %v6766
      %v6768 = vsel %vm6765, %v6767, %v6763
      %v6769 = vmul.f32 %v6724, %v6768
      %v6770 = vmul.f32 %v6736, %v6768
      %v6771 = vmul.f32 %v6753, %v6769
      %v6772 = vmul.f32 %v6754, %v6770
      %v6773 = vadd.f32 %v6771, 1.0
      %v6774 = vadd.f32 %v6772, 1.0
      %6776 = vset.pattern.permute.xlu0 0
      %6777 = vperm.xlu0 %6776, %v6773
      %v6778 = vpop.permute.xlu0 %6777
      %6781 = vset.pattern.permute.xlu0 0
      %6782 = vperm.xlu0 %6781, %v6774
      %v6783 = vpop.permute.xlu0 %6782
      %v6785 = vmul.f32 %v6647, %v6778
      %v6786 = vmul.f32 %v6648, %v6778
      %v6787 = vmul.f32 %v6649, %v6778
      %v6788 = vmul.f32 %v6650, %v6778
      %v6789 = vmul.f32 %v6651, %v6778
      %v6790 = vmul.f32 %v6652, %v6778
      %v6791 = vmul.f32 %v6653, %v6778
      %v6792 = vmul.f32 %v6654, %v6778
      %v6793 = vmul.f32 %v6655, %v6783
      %v6794 = vmul.f32 %v6656, %v6783
      %v6795 = vmul.f32 %v6657, %v6783
      %v6796 = vmul.f32 %v6658, %v6783
      %v6797 = vmul.f32 %v6659, %v6783
      %v6798 = vmul.f32 %v6660, %v6783
      %v6799 = vmul.f32 %v6661, %v6783
      %v6800 = vmul.f32 %v6662, %v6783
      %v6801 = vld [vmem:[%s22] sm:$0xff]
      %v6802 = vld [vmem:[%s22 + $0x8] sm:$0xff]
      %6804 = vset.pattern.permute.xlu0 0
      %6805 = vperm.xlu0 %6804, %v6801
      %v6806 = vpop.permute.xlu0 %6805
      %6809 = vset.pattern.permute.xlu0 0
      %6810 = vperm.xlu0 %6809, %v6802
      %v6811 = vpop.permute.xlu0 %6810
      %v6813 = vadd.f32 %v6785, %v6806
      %v6814 = vadd.f32 %v6786, %v6806
      %v6815 = vadd.f32 %v6787, %v6806
      %v6816 = vadd.f32 %v6788, %v6806
      %v6817 = vadd.f32 %v6789, %v6806
      %v6818 = vadd.f32 %v6790, %v6806
      %v6819 = vadd.f32 %v6791, %v6806
      %v6820 = vadd.f32 %v6792, %v6806
      %v6821 = vadd.f32 %v6793, %v6811
      %v6822 = vadd.f32 %v6794, %v6811
      %v6823 = vadd.f32 %v6795, %v6811
      %v6824 = vadd.f32 %v6796, %v6811
      %v6825 = vadd.f32 %v6797, %v6811
      %v6826 = vadd.f32 %v6798, %v6811
      %v6827 = vadd.f32 %v6799, %v6811
      %v6828 = vadd.f32 %v6800, %v6811
      %v6829 = vld [vmem:[%s23] sm:$0xff]
      %v6830 = vld [vmem:[%s23 + $0x8] sm:$0xff]
      %v6831 = vld [vmem:[%s24] sm:$0xff]
      %v6832 = vld [vmem:[%s24 + $0x8] sm:$0xff]
      %6834 = vset.pattern.permute.xlu0 0
      %6835 = vperm.xlu0 %6834, %v6831
      %v6836 = vpop.permute.xlu0 %6835
      %6839 = vset.pattern.permute.xlu0 0
      %6840 = vperm.xlu0 %6839, %v6832
      %v6841 = vpop.permute.xlu0 %6840
      %vm6843 = vcmask 130048
      %v6845 = vsel %vm6843, %v6829, 0
      %v6848 = vsel %vm6843, %v6830, 0
      %6850 = vmatpush.msra.mxu0 0.0
      %6851 = vmatpush.msra.mxu0 0.0
      %6852 = vmatpush.msra.mxu0 0.0
      %6853 = vmatpush.msra.mxu0 0.0
      %6854 = vmatpush.msra.mxu0 0.0
      %6855 = vmatpush.msra.mxu0 0.0
      %6856 = vmatpush.msra.mxu0 0.0
      %6857 = vmatpush.msra.mxu0 0.0
      %6858 = vmatpush.msra.mxu0 0.0
      %6859 = vmatpush.msra.mxu0 0.0
      %6860 = vmatpush.msra.mxu0 0.0
      %6861 = vmatpush.msra.mxu0 0.0
      %6862 = vmatpush.msra.mxu0 0.0
      %6863 = vmatpush.msra.mxu0 0.0
      %6864 = vmatpush.msra.mxu0 %v6821
      %6865 = vmatpush.msra.mxu0 %v6813
      %6866 = vmatmul.f32.gmra.mxu0 %v6845
      %v6867 = vpop.f32.mrf.mxu0
      %v6868 = vadd.f32 %v6836, %v6867
      %6869 = vmatmul.f32.gmra.mxu0 %v6848
      %v6870 = vpop.f32.mrf.mxu0
      %v6871 = vadd.f32 %v6841, %v6870
      %6872 = vdwg.mxu0
      %6873 = vmatpush.msra.mxu0 0.0
      %6874 = vmatpush.msra.mxu0 0.0
      %6875 = vmatpush.msra.mxu0 0.0
      %6876 = vmatpush.msra.mxu0 0.0
      %6877 = vmatpush.msra.mxu0 0.0
      %6878 = vmatpush.msra.mxu0 0.0
      %6879 = vmatpush.msra.mxu0 0.0
      %6880 = vmatpush.msra.mxu0 0.0
      %6881 = vmatpush.msra.mxu0 0.0
      %6882 = vmatpush.msra.mxu0 0.0
      %6883 = vmatpush.msra.mxu0 0.0
      %6884 = vmatpush.msra.mxu0 0.0
      %6885 = vmatpush.msra.mxu0 0.0
      %6886 = vmatpush.msra.mxu0 0.0
      %6887 = vmatpush.msra.mxu0 %v6822
      %6888 = vmatpush.msra.mxu0 %v6814
      %6889 = vmatmul.f32.gmra.mxu0 %v6845
      %v6890 = vpop.f32.mrf.mxu0
      %v6891 = vadd.f32 %v6836, %v6890
      %6892 = vmatmul.f32.gmra.mxu0 %v6848
      %v6893 = vpop.f32.mrf.mxu0
      %v6894 = vadd.f32 %v6841, %v6893
      %6895 = vdwg.mxu0
      %6896 = vmatpush.msra.mxu0 0.0
      %6897 = vmatpush.msra.mxu0 0.0
      %6898 = vmatpush.msra.mxu0 0.0
      %6899 = vmatpush.msra.mxu0 0.0
      %6900 = vmatpush.msra.mxu0 0.0
      %6901 = vmatpush.msra.mxu0 0.0
      %6902 = vmatpush.msra.mxu0 0.0
      %6903 = vmatpush.msra.mxu0 0.0
      %6904 = vmatpush.msra.mxu0 0.0
      %6905 = vmatpush.msra.mxu0 0.0
      %6906 = vmatpush.msra.mxu0 0.0
      %6907 = vmatpush.msra.mxu0 0.0
      %6908 = vmatpush.msra.mxu0 0.0
      %6909 = vmatpush.msra.mxu0 0.0
      %6910 = vmatpush.msra.mxu0 %v6823
      %6911 = vmatpush.msra.mxu0 %v6815
      %6912 = vmatmul.f32.gmra.mxu0 %v6845
      %v6913 = vpop.f32.mrf.mxu0
      %v6914 = vadd.f32 %v6836, %v6913
      %6915 = vmatmul.f32.gmra.mxu0 %v6848
      %v6916 = vpop.f32.mrf.mxu0
      %v6917 = vadd.f32 %v6841, %v6916
      %6918 = vdwg.mxu0
      %6919 = vmatpush.msra.mxu0 0.0
      %6920 = vmatpush.msra.mxu0 0.0
      %6921 = vmatpush.msra.mxu0 0.0
      %6922 = vmatpush.msra.mxu0 0.0
      %6923 = vmatpush.msra.mxu0 0.0
      %6924 = vmatpush.msra.mxu0 0.0
      %6925 = vmatpush.msra.mxu0 0.0
      %6926 = vmatpush.msra.mxu0 0.0
      %6927 = vmatpush.msra.mxu0 0.0
      %6928 = vmatpush.msra.mxu0 0.0
      %6929 = vmatpush.msra.mxu0 0.0
      %6930 = vmatpush.msra.mxu0 0.0
      %6931 = vmatpush.msra.mxu0 0.0
      %6932 = vmatpush.msra.mxu0 0.0
      %6933 = vmatpush.msra.mxu0 %v6824
      %6934 = vmatpush.msra.mxu0 %v6816
      %6935 = vmatmul.f32.gmra.mxu0 %v6845
      %v6936 = vpop.f32.mrf.mxu0
      %v6937 = vadd.f32 %v6836, %v6936
      %6938 = vmatmul.f32.gmra.mxu0 %v6848
      %v6939 = vpop.f32.mrf.mxu0
      %v6940 = vadd.f32 %v6841, %v6939
      %6941 = vdwg.mxu0
      %6942 = vmatpush.msra.mxu0 0.0
      %6943 = vmatpush.msra.mxu0 0.0
      %6944 = vmatpush.msra.mxu0 0.0
      %6945 = vmatpush.msra.mxu0 0.0
      %6946 = vmatpush.msra.mxu0 0.0
      %6947 = vmatpush.msra.mxu0 0.0
      %6948 = vmatpush.msra.mxu0 0.0
      %6949 = vmatpush.msra.mxu0 0.0
      %6950 = vmatpush.msra.mxu0 0.0
      %6951 = vmatpush.msra.mxu0 0.0
      %6952 = vmatpush.msra.mxu0 0.0
      %6953 = vmatpush.msra.mxu0 0.0
      %6954 = vmatpush.msra.mxu0 0.0
      %6955 = vmatpush.msra.mxu0 0.0
      %6956 = vmatpush.msra.mxu0 %v6825
      %6957 = vmatpush.msra.mxu0 %v6817
      %6958 = vmatmul.f32.gmra.mxu0 %v6845
      %v6959 = vpop.f32.mrf.mxu0
      %v6960 = vadd.f32 %v6836, %v6959
      %6961 = vmatmul.f32.gmra.mxu0 %v6848
      %v6962 = vpop.f32.mrf.mxu0
      %v6963 = vadd.f32 %v6841, %v6962
      %6964 = vdwg.mxu0
      %6965 = vmatpush.msra.mxu0 0.0
      %6966 = vmatpush.msra.mxu0 0.0
      %6967 = vmatpush.msra.mxu0 0.0
      %6968 = vmatpush.msra.mxu0 0.0
      %6969 = vmatpush.msra.mxu0 0.0
      %6970 = vmatpush.msra.mxu0 0.0
      %6971 = vmatpush.msra.mxu0 0.0
      %6972 = vmatpush.msra.mxu0 0.0
      %6973 = vmatpush.msra.mxu0 0.0
      %6974 = vmatpush.msra.mxu0 0.0
      %6975 = vmatpush.msra.mxu0 0.0
      %6976 = vmatpush.msra.mxu0 0.0
      %6977 = vmatpush.msra.mxu0 0.0
      %6978 = vmatpush.msra.mxu0 0.0
      %6979 = vmatpush.msra.mxu0 %v6826
      %6980 = vmatpush.msra.mxu0 %v6818
      %6981 = vmatmul.f32.gmra.mxu0 %v6845
      %v6982 = vpop.f32.mrf.mxu0
      %v6983 = vadd.f32 %v6836, %v6982
      %6984 = vmatmul.f32.gmra.mxu0 %v6848
      %v6985 = vpop.f32.mrf.mxu0
      %v6986 = vadd.f32 %v6841, %v6985
      %6987 = vdwg.mxu0
      %6988 = vmatpush.msra.mxu0 0.0
      %6989 = vmatpush.msra.mxu0 0.0
      %6990 = vmatpush.msra.mxu0 0.0
      %6991 = vmatpush.msra.mxu0 0.0
      %6992 = vmatpush.msra.mxu0 0.0
      %6993 = vmatpush.msra.mxu0 0.0
      %6994 = vmatpush.msra.mxu0 0.0
      %6995 = vmatpush.msra.mxu0 0.0
      %6996 = vmatpush.msra.mxu0 0.0
      %6997 = vmatpush.msra.mxu0 0.0
      %6998 = vmatpush.msra.mxu0 0.0
      %6999 = vmatpush.msra.mxu0 0.0
      %7000 = vmatpush.msra.mxu0 0.0
      %7001 = vmatpush.msra.mxu0 0.0
      %7002 = vmatpush.msra.mxu0 %v6827
      %7003 = vmatpush.msra.mxu0 %v6819
      %7004 = vmatmul.f32.gmra.mxu0 %v6845
      %v7005 = vpop.f32.mrf.mxu0
      %v7006 = vadd.f32 %v6836, %v7005
      %7007 = vmatmul.f32.gmra.mxu0 %v6848
      %v7008 = vpop.f32.mrf.mxu0
      %v7009 = vadd.f32 %v6841, %v7008
      %7010 = vdwg.mxu0
      %7011 = vmatpush.msra.mxu0 0.0
      %7012 = vmatpush.msra.mxu0 0.0
      %7013 = vmatpush.msra.mxu0 0.0
      %7014 = vmatpush.msra.mxu0 0.0
      %7015 = vmatpush.msra.mxu0 0.0
      %7016 = vmatpush.msra.mxu0 0.0
      %7017 = vmatpush.msra.mxu0 0.0
      %7018 = vmatpush.msra.mxu0 0.0
      %7019 = vmatpush.msra.mxu0 0.0
      %7020 = vmatpush.msra.mxu0 0.0
      %7021 = vmatpush.msra.mxu0 0.0
      %7022 = vmatpush.msra.mxu0 0.0
      %7023 = vmatpush.msra.mxu0 0.0
      %7024 = vmatpush.msra.mxu0 0.0
      %7025 = vmatpush.msra.mxu0 %v6828
      %7026 = vmatpush.msra.mxu0 %v6820
      %7027 = vmatmul.f32.gmra.mxu0 %v6845
      %v7028 = vpop.f32.mrf.mxu0
      %v7029 = vadd.f32 %v6836, %v7028
      %7030 = vmatmul.f32.gmra.mxu0 %v6848
      %v7031 = vpop.f32.mrf.mxu0
      %v7032 = vadd.f32 %v6841, %v7031
      %7033 = vdwg.mxu0
      %v7034 = vld [vmem:[%s25] sm:$0xff]
      %v7035 = vld [vmem:[%s25 + $0x8] sm:$0xff]
      %v7036 = vld [vmem:[%s26] sm:$0xff]
      %v7037 = vld [vmem:[%s26 + $0x8] sm:$0xff]
      %7039 = vset.pattern.permute.xlu0 0
      %7040 = vperm.xlu0 %7039, %v7036
      %v7041 = vpop.permute.xlu0 %7040
      %7044 = vset.pattern.permute.xlu0 0
      %7045 = vperm.xlu0 %7044, %v7037
      %v7046 = vpop.permute.xlu0 %7045
      %v7049 = vsel %vm3608, %v7034, 0
      %v7052 = vsel %vm3608, %v7035, 0
      %7054 = vmatpush.msra.mxu0 0.0
      %7055 = vmatpush.msra.mxu0 0.0
      %7056 = vmatpush.msra.mxu0 0.0
      %7057 = vmatpush.msra.mxu0 0.0
      %7058 = vmatpush.msra.mxu0 0.0
      %7059 = vmatpush.msra.mxu0 0.0
      %7060 = vmatpush.msra.mxu0 0.0
      %7061 = vmatpush.msra.mxu0 0.0
      %7062 = vmatpush.msra.mxu0 0.0
      %7063 = vmatpush.msra.mxu0 0.0
      %7064 = vmatpush.msra.mxu0 0.0
      %7065 = vmatpush.msra.mxu0 0.0
      %7066 = vmatpush.msra.mxu0 0.0
      %7067 = vmatpush.msra.mxu0 0.0
      %7068 = vmatpush.msra.mxu0 0.0
      %7069 = vmatpush.msra.mxu0 %v4399
      %7070 = vmatmul.f32.gmra.mxu0 %v7049
      %v7071 = vpop.f32.mrf.mxu0
      %v7072 = vadd.f32 %v7041, %v7071
      %7073 = vmatmul.f32.gmra.mxu0 %v7052
      %v7074 = vpop.f32.mrf.mxu0
      %v7075 = vadd.f32 %v7046, %v7074
      %7076 = vdwg.mxu0
      %7077 = vmatpush.msra.mxu0 0.0
      %7078 = vmatpush.msra.mxu0 0.0
      %7079 = vmatpush.msra.mxu0 0.0
      %7080 = vmatpush.msra.mxu0 0.0
      %7081 = vmatpush.msra.mxu0 0.0
      %7082 = vmatpush.msra.mxu0 0.0
      %7083 = vmatpush.msra.mxu0 0.0
      %7084 = vmatpush.msra.mxu0 0.0
      %7085 = vmatpush.msra.mxu0 0.0
      %7086 = vmatpush.msra.mxu0 0.0
      %7087 = vmatpush.msra.mxu0 0.0
      %7088 = vmatpush.msra.mxu0 0.0
      %7089 = vmatpush.msra.mxu0 0.0
      %7090 = vmatpush.msra.mxu0 0.0
      %7091 = vmatpush.msra.mxu0 0.0
      %7092 = vmatpush.msra.mxu0 %v4400
      %7093 = vmatmul.f32.gmra.mxu0 %v7049
      %v7094 = vpop.f32.mrf.mxu0
      %v7095 = vadd.f32 %v7041, %v7094
      %7096 = vmatmul.f32.gmra.mxu0 %v7052
      %v7097 = vpop.f32.mrf.mxu0
      %v7098 = vadd.f32 %v7046, %v7097
      %7099 = vdwg.mxu0
      %7100 = vmatpush.msra.mxu0 0.0
      %7101 = vmatpush.msra.mxu0 0.0
      %7102 = vmatpush.msra.mxu0 0.0
      %7103 = vmatpush.msra.mxu0 0.0
      %7104 = vmatpush.msra.mxu0 0.0
      %7105 = vmatpush.msra.mxu0 0.0
      %7106 = vmatpush.msra.mxu0 0.0
      %7107 = vmatpush.msra.mxu0 0.0
      %7108 = vmatpush.msra.mxu0 0.0
      %7109 = vmatpush.msra.mxu0 0.0
      %7110 = vmatpush.msra.mxu0 0.0
      %7111 = vmatpush.msra.mxu0 0.0
      %7112 = vmatpush.msra.mxu0 0.0
      %7113 = vmatpush.msra.mxu0 0.0
      %7114 = vmatpush.msra.mxu0 0.0
      %7115 = vmatpush.msra.mxu0 %v4401
      %7116 = vmatmul.f32.gmra.mxu0 %v7049
      %v7117 = vpop.f32.mrf.mxu0
      %v7118 = vadd.f32 %v7041, %v7117
      %7119 = vmatmul.f32.gmra.mxu0 %v7052
      %v7120 = vpop.f32.mrf.mxu0
      %v7121 = vadd.f32 %v7046, %v7120
      %7122 = vdwg.mxu0
      %7123 = vmatpush.msra.mxu0 0.0
      %7124 = vmatpush.msra.mxu0 0.0
      %7125 = vmatpush.msra.mxu0 0.0
      %7126 = vmatpush.msra.mxu0 0.0
      %7127 = vmatpush.msra.mxu0 0.0
      %7128 = vmatpush.msra.mxu0 0.0
      %7129 = vmatpush.msra.mxu0 0.0
      %7130 = vmatpush.msra.mxu0 0.0
      %7131 = vmatpush.msra.mxu0 0.0
      %7132 = vmatpush.msra.mxu0 0.0
      %7133 = vmatpush.msra.mxu0 0.0
      %7134 = vmatpush.msra.mxu0 0.0
      %7135 = vmatpush.msra.mxu0 0.0
      %7136 = vmatpush.msra.mxu0 0.0
      %7137 = vmatpush.msra.mxu0 0.0
      %7138 = vmatpush.msra.mxu0 %v4402
      %7139 = vmatmul.f32.gmra.mxu0 %v7049
      %v7140 = vpop.f32.mrf.mxu0
      %v7141 = vadd.f32 %v7041, %v7140
      %7142 = vmatmul.f32.gmra.mxu0 %v7052
      %v7143 = vpop.f32.mrf.mxu0
      %v7144 = vadd.f32 %v7046, %v7143
      %7145 = vdwg.mxu0
      %7146 = vmatpush.msra.mxu0 0.0
      %7147 = vmatpush.msra.mxu0 0.0
      %7148 = vmatpush.msra.mxu0 0.0
      %7149 = vmatpush.msra.mxu0 0.0
      %7150 = vmatpush.msra.mxu0 0.0
      %7151 = vmatpush.msra.mxu0 0.0
      %7152 = vmatpush.msra.mxu0 0.0
      %7153 = vmatpush.msra.mxu0 0.0
      %7154 = vmatpush.msra.mxu0 0.0
      %7155 = vmatpush.msra.mxu0 0.0
      %7156 = vmatpush.msra.mxu0 0.0
      %7157 = vmatpush.msra.mxu0 0.0
      %7158 = vmatpush.msra.mxu0 0.0
      %7159 = vmatpush.msra.mxu0 0.0
      %7160 = vmatpush.msra.mxu0 0.0
      %7161 = vmatpush.msra.mxu0 %v4403
      %7162 = vmatmul.f32.gmra.mxu0 %v7049
      %v7163 = vpop.f32.mrf.mxu0
      %v7164 = vadd.f32 %v7041, %v7163
      %7165 = vmatmul.f32.gmra.mxu0 %v7052
      %v7166 = vpop.f32.mrf.mxu0
      %v7167 = vadd.f32 %v7046, %v7166
      %7168 = vdwg.mxu0
      %7169 = vmatpush.msra.mxu0 0.0
      %7170 = vmatpush.msra.mxu0 0.0
      %7171 = vmatpush.msra.mxu0 0.0
      %7172 = vmatpush.msra.mxu0 0.0
      %7173 = vmatpush.msra.mxu0 0.0
      %7174 = vmatpush.msra.mxu0 0.0
      %7175 = vmatpush.msra.mxu0 0.0
      %7176 = vmatpush.msra.mxu0 0.0
      %7177 = vmatpush.msra.mxu0 0.0
      %7178 = vmatpush.msra.mxu0 0.0
      %7179 = vmatpush.msra.mxu0 0.0
      %7180 = vmatpush.msra.mxu0 0.0
      %7181 = vmatpush.msra.mxu0 0.0
      %7182 = vmatpush.msra.mxu0 0.0
      %7183 = vmatpush.msra.mxu0 0.0
      %7184 = vmatpush.msra.mxu0 %v4404
      %7185 = vmatmul.f32.gmra.mxu0 %v7049
      %v7186 = vpop.f32.mrf.mxu0
      %v7187 = vadd.f32 %v7041, %v7186
      %7188 = vmatmul.f32.gmra.mxu0 %v7052
      %v7189 = vpop.f32.mrf.mxu0
      %v7190 = vadd.f32 %v7046, %v7189
      %7191 = vdwg.mxu0
      %7192 = vmatpush.msra.mxu0 0.0
      %7193 = vmatpush.msra.mxu0 0.0
      %7194 = vmatpush.msra.mxu0 0.0
      %7195 = vmatpush.msra.mxu0 0.0
      %7196 = vmatpush.msra.mxu0 0.0
      %7197 = vmatpush.msra.mxu0 0.0
      %7198 = vmatpush.msra.mxu0 0.0
      %7199 = vmatpush.msra.mxu0 0.0
      %7200 = vmatpush.msra.mxu0 0.0
      %7201 = vmatpush.msra.mxu0 0.0
      %7202 = vmatpush.msra.mxu0 0.0
      %7203 = vmatpush.msra.mxu0 0.0
      %7204 = vmatpush.msra.mxu0 0.0
      %7205 = vmatpush.msra.mxu0 0.0
      %7206 = vmatpush.msra.mxu0 0.0
      %7207 = vmatpush.msra.mxu0 %v4405
      %7208 = vmatmul.f32.gmra.mxu0 %v7049
      %v7209 = vpop.f32.mrf.mxu0
      %v7210 = vadd.f32 %v7041, %v7209
      %7211 = vmatmul.f32.gmra.mxu0 %v7052
      %v7212 = vpop.f32.mrf.mxu0
      %v7213 = vadd.f32 %v7046, %v7212
      %7214 = vdwg.mxu0
      %7215 = vmatpush.msra.mxu0 0.0
      %7216 = vmatpush.msra.mxu0 0.0
      %7217 = vmatpush.msra.mxu0 0.0
      %7218 = vmatpush.msra.mxu0 0.0
      %7219 = vmatpush.msra.mxu0 0.0
      %7220 = vmatpush.msra.mxu0 0.0
      %7221 = vmatpush.msra.mxu0 0.0
      %7222 = vmatpush.msra.mxu0 0.0
      %7223 = vmatpush.msra.mxu0 0.0
      %7224 = vmatpush.msra.mxu0 0.0
      %7225 = vmatpush.msra.mxu0 0.0
      %7226 = vmatpush.msra.mxu0 0.0
      %7227 = vmatpush.msra.mxu0 0.0
      %7228 = vmatpush.msra.mxu0 0.0
      %7229 = vmatpush.msra.mxu0 0.0
      %7230 = vmatpush.msra.mxu0 %v4406
      %7231 = vmatmul.f32.gmra.mxu0 %v7049
      %v7232 = vpop.f32.mrf.mxu0
      %v7233 = vadd.f32 %v7041, %v7232
      %7234 = vmatmul.f32.gmra.mxu0 %v7052
      %v7235 = vpop.f32.mrf.mxu0
      %v7236 = vadd.f32 %v7046, %v7235
      %7237 = vdwg.mxu0
      %v7238 = vadd.f32 %v6868, %v7072
      %v7239 = vadd.f32 %v6891, %v7095
      %v7240 = vadd.f32 %v6914, %v7118
      %v7241 = vadd.f32 %v6937, %v7141
      %v7242 = vadd.f32 %v6960, %v7164
      %v7243 = vadd.f32 %v6983, %v7187
      %v7244 = vadd.f32 %v7006, %v7210
      %v7245 = vadd.f32 %v7029, %v7233
      %v7246 = vadd.f32 %v6871, %v7075
      %v7247 = vadd.f32 %v6894, %v7098
      %v7248 = vadd.f32 %v6917, %v7121
      %v7249 = vadd.f32 %v6940, %v7144
      %v7250 = vadd.f32 %v6963, %v7167
      %v7251 = vadd.f32 %v6986, %v7190
      %v7252 = vadd.f32 %v7009, %v7213
      %v7253 = vadd.f32 %v7032, %v7236
      %v7254 = vmul.f32 %v7238, %v5658
      %v7255 = vmul.f32 %v7239, %v5659
      %v7256 = vmul.f32 %v7240, %v5660
      %v7257 = vmul.f32 %v7241, %v5661
      %v7258 = vmul.f32 %v7242, %v5662
      %v7259 = vmul.f32 %v7243, %v5663
      %v7260 = vmul.f32 %v7244, %v5664
      %v7261 = vmul.f32 %v7245, %v5665
      %v7262 = vmul.f32 %v7246, %v5658
      %v7263 = vmul.f32 %v7247, %v5659
      %v7264 = vmul.f32 %v7248, %v5660
      %v7265 = vmul.f32 %v7249, %v5661
      %v7266 = vmul.f32 %v7250, %v5662
      %v7267 = vmul.f32 %v7251, %v5663
      %v7268 = vmul.f32 %v7252, %v5664
      %v7269 = vmul.f32 %v7253, %v5665
      %7270 = vst [vmem:[%s818] sm:$0xff] %v7254
      %7271 = vst [vmem:[%s818 + $0x8] sm:$0xff] %v7255
      %7272 = vst [vmem:[%s818 + $0x10] sm:$0xff] %v7256
      %7273 = vst [vmem:[%s818 + $0x18] sm:$0xff] %v7257
      %7274 = vst [vmem:[%s818 + $0x20] sm:$0xff] %v7258
      %7275 = vst [vmem:[%s818 + $0x28] sm:$0xff] %v7259
      %7276 = vst [vmem:[%s818 + $0x30] sm:$0xff] %v7260
      %7277 = vst [vmem:[%s818 + $0x38] sm:$0xff] %v7261
      %7278 = vst [vmem:[%s818 + $0x40] sm:$0xff] %v7262
      %7279 = vst [vmem:[%s818 + $0x48] sm:$0xff] %v7263
      %7280 = vst [vmem:[%s818 + $0x50] sm:$0xff] %v7264
      %7281 = vst [vmem:[%s818 + $0x58] sm:$0xff] %v7265
      %7282 = vst [vmem:[%s818 + $0x60] sm:$0xff] %v7266
      %7283 = vst [vmem:[%s818 + $0x68] sm:$0xff] %v7267
      %7284 = vst [vmem:[%s818 + $0x70] sm:$0xff] %v7268
      %7285 = vst [vmem:[%s818 + $0x78] sm:$0xff] %v7269
      %p7286 = scmp.lt.s32.totalorder %s38, 1
      %s7287 = scalar_select %p7286, %s38, 1
      %s7288 = smul.addr %s7287, 16
      %s7289 = smul.addr %s7288, 8
      %s7290 = scalar_lea.vmem %s27, %s7289
      // Predicated region
      $region129: #{encoder_forward.1} parent=127 // pred_check
        %p7291 = pneg %p628
      $region130: #{encoder_forward.1} parent=127 // pred_check_branch
        %7293 = sbr.rel (%p7291) target = $region132
      $region131: #{encoder_forward.1} parent=127 // pred_region
        _
      $region132: #{encoder_forward.1} parent=127 // pred_fallthru
        _
    $region128: #{encoder_forward.1} parent=5 // pred_fallthru
      _
    %p7294 = scmp.le.s32.totalorder 2, %s33
    // Predicated region
    $region133: #{encoder_forward.1} parent=5 // pred_check
      %p7295 = pneg %p7294
    $region134: #{encoder_forward.1} parent=5 // pred_check_branch
      %7297 = sbr.rel (%p7295) target = $region136
    $region135: #{encoder_forward.1} parent=5 // pred_region
      %s7298 = ssub.s32 %s33, 2
      // Predicated region
      $region137: #{encoder_forward.1} parent=135 // pred_check
        %p7299 = pneg %p634
      $region138: #{encoder_forward.1} parent=135 // pred_check_branch
        %7301 = sbr.rel (%p7299) target = $region140
      $region139: #{encoder_forward.1} parent=135 // pred_region
        %p7302 = scmp.lt.s32.totalorder %s39, 1
        %s7303 = scalar_select %p7302, %s39, 1
        %s7304 = smul.addr %s7303, 16
        %s7305 = smul.addr %s7304, 8
        %s7306 = scalar_lea.vmem %s27, %s7305
      $region140: #{encoder_forward.1} parent=135 // pred_fallthru
        _
    $region136: #{encoder_forward.1} parent=5 // pred_fallthru
      _
  $region6: #{encoder_forward.1} parent=0 // loop_footer
    %s37 = sadd.s32 1, %s33
  $region7: #{encoder_forward.1} parent=0 // loop_footer_branch
    %32 = sbr.rel target = $region3
  $region8: #{encoder_forward.1} parent=0 // loop_exit
    _

</llo_original>
